<compile_context>
chip_gen: v7x
topology: tpu7x:2x2x1
jax: 0.10.0
libtpu: 0.0.40
codegen_flags: <defaults>
</compile_context>

<pallas_src>
import functools

import jax
import jax.numpy as jnp
from jax.experimental import pallas as pl
from jax.experimental.pallas import tpu as pltpu

LATENT_CODE_NUM = 32
BN_EPS = 1e-5
VMEM_LIMIT = 32 * 1024 * 1024          # safe on v7x (64 MiB physical) too
SINGLE_BLOCK_MAX_M = 512               # d2 (M=450) stays single-block
TILE_M = 256

_VMEM = pl.BlockSpec(memory_space=pltpu.MemorySpace.VMEM)
_CP_NOGRID = pltpu.CompilerParams(vmem_limit_bytes=VMEM_LIMIT)


# --------------------------------------------------------------------------
# Pallas kernels
# --------------------------------------------------------------------------
def _matmul_fused_kernel(*refs, act, batchnorm):
    # refs = (x, w, b[, gamma, beta], out); x and w are bf16, accumulation f32.
    if batchnorm:
        x_ref, w_ref, b_ref, g_ref, beta_ref, o_ref = refs
    else:
        x_ref, w_ref, b_ref, o_ref = refs
    y = jnp.dot(x_ref[...], w_ref[...],
                preferred_element_type=jnp.float32) + b_ref[...]
    if batchnorm:
        # Training-mode BatchNorm2d over the batch rows (B*H*W), biased var,
        # one-pass sum / sum-of-squares statistics (f32).
        m = y.shape[0]
        mean = jnp.sum(y, axis=0, keepdims=True) * (1.0 / m)
        var = jnp.sum(y * y, axis=0, keepdims=True) * (1.0 / m) - mean * mean
        var = jnp.maximum(var, 0.0)
        y = (y - mean) * jax.lax.rsqrt(var + BN_EPS) * g_ref[...] + beta_ref[...]
    if act == "leaky_relu":
        y = jnp.where(y > 0, y, 0.2 * y)
    elif act == "relu":
        y = jnp.maximum(y, 0.0)
    elif act == "sigmoid":
        y = jax.nn.sigmoid(y)
    o_ref[...] = y.astype(o_ref.dtype)


def _pick_tile_m(K, N, tile_m):
    # VMEM-budget-aware tile for the M-tiled path (v7x has 64 MiB physical).
    budget = 24 * 1024 * 1024
    while tile_m > 128:
        per_block = 2 * (tile_m * K * 2 + tile_m * N * 4) + K * N * 2 + 3 * N * 4
        if per_block <= budget:
            break
        tile_m //= 2
    return tile_m


def matmul_fused(x, w, b, gamma=None, beta=None, *, act="none", batchnorm=False,
                 out_dtype=jnp.float32, tile_m=TILE_M):
    x = x.astype(jnp.bfloat16)            # wrapper-side cast: bf16 DMA
    M, K = x.shape
    K2, N = w.shape
    assert K == K2
    kernel = functools.partial(_matmul_fused_kernel, act=act, batchnorm=batchnorm)
    b2 = b.reshape(1, N).astype(jnp.float32)
    operands = [x, w, b2]
    if batchnorm:
        operands += [gamma.reshape(1, N).astype(jnp.float32),
                     beta.reshape(1, N).astype(jnp.float32)]

    in_bytes = sum(int(op.size) * op.dtype.itemsize for op in operands)
    out_bytes = M * N * jnp.dtype(out_dtype).itemsize
    cost = pl.CostEstimate(flops=2 * M * K * N,
                           transcendentals=(M * N if act == "sigmoid" else 0),
                           bytes_accessed=in_bytes + out_bytes)

    if batchnorm or M <= SINGLE_BLOCK_MAX_M:
        # Single block.  BatchNorm needs global batch statistics over all M
        # rows, so it is never M-tiled (per-tile stats would change numerics).
        # TODO(synk): tiled two-pass BN statistics for large batch.
        return pl.pallas_call(
            kernel,
            out_shape=jax.ShapeDtypeStruct((M, N), out_dtype),
            in_specs=[_VMEM] * len(operands),
            out_specs=_VMEM,
            compiler_params=_CP_NOGRID,
            cost_estimate=cost,
        )(*operands)

    # Row-tiled grid (row-independent epilogue only).  "parallel" lets v7x
    # shard tiles across both TensorCores; tiles are bounded in VMEM.
    tile_m = _pick_tile_m(K, N, tile_m)
    Mp = pl.cdiv(M, tile_m) * tile_m
    xp = jnp.pad(x, ((0, Mp - M), (0, 0))) if Mp != M else x
    out = pl.pallas_call(
        kernel,
        out_shape=jax.ShapeDtypeStruct((Mp, N), out_dtype),
        grid=(Mp // tile_m,),
        in_specs=[pl.BlockSpec((tile_m, K), lambda i: (i, 0)),
                  pl.BlockSpec((K, N), lambda i: (0, 0)),
                  pl.BlockSpec((1, N), lambda i: (0, 0))],
        out_specs=pl.BlockSpec((tile_m, N), lambda i: (i, 0)),
        compiler_params=pltpu.CompilerParams(
            dimension_semantics=("parallel",),
            vmem_limit_bytes=VMEM_LIMIT),
        cost_estimate=cost,
    )(xp, w, b2)
    return out[:M]


def _latent_fc2_kernel(x_ref, wl_ref, bl_ref, eps_ref, w2_ref, b2_ref,
                       lat_ref, h_ref):
    # [fc11 | fc12] matmul + reparameterization + fc2, all in one kernel.
    y = jnp.dot(x_ref[...], wl_ref[...],
                preferred_element_type=jnp.float32) + bl_ref[...]
    mu = y[:, :LATENT_CODE_NUM]
    lv = y[:, LATENT_CODE_NUM:2 * LATENT_CODE_NUM]
    z = mu + eps_ref[...] * jnp.exp(lv * 0.5)            # exp -> EUP slot
    # One lane-dense (B, 128) slab [mu | logvar | z | pad] -> one unmasked store.
    lat_ref[...] = jnp.concatenate([mu, lv, z, jnp.zeros_like(z)], axis=1)
    h = jnp.dot(z.astype(jnp.bfloat16), w2_ref[...],
                preferred_element_type=jnp.float32) + b2_ref[...]
    h_ref[...] = h.astype(h_ref.dtype)


def latent_fc2_fused(flat, wl, bl, eps, w2, b2):
    B, Kf = flat.shape
    L = LATENT_CODE_NUM
    N2 = w2.shape[1]
    flat = flat.astype(jnp.bfloat16)
    cost = pl.CostEstimate(
        flops=2 * B * Kf * wl.shape[1] + 2 * B * L * N2,
        transcendentals=B * L,
        bytes_accessed=int(flat.size) * 2 + int(wl.size) * 2 + int(w2.size) * 2
                       + B * 4 * L * 4 + B * N2 * 2)
    lat, h = pl.pallas_call(
        _latent_fc2_kernel,
        out_shape=(jax.ShapeDtypeStruct((B, 4 * L), jnp.float32),
                   jax.ShapeDtypeStruct((B, N2), jnp.bfloat16)),
        in_specs=[_VMEM] * 6,
        out_specs=(_VMEM, _VMEM),
        compiler_params=_CP_NOGRID,
        cost_estimate=cost,
    )(flat, wl, bl.reshape(1, -1).astype(jnp.float32), eps.astype(jnp.float32),
      w2, b2.reshape(1, -1).astype(jnp.float32))
    return lat, h


# --------------------------------------------------------------------------
# Plain-JAX glue: im2col (layout plumbing only, tiny tensors)
# --------------------------------------------------------------------------
def _im2col(x, kh, kw, stride, pad):
    # x: (B, H, W, C) NHWC  ->  (B*OH*OW, kh*kw*C)
    B, H, W, C = x.shape
    xp = jnp.pad(x, ((0, 0), (pad, pad), (pad, pad), (0, 0)))
    OH = (H + 2 * pad - kh) // stride + 1
    OW = (W + 2 * pad - kw) // stride + 1
    cols = []
    for i in range(kh):
        for j in range(kw):
            cols.append(xp[:, i:i + (OH - 1) * stride + 1:stride,
                           j:j + (OW - 1) * stride + 1:stride, :])
    patches = jnp.stack(cols, axis=3)              # (B, OH, OW, kh*kw, C)
    return patches.reshape(B * OH * OW, kh * kw * C), (B, OH, OW)


def conv2d_fused(x, w2, b, gamma, beta, *, kh, kw, stride, pad, act, batchnorm,
                 out_dtype=jnp.bfloat16, pad_k_to=None):
    # x: NHWC bf16 ; w2: prepared (kh*kw*Cin, Cout) bf16
    cols, (B, OH, OW) = _im2col(x, kh, kw, stride, pad)
    if pad_k_to is not None and cols.shape[1] < pad_k_to:
        cols = jnp.pad(cols, ((0, 0), (0, pad_k_to - cols.shape[1])))
    Cout = w2.shape[1]
    out = matmul_fused(cols, w2, b, gamma, beta, act=act, batchnorm=batchnorm,
                       out_dtype=out_dtype)
    return out.reshape(B, OH, OW, Cout)


def conv_transpose2d_fused(x, wct, bct, *, cout, act, out_dtype=jnp.bfloat16):
    # Sub-pixel decomposition of ConvTranspose2d(k=4, s=2, p=1):
    # one 2x2 stride-1 conv over the 1-padded input producing 4 parity groups,
    # then a pixel-shuffle gather.  out[2m+a, 2n+b] = res[m+a, n+b, group(a,b)].
    B, H, W, _ = x.shape
    cols, (_, OH1, OW1) = _im2col(x, 2, 2, 1, 1)          # OH1 = H+1
    out = matmul_fused(cols, wct, bct, act=act, out_dtype=out_dtype)
    res = out[:, :4 * cout].reshape(B, OH1, OW1, 2, 2, cout)
    subs = [[res[:, a:a + H, bb:bb + W, a, bb, :] for bb in (0, 1)] for a in (0, 1)]
    inter = jnp.stack([jnp.stack(subs[a], axis=3) for a in (0, 1)], axis=2)
    # TODO(synk): fold the pixel-shuffle into the kernel epilogue (strided
    # stores per parity group) to avoid this extra XLA pass at large batch.
    return inter.reshape(B, 2 * H, 2 * W, cout)            # (B, 2H, 2W, cout)


# --------------------------------------------------------------------------
# VAE forward (NCHW in / out, NHWC + bf16 internally)
# --------------------------------------------------------------------------
def vae_forward(params, x_nchw, eps):
    p = params
    x = jnp.transpose(x_nchw, (0, 2, 3, 1)).astype(jnp.bfloat16)   # NCHW -> NHWC
    B = x.shape[0]

    # Encoder computed ONCE (the two PyTorch encoder calls are identical).
    # e1: Cout padded 64->128 and im2col-K padded 16->128 (lane-dense); the
    # padded channels are exactly zero and e2's matching weight rows are zero.
    h = conv2d_fused(x, p["e1_w"], p["e1_b"], p["bn1_g"], p["bn1_b"],
                     kh=4, kw=4, stride=2, pad=1, act="leaky_relu",
                     batchnorm=True, pad_k_to=128)
    h = conv2d_fused(h, p["e2_w"], p["e2_b"], p["bn2_g"], p["bn2_b"],
                     kh=4, kw=4, stride=2, pad=1, act="leaky_relu", batchnorm=True)
    # TODO(synk): fuse e2+e3 into one pallas_call with the 3x3 window built in VMEM.
    h = conv2d_fused(h, p["e3_w"], p["e3_b"], p["bn3_g"], p["bn3_b"],
                     kh=3, kw=3, stride=1, pad=1, act="leaky_relu", batchnorm=True)

    # NHWC flatten feeds the FCs directly (fc weights row-permuted at prep).
    flat = h.reshape(B, -1)                                  # (B, 6272) bf16

    # fc11 + fc12 + reparameterization + fc2 in one fused kernel.
    lat, h2 = latent_fc2_fused(flat, p["fc_lat_w"], p["fc_lat_b"], eps,
                               p["fc2_w"], p["fc2_b"])
    mu = lat[:, :LATENT_CODE_NUM]
    logvar = lat[:, LATENT_CODE_NUM:2 * LATENT_CODE_NUM]

    h2 = h2.reshape(B, 7, 7, 128)                            # NHWC feature map
    d = conv_transpose2d_fused(h2, p["d1_wct"], p["d1_bct"], cout=64, act="relu")
    d = conv_transpose2d_fused(d, p["d2_wct"], p["d2_bct"], cout=1, act="sigmoid",
                               out_dtype=jnp.float32)

    recon = jnp.transpose(d, (0, 3, 1, 2))                   # NHWC -> NCHW
    return recon, mu, logvar


# --------------------------------------------------------------------------
# Parameter init (PyTorch layouts) + one-time kernel-ready preparation
# --------------------------------------------------------------------------
def init_params(key):
    ks = jax.random.split(key, 16)

    def w(k, shape, scale=0.05):
        return scale * jax.random.normal(k, shape, jnp.float32)

    p = {}
    p["e1_w"] = w(ks[0], (64, 1, 4, 4));    p["e1_b"] = w(ks[1], (64,))
    p["bn1_g"] = jnp.ones((64,), jnp.float32);  p["bn1_b"] = jnp.zeros((64,), jnp.float32)
    p["e2_w"] = w(ks[2], (128, 64, 4, 4));  p["e2_b"] = w(ks[3], (128,))
    p["bn2_g"] = jnp.ones((128,), jnp.float32); p["bn2_b"] = jnp.zeros((128,), jnp.float32)
    p["e3_w"] = w(ks[4], (128, 128, 3, 3)); p["e3_b"] = w(ks[5], (128,))
    p["bn3_g"] = jnp.ones((128,), jnp.float32); p["bn3_b"] = jnp.zeros((128,), jnp.float32)
    p["fc11_w"] = w(ks[6], (128 * 7 * 7, LATENT_CODE_NUM), 0.01)
    p["fc11_b"] = w(ks[7], (LATENT_CODE_NUM,))
    p["fc12_w"] = w(ks[8], (128 * 7 * 7, LATENT_CODE_NUM), 0.01)
    p["fc12_b"] = w(ks[9], (LATENT_CODE_NUM,))
    p["fc2_w"] = w(ks[10], (LATENT_CODE_NUM, 128 * 7 * 7), 0.01)
    p["fc2_b"] = w(ks[11], (128 * 7 * 7,))
    p["d1_w"] = w(ks[12], (128, 64, 4, 4)); p["d1_b"] = w(ks[13], (64,))
    p["d2_w"] = w(ks[14], (64, 1, 4, 4));   p["d2_b"] = w(ks[15], (1,))
    return p


# Sub-pixel tap table: output row parity a uses kernel rows (R[a][0], R[a][1]).
_SUBK = ((3, 1), (2, 0))


def _prep_convT(w, b, pad_cout_to=None):
    # w: (Cin, Cout, 4, 4) PyTorch ConvTranspose2d layout -> (4*Cin, 4*Cout)
    # combined sub-pixel weight; column group g = 2a+b is the 2x2 sub-kernel
    # for output parity (a, b); rows ordered (ki, kj, cin) to match im2col.
    Cin, Cout, _, _ = w.shape
    cols = []
    for a in (0, 1):
        for bb in (0, 1):
            sub = jnp.stack(
                [jnp.stack([w[:, :, _SUBK[a][ki], _SUBK[bb][kj]] for kj in (0, 1)],
                           axis=0) for ki in (0, 1)], axis=0)   # (2, 2, Cin, Cout)
            cols.append(sub.reshape(4 * Cin, Cout))
    wct = jnp.concatenate(cols, axis=1)                         # (4*Cin, 4*Cout)
    bct = jnp.tile(b, 4)                                        # (4*Cout,)
    if pad_cout_to is not None and wct.shape[1] < pad_cout_to:  # lane-dense output
        padn = pad_cout_to - wct.shape[1]
        wct = jnp.pad(wct, ((0, 0), (0, padn)))
        bct = jnp.pad(bct, ((0, padn),))
    return wct.astype(jnp.bfloat16), bct.astype(jnp.float32)


def prepare_params(p):
    """One-time layout / dtype preparation of PyTorch-layout parameters."""
    def conv_w(w):   # (Cout, Cin, KH, KW) -> (KH*KW*Cin, Cout) bf16
        Cout, Cin, KH, KW = w.shape
        return jnp.transpose(w, (2, 3, 1, 0)).reshape(KH * KW * Cin, Cout).astype(jnp.bfloat16)

    def fc_in_nhwc(w):   # rows NCHW-flatten order -> NHWC-flatten order
        return jnp.transpose(w.reshape(128, 7, 7, -1), (1, 2, 0, 3)).reshape(128 * 49, -1)

    q = {}
    # e1: pad K 16->128 (rows) and Cout 64->128 (cols); BN params padded with
    # zeros so the padded channels stay exactly zero through BN + LeakyReLU.
    e1 = conv_w(p["e1_w"])                                  # (16, 64)
    q["e1_w"] = jnp.pad(e1, ((0, 128 - 16), (0, 128 - 64)))
    q["e1_b"] = jnp.pad(p["e1_b"], (0, 64))
    q["bn1_g"] = jnp.pad(p["bn1_g"], (0, 64))
    q["bn1_b"] = jnp.pad(p["bn1_b"], (0, 64))
    # e2: zero-pad Cin 64->128 so it consumes the 128-wide e1 activation.
    e2_w = jnp.pad(p["e2_w"], ((0, 0), (0, 64), (0, 0), (0, 0)))
    q["e2_w"] = conv_w(e2_w); q["e2_b"] = p["e2_b"]
    q["bn2_g"] = p["bn2_g"]; q["bn2_b"] = p["bn2_b"]
    q["e3_w"] = conv_w(p["e3_w"]); q["e3_b"] = p["e3_b"]
    q["bn3_g"] = p["bn3_g"]; q["bn3_b"] = p["bn3_b"]

    # fc11 | fc12 | zero-pad concatenated column-wise into one (6272, 128) matmul.
    q["fc_lat_w"] = jnp.pad(
        jnp.concatenate([fc_in_nhwc(p["fc11_w"]), fc_in_nhwc(p["fc12_w"])], axis=1),
        ((0, 0), (0, 64))).astype(jnp.bfloat16)
    q["fc_lat_b"] = jnp.pad(jnp.concatenate([p["fc11_b"], p["fc12_b"]]), (0, 64))

    # fc2: output columns permuted NCHW -> NHWC (fused into the latent kernel).
    q["fc2_w"] = jnp.transpose(p["fc2_w"].reshape(-1, 128, 7, 7),
                               (0, 2, 3, 1)).reshape(-1, 128 * 49).astype(jnp.bfloat16)
    q["fc2_b"] = jnp.transpose(p["fc2_b"].reshape(128, 7, 7), (1, 2, 0)).reshape(-1)

    q["d1_wct"], q["d1_bct"] = _prep_convT(p["d1_w"], p["d1_b"])
    q["d2_wct"], q["d2_bct"] = _prep_convT(p["d2_w"], p["d2_b"], pad_cout_to=128)
    return q


if __name__ == "__main__":
    key = jax.random.PRNGKey(0)
    pkey, xkey, ekey = jax.random.split(key, 3)
    params = prepare_params(init_params(pkey))

    # input must be 28x28 single-channel (the fc layers require 128*7*7)
    x = jax.random.normal(xkey, (2, 1, 28, 28), jnp.float32)
    # eps ~ N(0, 1) (torch.randn equivalent; explicit input instead of .cuda RNG)
    eps = jax.random.normal(ekey, (2, LATENT_CODE_NUM), jnp.float32)

    recon, mu, logvar = jax.jit(vae_forward)(params, x, eps)
    jax.block_until_ready((recon, mu, logvar))

    assert recon.shape == (2, 1, 28, 28)
    assert mu.shape == (2, LATENT_CODE_NUM)
    assert logvar.shape == (2, LATENT_CODE_NUM)
    assert bool(jnp.all(jnp.isfinite(recon)))
    assert bool(jnp.all(recon >= 0.0)) and bool(jnp.all(recon <= 1.0))
    print("KERNEL_OK")
</pallas_src>

<mosaic_0001>
module attributes {stable_mosaic.version = 11 : i64} {
  func.func @_matmul_fused_kernel(%arg0: memref<392x128xbf16, #tpu.memory_space<vmem>>, %arg1: memref<128x128xbf16, #tpu.memory_space<vmem>>, %arg2: memref<1x128xf32, #tpu.memory_space<vmem>>, %arg3: memref<1x128xf32, #tpu.memory_space<vmem>>, %arg4: memref<1x128xf32, #tpu.memory_space<vmem>>, %arg5: memref<392x128xbf16, #tpu.memory_space<vmem>>) attributes {dimension_semantics = [], scalar_prefetch = 0 : i64, scratch_operands = 0 : i64, tpu.core_type = #tpu.core_type<tc>} {
    %c0 = arith.constant 0 : index
    %c0_0 = arith.constant 0 : index
    %0 = vector.load %arg0[%c0, %c0_0] : memref<392x128xbf16, #tpu.memory_space<vmem>>, vector<392x128xbf16>
    %c0_1 = arith.constant 0 : index
    %c0_2 = arith.constant 0 : index
    %1 = vector.load %arg1[%c0_1, %c0_2] : memref<128x128xbf16, #tpu.memory_space<vmem>>, vector<128x128xbf16>
    %cst = arith.constant dense<0.000000e+00> : vector<392x128xf32>
    %2 = tpu.matmul %0, %1, %cst {dimension_numbers = #tpu.dot_dimension_numbers<[1], [0], [0], [1], [0, 0, 1, 1], [], []>} : vector<392x128xbf16>, vector<128x128xbf16>, vector<392x128xf32> -> vector<392x128xf32>
    %c0_3 = arith.constant 0 : index
    %c0_4 = arith.constant 0 : index
    %3 = vector.load %arg2[%c0_3, %c0_4] : memref<1x128xf32, #tpu.memory_space<vmem>>, vector<1x128xf32>
    %4 = vector.broadcast %3 : vector<1x128xf32> to vector<392x128xf32>
    %5 = arith.addf %2, %4 : vector<392x128xf32>
    %cst_5 = arith.constant dense<0.000000e+00> : vector<128xf32>
    %6 = vector.multi_reduction <add>, %5, %cst_5 [0] : vector<392x128xf32> to vector<128xf32>
    %7 = vector.shape_cast %6 : vector<128xf32> to vector<1x128xf32>
    %cst_6 = arith.constant 0.00255102036 : f32
    %8 = vector.broadcast %cst_6 : f32 to vector<1x128xf32>
    %9 = arith.mulf %7, %8 : vector<1x128xf32>
    %10 = arith.mulf %5, %5 : vector<392x128xf32>
    %cst_7 = arith.constant dense<0.000000e+00> : vector<128xf32>
    %11 = vector.multi_reduction <add>, %10, %cst_7 [0] : vector<392x128xf32> to vector<128xf32>
    %12 = vector.shape_cast %11 : vector<128xf32> to vector<1x128xf32>
    %cst_8 = arith.constant 0.00255102036 : f32
    %13 = vector.broadcast %cst_8 : f32 to vector<1x128xf32>
    %14 = arith.mulf %12, %13 : vector<1x128xf32>
    %15 = arith.mulf %9, %9 : vector<1x128xf32>
    %16 = arith.subf %14, %15 : vector<1x128xf32>
    %cst_9 = arith.constant 0.000000e+00 : f32
    %17 = vector.broadcast %cst_9 : f32 to vector<1x128xf32>
    %18 = arith.maximumf %16, %17 : vector<1x128xf32>
    %19 = vector.broadcast %9 : vector<1x128xf32> to vector<392x128xf32>
    %20 = arith.subf %5, %19 : vector<392x128xf32>
    %cst_10 = arith.constant 9.99999974E-6 : f32
    %21 = vector.broadcast %cst_10 : f32 to vector<1x128xf32>
    %22 = arith.addf %18, %21 : vector<1x128xf32>
    %23 = math.rsqrt %22 : vector<1x128xf32>
    %24 = vector.broadcast %23 : vector<1x128xf32> to vector<392x128xf32>
    %25 = arith.mulf %20, %24 : vector<392x128xf32>
    %c0_11 = arith.constant 0 : index
    %c0_12 = arith.constant 0 : index
    %26 = vector.load %arg3[%c0_11, %c0_12] : memref<1x128xf32, #tpu.memory_space<vmem>>, vector<1x128xf32>
    %27 = vector.broadcast %26 : vector<1x128xf32> to vector<392x128xf32>
    %28 = arith.mulf %25, %27 : vector<392x128xf32>
    %c0_13 = arith.constant 0 : index
    %c0_14 = arith.constant 0 : index
    %29 = vector.load %arg4[%c0_13, %c0_14] : memref<1x128xf32, #tpu.memory_space<vmem>>, vector<1x128xf32>
    %30 = vector.broadcast %29 : vector<1x128xf32> to vector<392x128xf32>
    %31 = arith.addf %28, %30 : vector<392x128xf32>
    %cst_15 = arith.constant 0.000000e+00 : f32
    %32 = vector.broadcast %cst_15 : f32 to vector<392x128xf32>
    %33 = arith.cmpf ogt, %31, %32 : vector<392x128xf32>
    %cst_16 = arith.constant 2.000000e-01 : f32
    %34 = vector.broadcast %cst_16 : f32 to vector<392x128xf32>
    %35 = arith.mulf %34, %31 : vector<392x128xf32>
    %36 = arith.select %33, %31, %35 : vector<392x128xi1>, vector<392x128xf32>
    %37 = arith.truncf %36 : vector<392x128xf32> to vector<392x128xbf16>
    %c0_17 = arith.constant 0 : index
    %c0_18 = arith.constant 0 : index
    %38 = vector.load %arg5[%c0_17, %c0_18] : memref<392x128xbf16, #tpu.memory_space<vmem>>, vector<392x128xbf16>
    tpu.vector_store %arg5[%c0_17, %c0_18], %37 {strides = array<i32>} : memref<392x128xbf16, #tpu.memory_space<vmem>>, vector<392x128xbf16>,
    return
  }
}

module attributes {stable_mosaic.version = 11 : i64} {
  func.func @_matmul_fused_kernel(%arg0: memref<98x2048xbf16, #tpu.memory_space<vmem>>, %arg1: memref<2048x128xbf16, #tpu.memory_space<vmem>>, %arg2: memref<1x128xf32, #tpu.memory_space<vmem>>, %arg3: memref<1x128xf32, #tpu.memory_space<vmem>>, %arg4: memref<1x128xf32, #tpu.memory_space<vmem>>, %arg5: memref<98x128xbf16, #tpu.memory_space<vmem>>) attributes {dimension_semantics = [], scalar_prefetch = 0 : i64, scratch_operands = 0 : i64, tpu.core_type = #tpu.core_type<tc>} {
    %c0 = arith.constant 0 : index
    %c0_0 = arith.constant 0 : index
    %0 = vector.load %arg0[%c0, %c0_0] : memref<98x2048xbf16, #tpu.memory_space<vmem>>, vector<98x2048xbf16>
    %c0_1 = arith.constant 0 : index
    %c0_2 = arith.constant 0 : index
    %1 = vector.load %arg1[%c0_1, %c0_2] : memref<2048x128xbf16, #tpu.memory_space<vmem>>, vector<2048x128xbf16>
    %cst = arith.constant dense<0.000000e+00> : vector<98x128xf32>
    %2 = tpu.matmul %0, %1, %cst {dimension_numbers = #tpu.dot_dimension_numbers<[1], [0], [0], [1], [0, 0, 1, 1], [], []>} : vector<98x2048xbf16>, vector<2048x128xbf16>, vector<98x128xf32> -> vector<98x128xf32>
    %c0_3 = arith.constant 0 : index
    %c0_4 = arith.constant 0 : index
    %3 = vector.load %arg2[%c0_3, %c0_4] : memref<1x128xf32, #tpu.memory_space<vmem>>, vector<1x128xf32>
    %4 = vector.broadcast %3 : vector<1x128xf32> to vector<98x128xf32>
    %5 = arith.addf %2, %4 : vector<98x128xf32>
    %cst_5 = arith.constant dense<0.000000e+00> : vector<128xf32>
    %6 = vector.multi_reduction <add>, %5, %cst_5 [0] : vector<98x128xf32> to vector<128xf32>
    %7 = vector.shape_cast %6 : vector<128xf32> to vector<1x128xf32>
    %cst_6 = arith.constant 0.0102040814 : f32
    %8 = vector.broadcast %cst_6 : f32 to vector<1x128xf32>
    %9 = arith.mulf %7, %8 : vector<1x128xf32>
    %10 = arith.mulf %5, %5 : vector<98x128xf32>
    %cst_7 = arith.constant dense<0.000000e+00> : vector<128xf32>
    %11 = vector.multi_reduction <add>, %10, %cst_7 [0] : vector<98x128xf32> to vector<128xf32>
    %12 = vector.shape_cast %11 : vector<128xf32> to vector<1x128xf32>
    %cst_8 = arith.constant 0.0102040814 : f32
    %13 = vector.broadcast %cst_8 : f32 to vector<1x128xf32>
    %14 = arith.mulf %12, %13 : vector<1x128xf32>
    %15 = arith.mulf %9, %9 : vector<1x128xf32>
    %16 = arith.subf %14, %15 : vector<1x128xf32>
    %cst_9 = arith.constant 0.000000e+00 : f32
    %17 = vector.broadcast %cst_9 : f32 to vector<1x128xf32>
    %18 = arith.maximumf %16, %17 : vector<1x128xf32>
    %19 = vector.broadcast %9 : vector<1x128xf32> to vector<98x128xf32>
    %20 = arith.subf %5, %19 : vector<98x128xf32>
    %cst_10 = arith.constant 9.99999974E-6 : f32
    %21 = vector.broadcast %cst_10 : f32 to vector<1x128xf32>
    %22 = arith.addf %18, %21 : vector<1x128xf32>
    %23 = math.rsqrt %22 : vector<1x128xf32>
    %24 = vector.broadcast %23 : vector<1x128xf32> to vector<98x128xf32>
    %25 = arith.mulf %20, %24 : vector<98x128xf32>
    %c0_11 = arith.constant 0 : index
    %c0_12 = arith.constant 0 : index
    %26 = vector.load %arg3[%c0_11, %c0_12] : memref<1x128xf32, #tpu.memory_space<vmem>>, vector<1x128xf32>
    %27 = vector.broadcast %26 : vector<1x128xf32> to vector<98x128xf32>
    %28 = arith.mulf %25, %27 : vector<98x128xf32>
    %c0_13 = arith.constant 0 : index
    %c0_14 = arith.constant 0 : index
    %29 = vector.load %arg4[%c0_13, %c0_14] : memref<1x128xf32, #tpu.memory_space<vmem>>, vector<1x128xf32>
    %30 = vector.broadcast %29 : vector<1x128xf32> to vector<98x128xf32>
    %31 = arith.addf %28, %30 : vector<98x128xf32>
    %cst_15 = arith.constant 0.000000e+00 : f32
    %32 = vector.broadcast %cst_15 : f32 to vector<98x128xf32>
    %33 = arith.cmpf ogt, %31, %32 : vector<98x128xf32>
    %cst_16 = arith.constant 2.000000e-01 : f32
    %34 = vector.broadcast %cst_16 : f32 to vector<98x128xf32>
    %35 = arith.mulf %34, %31 : vector<98x128xf32>
    %36 = arith.select %33, %31, %35 : vector<98x128xi1>, vector<98x128xf32>
    %37 = arith.truncf %36 : vector<98x128xf32> to vector<98x128xbf16>
    %c0_17 = arith.constant 0 : index
    %c0_18 = arith.constant 0 : index
    %38 = vector.load %arg5[%c0_17, %c0_18] : memref<98x128xbf16, #tpu.memory_space<vmem>>, vector<98x128xbf16>
    tpu.vector_store %arg5[%c0_17, %c0_18], %37 {strides = array<i32>} : memref<98x128xbf16, #tpu.memory_space<vmem>>, vector<98x128xbf16>,
    return
  }
}

module attributes {stable_mosaic.version = 11 : i64} {
  func.func @_matmul_fused_kernel(%arg0: memref<98x1152xbf16, #tpu.memory_space<vmem>>, %arg1: memref<1152x128xbf16, #tpu.memory_space<vmem>>, %arg2: memref<1x128xf32, #tpu.memory_space<vmem>>, %arg3: memref<1x128xf32, #tpu.memory_space<vmem>>, %arg4: memref<1x128xf32, #tpu.memory_space<vmem>>, %arg5: memref<98x128xbf16, #tpu.memory_space<vmem>>) attributes {dimension_semantics = [], scalar_prefetch = 0 : i64, scratch_operands = 0 : i64, tpu.core_type = #tpu.core_type<tc>} {
    %c0 = arith.constant 0 : index
    %c0_0 = arith.constant 0 : index
    %0 = vector.load %arg0[%c0, %c0_0] : memref<98x1152xbf16, #tpu.memory_space<vmem>>, vector<98x1152xbf16>
    %c0_1 = arith.constant 0 : index
    %c0_2 = arith.constant 0 : index
    %1 = vector.load %arg1[%c0_1, %c0_2] : memref<1152x128xbf16, #tpu.memory_space<vmem>>, vector<1152x128xbf16>
    %cst = arith.constant dense<0.000000e+00> : vector<98x128xf32>
    %2 = tpu.matmul %0, %1, %cst {dimension_numbers = #tpu.dot_dimension_numbers<[1], [0], [0], [1], [0, 0, 1, 1], [], []>} : vector<98x1152xbf16>, vector<1152x128xbf16>, vector<98x128xf32> -> vector<98x128xf32>
    %c0_3 = arith.constant 0 : index
    %c0_4 = arith.constant 0 : index
    %3 = vector.load %arg2[%c0_3, %c0_4] : memref<1x128xf32, #tpu.memory_space<vmem>>, vector<1x128xf32>
    %4 = vector.broadcast %3 : vector<1x128xf32> to vector<98x128xf32>
    %5 = arith.addf %2, %4 : vector<98x128xf32>
    %cst_5 = arith.constant dense<0.000000e+00> : vector<128xf32>
    %6 = vector.multi_reduction <add>, %5, %cst_5 [0] : vector<98x128xf32> to vector<128xf32>
    %7 = vector.shape_cast %6 : vector<128xf32> to vector<1x128xf32>
    %cst_6 = arith.constant 0.0102040814 : f32
    %8 = vector.broadcast %cst_6 : f32 to vector<1x128xf32>
    %9 = arith.mulf %7, %8 : vector<1x128xf32>
    %10 = arith.mulf %5, %5 : vector<98x128xf32>
    %cst_7 = arith.constant dense<0.000000e+00> : vector<128xf32>
    %11 = vector.multi_reduction <add>, %10, %cst_7 [0] : vector<98x128xf32> to vector<128xf32>
    %12 = vector.shape_cast %11 : vector<128xf32> to vector<1x128xf32>
    %cst_8 = arith.constant 0.0102040814 : f32
    %13 = vector.broadcast %cst_8 : f32 to vector<1x128xf32>
    %14 = arith.mulf %12, %13 : vector<1x128xf32>
    %15 = arith.mulf %9, %9 : vector<1x128xf32>
    %16 = arith.subf %14, %15 : vector<1x128xf32>
    %cst_9 = arith.constant 0.000000e+00 : f32
    %17 = vector.broadcast %cst_9 : f32 to vector<1x128xf32>
    %18 = arith.maximumf %16, %17 : vector<1x128xf32>
    %19 = vector.broadcast %9 : vector<1x128xf32> to vector<98x128xf32>
    %20 = arith.subf %5, %19 : vector<98x128xf32>
    %cst_10 = arith.constant 9.99999974E-6 : f32
    %21 = vector.broadcast %cst_10 : f32 to vector<1x128xf32>
    %22 = arith.addf %18, %21 : vector<1x128xf32>
    %23 = math.rsqrt %22 : vector<1x128xf32>
    %24 = vector.broadcast %23 : vector<1x128xf32> to vector<98x128xf32>
    %25 = arith.mulf %20, %24 : vector<98x128xf32>
    %c0_11 = arith.constant 0 : index
    %c0_12 = arith.constant 0 : index
    %26 = vector.load %arg3[%c0_11, %c0_12] : memref<1x128xf32, #tpu.memory_space<vmem>>, vector<1x128xf32>
    %27 = vector.broadcast %26 : vector<1x128xf32> to vector<98x128xf32>
    %28 = arith.mulf %25, %27 : vector<98x128xf32>
    %c0_13 = arith.constant 0 : index
    %c0_14 = arith.constant 0 : index
    %29 = vector.load %arg4[%c0_13, %c0_14] : memref<1x128xf32, #tpu.memory_space<vmem>>, vector<1x128xf32>
    %30 = vector.broadcast %29 : vector<1x128xf32> to vector<98x128xf32>
    %31 = arith.addf %28, %30 : vector<98x128xf32>
    %cst_15 = arith.constant 0.000000e+00 : f32
    %32 = vector.broadcast %cst_15 : f32 to vector<98x128xf32>
    %33 = arith.cmpf ogt, %31, %32 : vector<98x128xf32>
    %cst_16 = arith.constant 2.000000e-01 : f32
    %34 = vector.broadcast %cst_16 : f32 to vector<98x128xf32>
    %35 = arith.mulf %34, %31 : vector<98x128xf32>
    %36 = arith.select %33, %31, %35 : vector<98x128xi1>, vector<98x128xf32>
    %37 = arith.truncf %36 : vector<98x128xf32> to vector<98x128xbf16>
    %c0_17 = arith.constant 0 : index
    %c0_18 = arith.constant 0 : index
    %38 = vector.load %arg5[%c0_17, %c0_18] : memref<98x128xbf16, #tpu.memory_space<vmem>>, vector<98x128xbf16>
    tpu.vector_store %arg5[%c0_17, %c0_18], %37 {strides = array<i32>} : memref<98x128xbf16, #tpu.memory_space<vmem>>, vector<98x128xbf16>,
    return
  }
}

module attributes {stable_mosaic.version = 11 : i64} {
  func.func @_latent_fc2_kernel(%arg0: memref<2x6272xbf16, #tpu.memory_space<vmem>>, %arg1: memref<6272x128xbf16, #tpu.memory_space<vmem>>, %arg2: memref<1x128xf32, #tpu.memory_space<vmem>>, %arg3: memref<2x32xf32, #tpu.memory_space<vmem>>, %arg4: memref<32x6272xbf16, #tpu.memory_space<vmem>>, %arg5: memref<1x6272xf32, #tpu.memory_space<vmem>>, %arg6: memref<2x128xf32, #tpu.memory_space<vmem>>, %arg7: memref<2x6272xbf16, #tpu.memory_space<vmem>>) attributes {dimension_semantics = [], scalar_prefetch = 0 : i64, scratch_operands = 0 : i64, tpu.core_type = #tpu.core_type<tc>} {
    %c0 = arith.constant 0 : index
    %c0_0 = arith.constant 0 : index
    %0 = vector.load %arg0[%c0, %c0_0] : memref<2x6272xbf16, #tpu.memory_space<vmem>>, vector<2x6272xbf16>
    %c0_1 = arith.constant 0 : index
    %c0_2 = arith.constant 0 : index
    %1 = vector.load %arg1[%c0_1, %c0_2] : memref<6272x128xbf16, #tpu.memory_space<vmem>>, vector<6272x128xbf16>
    %cst = arith.constant dense<0.000000e+00> : vector<2x128xf32>
    %2 = tpu.matmul %0, %1, %cst {dimension_numbers = #tpu.dot_dimension_numbers<[1], [0], [0], [1], [0, 0, 1, 1], [], []>} : vector<2x6272xbf16>, vector<6272x128xbf16>, vector<2x128xf32> -> vector<2x128xf32>
    %c0_3 = arith.constant 0 : index
    %c0_4 = arith.constant 0 : index
    %3 = vector.load %arg2[%c0_3, %c0_4] : memref<1x128xf32, #tpu.memory_space<vmem>>, vector<1x128xf32>
    %4 = vector.broadcast %3 : vector<1x128xf32> to vector<2x128xf32>
    %5 = arith.addf %2, %4 : vector<2x128xf32>
    %6 = vector.extract_strided_slice %5 {offsets = [0, 0], sizes = [2, 32], strides = [1, 1]} : vector<2x128xf32> to vector<2x32xf32>
    %7 = vector.extract_strided_slice %5 {offsets = [0, 32], sizes = [2, 32], strides = [1, 1]} : vector<2x128xf32> to vector<2x32xf32>
    %c0_5 = arith.constant 0 : index
    %c0_6 = arith.constant 0 : index
    %8 = vector.load %arg3[%c0_5, %c0_6] : memref<2x32xf32, #tpu.memory_space<vmem>>, vector<2x32xf32>
    %cst_7 = arith.constant 5.000000e-01 : f32
    %9 = vector.broadcast %cst_7 : f32 to vector<2x32xf32>
    %10 = arith.mulf %7, %9 : vector<2x32xf32>
    %11 = math.exp %10 : vector<2x32xf32>
    %12 = arith.mulf %8, %11 : vector<2x32xf32>
    %13 = arith.addf %6, %12 : vector<2x32xf32>
    %cst_8 = arith.constant 0.000000e+00 : f32
    %14 = vector.broadcast %cst_8 : f32 to vector<2x32xf32>
    %15 = tpu.concatenate %6, %7, %13, %14 in 1 : vector<2x32xf32>, vector<2x32xf32>, vector<2x32xf32>, vector<2x32xf32> -> vector<2x128xf32>
    %c0_9 = arith.constant 0 : index
    %c0_10 = arith.constant 0 : index
    %16 = vector.load %arg6[%c0_9, %c0_10] : memref<2x128xf32, #tpu.memory_space<vmem>>, vector<2x128xf32>
    tpu.vector_store %arg6[%c0_9, %c0_10], %15 {strides = array<i32>} : memref<2x128xf32, #tpu.memory_space<vmem>>, vector<2x128xf32>,
    %17 = arith.truncf %13 : vector<2x32xf32> to vector<2x32xbf16>
    %c0_11 = arith.constant 0 : index
    %c0_12 = arith.constant 0 : index
    %18 = vector.load %arg4[%c0_11, %c0_12] : memref<32x6272xbf16, #tpu.memory_space<vmem>>, vector<32x6272xbf16>
    %cst_13 = arith.constant dense<0.000000e+00> : vector<2x6272xf32>
    %19 = tpu.matmul %17, %18, %cst_13 {dimension_numbers = #tpu.dot_dimension_numbers<[1], [0], [0], [1], [0, 0, 1, 1], [], []>} : vector<2x32xbf16>, vector<32x6272xbf16>, vector<2x6272xf32> -> vector<2x6272xf32>
    %c0_14 = arith.constant 0 : index
    %c0_15 = arith.constant 0 : index
    %20 = vector.load %arg5[%c0_14, %c0_15] : memref<1x6272xf32, #tpu.memory_space<vmem>>, vector<1x6272xf32>
    %21 = vector.broadcast %20 : vector<1x6272xf32> to vector<2x6272xf32>
    %22 = arith.addf %19, %21 : vector<2x6272xf32>
    %23 = arith.truncf %22 : vector<2x6272xf32> to vector<2x6272xbf16>
    %c0_16 = arith.constant 0 : index
    %c0_17 = arith.constant 0 : index
    %24 = vector.load %arg7[%c0_16, %c0_17] : memref<2x6272xbf16, #tpu.memory_space<vmem>>, vector<2x6272xbf16>
    tpu.vector_store %arg7[%c0_16, %c0_17], %23 {strides = array<i32>} : memref<2x6272xbf16, #tpu.memory_space<vmem>>, vector<2x6272xbf16>,
    return
  }
}

module attributes {stable_mosaic.version = 11 : i64} {
  func.func @_matmul_fused_kernel(%arg0: memref<128x512xbf16, #tpu.memory_space<vmem>>, %arg1: memref<512x256xbf16, #tpu.memory_space<vmem>>, %arg2: memref<1x256xf32, #tpu.memory_space<vmem>>, %arg3: memref<128x256xbf16, #tpu.memory_space<vmem>>) attributes {dimension_semantics = [], scalar_prefetch = 0 : i64, scratch_operands = 0 : i64, tpu.core_type = #tpu.core_type<tc>} {
    %c0 = arith.constant 0 : index
    %c0_0 = arith.constant 0 : index
    %0 = vector.load %arg0[%c0, %c0_0] : memref<128x512xbf16, #tpu.memory_space<vmem>>, vector<128x512xbf16>
    %c0_1 = arith.constant 0 : index
    %c0_2 = arith.constant 0 : index
    %1 = vector.load %arg1[%c0_1, %c0_2] : memref<512x256xbf16, #tpu.memory_space<vmem>>, vector<512x256xbf16>
    %cst = arith.constant dense<0.000000e+00> : vector<128x256xf32>
    %2 = tpu.matmul %0, %1, %cst {dimension_numbers = #tpu.dot_dimension_numbers<[1], [0], [0], [1], [0, 0, 1, 1], [], []>} : vector<128x512xbf16>, vector<512x256xbf16>, vector<128x256xf32> -> vector<128x256xf32>
    %c0_3 = arith.constant 0 : index
    %c0_4 = arith.constant 0 : index
    %3 = vector.load %arg2[%c0_3, %c0_4] : memref<1x256xf32, #tpu.memory_space<vmem>>, vector<1x256xf32>
    %4 = vector.broadcast %3 : vector<1x256xf32> to vector<128x256xf32>
    %5 = arith.addf %2, %4 : vector<128x256xf32>
    %cst_5 = arith.constant 0.000000e+00 : f32
    %6 = vector.broadcast %cst_5 : f32 to vector<128x256xf32>
    %7 = arith.maximumf %5, %6 : vector<128x256xf32>
    %8 = arith.truncf %7 : vector<128x256xf32> to vector<128x256xbf16>
    %c0_6 = arith.constant 0 : index
    %c0_7 = arith.constant 0 : index
    %9 = vector.load %arg3[%c0_6, %c0_7] : memref<128x256xbf16, #tpu.memory_space<vmem>>, vector<128x256xbf16>
    tpu.vector_store %arg3[%c0_6, %c0_7], %8 {strides = array<i32>} : memref<128x256xbf16, #tpu.memory_space<vmem>>, vector<128x256xbf16>,
    return
  }
}

module attributes {stable_mosaic.version = 11 : i64} {
  func.func @_matmul_fused_kernel(%arg0: memref<450x256xbf16, #tpu.memory_space<vmem>>, %arg1: memref<256x128xbf16, #tpu.memory_space<vmem>>, %arg2: memref<1x128xf32, #tpu.memory_space<vmem>>, %arg3: memref<450x128xf32, #tpu.memory_space<vmem>>) attributes {dimension_semantics = [], scalar_prefetch = 0 : i64, scratch_operands = 0 : i64, tpu.core_type = #tpu.core_type<tc>} {
    %c0 = arith.constant 0 : index
    %c0_0 = arith.constant 0 : index
    %0 = vector.load %arg0[%c0, %c0_0] : memref<450x256xbf16, #tpu.memory_space<vmem>>, vector<450x256xbf16>
    %c0_1 = arith.constant 0 : index
    %c0_2 = arith.constant 0 : index
    %1 = vector.load %arg1[%c0_1, %c0_2] : memref<256x128xbf16, #tpu.memory_space<vmem>>, vector<256x128xbf16>
    %cst = arith.constant dense<0.000000e+00> : vector<450x128xf32>
    %2 = tpu.matmul %0, %1, %cst {dimension_numbers = #tpu.dot_dimension_numbers<[1], [0], [0], [1], [0, 0, 1, 1], [], []>} : vector<450x256xbf16>, vector<256x128xbf16>, vector<450x128xf32> -> vector<450x128xf32>
    %c0_3 = arith.constant 0 : index
    %c0_4 = arith.constant 0 : index
    %3 = vector.load %arg2[%c0_3, %c0_4] : memref<1x128xf32, #tpu.memory_space<vmem>>, vector<1x128xf32>
    %4 = vector.broadcast %3 : vector<1x128xf32> to vector<450x128xf32>
    %5 = arith.addf %2, %4 : vector<450x128xf32>
    %6 = arith.negf %5 : vector<450x128xf32>
    %7 = math.exp %6 : vector<450x128xf32>
    %cst_5 = arith.constant 1.000000e+00 : f32
    %8 = vector.broadcast %cst_5 : f32 to vector<450x128xf32>
    %9 = arith.addf %8, %7 : vector<450x128xf32>
    %10 = arith.divf %8, %9 : vector<450x128xf32>
    %c0_6 = arith.constant 0 : index
    %c0_7 = arith.constant 0 : index
    %11 = vector.load %arg3[%c0_6, %c0_7] : memref<450x128xf32, #tpu.memory_space<vmem>>, vector<450x128xf32>
    tpu.vector_store %arg3[%c0_6, %c0_7], %10 {strides = array<i32>} : memref<450x128xf32, #tpu.memory_space<vmem>>, vector<450x128xf32>,
    return
  }
}

</mosaic_0001>

<llo_original>
// kernel: vae_forward.6
$region0: #{vae_forward.6}
  #allocation0 [shape = 'u32[]', space=smem, size = 0x4, offset = 0x4, fixed_abs, tag = 'smem constant byte address 0x4 - core index']
  #allocation1 [shape = 'u32[144,128]{1,0:T(1,128)}', space=vmem, size = 0x12000, scoped, tag = 'internal scratch']
  %s0 = inlined_call_operand.vmem [shape: bf16[392,128], index: 0, kind: input, shape index: {}]
  %s1 = inlined_call_operand.hbm [shape: bf16[128,128], index: 1, kind: input, shape index: {}]
  %s2 = inlined_call_operand.hbm [shape: f32[1,128], index: 2, kind: input, shape index: {}]
  %s3 = inlined_call_operand.hbm [shape: f32[1,128], index: 3, kind: input, shape index: {}]
  %s4 = inlined_call_operand.hbm [shape: f32[1,128], index: 4, kind: input, shape index: {}]
  %s5 = inlined_call_operand.vmem [shape: bf16[392,128], index: 5, kind: output, shape index: {}]
  %s6 = sld [smem:[#allocation0]]
  $region46: #{vae_forward.6} parent=0
    _
  %s8 = ssub.s32 1, %s6
  %s9 = scalar_select 0, %s8, %s6
  $region1: #{vae_forward.6} parent=0
    #allocation2 [shape = 'u8[32768]{0}', space=vmem, size = 0x8000, scoped, tag = 'input window, operand 1, single buffered']
    #allocation3 [shape = 's32[1]{0}', space=sflag, size = 0x4, scoped, tag = 'scoped memory for vae_forward.6']
    #allocation4 [shape = 'u8[512]{0}', space=vmem, size = 0x400, scoped, tag = 'input window, operand 2, single buffered']
    #allocation5 [shape = 's32[1]{0}', space=sflag, size = 0x4, scoped, tag = 'scoped memory for vae_forward.6']
    #allocation6 [shape = 'u8[512]{0}', space=vmem, size = 0x400, scoped, tag = 'input window, operand 3, single buffered']
    #allocation7 [shape = 'u8[512]{0}', space=vmem, size = 0x400, scoped, tag = 'input window, operand 4, single buffered']
    #allocation8 [shape = 's32[1]{0}', space=sflag, size = 0x4, scoped, tag = 'scoped memory for vae_forward.6']
    %10 = vsyncpa [#allocation3], 0
    %11 = vsyncpa [#allocation5], 0
    %12 = vsyncpa [#allocation8], 0
    // Predicated region
    $region2: #{vae_forward.6} parent=1 // pred_check
      _
    $region3: #{vae_forward.6} parent=1 // pred_check_branch
      %14 = sbr.rel (0) target = $region5
    $region4: #{vae_forward.6} parent=1 // pred_region
      _
    $region5: #{vae_forward.6} parent=1 // pred_fallthru
      _
    // Predicated region
    $region6: #{vae_forward.6} parent=1 // pred_check
      _
    $region7: #{vae_forward.6} parent=1 // pred_check_branch
      %16 = sbr.rel (0) target = $region9
    $region8: #{vae_forward.6} parent=1 // pred_region
      %s18 = ssub.s32 1024, 1024
      %19 = vsyncadd [#allocation3], %s18
      %s20 = sshll.u32 [#allocation2], 4
      %s21 = int_to_ptr.vmem [resolvable:$true] %s20
      %26 = dma.hbm_to_vmem [thread:$0]  %s1, 1024, %s21, [#allocation3], 64, 64, 4
    $region9: #{vae_forward.6} parent=1 // pred_fallthru
      _
    // Predicated region
    $region10: #{vae_forward.6} parent=1 // pred_check
      _
    $region11: #{vae_forward.6} parent=1 // pred_check_branch
      %28 = sbr.rel (0) target = $region13
    $region12: #{vae_forward.6} parent=1 // pred_region
      %s30 = ssub.s32 16, 16
      %31 = vsyncadd [#allocation5], %s30
      %s33 = sshll.u32 [#allocation4], 4
      %s34 = int_to_ptr.vmem [resolvable:$true] %s33
      %36 = dma.hbm_to_vmem [thread:$0]  %s2, 16, %s34, [#allocation5]
    $region13: #{vae_forward.6} parent=1 // pred_fallthru
      _
    // Predicated region
    $region14: #{vae_forward.6} parent=1 // pred_check
      _
    $region15: #{vae_forward.6} parent=1 // pred_check_branch
      %38 = sbr.rel (0) target = $region17
    $region16: #{vae_forward.6} parent=1 // pred_region
      %s40 = ssub.s32 16, 16
      %41 = vsyncadd [#allocation5], %s40
      %s43 = sshll.u32 [#allocation6], 4
      %s44 = int_to_ptr.vmem [resolvable:$true] %s43
      %46 = dma.hbm_to_vmem [thread:$0]  %s3, 16, %s44, [#allocation5]
    $region17: #{vae_forward.6} parent=1 // pred_fallthru
      _
    // Predicated region
    $region18: #{vae_forward.6} parent=1 // pred_check
      _
    $region19: #{vae_forward.6} parent=1 // pred_check_branch
      %48 = sbr.rel (0) target = $region21
    $region20: #{vae_forward.6} parent=1 // pred_region
      %s50 = ssub.s32 16, 16
      %51 = vsyncadd [#allocation8], %s50
      %s53 = sshll.u32 [#allocation7], 4
      %s54 = int_to_ptr.vmem [resolvable:$true] %s53
      %56 = dma.hbm_to_vmem [thread:$0]  %s4, 16, %s54, [#allocation8]
    $region21: #{vae_forward.6} parent=1 // pred_fallthru
      _
    // Predicated region
    $region22: #{vae_forward.6} parent=1 // pred_check
      _
    $region23: #{vae_forward.6} parent=1 // pred_check_branch
      %58 = sbr.rel (0) target = $region25
    $region24: #{vae_forward.6} parent=1 // pred_region
      %59 = dma.done [#allocation3], 1024
    $region25: #{vae_forward.6} parent=1 // pred_fallthru
      _
    // Predicated region
    $region26: #{vae_forward.6} parent=1 // pred_check
      _
    $region27: #{vae_forward.6} parent=1 // pred_check_branch
      %61 = sbr.rel (0) target = $region29
    $region28: #{vae_forward.6} parent=1 // pred_region
      %62 = dma.done [#allocation5], 16
    $region29: #{vae_forward.6} parent=1 // pred_fallthru
      _
    // Predicated region
    $region30: #{vae_forward.6} parent=1 // pred_check
      _
    $region31: #{vae_forward.6} parent=1 // pred_check_branch
      %64 = sbr.rel (0) target = $region33
    $region32: #{vae_forward.6} parent=1 // pred_region
      %65 = dma.done [#allocation5], 16
    $region33: #{vae_forward.6} parent=1 // pred_fallthru
      _
    // Predicated region
    $region34: #{vae_forward.6} parent=1 // pred_check
      _
    $region35: #{vae_forward.6} parent=1 // pred_check_branch
      %67 = sbr.rel (0) target = $region37
    $region36: #{vae_forward.6} parent=1 // pred_region
      %68 = dma.done [#allocation8], 16
    $region37: #{vae_forward.6} parent=1 // pred_fallthru
      _
    %v70 = vld [vmem:[%s0] sm:$0xf]
    %v71 = vld [vmem:[%s0 + $0x4] sm:$0xf]
    %v72 = vld [vmem:[%s0 + $0x8] sm:$0xf]
    %v73 = vld [vmem:[%s0 + $0xc] sm:$0xf]
    %v74 = vld [vmem:[%s0 + $0x10] sm:$0xf]
    %v75 = vld [vmem:[%s0 + $0x14] sm:$0xf]
    %v76 = vld [vmem:[%s0 + $0x18] sm:$0xf]
    %v77 = vld [vmem:[%s0 + $0x1c] sm:$0xf]
    %v78 = vld [vmem:[%s0 + $0x20] sm:$0xf]
    %v79 = vld [vmem:[%s0 + $0x24] sm:$0xf]
    %v80 = vld [vmem:[%s0 + $0x28] sm:$0xf]
    %v81 = vld [vmem:[%s0 + $0x2c] sm:$0xf]
    %v82 = vld [vmem:[%s0 + $0x30] sm:$0xf]
    %v83 = vld [vmem:[%s0 + $0x34] sm:$0xf]
    %v84 = vld [vmem:[%s0 + $0x38] sm:$0xf]
    %v85 = vld [vmem:[%s0 + $0x3c] sm:$0xf]
    %v86 = vld [vmem:[%s0 + $0x40] sm:$0xf]
    %v87 = vld [vmem:[%s0 + $0x44] sm:$0xf]
    %v88 = vld [vmem:[%s0 + $0x48] sm:$0xf]
    %v89 = vld [vmem:[%s0 + $0x4c] sm:$0xf]
    %v90 = vld [vmem:[%s0 + $0x50] sm:$0xf]
    %v91 = vld [vmem:[%s0 + $0x54] sm:$0xf]
    %v92 = vld [vmem:[%s0 + $0x58] sm:$0xf]
    %v93 = vld [vmem:[%s0 + $0x5c] sm:$0xf]
    %v94 = vld [vmem:[%s0 + $0x60] sm:$0xf]
    %v95 = vld [vmem:[%s0 + $0x64] sm:$0xf]
    %v96 = vld [vmem:[%s0 + $0x68] sm:$0xf]
    %v97 = vld [vmem:[%s0 + $0x6c] sm:$0xf]
    %v98 = vld [vmem:[%s0 + $0x70] sm:$0xf]
    %v99 = vld [vmem:[%s0 + $0x74] sm:$0xf]
    %v100 = vld [vmem:[%s0 + $0x78] sm:$0xf]
    %v101 = vld [vmem:[%s0 + $0x7c] sm:$0xf]
    %v102 = vld [vmem:[%s0 + $0x80] sm:$0xf]
    %v103 = vld [vmem:[%s0 + $0x84] sm:$0xf]
    %v104 = vld [vmem:[%s0 + $0x88] sm:$0xf]
    %v105 = vld [vmem:[%s0 + $0x8c] sm:$0xf]
    %v106 = vld [vmem:[%s0 + $0x90] sm:$0xf]
    %v107 = vld [vmem:[%s0 + $0x94] sm:$0xf]
    %v108 = vld [vmem:[%s0 + $0x98] sm:$0xf]
    %v109 = vld [vmem:[%s0 + $0x9c] sm:$0xf]
    %v110 = vld [vmem:[%s0 + $0xa0] sm:$0xf]
    %v111 = vld [vmem:[%s0 + $0xa4] sm:$0xf]
    %v112 = vld [vmem:[%s0 + $0xa8] sm:$0xf]
    %v113 = vld [vmem:[%s0 + $0xac] sm:$0xf]
    %v114 = vld [vmem:[%s0 + $0xb0] sm:$0xf]
    %v115 = vld [vmem:[%s0 + $0xb4] sm:$0xf]
    %v116 = vld [vmem:[%s0 + $0xb8] sm:$0xf]
    %v117 = vld [vmem:[%s0 + $0xbc] sm:$0xf]
    %v118 = vld [vmem:[%s0 + $0xc0] sm:$0xf]
    %v119 = vld [vmem:[#allocation2] sm:$0xf]
    %v120 = vld [vmem:[#allocation2 + $0x4] sm:$0xf]
    %v121 = vld [vmem:[#allocation2 + $0x8] sm:$0xf]
    %v122 = vld [vmem:[#allocation2 + $0xc] sm:$0xf]
    %v123 = vld [vmem:[#allocation2 + $0x10] sm:$0xf]
    %v124 = vld [vmem:[#allocation2 + $0x14] sm:$0xf]
    %v125 = vld [vmem:[#allocation2 + $0x18] sm:$0xf]
    %v126 = vld [vmem:[#allocation2 + $0x1c] sm:$0xf]
    %v127 = vld [vmem:[#allocation2 + $0x20] sm:$0xf]
    %v128 = vld [vmem:[#allocation2 + $0x24] sm:$0xf]
    %v129 = vld [vmem:[#allocation2 + $0x28] sm:$0xf]
    %v130 = vld [vmem:[#allocation2 + $0x2c] sm:$0xf]
    %v131 = vld [vmem:[#allocation2 + $0x30] sm:$0xf]
    %v132 = vld [vmem:[#allocation2 + $0x34] sm:$0xf]
    %v133 = vld [vmem:[#allocation2 + $0x38] sm:$0xf]
    %v134 = vld [vmem:[#allocation2 + $0x3c] sm:$0xf]
    %v135 = vld [vmem:[#allocation4] sm:$0x1]
    %v137 = vlaneseq
    %v138 = vshrl.u32 %v137, 7
    %v139 = vsub.s32 0, %v138
    %v140 = vrot.slane %v135, %v139
    %v191 = vunpack.c.l.b16 %v70
    %v192 = vunpack.c.l.b16 %v71
    %v193 = vunpack.c.l.b16 %v72
    %v194 = vunpack.c.l.b16 %v73
    %v195 = vunpack.c.l.b16 %v74
    %v196 = vunpack.c.l.b16 %v75
    %v197 = vunpack.c.l.b16 %v76
    %v198 = vunpack.c.l.b16 %v77
    %v199 = vunpack.c.l.b16 %v78
    %v200 = vunpack.c.l.b16 %v79
    %v201 = vunpack.c.l.b16 %v80
    %v202 = vunpack.c.l.b16 %v81
    %v203 = vunpack.c.l.b16 %v82
    %v204 = vunpack.c.l.b16 %v83
    %v205 = vunpack.c.l.b16 %v84
    %v206 = vunpack.c.l.b16 %v85
    %v207 = vunpack.c.l.b16 %v86
    %v208 = vunpack.c.l.b16 %v87
    %v209 = vunpack.c.l.b16 %v88
    %v210 = vunpack.c.l.b16 %v89
    %v211 = vunpack.c.l.b16 %v90
    %v212 = vunpack.c.l.b16 %v91
    %v213 = vunpack.c.l.b16 %v92
    %v214 = vunpack.c.l.b16 %v93
    %v215 = vunpack.c.l.b16 %v94
    %v216 = vunpack.c.l.b16 %v95
    %v217 = vunpack.c.l.b16 %v96
    %v218 = vunpack.c.l.b16 %v97
    %v219 = vunpack.c.l.b16 %v98
    %v220 = vunpack.c.l.b16 %v99
    %v221 = vunpack.c.l.b16 %v100
    %v222 = vunpack.c.l.b16 %v101
    %v223 = vunpack.c.l.b16 %v102
    %v224 = vunpack.c.l.b16 %v103
    %v225 = vunpack.c.l.b16 %v104
    %v226 = vunpack.c.l.b16 %v105
    %v227 = vunpack.c.l.b16 %v106
    %v228 = vunpack.c.l.b16 %v107
    %v229 = vunpack.c.l.b16 %v108
    %v230 = vunpack.c.l.b16 %v109
    %v231 = vunpack.c.l.b16 %v110
    %v232 = vunpack.c.l.b16 %v111
    %v233 = vunpack.c.l.b16 %v112
    %v234 = vunpack.c.l.b16 %v113
    %v235 = vunpack.c.l.b16 %v114
    %v236 = vunpack.c.l.b16 %v115
    %v237 = vunpack.c.l.b16 %v116
    %v238 = vunpack.c.l.b16 %v117
    %v239 = vunpack.c.l.b16 %v118
    %v240 = vpack.c.b16 %v192, %v191
    %v241 = vpack.c.b16 %v194, %v193
    %v242 = vpack.c.b16 %v196, %v195
    %v243 = vpack.c.b16 %v198, %v197
    %v244 = vpack.c.b16 %v200, %v199
    %v245 = vpack.c.b16 %v202, %v201
    %v246 = vpack.c.b16 %v204, %v203
    %v247 = vpack.c.b16 %v206, %v205
    %v248 = vpack.c.b16 %v208, %v207
    %v249 = vpack.c.b16 %v210, %v209
    %v250 = vpack.c.b16 %v212, %v211
    %v251 = vpack.c.b16 %v214, %v213
    %v252 = vpack.c.b16 %v216, %v215
    %v253 = vpack.c.b16 %v218, %v217
    %v254 = vpack.c.b16 %v220, %v219
    %v255 = vpack.c.b16 %v222, %v221
    %v256 = vpack.c.b16 %v224, %v223
    %v257 = vpack.c.b16 %v226, %v225
    %v258 = vpack.c.b16 %v228, %v227
    %v259 = vpack.c.b16 %v230, %v229
    %v260 = vpack.c.b16 %v232, %v231
    %v261 = vpack.c.b16 %v234, %v233
    %v262 = vpack.c.b16 %v236, %v235
    %v263 = vpack.c.b16 %v238, %v237
    %v264 = vpack.c.b16 %v239, %v239
    %v306 = vunpack.c.l.b16 %v119
    %v307 = vunpack.c.l.b16 %v120
    %v308 = vunpack.c.l.b16 %v121
    %v309 = vunpack.c.l.b16 %v122
    %v310 = vunpack.c.l.b16 %v123
    %v311 = vunpack.c.l.b16 %v124
    %v312 = vunpack.c.l.b16 %v125
    %v313 = vunpack.c.l.b16 %v126
    %v314 = vunpack.c.l.b16 %v127
    %v315 = vunpack.c.l.b16 %v128
    %v316 = vunpack.c.l.b16 %v129
    %v317 = vunpack.c.l.b16 %v130
    %v318 = vunpack.c.l.b16 %v131
    %v319 = vunpack.c.l.b16 %v132
    %v320 = vunpack.c.l.b16 %v133
    %v321 = vunpack.c.l.b16 %v134
    %v322 = vpack.c.b16 %v307, %v306
    %v323 = vpack.c.b16 %v309, %v308
    %v324 = vpack.c.b16 %v311, %v310
    %v325 = vpack.c.b16 %v313, %v312
    %v326 = vpack.c.b16 %v315, %v314
    %v327 = vpack.c.b16 %v317, %v316
    %v328 = vpack.c.b16 %v319, %v318
    %v329 = vpack.c.b16 %v321, %v320
    %338 = vmatprep.subr.bf16.mxu0 0
    %339 = vmatpush1.bf16.msra.mxu0 %v322
    %340 = vmatprep.subr.bf16.mxu0 0
    %341 = vmatpush1.bf16.msra.mxu0 %v323
    %342 = vmatprep.subr.bf16.mxu0 0
    %343 = vmatpush1.bf16.msra.mxu0 %v324
    %344 = vmatprep.subr.bf16.mxu0 0
    %345 = vmatpush1.bf16.msra.mxu0 %v325
    %346 = vmatprep.subr.bf16.mxu0 0
    %347 = vmatpush1.bf16.msra.mxu0 %v326
    %348 = vmatprep.subr.bf16.mxu0 0
    %349 = vmatpush1.bf16.msra.mxu0 %v327
    %350 = vmatprep.subr.bf16.mxu0 0
    %351 = vmatpush1.bf16.msra.mxu0 %v328
    %352 = vmatprep.subr.bf16.mxu0 0
    %353 = vmatpush1.bf16.msra.mxu0 %v329
    %354 = vmatprep.subr.bf16.mxu0 0
    %355 = vmatpush1.bf16.msra.mxu0 0
    %356 = vmatprep.subr.bf16.mxu0 0
    %357 = vmatpush1.bf16.msra.mxu0 0
    %358 = vmatprep.subr.bf16.mxu0 0
    %359 = vmatpush1.bf16.msra.mxu0 0
    %360 = vmatprep.subr.bf16.mxu0 0
    %361 = vmatpush1.bf16.msra.mxu0 0
    %362 = vmatprep.subr.bf16.mxu0 0
    %363 = vmatpush1.bf16.msra.mxu0 0
    %364 = vmatprep.subr.bf16.mxu0 0
    %365 = vmatpush1.bf16.msra.mxu0 0
    %366 = vmatprep.subr.bf16.mxu0 0
    %367 = vmatpush1.bf16.msra.mxu0 0
    %368 = vmatprep.subr.bf16.mxu0 0
    %369 = vmatpush1.bf16.msra.mxu0 0
    %370 = vmatprep.mubr.bf16.mxu0 0
    %371 = vmatmul.mubr.bf16.gmra.mrb[0].mxu0 %v240
    %v372 = vpop.f32.mrb[0].mxu0
    %v373 = vadd.f32 %v140, %v372
    %v374 = vpop.f32.mrb[0].mxu0
    %v375 = vpop.f32.mrb[0].mxu0
    %v376 = vadd.f32 %v140, %v375
    %v377 = vpop.f32.mrb[0].mxu0
    %378 = vmatprep.mubr.bf16.mxu0 0
    %379 = vmatmul.mubr.bf16.gmra.mrb[0].mxu0 %v241
    %v380 = vpop.f32.mrb[0].mxu0
    %v381 = vadd.f32 %v140, %v380
    %v382 = vpop.f32.mrb[0].mxu0
    %v383 = vpop.f32.mrb[0].mxu0
    %v384 = vadd.f32 %v140, %v383
    %v385 = vpop.f32.mrb[0].mxu0
    %386 = vmatprep.mubr.bf16.mxu0 0
    %387 = vmatmul.mubr.bf16.gmra.mrb[0].mxu0 %v242
    %v388 = vpop.f32.mrb[0].mxu0
    %v389 = vadd.f32 %v140, %v388
    %v390 = vpop.f32.mrb[0].mxu0
    %v391 = vpop.f32.mrb[0].mxu0
    %v392 = vadd.f32 %v140, %v391
    %v393 = vpop.f32.mrb[0].mxu0
    %394 = vmatprep.mubr.bf16.mxu0 0
    %395 = vmatmul.mubr.bf16.gmra.mrb[0].mxu0 %v243
    %v396 = vpop.f32.mrb[0].mxu0
    %v397 = vadd.f32 %v140, %v396
    %v398 = vpop.f32.mrb[0].mxu0
    %v399 = vpop.f32.mrb[0].mxu0
    %v400 = vadd.f32 %v140, %v399
    %v401 = vpop.f32.mrb[0].mxu0
    %402 = vmatprep.mubr.bf16.mxu0 0
    %403 = vmatmul.mubr.bf16.gmra.mrb[0].mxu0 %v244
    %v404 = vpop.f32.mrb[0].mxu0
    %v405 = vadd.f32 %v140, %v404
    %v406 = vpop.f32.mrb[0].mxu0
    %v407 = vpop.f32.mrb[0].mxu0
    %v408 = vadd.f32 %v140, %v407
    %v409 = vpop.f32.mrb[0].mxu0
    %410 = vmatprep.mubr.bf16.mxu0 0
    %411 = vmatmul.mubr.bf16.gmra.mrb[0].mxu0 %v245
    %v412 = vpop.f32.mrb[0].mxu0
    %v413 = vadd.f32 %v140, %v412
    %v414 = vpop.f32.mrb[0].mxu0
    %v415 = vpop.f32.mrb[0].mxu0
    %v416 = vadd.f32 %v140, %v415
    %v417 = vpop.f32.mrb[0].mxu0
    %418 = vmatprep.mubr.bf16.mxu0 0
    %419 = vmatmul.mubr.bf16.gmra.mrb[0].mxu0 %v246
    %v420 = vpop.f32.mrb[0].mxu0
    %v421 = vadd.f32 %v140, %v420
    %v422 = vpop.f32.mrb[0].mxu0
    %v423 = vpop.f32.mrb[0].mxu0
    %v424 = vadd.f32 %v140, %v423
    %v425 = vpop.f32.mrb[0].mxu0
    %426 = vmatprep.mubr.bf16.mxu0 0
    %427 = vmatmul.mubr.bf16.gmra.mrb[0].mxu0 %v247
    %v428 = vpop.f32.mrb[0].mxu0
    %v429 = vadd.f32 %v140, %v428
    %v430 = vpop.f32.mrb[0].mxu0
    %v431 = vpop.f32.mrb[0].mxu0
    %v432 = vadd.f32 %v140, %v431
    %v433 = vpop.f32.mrb[0].mxu0
    %434 = vmatprep.mubr.bf16.mxu0 0
    %435 = vmatmul.mubr.bf16.gmra.mrb[0].mxu0 %v248
    %v436 = vpop.f32.mrb[0].mxu0
    %v437 = vadd.f32 %v140, %v436
    %v438 = vpop.f32.mrb[0].mxu0
    %v439 = vpop.f32.mrb[0].mxu0
    %v440 = vadd.f32 %v140, %v439
    %v441 = vpop.f32.mrb[0].mxu0
    %442 = vmatprep.mubr.bf16.mxu0 0
    %443 = vmatmul.mubr.bf16.gmra.mrb[0].mxu0 %v249
    %v444 = vpop.f32.mrb[0].mxu0
    %v445 = vadd.f32 %v140, %v444
    %v446 = vpop.f32.mrb[0].mxu0
    %v447 = vpop.f32.mrb[0].mxu0
    %v448 = vadd.f32 %v140, %v447
    %v449 = vpop.f32.mrb[0].mxu0
    %450 = vmatprep.mubr.bf16.mxu0 0
    %451 = vmatmul.mubr.bf16.gmra.mrb[0].mxu0 %v250
    %v452 = vpop.f32.mrb[0].mxu0
    %v453 = vadd.f32 %v140, %v452
    %v454 = vpop.f32.mrb[0].mxu0
    %v455 = vpop.f32.mrb[0].mxu0
    %v456 = vadd.f32 %v140, %v455
    %v457 = vpop.f32.mrb[0].mxu0
    %458 = vmatprep.mubr.bf16.mxu0 0
    %459 = vmatmul.mubr.bf16.gmra.mrb[0].mxu0 %v251
    %v460 = vpop.f32.mrb[0].mxu0
    %v461 = vadd.f32 %v140, %v460
    %v462 = vpop.f32.mrb[0].mxu0
    %v463 = vpop.f32.mrb[0].mxu0
    %v464 = vadd.f32 %v140, %v463
    %v465 = vpop.f32.mrb[0].mxu0
    %466 = vmatprep.mubr.bf16.mxu0 0
    %467 = vmatmul.mubr.bf16.gmra.mrb[0].mxu0 %v252
    %v468 = vpop.f32.mrb[0].mxu0
    %v469 = vadd.f32 %v140, %v468
    %v470 = vpop.f32.mrb[0].mxu0
    %v471 = vpop.f32.mrb[0].mxu0
    %v472 = vadd.f32 %v140, %v471
    %v473 = vpop.f32.mrb[0].mxu0
    %474 = vmatprep.mubr.bf16.mxu0 0
    %475 = vmatmul.mubr.bf16.gmra.mrb[0].mxu0 %v253
    %v476 = vpop.f32.mrb[0].mxu0
    %v477 = vadd.f32 %v140, %v476
    %v478 = vpop.f32.mrb[0].mxu0
    %v479 = vpop.f32.mrb[0].mxu0
    %v480 = vadd.f32 %v140, %v479
    %v481 = vpop.f32.mrb[0].mxu0
    %482 = vmatprep.mubr.bf16.mxu0 0
    %483 = vmatmul.mubr.bf16.gmra.mrb[0].mxu0 %v254
    %v484 = vpop.f32.mrb[0].mxu0
    %v485 = vadd.f32 %v140, %v484
    %v486 = vpop.f32.mrb[0].mxu0
    %v487 = vpop.f32.mrb[0].mxu0
    %v488 = vadd.f32 %v140, %v487
    %v489 = vpop.f32.mrb[0].mxu0
    %490 = vmatprep.mubr.bf16.mxu0 0
    %491 = vmatmul.mubr.bf16.gmra.mrb[0].mxu0 %v255
    %v492 = vpop.f32.mrb[0].mxu0
    %v493 = vadd.f32 %v140, %v492
    %v494 = vpop.f32.mrb[0].mxu0
    %v495 = vpop.f32.mrb[0].mxu0
    %v496 = vadd.f32 %v140, %v495
    %v497 = vpop.f32.mrb[0].mxu0
    %498 = vmatprep.mubr.bf16.mxu0 0
    %499 = vmatmul.mubr.bf16.gmra.mrb[0].mxu0 %v256
    %v500 = vpop.f32.mrb[0].mxu0
    %v501 = vadd.f32 %v140, %v500
    %v502 = vpop.f32.mrb[0].mxu0
    %v503 = vpop.f32.mrb[0].mxu0
    %v504 = vadd.f32 %v140, %v503
    %v505 = vpop.f32.mrb[0].mxu0
    %506 = vmatprep.mubr.bf16.mxu0 0
    %507 = vmatmul.mubr.bf16.gmra.mrb[0].mxu0 %v257
    %v508 = vpop.f32.mrb[0].mxu0
    %v509 = vadd.f32 %v140, %v508
    %v510 = vpop.f32.mrb[0].mxu0
    %v511 = vpop.f32.mrb[0].mxu0
    %v512 = vadd.f32 %v140, %v511
    %v513 = vpop.f32.mrb[0].mxu0
    %514 = vmatprep.mubr.bf16.mxu0 0
    %515 = vmatmul.mubr.bf16.gmra.mrb[0].mxu0 %v258
    %v516 = vpop.f32.mrb[0].mxu0
    %v517 = vadd.f32 %v140, %v516
    %v518 = vpop.f32.mrb[0].mxu0
    %v519 = vpop.f32.mrb[0].mxu0
    %v520 = vadd.f32 %v140, %v519
    %v521 = vpop.f32.mrb[0].mxu0
    %522 = vmatprep.mubr.bf16.mxu0 0
    %523 = vmatmul.mubr.bf16.gmra.mrb[0].mxu0 %v259
    %v524 = vpop.f32.mrb[0].mxu0
    %v525 = vadd.f32 %v140, %v524
    %v526 = vpop.f32.mrb[0].mxu0
    %v527 = vpop.f32.mrb[0].mxu0
    %v528 = vadd.f32 %v140, %v527
    %v529 = vpop.f32.mrb[0].mxu0
    %530 = vmatprep.mubr.bf16.mxu0 0
    %531 = vmatmul.mubr.bf16.gmra.mrb[0].mxu0 %v260
    %v532 = vpop.f32.mrb[0].mxu0
    %v533 = vadd.f32 %v140, %v532
    %v534 = vpop.f32.mrb[0].mxu0
    %v535 = vpop.f32.mrb[0].mxu0
    %v536 = vadd.f32 %v140, %v535
    %v537 = vpop.f32.mrb[0].mxu0
    %538 = vmatprep.mubr.bf16.mxu0 0
    %539 = vmatmul.mubr.bf16.gmra.mrb[0].mxu0 %v261
    %v540 = vpop.f32.mrb[0].mxu0
    %v541 = vadd.f32 %v140, %v540
    %v542 = vpop.f32.mrb[0].mxu0
    %v543 = vpop.f32.mrb[0].mxu0
    %v544 = vadd.f32 %v140, %v543
    %v545 = vpop.f32.mrb[0].mxu0
    %546 = vmatprep.mubr.bf16.mxu0 0
    %547 = vmatmul.mubr.bf16.gmra.mrb[0].mxu0 %v262
    %v548 = vpop.f32.mrb[0].mxu0
    %v549 = vadd.f32 %v140, %v548
    %v550 = vpop.f32.mrb[0].mxu0
    %v551 = vpop.f32.mrb[0].mxu0
    %v552 = vadd.f32 %v140, %v551
    %v553 = vpop.f32.mrb[0].mxu0
    %554 = vmatprep.mubr.bf16.mxu0 0
    %555 = vmatmul.mubr.bf16.gmra.mrb[0].mxu0 %v263
    %v556 = vpop.f32.mrb[0].mxu0
    %v557 = vadd.f32 %v140, %v556
    %v558 = vpop.f32.mrb[0].mxu0
    %v559 = vpop.f32.mrb[0].mxu0
    %v560 = vadd.f32 %v140, %v559
    %v561 = vpop.f32.mrb[0].mxu0
    %562 = vmatprep.mubr.bf16.mxu0 0
    %563 = vmatmul.mubr.bf16.gmra.mrb[0].mxu0 %v264
    %v564 = vpop.f32.mrb[0].mxu0
    %v565 = vadd.f32 %v140, %v564
    %v566 = vpop.f32.mrb[0].mxu0
    %v567 = vpop.f32.mrb[0].mxu0
    %v568 = vpop.f32.mrb[0].mxu0
    %569 = vdwg.mxu0
    %v570 = vadd.f32 %v373, %v376
    %v571 = vadd.f32 %v570, %v381
    %v572 = vadd.f32 %v571, %v384
    %v573 = vadd.f32 %v572, %v389
    %v574 = vadd.f32 %v573, %v392
    %v575 = vadd.f32 %v574, %v397
    %v576 = vadd.f32 %v575, %v400
    %v577 = vadd.f32 %v576, %v405
    %v578 = vadd.f32 %v577, %v408
    %v579 = vadd.f32 %v578, %v413
    %v580 = vadd.f32 %v579, %v416
    %v581 = vadd.f32 %v580, %v421
    %v582 = vadd.f32 %v581, %v424
    %v583 = vadd.f32 %v582, %v429
    %v584 = vadd.f32 %v583, %v432
    %v585 = vadd.f32 %v584, %v437
    %v586 = vadd.f32 %v585, %v440
    %v587 = vadd.f32 %v586, %v445
    %v588 = vadd.f32 %v587, %v448
    %v589 = vadd.f32 %v588, %v453
    %v590 = vadd.f32 %v589, %v456
    %v591 = vadd.f32 %v590, %v461
    %v592 = vadd.f32 %v591, %v464
    %v593 = vadd.f32 %v592, %v469
    %v594 = vadd.f32 %v593, %v472
    %v595 = vadd.f32 %v594, %v477
    %v596 = vadd.f32 %v595, %v480
    %v597 = vadd.f32 %v596, %v485
    %v598 = vadd.f32 %v597, %v488
    %v599 = vadd.f32 %v598, %v493
    %v600 = vadd.f32 %v599, %v496
    %v601 = vadd.f32 %v600, %v501
    %v602 = vadd.f32 %v601, %v504
    %v603 = vadd.f32 %v602, %v509
    %v604 = vadd.f32 %v603, %v512
    %v605 = vadd.f32 %v604, %v517
    %v606 = vadd.f32 %v605, %v520
    %v607 = vadd.f32 %v606, %v525
    %v608 = vadd.f32 %v607, %v528
    %v609 = vadd.f32 %v608, %v533
    %v610 = vadd.f32 %v609, %v536
    %v611 = vadd.f32 %v610, %v541
    %v612 = vadd.f32 %v611, %v544
    %v613 = vadd.f32 %v612, %v549
    %v614 = vadd.f32 %v613, %v552
    %v615 = vadd.f32 %v614, %v557
    %v616 = vadd.f32 %v615, %v560
    %v617 = vadd.f32 %v616, %v565
    %v618 = vrot.slane %v617, 4
    %v619 = vadd.f32 %v617, %v618
    %v620 = vrot.slane %v619, 2
    %v621 = vadd.f32 %v619, %v620
    %v622 = vrot.slane %v621, 1
    %v623 = vadd.f32 %v621, %v622
    %v624 = vmul.f32 %v623, 0.0025510204
    %v625 = vmul.f32 %v373, %v373
    %v626 = vmul.f32 %v376, %v376
    %v627 = vmul.f32 %v381, %v381
    %v628 = vmul.f32 %v384, %v384
    %v629 = vmul.f32 %v389, %v389
    %v630 = vmul.f32 %v392, %v392
    %v631 = vmul.f32 %v397, %v397
    %v632 = vmul.f32 %v400, %v400
    %v633 = vmul.f32 %v405, %v405
    %v634 = vmul.f32 %v408, %v408
    %v635 = vmul.f32 %v413, %v413
    %v636 = vmul.f32 %v416, %v416
    %v637 = vmul.f32 %v421, %v421
    %v638 = vmul.f32 %v424, %v424
    %v639 = vmul.f32 %v429, %v429
    %v640 = vmul.f32 %v432, %v432
    %v641 = vmul.f32 %v437, %v437
    %v642 = vmul.f32 %v440, %v440
    %v643 = vmul.f32 %v445, %v445
    %v644 = vmul.f32 %v448, %v448
    %v645 = vmul.f32 %v453, %v453
    %v646 = vmul.f32 %v456, %v456
    %v647 = vmul.f32 %v461, %v461
    %v648 = vmul.f32 %v464, %v464
    %v649 = vmul.f32 %v469, %v469
    %v650 = vmul.f32 %v472, %v472
    %v651 = vmul.f32 %v477, %v477
    %v652 = vmul.f32 %v480, %v480
    %v653 = vmul.f32 %v485, %v485
    %v654 = vmul.f32 %v488, %v488
    %v655 = vmul.f32 %v493, %v493
    %v656 = vmul.f32 %v496, %v496
    %v657 = vmul.f32 %v501, %v501
    %v658 = vmul.f32 %v504, %v504
    %v659 = vmul.f32 %v509, %v509
    %v660 = vmul.f32 %v512, %v512
    %v661 = vmul.f32 %v517, %v517
    %v662 = vmul.f32 %v520, %v520
    %v663 = vmul.f32 %v525, %v525
    %v664 = vmul.f32 %v528, %v528
    %v665 = vmul.f32 %v533, %v533
    %v666 = vmul.f32 %v536, %v536
    %v667 = vmul.f32 %v541, %v541
    %v668 = vmul.f32 %v544, %v544
    %v669 = vmul.f32 %v549, %v549
    %v670 = vmul.f32 %v552, %v552
    %v671 = vmul.f32 %v557, %v557
    %v672 = vmul.f32 %v560, %v560
    %v673 = vmul.f32 %v565, %v565
    %v674 = vadd.f32 %v625, %v626
    %v675 = vadd.f32 %v674, %v627
    %v676 = vadd.f32 %v675, %v628
    %v677 = vadd.f32 %v676, %v629
    %v678 = vadd.f32 %v677, %v630
    %v679 = vadd.f32 %v678, %v631
    %v680 = vadd.f32 %v679, %v632
    %v681 = vadd.f32 %v680, %v633
    %v682 = vadd.f32 %v681, %v634
    %v683 = vadd.f32 %v682, %v635
    %v684 = vadd.f32 %v683, %v636
    %v685 = vadd.f32 %v684, %v637
    %v686 = vadd.f32 %v685, %v638
    %v687 = vadd.f32 %v686, %v639
    %v688 = vadd.f32 %v687, %v640
    %v689 = vadd.f32 %v688, %v641
    %v690 = vadd.f32 %v689, %v642
    %v691 = vadd.f32 %v690, %v643
    %v692 = vadd.f32 %v691, %v644
    %v693 = vadd.f32 %v692, %v645
    %v694 = vadd.f32 %v693, %v646
    %v695 = vadd.f32 %v694, %v647
    %v696 = vadd.f32 %v695, %v648
    %v697 = vadd.f32 %v696, %v649
    %v698 = vadd.f32 %v697, %v650
    %v699 = vadd.f32 %v698, %v651
    %v700 = vadd.f32 %v699, %v652
    %v701 = vadd.f32 %v700, %v653
    %v702 = vadd.f32 %v701, %v654
    %v703 = vadd.f32 %v702, %v655
    %v704 = vadd.f32 %v703, %v656
    %v705 = vadd.f32 %v704, %v657
    %v706 = vadd.f32 %v705, %v658
    %v707 = vadd.f32 %v706, %v659
    %v708 = vadd.f32 %v707, %v660
    %v709 = vadd.f32 %v708, %v661
    %v710 = vadd.f32 %v709, %v662
    %v711 = vadd.f32 %v710, %v663
    %v712 = vadd.f32 %v711, %v664
    %v713 = vadd.f32 %v712, %v665
    %v714 = vadd.f32 %v713, %v666
    %v715 = vadd.f32 %v714, %v667
    %v716 = vadd.f32 %v715, %v668
    %v717 = vadd.f32 %v716, %v669
    %v718 = vadd.f32 %v717, %v670
    %v719 = vadd.f32 %v718, %v671
    %v720 = vadd.f32 %v719, %v672
    %v721 = vadd.f32 %v720, %v673
    %v722 = vrot.slane %v721, 4
    %v723 = vadd.f32 %v721, %v722
    %v724 = vrot.slane %v723, 2
    %v725 = vadd.f32 %v723, %v724
    %v726 = vrot.slane %v725, 1
    %v727 = vadd.f32 %v725, %v726
    %v728 = vmul.f32 %v727, 0.0025510204
    %v729 = vmul.f32 %v624, %v624
    %v730 = vsub.f32 %v728, %v729
    %v731 = vmax.f32 %v730, 0.0
    %v732 = vsub.f32 %v373, %v624
    %v733 = vsub.f32 %v376, %v624
    %v734 = vsub.f32 %v381, %v624
    %v735 = vsub.f32 %v384, %v624
    %v736 = vsub.f32 %v389, %v624
    %v737 = vsub.f32 %v392, %v624
    %v738 = vsub.f32 %v397, %v624
    %v739 = vsub.f32 %v400, %v624
    %v740 = vsub.f32 %v405, %v624
    %v741 = vsub.f32 %v408, %v624
    %v742 = vsub.f32 %v413, %v624
    %v743 = vsub.f32 %v416, %v624
    %v744 = vsub.f32 %v421, %v624
    %v745 = vsub.f32 %v424, %v624
    %v746 = vsub.f32 %v429, %v624
    %v747 = vsub.f32 %v432, %v624
    %v748 = vsub.f32 %v437, %v624
    %v749 = vsub.f32 %v440, %v624
    %v750 = vsub.f32 %v445, %v624
    %v751 = vsub.f32 %v448, %v624
    %v752 = vsub.f32 %v453, %v624
    %v753 = vsub.f32 %v456, %v624
    %v754 = vsub.f32 %v461, %v624
    %v755 = vsub.f32 %v464, %v624
    %v756 = vsub.f32 %v469, %v624
    %v757 = vsub.f32 %v472, %v624
    %v758 = vsub.f32 %v477, %v624
    %v759 = vsub.f32 %v480, %v624
    %v760 = vsub.f32 %v485, %v624
    %v761 = vsub.f32 %v488, %v624
    %v762 = vsub.f32 %v493, %v624
    %v763 = vsub.f32 %v496, %v624
    %v764 = vsub.f32 %v501, %v624
    %v765 = vsub.f32 %v504, %v624
    %v766 = vsub.f32 %v509, %v624
    %v767 = vsub.f32 %v512, %v624
    %v768 = vsub.f32 %v517, %v624
    %v769 = vsub.f32 %v520, %v624
    %v770 = vsub.f32 %v525, %v624
    %v771 = vsub.f32 %v528, %v624
    %v772 = vsub.f32 %v533, %v624
    %v773 = vsub.f32 %v536, %v624
    %v774 = vsub.f32 %v541, %v624
    %v775 = vsub.f32 %v544, %v624
    %v776 = vsub.f32 %v549, %v624
    %v777 = vsub.f32 %v552, %v624
    %v778 = vsub.f32 %v557, %v624
    %v779 = vsub.f32 %v560, %v624
    %v780 = vsub.f32 %v565, %v624
    %v781 = vadd.f32 %v731, 1e-05
    %v782 = vrsqrt.pop %v781
    %v783 = vmul.f32 %v732, %v782
    %v784 = vmul.f32 %v733, %v782
    %v785 = vmul.f32 %v734, %v782
    %v786 = vmul.f32 %v735, %v782
    %v787 = vmul.f32 %v736, %v782
    %v788 = vmul.f32 %v737, %v782
    %v789 = vmul.f32 %v738, %v782
    %v790 = vmul.f32 %v739, %v782
    %v791 = vmul.f32 %v740, %v782
    %v792 = vmul.f32 %v741, %v782
    %v793 = vmul.f32 %v742, %v782
    %v794 = vmul.f32 %v743, %v782
    %v795 = vmul.f32 %v744, %v782
    %v796 = vmul.f32 %v745, %v782
    %v797 = vmul.f32 %v746, %v782
    %v798 = vmul.f32 %v747, %v782
    %v799 = vmul.f32 %v748, %v782
    %v800 = vmul.f32 %v749, %v782
    %v801 = vmul.f32 %v750, %v782
    %v802 = vmul.f32 %v751, %v782
    %v803 = vmul.f32 %v752, %v782
    %v804 = vmul.f32 %v753, %v782
    %v805 = vmul.f32 %v754, %v782
    %v806 = vmul.f32 %v755, %v782
    %v807 = vmul.f32 %v756, %v782
    %v808 = vmul.f32 %v757, %v782
    %v809 = vmul.f32 %v758, %v782
    %v810 = vmul.f32 %v759, %v782
    %v811 = vmul.f32 %v760, %v782
    %v812 = vmul.f32 %v761, %v782
    %v813 = vmul.f32 %v762, %v782
    %v814 = vmul.f32 %v763, %v782
    %v815 = vmul.f32 %v764, %v782
    %v816 = vmul.f32 %v765, %v782
    %v817 = vmul.f32 %v766, %v782
    %v818 = vmul.f32 %v767, %v782
    %v819 = vmul.f32 %v768, %v782
    %v820 = vmul.f32 %v769, %v782
    %v821 = vmul.f32 %v770, %v782
    %v822 = vmul.f32 %v771, %v782
    %v823 = vmul.f32 %v772, %v782
    %v824 = vmul.f32 %v773, %v782
    %v825 = vmul.f32 %v774, %v782
    %v826 = vmul.f32 %v775, %v782
    %v827 = vmul.f32 %v776, %v782
    %v828 = vmul.f32 %v777, %v782
    %v829 = vmul.f32 %v778, %v782
    %v830 = vmul.f32 %v779, %v782
    %v831 = vmul.f32 %v780, %v782
    %v832 = vld [vmem:[#allocation6] sm:$0x1]
    %v834 = vlaneseq
    %v835 = vshrl.u32 %v834, 7
    %v836 = vsub.s32 0, %v835
    %v837 = vrot.slane %v832, %v836
    %v839 = vmul.f32 %v783, %v837
    %v840 = vmul.f32 %v784, %v837
    %v841 = vmul.f32 %v785, %v837
    %v842 = vmul.f32 %v786, %v837
    %v843 = vmul.f32 %v787, %v837
    %v844 = vmul.f32 %v788, %v837
    %v845 = vmul.f32 %v789, %v837
    %v846 = vmul.f32 %v790, %v837
    %v847 = vmul.f32 %v791, %v837
    %v848 = vmul.f32 %v792, %v837
    %v849 = vmul.f32 %v793, %v837
    %v850 = vmul.f32 %v794, %v837
    %v851 = vmul.f32 %v795, %v837
    %v852 = vmul.f32 %v796, %v837
    %v853 = vmul.f32 %v797, %v837
    %v854 = vmul.f32 %v798, %v837
    %v855 = vmul.f32 %v799, %v837
    %v856 = vmul.f32 %v800, %v837
    %v857 = vmul.f32 %v801, %v837
    %v858 = vmul.f32 %v802, %v837
    %v859 = vmul.f32 %v803, %v837
    %v860 = vmul.f32 %v804, %v837
    %v861 = vmul.f32 %v805, %v837
    %v862 = vmul.f32 %v806, %v837
    %v863 = vmul.f32 %v807, %v837
    %v864 = vmul.f32 %v808, %v837
    %v865 = vmul.f32 %v809, %v837
    %v866 = vmul.f32 %v810, %v837
    %v867 = vmul.f32 %v811, %v837
    %v868 = vmul.f32 %v812, %v837
    %v869 = vmul.f32 %v813, %v837
    %v870 = vmul.f32 %v814, %v837
    %v871 = vmul.f32 %v815, %v837
    %v872 = vmul.f32 %v816, %v837
    %v873 = vmul.f32 %v817, %v837
    %v874 = vmul.f32 %v818, %v837
    %v875 = vmul.f32 %v819, %v837
    %v876 = vmul.f32 %v820, %v837
    %v877 = vmul.f32 %v821, %v837
    %v878 = vmul.f32 %v822, %v837
    %v879 = vmul.f32 %v823, %v837
    %v880 = vmul.f32 %v824, %v837
    %v881 = vmul.f32 %v825, %v837
    %v882 = vmul.f32 %v826, %v837
    %v883 = vmul.f32 %v827, %v837
    %v884 = vmul.f32 %v828, %v837
    %v885 = vmul.f32 %v829, %v837
    %v886 = vmul.f32 %v830, %v837
    %v887 = vmul.f32 %v831, %v837
    %v888 = vld [vmem:[#allocation7] sm:$0x1]
    %v890 = vlaneseq
    %v891 = vshrl.u32 %v890, 7
    %v892 = vsub.s32 0, %v891
    %v893 = vrot.slane %v888, %v892
    %v895 = vadd.f32 %v839, %v893
    %v896 = vadd.f32 %v840, %v893
    %v897 = vadd.f32 %v841, %v893
    %v898 = vadd.f32 %v842, %v893
    %v899 = vadd.f32 %v843, %v893
    %v900 = vadd.f32 %v844, %v893
    %v901 = vadd.f32 %v845, %v893
    %v902 = vadd.f32 %v846, %v893
    %v903 = vadd.f32 %v847, %v893
    %v904 = vadd.f32 %v848, %v893
    %v905 = vadd.f32 %v849, %v893
    %v906 = vadd.f32 %v850, %v893
    %v907 = vadd.f32 %v851, %v893
    %v908 = vadd.f32 %v852, %v893
    %v909 = vadd.f32 %v853, %v893
    %v910 = vadd.f32 %v854, %v893
    %v911 = vadd.f32 %v855, %v893
    %v912 = vadd.f32 %v856, %v893
    %v913 = vadd.f32 %v857, %v893
    %v914 = vadd.f32 %v858, %v893
    %v915 = vadd.f32 %v859, %v893
    %v916 = vadd.f32 %v860, %v893
    %v917 = vadd.f32 %v861, %v893
    %v918 = vadd.f32 %v862, %v893
    %v919 = vadd.f32 %v863, %v893
    %v920 = vadd.f32 %v864, %v893
    %v921 = vadd.f32 %v865, %v893
    %v922 = vadd.f32 %v866, %v893
    %v923 = vadd.f32 %v867, %v893
    %v924 = vadd.f32 %v868, %v893
    %v925 = vadd.f32 %v869, %v893
    %v926 = vadd.f32 %v870, %v893
    %v927 = vadd.f32 %v871, %v893
    %v928 = vadd.f32 %v872, %v893
    %v929 = vadd.f32 %v873, %v893
    %v930 = vadd.f32 %v874, %v893
    %v931 = vadd.f32 %v875, %v893
    %v932 = vadd.f32 %v876, %v893
    %v933 = vadd.f32 %v877, %v893
    %v934 = vadd.f32 %v878, %v893
    %v935 = vadd.f32 %v879, %v893
    %v936 = vadd.f32 %v880, %v893
    %v937 = vadd.f32 %v881, %v893
    %v938 = vadd.f32 %v882, %v893
    %v939 = vadd.f32 %v883, %v893
    %v940 = vadd.f32 %v884, %v893
    %v941 = vadd.f32 %v885, %v893
    %v942 = vadd.f32 %v886, %v893
    %v943 = vadd.f32 %v887, %v893
    %vm944 = vcmp.gt.f32.partialorder %v895, 0.0
    %vm945 = vcmp.gt.f32.partialorder %v896, 0.0
    %vm946 = vcmp.gt.f32.partialorder %v897, 0.0
    %vm947 = vcmp.gt.f32.partialorder %v898, 0.0
    %vm948 = vcmp.gt.f32.partialorder %v899, 0.0
    %vm949 = vcmp.gt.f32.partialorder %v900, 0.0
    %vm950 = vcmp.gt.f32.partialorder %v901, 0.0
    %vm951 = vcmp.gt.f32.partialorder %v902, 0.0
    %vm952 = vcmp.gt.f32.partialorder %v903, 0.0
    %vm953 = vcmp.gt.f32.partialorder %v904, 0.0
    %vm954 = vcmp.gt.f32.partialorder %v905, 0.0
    %vm955 = vcmp.gt.f32.partialorder %v906, 0.0
    %vm956 = vcmp.gt.f32.partialorder %v907, 0.0
    %vm957 = vcmp.gt.f32.partialorder %v908, 0.0
    %vm958 = vcmp.gt.f32.partialorder %v909, 0.0
    %vm959 = vcmp.gt.f32.partialorder %v910, 0.0
    %vm960 = vcmp.gt.f32.partialorder %v911, 0.0
    %vm961 = vcmp.gt.f32.partialorder %v912, 0.0
    %vm962 = vcmp.gt.f32.partialorder %v913, 0.0
    %vm963 = vcmp.gt.f32.partialorder %v914, 0.0
    %vm964 = vcmp.gt.f32.partialorder %v915, 0.0
    %vm965 = vcmp.gt.f32.partialorder %v916, 0.0
    %vm966 = vcmp.gt.f32.partialorder %v917, 0.0
    %vm967 = vcmp.gt.f32.partialorder %v918, 0.0
    %vm968 = vcmp.gt.f32.partialorder %v919, 0.0
    %vm969 = vcmp.gt.f32.partialorder %v920, 0.0
    %vm970 = vcmp.gt.f32.partialorder %v921, 0.0
    %vm971 = vcmp.gt.f32.partialorder %v922, 0.0
    %vm972 = vcmp.gt.f32.partialorder %v923, 0.0
    %vm973 = vcmp.gt.f32.partialorder %v924, 0.0
    %vm974 = vcmp.gt.f32.partialorder %v925, 0.0
    %vm975 = vcmp.gt.f32.partialorder %v926, 0.0
    %vm976 = vcmp.gt.f32.partialorder %v927, 0.0
    %vm977 = vcmp.gt.f32.partialorder %v928, 0.0
    %vm978 = vcmp.gt.f32.partialorder %v929, 0.0
    %vm979 = vcmp.gt.f32.partialorder %v930, 0.0
    %vm980 = vcmp.gt.f32.partialorder %v931, 0.0
    %vm981 = vcmp.gt.f32.partialorder %v932, 0.0
    %vm982 = vcmp.gt.f32.partialorder %v933, 0.0
    %vm983 = vcmp.gt.f32.partialorder %v934, 0.0
    %vm984 = vcmp.gt.f32.partialorder %v935, 0.0
    %vm985 = vcmp.gt.f32.partialorder %v936, 0.0
    %vm986 = vcmp.gt.f32.partialorder %v937, 0.0
    %vm987 = vcmp.gt.f32.partialorder %v938, 0.0
    %vm988 = vcmp.gt.f32.partialorder %v939, 0.0
    %vm989 = vcmp.gt.f32.partialorder %v940, 0.0
    %vm990 = vcmp.gt.f32.partialorder %v941, 0.0
    %vm991 = vcmp.gt.f32.partialorder %v942, 0.0
    %vm992 = vcmp.gt.f32.partialorder %v943, 0.0
    %v993 = vmul.f32 %v895, 0.2
    %v994 = vmul.f32 %v896, 0.2
    %v995 = vmul.f32 %v897, 0.2
    %v996 = vmul.f32 %v898, 0.2
    %v997 = vmul.f32 %v899, 0.2
    %v998 = vmul.f32 %v900, 0.2
    %v999 = vmul.f32 %v901, 0.2
    %v1000 = vmul.f32 %v902, 0.2
    %v1001 = vmul.f32 %v903, 0.2
    %v1002 = vmul.f32 %v904, 0.2
    %v1003 = vmul.f32 %v905, 0.2
    %v1004 = vmul.f32 %v906, 0.2
    %v1005 = vmul.f32 %v907, 0.2
    %v1006 = vmul.f32 %v908, 0.2
    %v1007 = vmul.f32 %v909, 0.2
    %v1008 = vmul.f32 %v910, 0.2
    %v1009 = vmul.f32 %v911, 0.2
    %v1010 = vmul.f32 %v912, 0.2
    %v1011 = vmul.f32 %v913, 0.2
    %v1012 = vmul.f32 %v914, 0.2
    %v1013 = vmul.f32 %v915, 0.2
    %v1014 = vmul.f32 %v916, 0.2
    %v1015 = vmul.f32 %v917, 0.2
    %v1016 = vmul.f32 %v918, 0.2
    %v1017 = vmul.f32 %v919, 0.2
    %v1018 = vmul.f32 %v920, 0.2
    %v1019 = vmul.f32 %v921, 0.2
    %v1020 = vmul.f32 %v922, 0.2
    %v1021 = vmul.f32 %v923, 0.2
    %v1022 = vmul.f32 %v924, 0.2
    %v1023 = vmul.f32 %v925, 0.2
    %v1024 = vmul.f32 %v926, 0.2
    %v1025 = vmul.f32 %v927, 0.2
    %v1026 = vmul.f32 %v928, 0.2
    %v1027 = vmul.f32 %v929, 0.2
    %v1028 = vmul.f32 %v930, 0.2
    %v1029 = vmul.f32 %v931, 0.2
    %v1030 = vmul.f32 %v932, 0.2
    %v1031 = vmul.f32 %v933, 0.2
    %v1032 = vmul.f32 %v934, 0.2
    %v1033 = vmul.f32 %v935, 0.2
    %v1034 = vmul.f32 %v936, 0.2
    %v1035 = vmul.f32 %v937, 0.2
    %v1036 = vmul.f32 %v938, 0.2
    %v1037 = vmul.f32 %v939, 0.2
    %v1038 = vmul.f32 %v940, 0.2
    %v1039 = vmul.f32 %v941, 0.2
    %v1040 = vmul.f32 %v942, 0.2
    %v1041 = vmul.f32 %v943, 0.2
    %v1042 = vsel %vm944, %v895, %v993
    %v1043 = vsel %vm945, %v896, %v994
    %v1044 = vsel %vm946, %v897, %v995
    %v1045 = vsel %vm947, %v898, %v996
    %v1046 = vsel %vm948, %v899, %v997
    %v1047 = vsel %vm949, %v900, %v998
    %v1048 = vsel %vm950, %v901, %v999
    %v1049 = vsel %vm951, %v902, %v1000
    %v1050 = vsel %vm952, %v903, %v1001
    %v1051 = vsel %vm953, %v904, %v1002
    %v1052 = vsel %vm954, %v905, %v1003
    %v1053 = vsel %vm955, %v906, %v1004
    %v1054 = vsel %vm956, %v907, %v1005
    %v1055 = vsel %vm957, %v908, %v1006
    %v1056 = vsel %vm958, %v909, %v1007
    %v1057 = vsel %vm959, %v910, %v1008
    %v1058 = vsel %vm960, %v911, %v1009
    %v1059 = vsel %vm961, %v912, %v1010
    %v1060 = vsel %vm962, %v913, %v1011
    %v1061 = vsel %vm963, %v914, %v1012
    %v1062 = vsel %vm964, %v915, %v1013
    %v1063 = vsel %vm965, %v916, %v1014
    %v1064 = vsel %vm966, %v917, %v1015
    %v1065 = vsel %vm967, %v918, %v1016
    %v1066 = vsel %vm968, %v919, %v1017
    %v1067 = vsel %vm969, %v920, %v1018
    %v1068 = vsel %vm970, %v921, %v1019
    %v1069 = vsel %vm971, %v922, %v1020
    %v1070 = vsel %vm972, %v923, %v1021
    %v1071 = vsel %vm973, %v924, %v1022
    %v1072 = vsel %vm974, %v925, %v1023
    %v1073 = vsel %vm975, %v926, %v1024
    %v1074 = vsel %vm976, %v927, %v1025
    %v1075 = vsel %vm977, %v928, %v1026
    %v1076 = vsel %vm978, %v929, %v1027
    %v1077 = vsel %vm979, %v930, %v1028
    %v1078 = vsel %vm980, %v931, %v1029
    %v1079 = vsel %vm981, %v932, %v1030
    %v1080 = vsel %vm982, %v933, %v1031
    %v1081 = vsel %vm983, %v934, %v1032
    %v1082 = vsel %vm984, %v935, %v1033
    %v1083 = vsel %vm985, %v936, %v1034
    %v1084 = vsel %vm986, %v937, %v1035
    %v1085 = vsel %vm987, %v938, %v1036
    %v1086 = vsel %vm988, %v939, %v1037
    %v1087 = vsel %vm989, %v940, %v1038
    %v1088 = vsel %vm990, %v941, %v1039
    %v1089 = vsel %vm991, %v942, %v1040
    %v1090 = vsel %vm992, %v943, %v1041
    %v1091 = vpack.c.bf16 %v1043, %v1042
    %v1092 = vpack.c.bf16 %v1045, %v1044
    %v1093 = vpack.c.bf16 %v1047, %v1046
    %v1094 = vpack.c.bf16 %v1049, %v1048
    %v1095 = vpack.c.bf16 %v1051, %v1050
    %v1096 = vpack.c.bf16 %v1053, %v1052
    %v1097 = vpack.c.bf16 %v1055, %v1054
    %v1098 = vpack.c.bf16 %v1057, %v1056
    %v1099 = vpack.c.bf16 %v1059, %v1058
    %v1100 = vpack.c.bf16 %v1061, %v1060
    %v1101 = vpack.c.bf16 %v1063, %v1062
    %v1102 = vpack.c.bf16 %v1065, %v1064
    %v1103 = vpack.c.bf16 %v1067, %v1066
    %v1104 = vpack.c.bf16 %v1069, %v1068
    %v1105 = vpack.c.bf16 %v1071, %v1070
    %v1106 = vpack.c.bf16 %v1073, %v1072
    %v1107 = vpack.c.bf16 %v1075, %v1074
    %v1108 = vpack.c.bf16 %v1077, %v1076
    %v1109 = vpack.c.bf16 %v1079, %v1078
    %v1110 = vpack.c.bf16 %v1081, %v1080
    %v1111 = vpack.c.bf16 %v1083, %v1082
    %v1112 = vpack.c.bf16 %v1085, %v1084
    %v1113 = vpack.c.bf16 %v1087, %v1086
    %v1114 = vpack.c.bf16 %v1089, %v1088
    %v1115 = vpack.c.bf16 %v1090, %v1090
    %v1141 = vunpack.c.l.b16 %v1091
    %v1142 = vunpack.c.h.b16 %v1091
    %v1143 = vunpack.c.l.b16 %v1092
    %v1144 = vunpack.c.h.b16 %v1092
    %v1145 = vunpack.c.l.b16 %v1093
    %v1146 = vunpack.c.h.b16 %v1093
    %v1147 = vunpack.c.l.b16 %v1094
    %v1148 = vunpack.c.h.b16 %v1094
    %v1149 = vunpack.c.l.b16 %v1095
    %v1150 = vunpack.c.h.b16 %v1095
    %v1151 = vunpack.c.l.b16 %v1096
    %v1152 = vunpack.c.h.b16 %v1096
    %v1153 = vunpack.c.l.b16 %v1097
    %v1154 = vunpack.c.h.b16 %v1097
    %v1155 = vunpack.c.l.b16 %v1098
    %v1156 = vunpack.c.h.b16 %v1098
    %v1157 = vunpack.c.l.b16 %v1099
    %v1158 = vunpack.c.h.b16 %v1099
    %v1159 = vunpack.c.l.b16 %v1100
    %v1160 = vunpack.c.h.b16 %v1100
    %v1161 = vunpack.c.l.b16 %v1101
    %v1162 = vunpack.c.h.b16 %v1101
    %v1163 = vunpack.c.l.b16 %v1102
    %v1164 = vunpack.c.h.b16 %v1102
    %v1165 = vunpack.c.l.b16 %v1103
    %v1166 = vunpack.c.h.b16 %v1103
    %v1167 = vunpack.c.l.b16 %v1104
    %v1168 = vunpack.c.h.b16 %v1104
    %v1169 = vunpack.c.l.b16 %v1105
    %v1170 = vunpack.c.h.b16 %v1105
    %v1171 = vunpack.c.l.b16 %v1106
    %v1172 = vunpack.c.h.b16 %v1106
    %v1173 = vunpack.c.l.b16 %v1107
    %v1174 = vunpack.c.h.b16 %v1107
    %v1175 = vunpack.c.l.b16 %v1108
    %v1176 = vunpack.c.h.b16 %v1108
    %v1177 = vunpack.c.l.b16 %v1109
    %v1178 = vunpack.c.h.b16 %v1109
    %v1179 = vunpack.c.l.b16 %v1110
    %v1180 = vunpack.c.h.b16 %v1110
    %v1181 = vunpack.c.l.b16 %v1111
    %v1182 = vunpack.c.h.b16 %v1111
    %v1183 = vunpack.c.l.b16 %v1112
    %v1184 = vunpack.c.h.b16 %v1112
    %v1185 = vunpack.c.l.b16 %v1113
    %v1186 = vunpack.c.h.b16 %v1113
    %v1187 = vunpack.c.l.b16 %v1114
    %v1188 = vunpack.c.h.b16 %v1114
    %v1189 = vunpack.c.l.b16 %v1115
    %v1190 = vpack.c.b16 %v1141, %v1141
    %v1191 = vpack.c.b16 %v1142, %v1142
    %v1192 = vpack.c.b16 %v1143, %v1143
    %v1193 = vpack.c.b16 %v1144, %v1144
    %v1194 = vpack.c.b16 %v1145, %v1145
    %v1195 = vpack.c.b16 %v1146, %v1146
    %v1196 = vpack.c.b16 %v1147, %v1147
    %v1197 = vpack.c.b16 %v1148, %v1148
    %v1198 = vpack.c.b16 %v1149, %v1149
    %v1199 = vpack.c.b16 %v1150, %v1150
    %v1200 = vpack.c.b16 %v1151, %v1151
    %v1201 = vpack.c.b16 %v1152, %v1152
    %v1202 = vpack.c.b16 %v1153, %v1153
    %v1203 = vpack.c.b16 %v1154, %v1154
    %v1204 = vpack.c.b16 %v1155, %v1155
    %v1205 = vpack.c.b16 %v1156, %v1156
    %v1206 = vpack.c.b16 %v1157, %v1157
    %v1207 = vpack.c.b16 %v1158, %v1158
    %v1208 = vpack.c.b16 %v1159, %v1159
    %v1209 = vpack.c.b16 %v1160, %v1160
    %v1210 = vpack.c.b16 %v1161, %v1161
    %v1211 = vpack.c.b16 %v1162, %v1162
    %v1212 = vpack.c.b16 %v1163, %v1163
    %v1213 = vpack.c.b16 %v1164, %v1164
    %v1214 = vpack.c.b16 %v1165, %v1165
    %v1215 = vpack.c.b16 %v1166, %v1166
    %v1216 = vpack.c.b16 %v1167, %v1167
    %v1217 = vpack.c.b16 %v1168, %v1168
    %v1218 = vpack.c.b16 %v1169, %v1169
    %v1219 = vpack.c.b16 %v1170, %v1170
    %v1220 = vpack.c.b16 %v1171, %v1171
    %v1221 = vpack.c.b16 %v1172, %v1172
    %v1222 = vpack.c.b16 %v1173, %v1173
    %v1223 = vpack.c.b16 %v1174, %v1174
    %v1224 = vpack.c.b16 %v1175, %v1175
    %v1225 = vpack.c.b16 %v1176, %v1176
    %v1226 = vpack.c.b16 %v1177, %v1177
    %v1227 = vpack.c.b16 %v1178, %v1178
    %v1228 = vpack.c.b16 %v1179, %v1179
    %v1229 = vpack.c.b16 %v1180, %v1180
    %v1230 = vpack.c.b16 %v1181, %v1181
    %v1231 = vpack.c.b16 %v1182, %v1182
    %v1232 = vpack.c.b16 %v1183, %v1183
    %v1233 = vpack.c.b16 %v1184, %v1184
    %v1234 = vpack.c.b16 %v1185, %v1185
    %v1235 = vpack.c.b16 %v1186, %v1186
    %v1236 = vpack.c.b16 %v1187, %v1187
    %v1237 = vpack.c.b16 %v1188, %v1188
    %v1238 = vpack.c.b16 %v1189, %v1189
    %1288 = vst [vmem:[%s5] sm:$0xf] %v1190
    %1289 = vst [vmem:[%s5 + $0x4] sm:$0xf] %v1191
    %1290 = vst [vmem:[%s5 + $0x8] sm:$0xf] %v1192
    %1291 = vst [vmem:[%s5 + $0xc] sm:$0xf] %v1193
    %1292 = vst [vmem:[%s5 + $0x10] sm:$0xf] %v1194
    %1293 = vst [vmem:[%s5 + $0x14] sm:$0xf] %v1195
    %1294 = vst [vmem:[%s5 + $0x18] sm:$0xf] %v1196
    %1295 = vst [vmem:[%s5 + $0x1c] sm:$0xf] %v1197
    %1296 = vst [vmem:[%s5 + $0x20] sm:$0xf] %v1198
    %1297 = vst [vmem:[%s5 + $0x24] sm:$0xf] %v1199
    %1298 = vst [vmem:[%s5 + $0x28] sm:$0xf] %v1200
    %1299 = vst [vmem:[%s5 + $0x2c] sm:$0xf] %v1201
    %1300 = vst [vmem:[%s5 + $0x30] sm:$0xf] %v1202
    %1301 = vst [vmem:[%s5 + $0x34] sm:$0xf] %v1203
    %1302 = vst [vmem:[%s5 + $0x38] sm:$0xf] %v1204
    %1303 = vst [vmem:[%s5 + $0x3c] sm:$0xf] %v1205
    %1304 = vst [vmem:[%s5 + $0x40] sm:$0xf] %v1206
    %1305 = vst [vmem:[%s5 + $0x44] sm:$0xf] %v1207
    %1306 = vst [vmem:[%s5 + $0x48] sm:$0xf] %v1208
    %1307 = vst [vmem:[%s5 + $0x4c] sm:$0xf] %v1209
    %1308 = vst [vmem:[%s5 + $0x50] sm:$0xf] %v1210
    %1309 = vst [vmem:[%s5 + $0x54] sm:$0xf] %v1211
    %1310 = vst [vmem:[%s5 + $0x58] sm:$0xf] %v1212
    %1311 = vst [vmem:[%s5 + $0x5c] sm:$0xf] %v1213
    %1312 = vst [vmem:[%s5 + $0x60] sm:$0xf] %v1214
    %1313 = vst [vmem:[%s5 + $0x64] sm:$0xf] %v1215
    %1314 = vst [vmem:[%s5 + $0x68] sm:$0xf] %v1216
    %1315 = vst [vmem:[%s5 + $0x6c] sm:$0xf] %v1217
    %1316 = vst [vmem:[%s5 + $0x70] sm:$0xf] %v1218
    %1317 = vst [vmem:[%s5 + $0x74] sm:$0xf] %v1219
    %1318 = vst [vmem:[%s5 + $0x78] sm:$0xf] %v1220
    %1319 = vst [vmem:[%s5 + $0x7c] sm:$0xf] %v1221
    %1320 = vst [vmem:[%s5 + $0x80] sm:$0xf] %v1222
    %1321 = vst [vmem:[%s5 + $0x84] sm:$0xf] %v1223
    %1322 = vst [vmem:[%s5 + $0x88] sm:$0xf] %v1224
    %1323 = vst [vmem:[%s5 + $0x8c] sm:$0xf] %v1225
    %1324 = vst [vmem:[%s5 + $0x90] sm:$0xf] %v1226
    %1325 = vst [vmem:[%s5 + $0x94] sm:$0xf] %v1227
    %1326 = vst [vmem:[%s5 + $0x98] sm:$0xf] %v1228
    %1327 = vst [vmem:[%s5 + $0x9c] sm:$0xf] %v1229
    %1328 = vst [vmem:[%s5 + $0xa0] sm:$0xf] %v1230
    %1329 = vst [vmem:[%s5 + $0xa4] sm:$0xf] %v1231
    %1330 = vst [vmem:[%s5 + $0xa8] sm:$0xf] %v1232
    %1331 = vst [vmem:[%s5 + $0xac] sm:$0xf] %v1233
    %1332 = vst [vmem:[%s5 + $0xb0] sm:$0xf] %v1234
    %1333 = vst [vmem:[%s5 + $0xb4] sm:$0xf] %v1235
    %1334 = vst [vmem:[%s5 + $0xb8] sm:$0xf] %v1236
    %1335 = vst [vmem:[%s5 + $0xbc] sm:$0xf] %v1237
    %1336 = vst [vmem:[%s5 + $0xc0] sm:$0xf] %v1238
    // Predicated region
    $region38: #{vae_forward.6} parent=1 // pred_check
      _
    $region39: #{vae_forward.6} parent=1 // pred_check_branch
      %1338 = sbr.rel (0) target = $region41
    $region40: #{vae_forward.6} parent=1 // pred_region
      _
    $region41: #{vae_forward.6} parent=1 // pred_fallthru
      _
    // Predicated region
    $region42: #{vae_forward.6} parent=1 // pred_check
      _
    $region43: #{vae_forward.6} parent=1 // pred_check_branch
      %1340 = sbr.rel (0) target = $region45
    $region44: #{vae_forward.6} parent=1 // pred_region
      _
    $region45: #{vae_forward.6} parent=1 // pred_fallthru
      _
    %1341 = vsyncpa [#allocation3], 1
    %1342 = vsyncpa [#allocation5], 1
    %1343 = vsyncpa [#allocation8], 1

// kernel: vae_forward.7
$region0: #{vae_forward.7}
  #allocation0 [shape = 'u32[]', space=smem, size = 0x4, offset = 0x4, fixed_abs, tag = 'smem constant byte address 0x4 - core index']
  #allocation1 [shape = 'u32[144,128]{1,0:T(1,128)}', space=vmem, size = 0x12000, scoped, tag = 'internal scratch']
  %s0 = inlined_call_operand.vmem [shape: bf16[98,2048], index: 0, kind: input, shape index: {}]
  %s1 = inlined_call_operand.vmem [shape: bf16[2048,128], index: 1, kind: input, shape index: {}]
  %s2 = inlined_call_operand.vmem [shape: f32[1,128], index: 2, kind: input, shape index: {}]
  %s3 = inlined_call_operand.vmem [shape: f32[1,128], index: 3, kind: input, shape index: {}]
  %s4 = inlined_call_operand.vmem [shape: f32[1,128], index: 4, kind: input, shape index: {}]
  %s5 = inlined_call_operand.vmem [shape: bf16[98,128], index: 5, kind: output, shape index: {}]
  %s6 = sld [smem:[#allocation0]]
  $region30: #{vae_forward.7} parent=0
    _
  %s8 = ssub.s32 1, %s6
  %s9 = scalar_select 0, %s8, %s6
  // Predicated region
  $region2: #{vae_forward.7} parent=0 // pred_check
    _
  $region3: #{vae_forward.7} parent=0 // pred_check_branch
    %11 = sbr.rel (0) target = $region5
  $region4: #{vae_forward.7} parent=0 // pred_region
    _
  $region5: #{vae_forward.7} parent=0 // pred_fallthru
    _
  // Predicated region
  $region6: #{vae_forward.7} parent=0 // pred_check
    _
  $region7: #{vae_forward.7} parent=0 // pred_check_branch
    %13 = sbr.rel (0) target = $region9
  $region8: #{vae_forward.7} parent=0 // pred_region
    _
  $region9: #{vae_forward.7} parent=0 // pred_fallthru
    _
  // Predicated region
  $region10: #{vae_forward.7} parent=0 // pred_check
    _
  $region11: #{vae_forward.7} parent=0 // pred_check_branch
    %15 = sbr.rel (0) target = $region13
  $region12: #{vae_forward.7} parent=0 // pred_region
    _
  $region13: #{vae_forward.7} parent=0 // pred_fallthru
    _
  // Predicated region
  $region14: #{vae_forward.7} parent=0 // pred_check
    _
  $region15: #{vae_forward.7} parent=0 // pred_check_branch
    %17 = sbr.rel (0) target = $region17
  $region16: #{vae_forward.7} parent=0 // pred_region
    _
  $region17: #{vae_forward.7} parent=0 // pred_fallthru
    _
  // Predicated region
  $region18: #{vae_forward.7} parent=0 // pred_check
    _
  $region19: #{vae_forward.7} parent=0 // pred_check_branch
    %19 = sbr.rel (0) target = $region21
  $region20: #{vae_forward.7} parent=0 // pred_region
    _
  $region21: #{vae_forward.7} parent=0 // pred_fallthru
    _
  %v21 = vld [vmem:[%s0] sm:$0xff]
  %v22 = vld [vmem:[%s0 + $0x8] sm:$0xff]
  %v23 = vld [vmem:[%s0 + $0x10] sm:$0xff]
  %v24 = vld [vmem:[%s0 + $0x18] sm:$0xff]
  %v25 = vld [vmem:[%s0 + $0x20] sm:$0xff]
  %v26 = vld [vmem:[%s0 + $0x28] sm:$0xff]
  %v27 = vld [vmem:[%s0 + $0x30] sm:$0xff]
  %v28 = vld [vmem:[%s0 + $0x38] sm:$0xff]
  %v29 = vld [vmem:[%s0 + $0x40] sm:$0xff]
  %v30 = vld [vmem:[%s0 + $0x48] sm:$0xff]
  %v31 = vld [vmem:[%s0 + $0x50] sm:$0xff]
  %v32 = vld [vmem:[%s0 + $0x58] sm:$0xff]
  %v33 = vld [vmem:[%s0 + $0x60] sm:$0xff]
  %v34 = vld [vmem:[%s0 + $0x68] sm:$0xff]
  %v35 = vld [vmem:[%s0 + $0x70] sm:$0xff]
  %v36 = vld [vmem:[%s0 + $0x78] sm:$0xff]
  %v37 = vld [vmem:[%s0 + $0x80] sm:$0xff]
  %v38 = vld [vmem:[%s0 + $0x88] sm:$0xff]
  %v39 = vld [vmem:[%s0 + $0x90] sm:$0xff]
  %v40 = vld [vmem:[%s0 + $0x98] sm:$0xff]
  %v41 = vld [vmem:[%s0 + $0xa0] sm:$0xff]
  %v42 = vld [vmem:[%s0 + $0xa8] sm:$0xff]
  %v43 = vld [vmem:[%s0 + $0xb0] sm:$0xff]
  %v44 = vld [vmem:[%s0 + $0xb8] sm:$0xff]
  %v45 = vld [vmem:[%s0 + $0xc0] sm:$0xff]
  %v46 = vld [vmem:[%s0 + $0xc8] sm:$0xff]
  %v47 = vld [vmem:[%s0 + $0xd0] sm:$0xff]
  %v48 = vld [vmem:[%s0 + $0xd8] sm:$0xff]
  %v49 = vld [vmem:[%s0 + $0xe0] sm:$0xff]
  %v50 = vld [vmem:[%s0 + $0xe8] sm:$0xff]
  %v51 = vld [vmem:[%s0 + $0xf0] sm:$0xff]
  %v52 = vld [vmem:[%s0 + $0xf8] sm:$0xff]
  %v53 = vld [vmem:[%s0 + $0x100] sm:$0xff]
  %v54 = vld [vmem:[%s0 + $0x108] sm:$0xff]
  %v55 = vld [vmem:[%s0 + $0x110] sm:$0xff]
  %v56 = vld [vmem:[%s0 + $0x118] sm:$0xff]
  %v57 = vld [vmem:[%s0 + $0x120] sm:$0xff]
  %v58 = vld [vmem:[%s0 + $0x128] sm:$0xff]
  %v59 = vld [vmem:[%s0 + $0x130] sm:$0xff]
  %v60 = vld [vmem:[%s0 + $0x138] sm:$0xff]
  %v61 = vld [vmem:[%s0 + $0x140] sm:$0xff]
  %v62 = vld [vmem:[%s0 + $0x148] sm:$0xff]
  %v63 = vld [vmem:[%s0 + $0x150] sm:$0xff]
  %v64 = vld [vmem:[%s0 + $0x158] sm:$0xff]
  %v65 = vld [vmem:[%s0 + $0x160] sm:$0xff]
  %v66 = vld [vmem:[%s0 + $0x168] sm:$0xff]
  %v67 = vld [vmem:[%s0 + $0x170] sm:$0xff]
  %v68 = vld [vmem:[%s0 + $0x178] sm:$0xff]
  %v69 = vld [vmem:[%s0 + $0x180] sm:$0xff]
  %v70 = vld [vmem:[%s0 + $0x188] sm:$0xff]
  %v71 = vld [vmem:[%s0 + $0x190] sm:$0xff]
  %v72 = vld [vmem:[%s0 + $0x198] sm:$0xff]
  %v73 = vld [vmem:[%s0 + $0x1a0] sm:$0xff]
  %v74 = vld [vmem:[%s0 + $0x1a8] sm:$0xff]
  %v75 = vld [vmem:[%s0 + $0x1b0] sm:$0xff]
  %v76 = vld [vmem:[%s0 + $0x1b8] sm:$0xff]
  %v77 = vld [vmem:[%s0 + $0x1c0] sm:$0xff]
  %v78 = vld [vmem:[%s0 + $0x1c8] sm:$0xff]
  %v79 = vld [vmem:[%s0 + $0x1d0] sm:$0xff]
  %v80 = vld [vmem:[%s0 + $0x1d8] sm:$0xff]
  %v81 = vld [vmem:[%s0 + $0x1e0] sm:$0xff]
  %v82 = vld [vmem:[%s0 + $0x1e8] sm:$0xff]
  %v83 = vld [vmem:[%s0 + $0x1f0] sm:$0xff]
  %v84 = vld [vmem:[%s0 + $0x1f8] sm:$0xff]
  %v85 = vld [vmem:[%s0 + $0x200] sm:$0xff]
  %v86 = vld [vmem:[%s0 + $0x208] sm:$0xff]
  %v87 = vld [vmem:[%s0 + $0x210] sm:$0xff]
  %v88 = vld [vmem:[%s0 + $0x218] sm:$0xff]
  %v89 = vld [vmem:[%s0 + $0x220] sm:$0xff]
  %v90 = vld [vmem:[%s0 + $0x228] sm:$0xff]
  %v91 = vld [vmem:[%s0 + $0x230] sm:$0xff]
  %v92 = vld [vmem:[%s0 + $0x238] sm:$0xff]
  %v93 = vld [vmem:[%s0 + $0x240] sm:$0xff]
  %v94 = vld [vmem:[%s0 + $0x248] sm:$0xff]
  %v95 = vld [vmem:[%s0 + $0x250] sm:$0xff]
  %v96 = vld [vmem:[%s0 + $0x258] sm:$0xff]
  %v97 = vld [vmem:[%s0 + $0x260] sm:$0xff]
  %v98 = vld [vmem:[%s0 + $0x268] sm:$0xff]
  %v99 = vld [vmem:[%s0 + $0x270] sm:$0xff]
  %v100 = vld [vmem:[%s0 + $0x278] sm:$0xff]
  %v101 = vld [vmem:[%s0 + $0x280] sm:$0xff]
  %v102 = vld [vmem:[%s0 + $0x288] sm:$0xff]
  %v103 = vld [vmem:[%s0 + $0x290] sm:$0xff]
  %v104 = vld [vmem:[%s0 + $0x298] sm:$0xff]
  %v105 = vld [vmem:[%s0 + $0x2a0] sm:$0xff]
  %v106 = vld [vmem:[%s0 + $0x2a8] sm:$0xff]
  %v107 = vld [vmem:[%s0 + $0x2b0] sm:$0xff]
  %v108 = vld [vmem:[%s0 + $0x2b8] sm:$0xff]
  %v109 = vld [vmem:[%s0 + $0x2c0] sm:$0xff]
  %v110 = vld [vmem:[%s0 + $0x2c8] sm:$0xff]
  %v111 = vld [vmem:[%s0 + $0x2d0] sm:$0xff]
  %v112 = vld [vmem:[%s0 + $0x2d8] sm:$0xff]
  %v113 = vld [vmem:[%s0 + $0x2e0] sm:$0xff]
  %v114 = vld [vmem:[%s0 + $0x2e8] sm:$0xff]
  %v115 = vld [vmem:[%s0 + $0x2f0] sm:$0xff]
  %v116 = vld [vmem:[%s0 + $0x2f8] sm:$0xff]
  %v117 = vld [vmem:[%s0 + $0x300] sm:$0x11]
  %v118 = vld [vmem:[%s0 + $0x308] sm:$0x11]
  %v119 = vld [vmem:[%s0 + $0x310] sm:$0x11]
  %v120 = vld [vmem:[%s0 + $0x318] sm:$0x11]
  %v121 = vld [vmem:[%s0 + $0x320] sm:$0x11]
  %v122 = vld [vmem:[%s0 + $0x328] sm:$0x11]
  %v123 = vld [vmem:[%s0 + $0x330] sm:$0x11]
  %v124 = vld [vmem:[%s0 + $0x338] sm:$0x11]
  %v125 = vld [vmem:[%s1] sm:$0xf]
  %v126 = vld [vmem:[%s1 + $0x4] sm:$0xf]
  %v127 = vld [vmem:[%s1 + $0x8] sm:$0xf]
  %v128 = vld [vmem:[%s1 + $0xc] sm:$0xf]
  %v129 = vld [vmem:[%s1 + $0x10] sm:$0xf]
  %v130 = vld [vmem:[%s1 + $0x14] sm:$0xf]
  %v131 = vld [vmem:[%s1 + $0x18] sm:$0xf]
  %v132 = vld [vmem:[%s1 + $0x1c] sm:$0xf]
  %v133 = vld [vmem:[%s1 + $0x20] sm:$0xf]
  %v134 = vld [vmem:[%s1 + $0x24] sm:$0xf]
  %v135 = vld [vmem:[%s1 + $0x28] sm:$0xf]
  %v136 = vld [vmem:[%s1 + $0x2c] sm:$0xf]
  %v137 = vld [vmem:[%s1 + $0x30] sm:$0xf]
  %v138 = vld [vmem:[%s1 + $0x34] sm:$0xf]
  %v139 = vld [vmem:[%s1 + $0x38] sm:$0xf]
  %v140 = vld [vmem:[%s1 + $0x3c] sm:$0xf]
  %v141 = vld [vmem:[%s1 + $0x40] sm:$0xf]
  %v142 = vld [vmem:[%s1 + $0x44] sm:$0xf]
  %v143 = vld [vmem:[%s1 + $0x48] sm:$0xf]
  %v144 = vld [vmem:[%s1 + $0x4c] sm:$0xf]
  %v145 = vld [vmem:[%s1 + $0x50] sm:$0xf]
  %v146 = vld [vmem:[%s1 + $0x54] sm:$0xf]
  %v147 = vld [vmem:[%s1 + $0x58] sm:$0xf]
  %v148 = vld [vmem:[%s1 + $0x5c] sm:$0xf]
  %v149 = vld [vmem:[%s1 + $0x60] sm:$0xf]
  %v150 = vld [vmem:[%s1 + $0x64] sm:$0xf]
  %v151 = vld [vmem:[%s1 + $0x68] sm:$0xf]
  %v152 = vld [vmem:[%s1 + $0x6c] sm:$0xf]
  %v153 = vld [vmem:[%s1 + $0x70] sm:$0xf]
  %v154 = vld [vmem:[%s1 + $0x74] sm:$0xf]
  %v155 = vld [vmem:[%s1 + $0x78] sm:$0xf]
  %v156 = vld [vmem:[%s1 + $0x7c] sm:$0xf]
  %v157 = vld [vmem:[%s1 + $0x80] sm:$0xf]
  %v158 = vld [vmem:[%s1 + $0x84] sm:$0xf]
  %v159 = vld [vmem:[%s1 + $0x88] sm:$0xf]
  %v160 = vld [vmem:[%s1 + $0x8c] sm:$0xf]
  %v161 = vld [vmem:[%s1 + $0x90] sm:$0xf]
  %v162 = vld [vmem:[%s1 + $0x94] sm:$0xf]
  %v163 = vld [vmem:[%s1 + $0x98] sm:$0xf]
  %v164 = vld [vmem:[%s1 + $0x9c] sm:$0xf]
  %v165 = vld [vmem:[%s1 + $0xa0] sm:$0xf]
  %v166 = vld [vmem:[%s1 + $0xa4] sm:$0xf]
  %v167 = vld [vmem:[%s1 + $0xa8] sm:$0xf]
  %v168 = vld [vmem:[%s1 + $0xac] sm:$0xf]
  %v169 = vld [vmem:[%s1 + $0xb0] sm:$0xf]
  %v170 = vld [vmem:[%s1 + $0xb4] sm:$0xf]
  %v171 = vld [vmem:[%s1 + $0xb8] sm:$0xf]
  %v172 = vld [vmem:[%s1 + $0xbc] sm:$0xf]
  %v173 = vld [vmem:[%s1 + $0xc0] sm:$0xf]
  %v174 = vld [vmem:[%s1 + $0xc4] sm:$0xf]
  %v175 = vld [vmem:[%s1 + $0xc8] sm:$0xf]
  %v176 = vld [vmem:[%s1 + $0xcc] sm:$0xf]
  %v177 = vld [vmem:[%s1 + $0xd0] sm:$0xf]
  %v178 = vld [vmem:[%s1 + $0xd4] sm:$0xf]
  %v179 = vld [vmem:[%s1 + $0xd8] sm:$0xf]
  %v180 = vld [vmem:[%s1 + $0xdc] sm:$0xf]
  %v181 = vld [vmem:[%s1 + $0xe0] sm:$0xf]
  %v182 = vld [vmem:[%s1 + $0xe4] sm:$0xf]
  %v183 = vld [vmem:[%s1 + $0xe8] sm:$0xf]
  %v184 = vld [vmem:[%s1 + $0xec] sm:$0xf]
  %v185 = vld [vmem:[%s1 + $0xf0] sm:$0xf]
  %v186 = vld [vmem:[%s1 + $0xf4] sm:$0xf]
  %v187 = vld [vmem:[%s1 + $0xf8] sm:$0xf]
  %v188 = vld [vmem:[%s1 + $0xfc] sm:$0xf]
  %v189 = vld [vmem:[%s1 + $0x100] sm:$0xf]
  %v190 = vld [vmem:[%s1 + $0x104] sm:$0xf]
  %v191 = vld [vmem:[%s1 + $0x108] sm:$0xf]
  %v192 = vld [vmem:[%s1 + $0x10c] sm:$0xf]
  %v193 = vld [vmem:[%s1 + $0x110] sm:$0xf]
  %v194 = vld [vmem:[%s1 + $0x114] sm:$0xf]
  %v195 = vld [vmem:[%s1 + $0x118] sm:$0xf]
  %v196 = vld [vmem:[%s1 + $0x11c] sm:$0xf]
  %v197 = vld [vmem:[%s1 + $0x120] sm:$0xf]
  %v198 = vld [vmem:[%s1 + $0x124] sm:$0xf]
  %v199 = vld [vmem:[%s1 + $0x128] sm:$0xf]
  %v200 = vld [vmem:[%s1 + $0x12c] sm:$0xf]
  %v201 = vld [vmem:[%s1 + $0x130] sm:$0xf]
  %v202 = vld [vmem:[%s1 + $0x134] sm:$0xf]
  %v203 = vld [vmem:[%s1 + $0x138] sm:$0xf]
  %v204 = vld [vmem:[%s1 + $0x13c] sm:$0xf]
  %v205 = vld [vmem:[%s1 + $0x140] sm:$0xf]
  %v206 = vld [vmem:[%s1 + $0x144] sm:$0xf]
  %v207 = vld [vmem:[%s1 + $0x148] sm:$0xf]
  %v208 = vld [vmem:[%s1 + $0x14c] sm:$0xf]
  %v209 = vld [vmem:[%s1 + $0x150] sm:$0xf]
  %v210 = vld [vmem:[%s1 + $0x154] sm:$0xf]
  %v211 = vld [vmem:[%s1 + $0x158] sm:$0xf]
  %v212 = vld [vmem:[%s1 + $0x15c] sm:$0xf]
  %v213 = vld [vmem:[%s1 + $0x160] sm:$0xf]
  %v214 = vld [vmem:[%s1 + $0x164] sm:$0xf]
  %v215 = vld [vmem:[%s1 + $0x168] sm:$0xf]
  %v216 = vld [vmem:[%s1 + $0x16c] sm:$0xf]
  %v217 = vld [vmem:[%s1 + $0x170] sm:$0xf]
  %v218 = vld [vmem:[%s1 + $0x174] sm:$0xf]
  %v219 = vld [vmem:[%s1 + $0x178] sm:$0xf]
  %v220 = vld [vmem:[%s1 + $0x17c] sm:$0xf]
  %v221 = vld [vmem:[%s1 + $0x180] sm:$0xf]
  %v222 = vld [vmem:[%s1 + $0x184] sm:$0xf]
  %v223 = vld [vmem:[%s1 + $0x188] sm:$0xf]
  %v224 = vld [vmem:[%s1 + $0x18c] sm:$0xf]
  %v225 = vld [vmem:[%s1 + $0x190] sm:$0xf]
  %v226 = vld [vmem:[%s1 + $0x194] sm:$0xf]
  %v227 = vld [vmem:[%s1 + $0x198] sm:$0xf]
  %v228 = vld [vmem:[%s1 + $0x19c] sm:$0xf]
  %v229 = vld [vmem:[%s1 + $0x1a0] sm:$0xf]
  %v230 = vld [vmem:[%s1 + $0x1a4] sm:$0xf]
  %v231 = vld [vmem:[%s1 + $0x1a8] sm:$0xf]
  %v232 = vld [vmem:[%s1 + $0x1ac] sm:$0xf]
  %v233 = vld [vmem:[%s1 + $0x1b0] sm:$0xf]
  %v234 = vld [vmem:[%s1 + $0x1b4] sm:$0xf]
  %v235 = vld [vmem:[%s1 + $0x1b8] sm:$0xf]
  %v236 = vld [vmem:[%s1 + $0x1bc] sm:$0xf]
  %v237 = vld [vmem:[%s1 + $0x1c0] sm:$0xf]
  %v238 = vld [vmem:[%s1 + $0x1c4] sm:$0xf]
  %v239 = vld [vmem:[%s1 + $0x1c8] sm:$0xf]
  %v240 = vld [vmem:[%s1 + $0x1cc] sm:$0xf]
  %v241 = vld [vmem:[%s1 + $0x1d0] sm:$0xf]
  %v242 = vld [vmem:[%s1 + $0x1d4] sm:$0xf]
  %v243 = vld [vmem:[%s1 + $0x1d8] sm:$0xf]
  %v244 = vld [vmem:[%s1 + $0x1dc] sm:$0xf]
  %v245 = vld [vmem:[%s1 + $0x1e0] sm:$0xf]
  %v246 = vld [vmem:[%s1 + $0x1e4] sm:$0xf]
  %v247 = vld [vmem:[%s1 + $0x1e8] sm:$0xf]
  %v248 = vld [vmem:[%s1 + $0x1ec] sm:$0xf]
  %v249 = vld [vmem:[%s1 + $0x1f0] sm:$0xf]
  %v250 = vld [vmem:[%s1 + $0x1f4] sm:$0xf]
  %v251 = vld [vmem:[%s1 + $0x1f8] sm:$0xf]
  %v252 = vld [vmem:[%s1 + $0x1fc] sm:$0xf]
  %v253 = vld [vmem:[%s1 + $0x200] sm:$0xf]
  %v254 = vld [vmem:[%s1 + $0x204] sm:$0xf]
  %v255 = vld [vmem:[%s1 + $0x208] sm:$0xf]
  %v256 = vld [vmem:[%s1 + $0x20c] sm:$0xf]
  %v257 = vld [vmem:[%s1 + $0x210] sm:$0xf]
  %v258 = vld [vmem:[%s1 + $0x214] sm:$0xf]
  %v259 = vld [vmem:[%s1 + $0x218] sm:$0xf]
  %v260 = vld [vmem:[%s1 + $0x21c] sm:$0xf]
  %v261 = vld [vmem:[%s1 + $0x220] sm:$0xf]
  %v262 = vld [vmem:[%s1 + $0x224] sm:$0xf]
  %v263 = vld [vmem:[%s1 + $0x228] sm:$0xf]
  %v264 = vld [vmem:[%s1 + $0x22c] sm:$0xf]
  %v265 = vld [vmem:[%s1 + $0x230] sm:$0xf]
  %v266 = vld [vmem:[%s1 + $0x234] sm:$0xf]
  %v267 = vld [vmem:[%s1 + $0x238] sm:$0xf]
  %v268 = vld [vmem:[%s1 + $0x23c] sm:$0xf]
  %v269 = vld [vmem:[%s1 + $0x240] sm:$0xf]
  %v270 = vld [vmem:[%s1 + $0x244] sm:$0xf]
  %v271 = vld [vmem:[%s1 + $0x248] sm:$0xf]
  %v272 = vld [vmem:[%s1 + $0x24c] sm:$0xf]
  %v273 = vld [vmem:[%s1 + $0x250] sm:$0xf]
  %v274 = vld [vmem:[%s1 + $0x254] sm:$0xf]
  %v275 = vld [vmem:[%s1 + $0x258] sm:$0xf]
  %v276 = vld [vmem:[%s1 + $0x25c] sm:$0xf]
  %v277 = vld [vmem:[%s1 + $0x260] sm:$0xf]
  %v278 = vld [vmem:[%s1 + $0x264] sm:$0xf]
  %v279 = vld [vmem:[%s1 + $0x268] sm:$0xf]
  %v280 = vld [vmem:[%s1 + $0x26c] sm:$0xf]
  %v281 = vld [vmem:[%s1 + $0x270] sm:$0xf]
  %v282 = vld [vmem:[%s1 + $0x274] sm:$0xf]
  %v283 = vld [vmem:[%s1 + $0x278] sm:$0xf]
  %v284 = vld [vmem:[%s1 + $0x27c] sm:$0xf]
  %v285 = vld [vmem:[%s1 + $0x280] sm:$0xf]
  %v286 = vld [vmem:[%s1 + $0x284] sm:$0xf]
  %v287 = vld [vmem:[%s1 + $0x288] sm:$0xf]
  %v288 = vld [vmem:[%s1 + $0x28c] sm:$0xf]
  %v289 = vld [vmem:[%s1 + $0x290] sm:$0xf]
  %v290 = vld [vmem:[%s1 + $0x294] sm:$0xf]
  %v291 = vld [vmem:[%s1 + $0x298] sm:$0xf]
  %v292 = vld [vmem:[%s1 + $0x29c] sm:$0xf]
  %v293 = vld [vmem:[%s1 + $0x2a0] sm:$0xf]
  %v294 = vld [vmem:[%s1 + $0x2a4] sm:$0xf]
  %v295 = vld [vmem:[%s1 + $0x2a8] sm:$0xf]
  %v296 = vld [vmem:[%s1 + $0x2ac] sm:$0xf]
  %v297 = vld [vmem:[%s1 + $0x2b0] sm:$0xf]
  %v298 = vld [vmem:[%s1 + $0x2b4] sm:$0xf]
  %v299 = vld [vmem:[%s1 + $0x2b8] sm:$0xf]
  %v300 = vld [vmem:[%s1 + $0x2bc] sm:$0xf]
  %v301 = vld [vmem:[%s1 + $0x2c0] sm:$0xf]
  %v302 = vld [vmem:[%s1 + $0x2c4] sm:$0xf]
  %v303 = vld [vmem:[%s1 + $0x2c8] sm:$0xf]
  %v304 = vld [vmem:[%s1 + $0x2cc] sm:$0xf]
  %v305 = vld [vmem:[%s1 + $0x2d0] sm:$0xf]
  %v306 = vld [vmem:[%s1 + $0x2d4] sm:$0xf]
  %v307 = vld [vmem:[%s1 + $0x2d8] sm:$0xf]
  %v308 = vld [vmem:[%s1 + $0x2dc] sm:$0xf]
  %v309 = vld [vmem:[%s1 + $0x2e0] sm:$0xf]
  %v310 = vld [vmem:[%s1 + $0x2e4] sm:$0xf]
  %v311 = vld [vmem:[%s1 + $0x2e8] sm:$0xf]
  %v312 = vld [vmem:[%s1 + $0x2ec] sm:$0xf]
  %v313 = vld [vmem:[%s1 + $0x2f0] sm:$0xf]
  %v314 = vld [vmem:[%s1 + $0x2f4] sm:$0xf]
  %v315 = vld [vmem:[%s1 + $0x2f8] sm:$0xf]
  %v316 = vld [vmem:[%s1 + $0x2fc] sm:$0xf]
  %v317 = vld [vmem:[%s1 + $0x300] sm:$0xf]
  %v318 = vld [vmem:[%s1 + $0x304] sm:$0xf]
  %v319 = vld [vmem:[%s1 + $0x308] sm:$0xf]
  %v320 = vld [vmem:[%s1 + $0x30c] sm:$0xf]
  %v321 = vld [vmem:[%s1 + $0x310] sm:$0xf]
  %v322 = vld [vmem:[%s1 + $0x314] sm:$0xf]
  %v323 = vld [vmem:[%s1 + $0x318] sm:$0xf]
  %v324 = vld [vmem:[%s1 + $0x31c] sm:$0xf]
  %v325 = vld [vmem:[%s1 + $0x320] sm:$0xf]
  %v326 = vld [vmem:[%s1 + $0x324] sm:$0xf]
  %v327 = vld [vmem:[%s1 + $0x328] sm:$0xf]
  %v328 = vld [vmem:[%s1 + $0x32c] sm:$0xf]
  %v329 = vld [vmem:[%s1 + $0x330] sm:$0xf]
  %v330 = vld [vmem:[%s1 + $0x334] sm:$0xf]
  %v331 = vld [vmem:[%s1 + $0x338] sm:$0xf]
  %v332 = vld [vmem:[%s1 + $0x33c] sm:$0xf]
  %v333 = vld [vmem:[%s1 + $0x340] sm:$0xf]
  %v334 = vld [vmem:[%s1 + $0x344] sm:$0xf]
  %v335 = vld [vmem:[%s1 + $0x348] sm:$0xf]
  %v336 = vld [vmem:[%s1 + $0x34c] sm:$0xf]
  %v337 = vld [vmem:[%s1 + $0x350] sm:$0xf]
  %v338 = vld [vmem:[%s1 + $0x354] sm:$0xf]
  %v339 = vld [vmem:[%s1 + $0x358] sm:$0xf]
  %v340 = vld [vmem:[%s1 + $0x35c] sm:$0xf]
  %v341 = vld [vmem:[%s1 + $0x360] sm:$0xf]
  %v342 = vld [vmem:[%s1 + $0x364] sm:$0xf]
  %v343 = vld [vmem:[%s1 + $0x368] sm:$0xf]
  %v344 = vld [vmem:[%s1 + $0x36c] sm:$0xf]
  %v345 = vld [vmem:[%s1 + $0x370] sm:$0xf]
  %v346 = vld [vmem:[%s1 + $0x374] sm:$0xf]
  %v347 = vld [vmem:[%s1 + $0x378] sm:$0xf]
  %v348 = vld [vmem:[%s1 + $0x37c] sm:$0xf]
  %v349 = vld [vmem:[%s1 + $0x380] sm:$0xf]
  %v350 = vld [vmem:[%s1 + $0x384] sm:$0xf]
  %v351 = vld [vmem:[%s1 + $0x388] sm:$0xf]
  %v352 = vld [vmem:[%s1 + $0x38c] sm:$0xf]
  %v353 = vld [vmem:[%s1 + $0x390] sm:$0xf]
  %v354 = vld [vmem:[%s1 + $0x394] sm:$0xf]
  %v355 = vld [vmem:[%s1 + $0x398] sm:$0xf]
  %v356 = vld [vmem:[%s1 + $0x39c] sm:$0xf]
  %v357 = vld [vmem:[%s1 + $0x3a0] sm:$0xf]
  %v358 = vld [vmem:[%s1 + $0x3a4] sm:$0xf]
  %v359 = vld [vmem:[%s1 + $0x3a8] sm:$0xf]
  %v360 = vld [vmem:[%s1 + $0x3ac] sm:$0xf]
  %v361 = vld [vmem:[%s1 + $0x3b0] sm:$0xf]
  %v362 = vld [vmem:[%s1 + $0x3b4] sm:$0xf]
  %v363 = vld [vmem:[%s1 + $0x3b8] sm:$0xf]
  %v364 = vld [vmem:[%s1 + $0x3bc] sm:$0xf]
  %v365 = vld [vmem:[%s1 + $0x3c0] sm:$0xf]
  %v366 = vld [vmem:[%s1 + $0x3c4] sm:$0xf]
  %v367 = vld [vmem:[%s1 + $0x3c8] sm:$0xf]
  %v368 = vld [vmem:[%s1 + $0x3cc] sm:$0xf]
  %v369 = vld [vmem:[%s1 + $0x3d0] sm:$0xf]
  %v370 = vld [vmem:[%s1 + $0x3d4] sm:$0xf]
  %v371 = vld [vmem:[%s1 + $0x3d8] sm:$0xf]
  %v372 = vld [vmem:[%s1 + $0x3dc] sm:$0xf]
  %v373 = vld [vmem:[%s1 + $0x3e0] sm:$0xf]
  %v374 = vld [vmem:[%s1 + $0x3e4] sm:$0xf]
  %v375 = vld [vmem:[%s1 + $0x3e8] sm:$0xf]
  %v376 = vld [vmem:[%s1 + $0x3ec] sm:$0xf]
  %v377 = vld [vmem:[%s1 + $0x3f0] sm:$0xf]
  %v378 = vld [vmem:[%s1 + $0x3f4] sm:$0xf]
  %v379 = vld [vmem:[%s1 + $0x3f8] sm:$0xf]
  %v380 = vld [vmem:[%s1 + $0x3fc] sm:$0xf]
  %v381 = vld [vmem:[%s2] sm:$0x1]
  %v383 = vlaneseq
  %v384 = vshrl.u32 %v383, 7
  %v385 = vsub.s32 0, %v384
  %v386 = vrot.slane %v381, %v385
  %v492 = vunpack.c.l.b16 %v21
  %v493 = vunpack.c.h.b16 %v21
  %v494 = vunpack.c.l.b16 %v22
  %v495 = vunpack.c.h.b16 %v22
  %v496 = vunpack.c.l.b16 %v23
  %v497 = vunpack.c.h.b16 %v23
  %v498 = vunpack.c.l.b16 %v24
  %v499 = vunpack.c.h.b16 %v24
  %v500 = vunpack.c.l.b16 %v25
  %v501 = vunpack.c.h.b16 %v25
  %v502 = vunpack.c.l.b16 %v26
  %v503 = vunpack.c.h.b16 %v26
  %v504 = vunpack.c.l.b16 %v27
  %v505 = vunpack.c.h.b16 %v27
  %v506 = vunpack.c.l.b16 %v28
  %v507 = vunpack.c.h.b16 %v28
  %v508 = vunpack.c.l.b16 %v29
  %v509 = vunpack.c.h.b16 %v29
  %v510 = vunpack.c.l.b16 %v30
  %v511 = vunpack.c.h.b16 %v30
  %v512 = vunpack.c.l.b16 %v31
  %v513 = vunpack.c.h.b16 %v31
  %v514 = vunpack.c.l.b16 %v32
  %v515 = vunpack.c.h.b16 %v32
  %v516 = vunpack.c.l.b16 %v33
  %v517 = vunpack.c.h.b16 %v33
  %v518 = vunpack.c.l.b16 %v34
  %v519 = vunpack.c.h.b16 %v34
  %v520 = vunpack.c.l.b16 %v35
  %v521 = vunpack.c.h.b16 %v35
  %v522 = vunpack.c.l.b16 %v36
  %v523 = vunpack.c.h.b16 %v36
  %v524 = vunpack.c.l.b16 %v37
  %v525 = vunpack.c.h.b16 %v37
  %v526 = vunpack.c.l.b16 %v38
  %v527 = vunpack.c.h.b16 %v38
  %v528 = vunpack.c.l.b16 %v39
  %v529 = vunpack.c.h.b16 %v39
  %v530 = vunpack.c.l.b16 %v40
  %v531 = vunpack.c.h.b16 %v40
  %v532 = vunpack.c.l.b16 %v41
  %v533 = vunpack.c.h.b16 %v41
  %v534 = vunpack.c.l.b16 %v42
  %v535 = vunpack.c.h.b16 %v42
  %v536 = vunpack.c.l.b16 %v43
  %v537 = vunpack.c.h.b16 %v43
  %v538 = vunpack.c.l.b16 %v44
  %v539 = vunpack.c.h.b16 %v44
  %v540 = vunpack.c.l.b16 %v45
  %v541 = vunpack.c.h.b16 %v45
  %v542 = vunpack.c.l.b16 %v46
  %v543 = vunpack.c.h.b16 %v46
  %v544 = vunpack.c.l.b16 %v47
  %v545 = vunpack.c.h.b16 %v47
  %v546 = vunpack.c.l.b16 %v48
  %v547 = vunpack.c.h.b16 %v48
  %v548 = vunpack.c.l.b16 %v49
  %v549 = vunpack.c.h.b16 %v49
  %v550 = vunpack.c.l.b16 %v50
  %v551 = vunpack.c.h.b16 %v50
  %v552 = vunpack.c.l.b16 %v51
  %v553 = vunpack.c.h.b16 %v51
  %v554 = vunpack.c.l.b16 %v52
  %v555 = vunpack.c.h.b16 %v52
  %v556 = vunpack.c.l.b16 %v53
  %v557 = vunpack.c.h.b16 %v53
  %v558 = vunpack.c.l.b16 %v54
  %v559 = vunpack.c.h.b16 %v54
  %v560 = vunpack.c.l.b16 %v55
  %v561 = vunpack.c.h.b16 %v55
  %v562 = vunpack.c.l.b16 %v56
  %v563 = vunpack.c.h.b16 %v56
  %v564 = vunpack.c.l.b16 %v57
  %v565 = vunpack.c.h.b16 %v57
  %v566 = vunpack.c.l.b16 %v58
  %v567 = vunpack.c.h.b16 %v58
  %v568 = vunpack.c.l.b16 %v59
  %v569 = vunpack.c.h.b16 %v59
  %v570 = vunpack.c.l.b16 %v60
  %v571 = vunpack.c.h.b16 %v60
  %v572 = vunpack.c.l.b16 %v61
  %v573 = vunpack.c.h.b16 %v61
  %v574 = vunpack.c.l.b16 %v62
  %v575 = vunpack.c.h.b16 %v62
  %v576 = vunpack.c.l.b16 %v63
  %v577 = vunpack.c.h.b16 %v63
  %v578 = vunpack.c.l.b16 %v64
  %v579 = vunpack.c.h.b16 %v64
  %v580 = vunpack.c.l.b16 %v65
  %v581 = vunpack.c.h.b16 %v65
  %v582 = vunpack.c.l.b16 %v66
  %v583 = vunpack.c.h.b16 %v66
  %v584 = vunpack.c.l.b16 %v67
  %v585 = vunpack.c.h.b16 %v67
  %v586 = vunpack.c.l.b16 %v68
  %v587 = vunpack.c.h.b16 %v68
  %v588 = vunpack.c.l.b16 %v69
  %v589 = vunpack.c.h.b16 %v69
  %v590 = vunpack.c.l.b16 %v70
  %v591 = vunpack.c.h.b16 %v70
  %v592 = vunpack.c.l.b16 %v71
  %v593 = vunpack.c.h.b16 %v71
  %v594 = vunpack.c.l.b16 %v72
  %v595 = vunpack.c.h.b16 %v72
  %v596 = vunpack.c.l.b16 %v73
  %v597 = vunpack.c.h.b16 %v73
  %v598 = vunpack.c.l.b16 %v74
  %v599 = vunpack.c.h.b16 %v74
  %v600 = vunpack.c.l.b16 %v75
  %v601 = vunpack.c.h.b16 %v75
  %v602 = vunpack.c.l.b16 %v76
  %v603 = vunpack.c.h.b16 %v76
  %v604 = vunpack.c.l.b16 %v77
  %v605 = vunpack.c.h.b16 %v77
  %v606 = vunpack.c.l.b16 %v78
  %v607 = vunpack.c.h.b16 %v78
  %v608 = vunpack.c.l.b16 %v79
  %v609 = vunpack.c.h.b16 %v79
  %v610 = vunpack.c.l.b16 %v80
  %v611 = vunpack.c.h.b16 %v80
  %v612 = vunpack.c.l.b16 %v81
  %v613 = vunpack.c.h.b16 %v81
  %v614 = vunpack.c.l.b16 %v82
  %v615 = vunpack.c.h.b16 %v82
  %v616 = vunpack.c.l.b16 %v83
  %v617 = vunpack.c.h.b16 %v83
  %v618 = vunpack.c.l.b16 %v84
  %v619 = vunpack.c.h.b16 %v84
  %v620 = vunpack.c.l.b16 %v85
  %v621 = vunpack.c.h.b16 %v85
  %v622 = vunpack.c.l.b16 %v86
  %v623 = vunpack.c.h.b16 %v86
  %v624 = vunpack.c.l.b16 %v87
  %v625 = vunpack.c.h.b16 %v87
  %v626 = vunpack.c.l.b16 %v88
  %v627 = vunpack.c.h.b16 %v88
  %v628 = vunpack.c.l.b16 %v89
  %v629 = vunpack.c.h.b16 %v89
  %v630 = vunpack.c.l.b16 %v90
  %v631 = vunpack.c.h.b16 %v90
  %v632 = vunpack.c.l.b16 %v91
  %v633 = vunpack.c.h.b16 %v91
  %v634 = vunpack.c.l.b16 %v92
  %v635 = vunpack.c.h.b16 %v92
  %v636 = vunpack.c.l.b16 %v93
  %v637 = vunpack.c.h.b16 %v93
  %v638 = vunpack.c.l.b16 %v94
  %v639 = vunpack.c.h.b16 %v94
  %v640 = vunpack.c.l.b16 %v95
  %v641 = vunpack.c.h.b16 %v95
  %v642 = vunpack.c.l.b16 %v96
  %v643 = vunpack.c.h.b16 %v96
  %v644 = vunpack.c.l.b16 %v97
  %v645 = vunpack.c.h.b16 %v97
  %v646 = vunpack.c.l.b16 %v98
  %v647 = vunpack.c.h.b16 %v98
  %v648 = vunpack.c.l.b16 %v99
  %v649 = vunpack.c.h.b16 %v99
  %v650 = vunpack.c.l.b16 %v100
  %v651 = vunpack.c.h.b16 %v100
  %v652 = vunpack.c.l.b16 %v101
  %v653 = vunpack.c.h.b16 %v101
  %v654 = vunpack.c.l.b16 %v102
  %v655 = vunpack.c.h.b16 %v102
  %v656 = vunpack.c.l.b16 %v103
  %v657 = vunpack.c.h.b16 %v103
  %v658 = vunpack.c.l.b16 %v104
  %v659 = vunpack.c.h.b16 %v104
  %v660 = vunpack.c.l.b16 %v105
  %v661 = vunpack.c.h.b16 %v105
  %v662 = vunpack.c.l.b16 %v106
  %v663 = vunpack.c.h.b16 %v106
  %v664 = vunpack.c.l.b16 %v107
  %v665 = vunpack.c.h.b16 %v107
  %v666 = vunpack.c.l.b16 %v108
  %v667 = vunpack.c.h.b16 %v108
  %v668 = vunpack.c.l.b16 %v109
  %v669 = vunpack.c.h.b16 %v109
  %v670 = vunpack.c.l.b16 %v110
  %v671 = vunpack.c.h.b16 %v110
  %v672 = vunpack.c.l.b16 %v111
  %v673 = vunpack.c.h.b16 %v111
  %v674 = vunpack.c.l.b16 %v112
  %v675 = vunpack.c.h.b16 %v112
  %v676 = vunpack.c.l.b16 %v113
  %v677 = vunpack.c.h.b16 %v113
  %v678 = vunpack.c.l.b16 %v114
  %v679 = vunpack.c.h.b16 %v114
  %v680 = vunpack.c.l.b16 %v115
  %v681 = vunpack.c.h.b16 %v115
  %v682 = vunpack.c.l.b16 %v116
  %v683 = vunpack.c.h.b16 %v116
  %v684 = vunpack.c.l.b16 %v117
  %v685 = vunpack.c.h.b16 %v117
  %v686 = vunpack.c.l.b16 %v118
  %v687 = vunpack.c.h.b16 %v118
  %v688 = vunpack.c.l.b16 %v119
  %v689 = vunpack.c.h.b16 %v119
  %v690 = vunpack.c.l.b16 %v120
  %v691 = vunpack.c.h.b16 %v120
  %v692 = vunpack.c.l.b16 %v121
  %v693 = vunpack.c.h.b16 %v121
  %v694 = vunpack.c.l.b16 %v122
  %v695 = vunpack.c.h.b16 %v122
  %v696 = vunpack.c.l.b16 %v123
  %v697 = vunpack.c.h.b16 %v123
  %v698 = vunpack.c.l.b16 %v124
  %v699 = vunpack.c.h.b16 %v124
  %v700 = vpack.c.b16 %v508, %v492
  %v701 = vpack.c.b16 %v509, %v493
  %v702 = vpack.c.b16 %v510, %v494
  %v703 = vpack.c.b16 %v511, %v495
  %v704 = vpack.c.b16 %v512, %v496
  %v705 = vpack.c.b16 %v513, %v497
  %v706 = vpack.c.b16 %v514, %v498
  %v707 = vpack.c.b16 %v515, %v499
  %v708 = vpack.c.b16 %v516, %v500
  %v709 = vpack.c.b16 %v517, %v501
  %v710 = vpack.c.b16 %v518, %v502
  %v711 = vpack.c.b16 %v519, %v503
  %v712 = vpack.c.b16 %v520, %v504
  %v713 = vpack.c.b16 %v521, %v505
  %v714 = vpack.c.b16 %v522, %v506
  %v715 = vpack.c.b16 %v523, %v507
  %v716 = vpack.c.b16 %v540, %v524
  %v717 = vpack.c.b16 %v541, %v525
  %v718 = vpack.c.b16 %v542, %v526
  %v719 = vpack.c.b16 %v543, %v527
  %v720 = vpack.c.b16 %v544, %v528
  %v721 = vpack.c.b16 %v545, %v529
  %v722 = vpack.c.b16 %v546, %v530
  %v723 = vpack.c.b16 %v547, %v531
  %v724 = vpack.c.b16 %v548, %v532
  %v725 = vpack.c.b16 %v549, %v533
  %v726 = vpack.c.b16 %v550, %v534
  %v727 = vpack.c.b16 %v551, %v535
  %v728 = vpack.c.b16 %v552, %v536
  %v729 = vpack.c.b16 %v553, %v537
  %v730 = vpack.c.b16 %v554, %v538
  %v731 = vpack.c.b16 %v555, %v539
  %v732 = vpack.c.b16 %v572, %v556
  %v733 = vpack.c.b16 %v573, %v557
  %v734 = vpack.c.b16 %v574, %v558
  %v735 = vpack.c.b16 %v575, %v559
  %v736 = vpack.c.b16 %v576, %v560
  %v737 = vpack.c.b16 %v577, %v561
  %v738 = vpack.c.b16 %v578, %v562
  %v739 = vpack.c.b16 %v579, %v563
  %v740 = vpack.c.b16 %v580, %v564
  %v741 = vpack.c.b16 %v581, %v565
  %v742 = vpack.c.b16 %v582, %v566
  %v743 = vpack.c.b16 %v583, %v567
  %v744 = vpack.c.b16 %v584, %v568
  %v745 = vpack.c.b16 %v585, %v569
  %v746 = vpack.c.b16 %v586, %v570
  %v747 = vpack.c.b16 %v587, %v571
  %v748 = vpack.c.b16 %v604, %v588
  %v749 = vpack.c.b16 %v605, %v589
  %v750 = vpack.c.b16 %v606, %v590
  %v751 = vpack.c.b16 %v607, %v591
  %v752 = vpack.c.b16 %v608, %v592
  %v753 = vpack.c.b16 %v609, %v593
  %v754 = vpack.c.b16 %v610, %v594
  %v755 = vpack.c.b16 %v611, %v595
  %v756 = vpack.c.b16 %v612, %v596
  %v757 = vpack.c.b16 %v613, %v597
  %v758 = vpack.c.b16 %v614, %v598
  %v759 = vpack.c.b16 %v615, %v599
  %v760 = vpack.c.b16 %v616, %v600
  %v761 = vpack.c.b16 %v617, %v601
  %v762 = vpack.c.b16 %v618, %v602
  %v763 = vpack.c.b16 %v619, %v603
  %v764 = vpack.c.b16 %v636, %v620
  %v765 = vpack.c.b16 %v637, %v621
  %v766 = vpack.c.b16 %v638, %v622
  %v767 = vpack.c.b16 %v639, %v623
  %v768 = vpack.c.b16 %v640, %v624
  %v769 = vpack.c.b16 %v641, %v625
  %v770 = vpack.c.b16 %v642, %v626
  %v771 = vpack.c.b16 %v643, %v627
  %v772 = vpack.c.b16 %v644, %v628
  %v773 = vpack.c.b16 %v645, %v629
  %v774 = vpack.c.b16 %v646, %v630
  %v775 = vpack.c.b16 %v647, %v631
  %v776 = vpack.c.b16 %v648, %v632
  %v777 = vpack.c.b16 %v649, %v633
  %v778 = vpack.c.b16 %v650, %v634
  %v779 = vpack.c.b16 %v651, %v635
  %v780 = vpack.c.b16 %v668, %v652
  %v781 = vpack.c.b16 %v669, %v653
  %v782 = vpack.c.b16 %v670, %v654
  %v783 = vpack.c.b16 %v671, %v655
  %v784 = vpack.c.b16 %v672, %v656
  %v785 = vpack.c.b16 %v673, %v657
  %v786 = vpack.c.b16 %v674, %v658
  %v787 = vpack.c.b16 %v675, %v659
  %v788 = vpack.c.b16 %v676, %v660
  %v789 = vpack.c.b16 %v677, %v661
  %v790 = vpack.c.b16 %v678, %v662
  %v791 = vpack.c.b16 %v679, %v663
  %v792 = vpack.c.b16 %v680, %v664
  %v793 = vpack.c.b16 %v681, %v665
  %v794 = vpack.c.b16 %v682, %v666
  %v795 = vpack.c.b16 %v683, %v667
  %v796 = vpack.c.b16 %v684, %v684
  %v797 = vpack.c.b16 %v685, %v685
  %v798 = vpack.c.b16 %v686, %v686
  %v799 = vpack.c.b16 %v687, %v687
  %v800 = vpack.c.b16 %v688, %v688
  %v801 = vpack.c.b16 %v689, %v689
  %v802 = vpack.c.b16 %v690, %v690
  %v803 = vpack.c.b16 %v691, %v691
  %v804 = vpack.c.b16 %v692, %v692
  %v805 = vpack.c.b16 %v693, %v693
  %v806 = vpack.c.b16 %v694, %v694
  %v807 = vpack.c.b16 %v695, %v695
  %v808 = vpack.c.b16 %v696, %v696
  %v809 = vpack.c.b16 %v697, %v697
  %v810 = vpack.c.b16 %v698, %v698
  %v811 = vpack.c.b16 %v699, %v699
  %v1180 = vunpack.c.l.b16 %v125
  %v1181 = vunpack.c.l.b16 %v126
  %v1182 = vunpack.c.l.b16 %v127
  %v1183 = vunpack.c.l.b16 %v128
  %v1184 = vunpack.c.l.b16 %v129
  %v1185 = vunpack.c.l.b16 %v130
  %v1186 = vunpack.c.l.b16 %v131
  %v1187 = vunpack.c.l.b16 %v132
  %v1188 = vunpack.c.l.b16 %v133
  %v1189 = vunpack.c.l.b16 %v134
  %v1190 = vunpack.c.l.b16 %v135
  %v1191 = vunpack.c.l.b16 %v136
  %v1192 = vunpack.c.l.b16 %v137
  %v1193 = vunpack.c.l.b16 %v138
  %v1194 = vunpack.c.l.b16 %v139
  %v1195 = vunpack.c.l.b16 %v140
  %v1196 = vunpack.c.l.b16 %v141
  %v1197 = vunpack.c.l.b16 %v142
  %v1198 = vunpack.c.l.b16 %v143
  %v1199 = vunpack.c.l.b16 %v144
  %v1200 = vunpack.c.l.b16 %v145
  %v1201 = vunpack.c.l.b16 %v146
  %v1202 = vunpack.c.l.b16 %v147
  %v1203 = vunpack.c.l.b16 %v148
  %v1204 = vunpack.c.l.b16 %v149
  %v1205 = vunpack.c.l.b16 %v150
  %v1206 = vunpack.c.l.b16 %v151
  %v1207 = vunpack.c.l.b16 %v152
  %v1208 = vunpack.c.l.b16 %v153
  %v1209 = vunpack.c.l.b16 %v154
  %v1210 = vunpack.c.l.b16 %v155
  %v1211 = vunpack.c.l.b16 %v156
  %v1212 = vunpack.c.l.b16 %v157
  %v1213 = vunpack.c.l.b16 %v158
  %v1214 = vunpack.c.l.b16 %v159
  %v1215 = vunpack.c.l.b16 %v160
  %v1216 = vunpack.c.l.b16 %v161
  %v1217 = vunpack.c.l.b16 %v162
  %v1218 = vunpack.c.l.b16 %v163
  %v1219 = vunpack.c.l.b16 %v164
  %v1220 = vunpack.c.l.b16 %v165
  %v1221 = vunpack.c.l.b16 %v166
  %v1222 = vunpack.c.l.b16 %v167
  %v1223 = vunpack.c.l.b16 %v168
  %v1224 = vunpack.c.l.b16 %v169
  %v1225 = vunpack.c.l.b16 %v170
  %v1226 = vunpack.c.l.b16 %v171
  %v1227 = vunpack.c.l.b16 %v172
  %v1228 = vunpack.c.l.b16 %v173
  %v1229 = vunpack.c.l.b16 %v174
  %v1230 = vunpack.c.l.b16 %v175
  %v1231 = vunpack.c.l.b16 %v176
  %v1232 = vunpack.c.l.b16 %v177
  %v1233 = vunpack.c.l.b16 %v178
  %v1234 = vunpack.c.l.b16 %v179
  %v1235 = vunpack.c.l.b16 %v180
  %v1236 = vunpack.c.l.b16 %v181
  %v1237 = vunpack.c.l.b16 %v182
  %v1238 = vunpack.c.l.b16 %v183
  %v1239 = vunpack.c.l.b16 %v184
  %v1240 = vunpack.c.l.b16 %v185
  %v1241 = vunpack.c.l.b16 %v186
  %v1242 = vunpack.c.l.b16 %v187
  %v1243 = vunpack.c.l.b16 %v188
  %v1244 = vunpack.c.l.b16 %v189
  %v1245 = vunpack.c.l.b16 %v190
  %v1246 = vunpack.c.l.b16 %v191
  %v1247 = vunpack.c.l.b16 %v192
  %v1248 = vunpack.c.l.b16 %v193
  %v1249 = vunpack.c.l.b16 %v194
  %v1250 = vunpack.c.l.b16 %v195
  %v1251 = vunpack.c.l.b16 %v196
  %v1252 = vunpack.c.l.b16 %v197
  %v1253 = vunpack.c.l.b16 %v198
  %v1254 = vunpack.c.l.b16 %v199
  %v1255 = vunpack.c.l.b16 %v200
  %v1256 = vunpack.c.l.b16 %v201
  %v1257 = vunpack.c.l.b16 %v202
  %v1258 = vunpack.c.l.b16 %v203
  %v1259 = vunpack.c.l.b16 %v204
  %v1260 = vunpack.c.l.b16 %v205
  %v1261 = vunpack.c.l.b16 %v206
  %v1262 = vunpack.c.l.b16 %v207
  %v1263 = vunpack.c.l.b16 %v208
  %v1264 = vunpack.c.l.b16 %v209
  %v1265 = vunpack.c.l.b16 %v210
  %v1266 = vunpack.c.l.b16 %v211
  %v1267 = vunpack.c.l.b16 %v212
  %v1268 = vunpack.c.l.b16 %v213
  %v1269 = vunpack.c.l.b16 %v214
  %v1270 = vunpack.c.l.b16 %v215
  %v1271 = vunpack.c.l.b16 %v216
  %v1272 = vunpack.c.l.b16 %v217
  %v1273 = vunpack.c.l.b16 %v218
  %v1274 = vunpack.c.l.b16 %v219
  %v1275 = vunpack.c.l.b16 %v220
  %v1276 = vunpack.c.l.b16 %v221
  %v1277 = vunpack.c.l.b16 %v222
  %v1278 = vunpack.c.l.b16 %v223
  %v1279 = vunpack.c.l.b16 %v224
  %v1280 = vunpack.c.l.b16 %v225
  %v1281 = vunpack.c.l.b16 %v226
  %v1282 = vunpack.c.l.b16 %v227
  %v1283 = vunpack.c.l.b16 %v228
  %v1284 = vunpack.c.l.b16 %v229
  %v1285 = vunpack.c.l.b16 %v230
  %v1286 = vunpack.c.l.b16 %v231
  %v1287 = vunpack.c.l.b16 %v232
  %v1288 = vunpack.c.l.b16 %v233
  %v1289 = vunpack.c.l.b16 %v234
  %v1290 = vunpack.c.l.b16 %v235
  %v1291 = vunpack.c.l.b16 %v236
  %v1292 = vunpack.c.l.b16 %v237
  %v1293 = vunpack.c.l.b16 %v238
  %v1294 = vunpack.c.l.b16 %v239
  %v1295 = vunpack.c.l.b16 %v240
  %v1296 = vunpack.c.l.b16 %v241
  %v1297 = vunpack.c.l.b16 %v242
  %v1298 = vunpack.c.l.b16 %v243
  %v1299 = vunpack.c.l.b16 %v244
  %v1300 = vunpack.c.l.b16 %v245
  %v1301 = vunpack.c.l.b16 %v246
  %v1302 = vunpack.c.l.b16 %v247
  %v1303 = vunpack.c.l.b16 %v248
  %v1304 = vunpack.c.l.b16 %v249
  %v1305 = vunpack.c.l.b16 %v250
  %v1306 = vunpack.c.l.b16 %v251
  %v1307 = vunpack.c.l.b16 %v252
  %v1308 = vunpack.c.l.b16 %v253
  %v1309 = vunpack.c.l.b16 %v254
  %v1310 = vunpack.c.l.b16 %v255
  %v1311 = vunpack.c.l.b16 %v256
  %v1312 = vunpack.c.l.b16 %v257
  %v1313 = vunpack.c.l.b16 %v258
  %v1314 = vunpack.c.l.b16 %v259
  %v1315 = vunpack.c.l.b16 %v260
  %v1316 = vunpack.c.l.b16 %v261
  %v1317 = vunpack.c.l.b16 %v262
  %v1318 = vunpack.c.l.b16 %v263
  %v1319 = vunpack.c.l.b16 %v264
  %v1320 = vunpack.c.l.b16 %v265
  %v1321 = vunpack.c.l.b16 %v266
  %v1322 = vunpack.c.l.b16 %v267
  %v1323 = vunpack.c.l.b16 %v268
  %v1324 = vunpack.c.l.b16 %v269
  %v1325 = vunpack.c.l.b16 %v270
  %v1326 = vunpack.c.l.b16 %v271
  %v1327 = vunpack.c.l.b16 %v272
  %v1328 = vunpack.c.l.b16 %v273
  %v1329 = vunpack.c.l.b16 %v274
  %v1330 = vunpack.c.l.b16 %v275
  %v1331 = vunpack.c.l.b16 %v276
  %v1332 = vunpack.c.l.b16 %v277
  %v1333 = vunpack.c.l.b16 %v278
  %v1334 = vunpack.c.l.b16 %v279
  %v1335 = vunpack.c.l.b16 %v280
  %v1336 = vunpack.c.l.b16 %v281
  %v1337 = vunpack.c.l.b16 %v282
  %v1338 = vunpack.c.l.b16 %v283
  %v1339 = vunpack.c.l.b16 %v284
  %v1340 = vunpack.c.l.b16 %v285
  %v1341 = vunpack.c.l.b16 %v286
  %v1342 = vunpack.c.l.b16 %v287
  %v1343 = vunpack.c.l.b16 %v288
  %v1344 = vunpack.c.l.b16 %v289
  %v1345 = vunpack.c.l.b16 %v290
  %v1346 = vunpack.c.l.b16 %v291
  %v1347 = vunpack.c.l.b16 %v292
  %v1348 = vunpack.c.l.b16 %v293
  %v1349 = vunpack.c.l.b16 %v294
  %v1350 = vunpack.c.l.b16 %v295
  %v1351 = vunpack.c.l.b16 %v296
  %v1352 = vunpack.c.l.b16 %v297
  %v1353 = vunpack.c.l.b16 %v298
  %v1354 = vunpack.c.l.b16 %v299
  %v1355 = vunpack.c.l.b16 %v300
  %v1356 = vunpack.c.l.b16 %v301
  %v1357 = vunpack.c.l.b16 %v302
  %v1358 = vunpack.c.l.b16 %v303
  %v1359 = vunpack.c.l.b16 %v304
  %v1360 = vunpack.c.l.b16 %v305
  %v1361 = vunpack.c.l.b16 %v306
  %v1362 = vunpack.c.l.b16 %v307
  %v1363 = vunpack.c.l.b16 %v308
  %v1364 = vunpack.c.l.b16 %v309
  %v1365 = vunpack.c.l.b16 %v310
  %v1366 = vunpack.c.l.b16 %v311
  %v1367 = vunpack.c.l.b16 %v312
  %v1368 = vunpack.c.l.b16 %v313
  %v1369 = vunpack.c.l.b16 %v314
  %v1370 = vunpack.c.l.b16 %v315
  %v1371 = vunpack.c.l.b16 %v316
  %v1372 = vunpack.c.l.b16 %v317
  %v1373 = vunpack.c.l.b16 %v318
  %v1374 = vunpack.c.l.b16 %v319
  %v1375 = vunpack.c.l.b16 %v320
  %v1376 = vunpack.c.l.b16 %v321
  %v1377 = vunpack.c.l.b16 %v322
  %v1378 = vunpack.c.l.b16 %v323
  %v1379 = vunpack.c.l.b16 %v324
  %v1380 = vunpack.c.l.b16 %v325
  %v1381 = vunpack.c.l.b16 %v326
  %v1382 = vunpack.c.l.b16 %v327
  %v1383 = vunpack.c.l.b16 %v328
  %v1384 = vunpack.c.l.b16 %v329
  %v1385 = vunpack.c.l.b16 %v330
  %v1386 = vunpack.c.l.b16 %v331
  %v1387 = vunpack.c.l.b16 %v332
  %v1388 = vunpack.c.l.b16 %v333
  %v1389 = vunpack.c.l.b16 %v334
  %v1390 = vunpack.c.l.b16 %v335
  %v1391 = vunpack.c.l.b16 %v336
  %v1392 = vunpack.c.l.b16 %v337
  %v1393 = vunpack.c.l.b16 %v338
  %v1394 = vunpack.c.l.b16 %v339
  %v1395 = vunpack.c.l.b16 %v340
  %v1396 = vunpack.c.l.b16 %v341
  %v1397 = vunpack.c.l.b16 %v342
  %v1398 = vunpack.c.l.b16 %v343
  %v1399 = vunpack.c.l.b16 %v344
  %v1400 = vunpack.c.l.b16 %v345
  %v1401 = vunpack.c.l.b16 %v346
  %v1402 = vunpack.c.l.b16 %v347
  %v1403 = vunpack.c.l.b16 %v348
  %v1404 = vunpack.c.l.b16 %v349
  %v1405 = vunpack.c.l.b16 %v350
  %v1406 = vunpack.c.l.b16 %v351
  %v1407 = vunpack.c.l.b16 %v352
  %v1408 = vunpack.c.l.b16 %v353
  %v1409 = vunpack.c.l.b16 %v354
  %v1410 = vunpack.c.l.b16 %v355
  %v1411 = vunpack.c.l.b16 %v356
  %v1412 = vunpack.c.l.b16 %v357
  %v1413 = vunpack.c.l.b16 %v358
  %v1414 = vunpack.c.l.b16 %v359
  %v1415 = vunpack.c.l.b16 %v360
  %v1416 = vunpack.c.l.b16 %v361
  %v1417 = vunpack.c.l.b16 %v362
  %v1418 = vunpack.c.l.b16 %v363
  %v1419 = vunpack.c.l.b16 %v364
  %v1420 = vunpack.c.l.b16 %v365
  %v1421 = vunpack.c.l.b16 %v366
  %v1422 = vunpack.c.l.b16 %v367
  %v1423 = vunpack.c.l.b16 %v368
  %v1424 = vunpack.c.l.b16 %v369
  %v1425 = vunpack.c.l.b16 %v370
  %v1426 = vunpack.c.l.b16 %v371
  %v1427 = vunpack.c.l.b16 %v372
  %v1428 = vunpack.c.l.b16 %v373
  %v1429 = vunpack.c.l.b16 %v374
  %v1430 = vunpack.c.l.b16 %v375
  %v1431 = vunpack.c.l.b16 %v376
  %v1432 = vunpack.c.l.b16 %v377
  %v1433 = vunpack.c.l.b16 %v378
  %v1434 = vunpack.c.l.b16 %v379
  %v1435 = vunpack.c.l.b16 %v380
  %v1436 = vpack.c.b16 %v1181, %v1180
  %v1437 = vpack.c.b16 %v1183, %v1182
  %v1438 = vpack.c.b16 %v1185, %v1184
  %v1439 = vpack.c.b16 %v1187, %v1186
  %v1440 = vpack.c.b16 %v1189, %v1188
  %v1441 = vpack.c.b16 %v1191, %v1190
  %v1442 = vpack.c.b16 %v1193, %v1192
  %v1443 = vpack.c.b16 %v1195, %v1194
  %v1444 = vpack.c.b16 %v1197, %v1196
  %v1445 = vpack.c.b16 %v1199, %v1198
  %v1446 = vpack.c.b16 %v1201, %v1200
  %v1447 = vpack.c.b16 %v1203, %v1202
  %v1448 = vpack.c.b16 %v1205, %v1204
  %v1449 = vpack.c.b16 %v1207, %v1206
  %v1450 = vpack.c.b16 %v1209, %v1208
  %v1451 = vpack.c.b16 %v1211, %v1210
  %v1452 = vpack.c.b16 %v1213, %v1212
  %v1453 = vpack.c.b16 %v1215, %v1214
  %v1454 = vpack.c.b16 %v1217, %v1216
  %v1455 = vpack.c.b16 %v1219, %v1218
  %v1456 = vpack.c.b16 %v1221, %v1220
  %v1457 = vpack.c.b16 %v1223, %v1222
  %v1458 = vpack.c.b16 %v1225, %v1224
  %v1459 = vpack.c.b16 %v1227, %v1226
  %v1460 = vpack.c.b16 %v1229, %v1228
  %v1461 = vpack.c.b16 %v1231, %v1230
  %v1462 = vpack.c.b16 %v1233, %v1232
  %v1463 = vpack.c.b16 %v1235, %v1234
  %v1464 = vpack.c.b16 %v1237, %v1236
  %v1465 = vpack.c.b16 %v1239, %v1238
  %v1466 = vpack.c.b16 %v1241, %v1240
  %v1467 = vpack.c.b16 %v1243, %v1242
  %v1468 = vpack.c.b16 %v1245, %v1244
  %v1469 = vpack.c.b16 %v1247, %v1246
  %v1470 = vpack.c.b16 %v1249, %v1248
  %v1471 = vpack.c.b16 %v1251, %v1250
  %v1472 = vpack.c.b16 %v1253, %v1252
  %v1473 = vpack.c.b16 %v1255, %v1254
  %v1474 = vpack.c.b16 %v1257, %v1256
  %v1475 = vpack.c.b16 %v1259, %v1258
  %v1476 = vpack.c.b16 %v1261, %v1260
  %v1477 = vpack.c.b16 %v1263, %v1262
  %v1478 = vpack.c.b16 %v1265, %v1264
  %v1479 = vpack.c.b16 %v1267, %v1266
  %v1480 = vpack.c.b16 %v1269, %v1268
  %v1481 = vpack.c.b16 %v1271, %v1270
  %v1482 = vpack.c.b16 %v1273, %v1272
  %v1483 = vpack.c.b16 %v1275, %v1274
  %v1484 = vpack.c.b16 %v1277, %v1276
  %v1485 = vpack.c.b16 %v1279, %v1278
  %v1486 = vpack.c.b16 %v1281, %v1280
  %v1487 = vpack.c.b16 %v1283, %v1282
  %v1488 = vpack.c.b16 %v1285, %v1284
  %v1489 = vpack.c.b16 %v1287, %v1286
  %v1490 = vpack.c.b16 %v1289, %v1288
  %v1491 = vpack.c.b16 %v1291, %v1290
  %v1492 = vpack.c.b16 %v1293, %v1292
  %v1493 = vpack.c.b16 %v1295, %v1294
  %v1494 = vpack.c.b16 %v1297, %v1296
  %v1495 = vpack.c.b16 %v1299, %v1298
  %v1496 = vpack.c.b16 %v1301, %v1300
  %v1497 = vpack.c.b16 %v1303, %v1302
  %v1498 = vpack.c.b16 %v1305, %v1304
  %v1499 = vpack.c.b16 %v1307, %v1306
  %v1500 = vpack.c.b16 %v1309, %v1308
  %v1501 = vpack.c.b16 %v1311, %v1310
  %v1502 = vpack.c.b16 %v1313, %v1312
  %v1503 = vpack.c.b16 %v1315, %v1314
  %v1504 = vpack.c.b16 %v1317, %v1316
  %v1505 = vpack.c.b16 %v1319, %v1318
  %v1506 = vpack.c.b16 %v1321, %v1320
  %v1507 = vpack.c.b16 %v1323, %v1322
  %v1508 = vpack.c.b16 %v1325, %v1324
  %v1509 = vpack.c.b16 %v1327, %v1326
  %v1510 = vpack.c.b16 %v1329, %v1328
  %v1511 = vpack.c.b16 %v1331, %v1330
  %v1512 = vpack.c.b16 %v1333, %v1332
  %v1513 = vpack.c.b16 %v1335, %v1334
  %v1514 = vpack.c.b16 %v1337, %v1336
  %v1515 = vpack.c.b16 %v1339, %v1338
  %v1516 = vpack.c.b16 %v1341, %v1340
  %v1517 = vpack.c.b16 %v1343, %v1342
  %v1518 = vpack.c.b16 %v1345, %v1344
  %v1519 = vpack.c.b16 %v1347, %v1346
  %v1520 = vpack.c.b16 %v1349, %v1348
  %v1521 = vpack.c.b16 %v1351, %v1350
  %v1522 = vpack.c.b16 %v1353, %v1352
  %v1523 = vpack.c.b16 %v1355, %v1354
  %v1524 = vpack.c.b16 %v1357, %v1356
  %v1525 = vpack.c.b16 %v1359, %v1358
  %v1526 = vpack.c.b16 %v1361, %v1360
  %v1527 = vpack.c.b16 %v1363, %v1362
  %v1528 = vpack.c.b16 %v1365, %v1364
  %v1529 = vpack.c.b16 %v1367, %v1366
  %v1530 = vpack.c.b16 %v1369, %v1368
  %v1531 = vpack.c.b16 %v1371, %v1370
  %v1532 = vpack.c.b16 %v1373, %v1372
  %v1533 = vpack.c.b16 %v1375, %v1374
  %v1534 = vpack.c.b16 %v1377, %v1376
  %v1535 = vpack.c.b16 %v1379, %v1378
  %v1536 = vpack.c.b16 %v1381, %v1380
  %v1537 = vpack.c.b16 %v1383, %v1382
  %v1538 = vpack.c.b16 %v1385, %v1384
  %v1539 = vpack.c.b16 %v1387, %v1386
  %v1540 = vpack.c.b16 %v1389, %v1388
  %v1541 = vpack.c.b16 %v1391, %v1390
  %v1542 = vpack.c.b16 %v1393, %v1392
  %v1543 = vpack.c.b16 %v1395, %v1394
  %v1544 = vpack.c.b16 %v1397, %v1396
  %v1545 = vpack.c.b16 %v1399, %v1398
  %v1546 = vpack.c.b16 %v1401, %v1400
  %v1547 = vpack.c.b16 %v1403, %v1402
  %v1548 = vpack.c.b16 %v1405, %v1404
  %v1549 = vpack.c.b16 %v1407, %v1406
  %v1550 = vpack.c.b16 %v1409, %v1408
  %v1551 = vpack.c.b16 %v1411, %v1410
  %v1552 = vpack.c.b16 %v1413, %v1412
  %v1553 = vpack.c.b16 %v1415, %v1414
  %v1554 = vpack.c.b16 %v1417, %v1416
  %v1555 = vpack.c.b16 %v1419, %v1418
  %v1556 = vpack.c.b16 %v1421, %v1420
  %v1557 = vpack.c.b16 %v1423, %v1422
  %v1558 = vpack.c.b16 %v1425, %v1424
  %v1559 = vpack.c.b16 %v1427, %v1426
  %v1560 = vpack.c.b16 %v1429, %v1428
  %v1561 = vpack.c.b16 %v1431, %v1430
  %v1562 = vpack.c.b16 %v1433, %v1432
  %v1563 = vpack.c.b16 %v1435, %v1434
  %1692 = vmatprep.subr.bf16.mxu0 0
  %1693 = vmatpush1.bf16.msra.mxu0 %v1436
  %1694 = vmatprep.subr.bf16.mxu0 0
  %1695 = vmatpush1.bf16.msra.mxu0 %v1437
  %1696 = vmatprep.subr.bf16.mxu0 0
  %1697 = vmatpush1.bf16.msra.mxu0 %v1438
  %1698 = vmatprep.subr.bf16.mxu0 0
  %1699 = vmatpush1.bf16.msra.mxu0 %v1439
  %1700 = vmatprep.subr.bf16.mxu0 0
  %1701 = vmatpush1.bf16.msra.mxu0 %v1440
  %1702 = vmatprep.subr.bf16.mxu0 0
  %1703 = vmatpush1.bf16.msra.mxu0 %v1441
  %1704 = vmatprep.subr.bf16.mxu0 0
  %1705 = vmatpush1.bf16.msra.mxu0 %v1442
  %1706 = vmatprep.subr.bf16.mxu0 0
  %1707 = vmatpush1.bf16.msra.mxu0 %v1443
  %1708 = vmatprep.subr.bf16.mxu0 0
  %1709 = vmatpush1.bf16.msra.mxu0 %v1444
  %1710 = vmatprep.subr.bf16.mxu0 0
  %1711 = vmatpush1.bf16.msra.mxu0 %v1445
  %1712 = vmatprep.subr.bf16.mxu0 0
  %1713 = vmatpush1.bf16.msra.mxu0 %v1446
  %1714 = vmatprep.subr.bf16.mxu0 0
  %1715 = vmatpush1.bf16.msra.mxu0 %v1447
  %1716 = vmatprep.subr.bf16.mxu0 0
  %1717 = vmatpush1.bf16.msra.mxu0 %v1448
  %1718 = vmatprep.subr.bf16.mxu0 0
  %1719 = vmatpush1.bf16.msra.mxu0 %v1449
  %1720 = vmatprep.subr.bf16.mxu0 0
  %1721 = vmatpush1.bf16.msra.mxu0 %v1450
  %1722 = vmatprep.subr.bf16.mxu0 0
  %1723 = vmatpush1.bf16.msra.mxu0 %v1451
  %1724 = vmatprep.mubr.bf16.mxu0 %v701
  %1725 = vmatmul.mubr.bf16.gmra.mrb[0].mxu0 %v700
  %v1726 = vpop.f32.mrb[0].mxu0
  %v1727 = vadd.f32 %v386, %v1726
  %v1728 = vpop.f32.mrb[0].mxu0
  %v1729 = vpop.f32.mrb[0].mxu0
  %v1730 = vadd.f32 %v386, %v1729
  %v1731 = vpop.f32.mrb[0].mxu0
  %1732 = vmatprep.mubr.bf16.mxu0 %v717
  %1733 = vmatmul.mubr.bf16.gmra.mrb[0].mxu0 %v716
  %v1734 = vpop.f32.mrb[0].mxu0
  %v1735 = vadd.f32 %v386, %v1734
  %v1736 = vpop.f32.mrb[0].mxu0
  %v1737 = vpop.f32.mrb[0].mxu0
  %v1738 = vadd.f32 %v386, %v1737
  %v1739 = vpop.f32.mrb[0].mxu0
  %1740 = vmatprep.mubr.bf16.mxu0 %v733
  %1741 = vmatmul.mubr.bf16.gmra.mrb[0].mxu0 %v732
  %v1742 = vpop.f32.mrb[0].mxu0
  %v1743 = vadd.f32 %v386, %v1742
  %v1744 = vpop.f32.mrb[0].mxu0
  %v1745 = vpop.f32.mrb[0].mxu0
  %v1746 = vadd.f32 %v386, %v1745
  %v1747 = vpop.f32.mrb[0].mxu0
  %1748 = vmatprep.mubr.bf16.mxu0 %v749
  %1749 = vmatmul.mubr.bf16.gmra.mrb[0].mxu0 %v748
  %v1750 = vpop.f32.mrb[0].mxu0
  %v1751 = vadd.f32 %v386, %v1750
  %v1752 = vpop.f32.mrb[0].mxu0
  %v1753 = vpop.f32.mrb[0].mxu0
  %v1754 = vadd.f32 %v386, %v1753
  %v1755 = vpop.f32.mrb[0].mxu0
  %1756 = vmatprep.mubr.bf16.mxu0 %v765
  %1757 = vmatmul.mubr.bf16.gmra.mrb[0].mxu0 %v764
  %v1758 = vpop.f32.mrb[0].mxu0
  %v1759 = vadd.f32 %v386, %v1758
  %v1760 = vpop.f32.mrb[0].mxu0
  %v1761 = vpop.f32.mrb[0].mxu0
  %v1762 = vadd.f32 %v386, %v1761
  %v1763 = vpop.f32.mrb[0].mxu0
  %1764 = vmatprep.mubr.bf16.mxu0 %v781
  %1765 = vmatmul.mubr.bf16.gmra.mrb[0].mxu0 %v780
  %v1766 = vpop.f32.mrb[0].mxu0
  %v1767 = vadd.f32 %v386, %v1766
  %v1768 = vpop.f32.mrb[0].mxu0
  %v1769 = vpop.f32.mrb[0].mxu0
  %v1770 = vadd.f32 %v386, %v1769
  %v1771 = vpop.f32.mrb[0].mxu0
  %1772 = vmatprep.mubr.bf16.mxu0 %v797
  %1773 = vmatmul.mubr.bf16.gmra.mrb[0].mxu0 %v796
  %v1774 = vpop.f32.mrb[0].mxu0
  %v1775 = vadd.f32 %v386, %v1774
  %v1776 = vpop.f32.mrb[0].mxu0
  %v1777 = vpop.f32.mrb[0].mxu0
  %v1778 = vpop.f32.mrb[0].mxu0
  %1779 = vdwg.mxu0
  %1780 = vmatprep.subr.bf16.mxu0 0
  %1781 = vmatpush1.bf16.msra.mxu0 %v1452
  %1782 = vmatprep.subr.bf16.mxu0 0
  %1783 = vmatpush1.bf16.msra.mxu0 %v1453
  %1784 = vmatprep.subr.bf16.mxu0 0
  %1785 = vmatpush1.bf16.msra.mxu0 %v1454
  %1786 = vmatprep.subr.bf16.mxu0 0
  %1787 = vmatpush1.bf16.msra.mxu0 %v1455
  %1788 = vmatprep.subr.bf16.mxu0 0
  %1789 = vmatpush1.bf16.msra.mxu0 %v1456
  %1790 = vmatprep.subr.bf16.mxu0 0
  %1791 = vmatpush1.bf16.msra.mxu0 %v1457
  %1792 = vmatprep.subr.bf16.mxu0 0
  %1793 = vmatpush1.bf16.msra.mxu0 %v1458
  %1794 = vmatprep.subr.bf16.mxu0 0
  %1795 = vmatpush1.bf16.msra.mxu0 %v1459
  %1796 = vmatprep.subr.bf16.mxu0 0
  %1797 = vmatpush1.bf16.msra.mxu0 %v1460
  %1798 = vmatprep.subr.bf16.mxu0 0
  %1799 = vmatpush1.bf16.msra.mxu0 %v1461
  %1800 = vmatprep.subr.bf16.mxu0 0
  %1801 = vmatpush1.bf16.msra.mxu0 %v1462
  %1802 = vmatprep.subr.bf16.mxu0 0
  %1803 = vmatpush1.bf16.msra.mxu0 %v1463
  %1804 = vmatprep.subr.bf16.mxu0 0
  %1805 = vmatpush1.bf16.msra.mxu0 %v1464
  %1806 = vmatprep.subr.bf16.mxu0 0
  %1807 = vmatpush1.bf16.msra.mxu0 %v1465
  %1808 = vmatprep.subr.bf16.mxu0 0
  %1809 = vmatpush1.bf16.msra.mxu0 %v1466
  %1810 = vmatprep.subr.bf16.mxu0 0
  %1811 = vmatpush1.bf16.msra.mxu0 %v1467
  %1812 = vmatprep.mubr.bf16.mxu0 %v703
  %1813 = vmatmul.mubr.bf16.gmra.mrb[0].mxu0 %v702
  %v1814 = vpop.f32.mrb[0].mxu0
  %v1815 = vadd.f32 %v1727, %v1814
  %v1816 = vpop.f32.mrb[0].mxu0
  %v1817 = vpop.f32.mrb[0].mxu0
  %v1818 = vadd.f32 %v1730, %v1817
  %v1819 = vpop.f32.mrb[0].mxu0
  %1820 = vmatprep.mubr.bf16.mxu0 %v719
  %1821 = vmatmul.mubr.bf16.gmra.mrb[0].mxu0 %v718
  %v1822 = vpop.f32.mrb[0].mxu0
  %v1823 = vadd.f32 %v1735, %v1822
  %v1824 = vpop.f32.mrb[0].mxu0
  %v1825 = vpop.f32.mrb[0].mxu0
  %v1826 = vadd.f32 %v1738, %v1825
  %v1827 = vpop.f32.mrb[0].mxu0
  %1828 = vmatprep.mubr.bf16.mxu0 %v735
  %1829 = vmatmul.mubr.bf16.gmra.mrb[0].mxu0 %v734
  %v1830 = vpop.f32.mrb[0].mxu0
  %v1831 = vadd.f32 %v1743, %v1830
  %v1832 = vpop.f32.mrb[0].mxu0
  %v1833 = vpop.f32.mrb[0].mxu0
  %v1834 = vadd.f32 %v1746, %v1833
  %v1835 = vpop.f32.mrb[0].mxu0
  %1836 = vmatprep.mubr.bf16.mxu0 %v751
  %1837 = vmatmul.mubr.bf16.gmra.mrb[0].mxu0 %v750
  %v1838 = vpop.f32.mrb[0].mxu0
  %v1839 = vadd.f32 %v1751, %v1838
  %v1840 = vpop.f32.mrb[0].mxu0
  %v1841 = vpop.f32.mrb[0].mxu0
  %v1842 = vadd.f32 %v1754, %v1841
  %v1843 = vpop.f32.mrb[0].mxu0
  %1844 = vmatprep.mubr.bf16.mxu0 %v767
  %1845 = vmatmul.mubr.bf16.gmra.mrb[0].mxu0 %v766
  %v1846 = vpop.f32.mrb[0].mxu0
  %v1847 = vadd.f32 %v1759, %v1846
  %v1848 = vpop.f32.mrb[0].mxu0
  %v1849 = vpop.f32.mrb[0].mxu0
  %v1850 = vadd.f32 %v1762, %v1849
  %v1851 = vpop.f32.mrb[0].mxu0
  %1852 = vmatprep.mubr.bf16.mxu0 %v783
  %1853 = vmatmul.mubr.bf16.gmra.mrb[0].mxu0 %v782
  %v1854 = vpop.f32.mrb[0].mxu0
  %v1855 = vadd.f32 %v1767, %v1854
  %v1856 = vpop.f32.mrb[0].mxu0
  %v1857 = vpop.f32.mrb[0].mxu0
  %v1858 = vadd.f32 %v1770, %v1857
  %v1859 = vpop.f32.mrb[0].mxu0
  %1860 = vmatprep.mubr.bf16.mxu0 %v799
  %1861 = vmatmul.mubr.bf16.gmra.mrb[0].mxu0 %v798
  %v1862 = vpop.f32.mrb[0].mxu0
  %v1863 = vadd.f32 %v1775, %v1862
  %v1864 = vpop.f32.mrb[0].mxu0
  %v1865 = vpop.f32.mrb[0].mxu0
  %v1866 = vpop.f32.mrb[0].mxu0
  %1867 = vdwg.mxu0
  %1868 = vmatprep.subr.bf16.mxu0 0
  %1869 = vmatpush1.bf16.msra.mxu0 %v1468
  %1870 = vmatprep.subr.bf16.mxu0 0
  %1871 = vmatpush1.bf16.msra.mxu0 %v1469
  %1872 = vmatprep.subr.bf16.mxu0 0
  %1873 = vmatpush1.bf16.msra.mxu0 %v1470
  %1874 = vmatprep.subr.bf16.mxu0 0
  %1875 = vmatpush1.bf16.msra.mxu0 %v1471
  %1876 = vmatprep.subr.bf16.mxu0 0
  %1877 = vmatpush1.bf16.msra.mxu0 %v1472
  %1878 = vmatprep.subr.bf16.mxu0 0
  %1879 = vmatpush1.bf16.msra.mxu0 %v1473
  %1880 = vmatprep.subr.bf16.mxu0 0
  %1881 = vmatpush1.bf16.msra.mxu0 %v1474
  %1882 = vmatprep.subr.bf16.mxu0 0
  %1883 = vmatpush1.bf16.msra.mxu0 %v1475
  %1884 = vmatprep.subr.bf16.mxu0 0
  %1885 = vmatpush1.bf16.msra.mxu0 %v1476
  %1886 = vmatprep.subr.bf16.mxu0 0
  %1887 = vmatpush1.bf16.msra.mxu0 %v1477
  %1888 = vmatprep.subr.bf16.mxu0 0
  %1889 = vmatpush1.bf16.msra.mxu0 %v1478
  %1890 = vmatprep.subr.bf16.mxu0 0
  %1891 = vmatpush1.bf16.msra.mxu0 %v1479
  %1892 = vmatprep.subr.bf16.mxu0 0
  %1893 = vmatpush1.bf16.msra.mxu0 %v1480
  %1894 = vmatprep.subr.bf16.mxu0 0
  %1895 = vmatpush1.bf16.msra.mxu0 %v1481
  %1896 = vmatprep.subr.bf16.mxu0 0
  %1897 = vmatpush1.bf16.msra.mxu0 %v1482
  %1898 = vmatprep.subr.bf16.mxu0 0
  %1899 = vmatpush1.bf16.msra.mxu0 %v1483
  %1900 = vmatprep.mubr.bf16.mxu0 %v705
  %1901 = vmatmul.mubr.bf16.gmra.mrb[0].mxu0 %v704
  %v1902 = vpop.f32.mrb[0].mxu0
  %v1903 = vadd.f32 %v1815, %v1902
  %v1904 = vpop.f32.mrb[0].mxu0
  %v1905 = vpop.f32.mrb[0].mxu0
  %v1906 = vadd.f32 %v1818, %v1905
  %v1907 = vpop.f32.mrb[0].mxu0
  %1908 = vmatprep.mubr.bf16.mxu0 %v721
  %1909 = vmatmul.mubr.bf16.gmra.mrb[0].mxu0 %v720
  %v1910 = vpop.f32.mrb[0].mxu0
  %v1911 = vadd.f32 %v1823, %v1910
  %v1912 = vpop.f32.mrb[0].mxu0
  %v1913 = vpop.f32.mrb[0].mxu0
  %v1914 = vadd.f32 %v1826, %v1913
  %v1915 = vpop.f32.mrb[0].mxu0
  %1916 = vmatprep.mubr.bf16.mxu0 %v737
  %1917 = vmatmul.mubr.bf16.gmra.mrb[0].mxu0 %v736
  %v1918 = vpop.f32.mrb[0].mxu0
  %v1919 = vadd.f32 %v1831, %v1918
  %v1920 = vpop.f32.mrb[0].mxu0
  %v1921 = vpop.f32.mrb[0].mxu0
  %v1922 = vadd.f32 %v1834, %v1921
  %v1923 = vpop.f32.mrb[0].mxu0
  %1924 = vmatprep.mubr.bf16.mxu0 %v753
  %1925 = vmatmul.mubr.bf16.gmra.mrb[0].mxu0 %v752
  %v1926 = vpop.f32.mrb[0].mxu0
  %v1927 = vadd.f32 %v1839, %v1926
  %v1928 = vpop.f32.mrb[0].mxu0
  %v1929 = vpop.f32.mrb[0].mxu0
  %v1930 = vadd.f32 %v1842, %v1929
  %v1931 = vpop.f32.mrb[0].mxu0
  %1932 = vmatprep.mubr.bf16.mxu0 %v769
  %1933 = vmatmul.mubr.bf16.gmra.mrb[0].mxu0 %v768
  %v1934 = vpop.f32.mrb[0].mxu0
  %v1935 = vadd.f32 %v1847, %v1934
  %v1936 = vpop.f32.mrb[0].mxu0
  %v1937 = vpop.f32.mrb[0].mxu0
  %v1938 = vadd.f32 %v1850, %v1937
  %v1939 = vpop.f32.mrb[0].mxu0
  %1940 = vmatprep.mubr.bf16.mxu0 %v785
  %1941 = vmatmul.mubr.bf16.gmra.mrb[0].mxu0 %v784
  %v1942 = vpop.f32.mrb[0].mxu0
  %v1943 = vadd.f32 %v1855, %v1942
  %v1944 = vpop.f32.mrb[0].mxu0
  %v1945 = vpop.f32.mrb[0].mxu0
  %v1946 = vadd.f32 %v1858, %v1945
  %v1947 = vpop.f32.mrb[0].mxu0
  %1948 = vmatprep.mubr.bf16.mxu0 %v801
  %1949 = vmatmul.mubr.bf16.gmra.mrb[0].mxu0 %v800
  %v1950 = vpop.f32.mrb[0].mxu0
  %v1951 = vadd.f32 %v1863, %v1950
  %v1952 = vpop.f32.mrb[0].mxu0
  %v1953 = vpop.f32.mrb[0].mxu0
  %v1954 = vpop.f32.mrb[0].mxu0
  %1955 = vdwg.mxu0
  %1956 = vmatprep.subr.bf16.mxu0 0
  %1957 = vmatpush1.bf16.msra.mxu0 %v1484
  %1958 = vmatprep.subr.bf16.mxu0 0
  %1959 = vmatpush1.bf16.msra.mxu0 %v1485
  %1960 = vmatprep.subr.bf16.mxu0 0
  %1961 = vmatpush1.bf16.msra.mxu0 %v1486
  %1962 = vmatprep.subr.bf16.mxu0 0
  %1963 = vmatpush1.bf16.msra.mxu0 %v1487
  %1964 = vmatprep.subr.bf16.mxu0 0
  %1965 = vmatpush1.bf16.msra.mxu0 %v1488
  %1966 = vmatprep.subr.bf16.mxu0 0
  %1967 = vmatpush1.bf16.msra.mxu0 %v1489
  %1968 = vmatprep.subr.bf16.mxu0 0
  %1969 = vmatpush1.bf16.msra.mxu0 %v1490
  %1970 = vmatprep.subr.bf16.mxu0 0
  %1971 = vmatpush1.bf16.msra.mxu0 %v1491
  %1972 = vmatprep.subr.bf16.mxu0 0
  %1973 = vmatpush1.bf16.msra.mxu0 %v1492
  %1974 = vmatprep.subr.bf16.mxu0 0
  %1975 = vmatpush1.bf16.msra.mxu0 %v1493
  %1976 = vmatprep.subr.bf16.mxu0 0
  %1977 = vmatpush1.bf16.msra.mxu0 %v1494
  %1978 = vmatprep.subr.bf16.mxu0 0
  %1979 = vmatpush1.bf16.msra.mxu0 %v1495
  %1980 = vmatprep.subr.bf16.mxu0 0
  %1981 = vmatpush1.bf16.msra.mxu0 %v1496
  %1982 = vmatprep.subr.bf16.mxu0 0
  %1983 = vmatpush1.bf16.msra.mxu0 %v1497
  %1984 = vmatprep.subr.bf16.mxu0 0
  %1985 = vmatpush1.bf16.msra.mxu0 %v1498
  %1986 = vmatprep.subr.bf16.mxu0 0
  %1987 = vmatpush1.bf16.msra.mxu0 %v1499
  %1988 = vmatprep.mubr.bf16.mxu0 %v707
  %1989 = vmatmul.mubr.bf16.gmra.mrb[0].mxu0 %v706
  %v1990 = vpop.f32.mrb[0].mxu0
  %v1991 = vadd.f32 %v1903, %v1990
  %v1992 = vpop.f32.mrb[0].mxu0
  %v1993 = vpop.f32.mrb[0].mxu0
  %v1994 = vadd.f32 %v1906, %v1993
  %v1995 = vpop.f32.mrb[0].mxu0
  %1996 = vmatprep.mubr.bf16.mxu0 %v723
  %1997 = vmatmul.mubr.bf16.gmra.mrb[0].mxu0 %v722
  %v1998 = vpop.f32.mrb[0].mxu0
  %v1999 = vadd.f32 %v1911, %v1998
  %v2000 = vpop.f32.mrb[0].mxu0
  %v2001 = vpop.f32.mrb[0].mxu0
  %v2002 = vadd.f32 %v1914, %v2001
  %v2003 = vpop.f32.mrb[0].mxu0
  %2004 = vmatprep.mubr.bf16.mxu0 %v739
  %2005 = vmatmul.mubr.bf16.gmra.mrb[0].mxu0 %v738
  %v2006 = vpop.f32.mrb[0].mxu0
  %v2007 = vadd.f32 %v1919, %v2006
  %v2008 = vpop.f32.mrb[0].mxu0
  %v2009 = vpop.f32.mrb[0].mxu0
  %v2010 = vadd.f32 %v1922, %v2009
  %v2011 = vpop.f32.mrb[0].mxu0
  %2012 = vmatprep.mubr.bf16.mxu0 %v755
  %2013 = vmatmul.mubr.bf16.gmra.mrb[0].mxu0 %v754
  %v2014 = vpop.f32.mrb[0].mxu0
  %v2015 = vadd.f32 %v1927, %v2014
  %v2016 = vpop.f32.mrb[0].mxu0
  %v2017 = vpop.f32.mrb[0].mxu0
  %v2018 = vadd.f32 %v1930, %v2017
  %v2019 = vpop.f32.mrb[0].mxu0
  %2020 = vmatprep.mubr.bf16.mxu0 %v771
  %2021 = vmatmul.mubr.bf16.gmra.mrb[0].mxu0 %v770
  %v2022 = vpop.f32.mrb[0].mxu0
  %v2023 = vadd.f32 %v1935, %v2022
  %v2024 = vpop.f32.mrb[0].mxu0
  %v2025 = vpop.f32.mrb[0].mxu0
  %v2026 = vadd.f32 %v1938, %v2025
  %v2027 = vpop.f32.mrb[0].mxu0
  %2028 = vmatprep.mubr.bf16.mxu0 %v787
  %2029 = vmatmul.mubr.bf16.gmra.mrb[0].mxu0 %v786
  %v2030 = vpop.f32.mrb[0].mxu0
  %v2031 = vadd.f32 %v1943, %v2030
  %v2032 = vpop.f32.mrb[0].mxu0
  %v2033 = vpop.f32.mrb[0].mxu0
  %v2034 = vadd.f32 %v1946, %v2033
  %v2035 = vpop.f32.mrb[0].mxu0
  %2036 = vmatprep.mubr.bf16.mxu0 %v803
  %2037 = vmatmul.mubr.bf16.gmra.mrb[0].mxu0 %v802
  %v2038 = vpop.f32.mrb[0].mxu0
  %v2039 = vadd.f32 %v1951, %v2038
  %v2040 = vpop.f32.mrb[0].mxu0
  %v2041 = vpop.f32.mrb[0].mxu0
  %v2042 = vpop.f32.mrb[0].mxu0
  %2043 = vdwg.mxu0
  %2044 = vmatprep.subr.bf16.mxu0 0
  %2045 = vmatpush1.bf16.msra.mxu0 %v1500
  %2046 = vmatprep.subr.bf16.mxu0 0
  %2047 = vmatpush1.bf16.msra.mxu0 %v1501
  %2048 = vmatprep.subr.bf16.mxu0 0
  %2049 = vmatpush1.bf16.msra.mxu0 %v1502
  %2050 = vmatprep.subr.bf16.mxu0 0
  %2051 = vmatpush1.bf16.msra.mxu0 %v1503
  %2052 = vmatprep.subr.bf16.mxu0 0
  %2053 = vmatpush1.bf16.msra.mxu0 %v1504
  %2054 = vmatprep.subr.bf16.mxu0 0
  %2055 = vmatpush1.bf16.msra.mxu0 %v1505
  %2056 = vmatprep.subr.bf16.mxu0 0
  %2057 = vmatpush1.bf16.msra.mxu0 %v1506
  %2058 = vmatprep.subr.bf16.mxu0 0
  %2059 = vmatpush1.bf16.msra.mxu0 %v1507
  %2060 = vmatprep.subr.bf16.mxu0 0
  %2061 = vmatpush1.bf16.msra.mxu0 %v1508
  %2062 = vmatprep.subr.bf16.mxu0 0
  %2063 = vmatpush1.bf16.msra.mxu0 %v1509
  %2064 = vmatprep.subr.bf16.mxu0 0
  %2065 = vmatpush1.bf16.msra.mxu0 %v1510
  %2066 = vmatprep.subr.bf16.mxu0 0
  %2067 = vmatpush1.bf16.msra.mxu0 %v1511
  %2068 = vmatprep.subr.bf16.mxu0 0
  %2069 = vmatpush1.bf16.msra.mxu0 %v1512
  %2070 = vmatprep.subr.bf16.mxu0 0
  %2071 = vmatpush1.bf16.msra.mxu0 %v1513
  %2072 = vmatprep.subr.bf16.mxu0 0
  %2073 = vmatpush1.bf16.msra.mxu0 %v1514
  %2074 = vmatprep.subr.bf16.mxu0 0
  %2075 = vmatpush1.bf16.msra.mxu0 %v1515
  %2076 = vmatprep.mubr.bf16.mxu0 %v709
  %2077 = vmatmul.mubr.bf16.gmra.mrb[0].mxu0 %v708
  %v2078 = vpop.f32.mrb[0].mxu0
  %v2079 = vadd.f32 %v1991, %v2078
  %v2080 = vpop.f32.mrb[0].mxu0
  %v2081 = vpop.f32.mrb[0].mxu0
  %v2082 = vadd.f32 %v1994, %v2081
  %v2083 = vpop.f32.mrb[0].mxu0
  %2084 = vmatprep.mubr.bf16.mxu0 %v725
  %2085 = vmatmul.mubr.bf16.gmra.mrb[0].mxu0 %v724
  %v2086 = vpop.f32.mrb[0].mxu0
  %v2087 = vadd.f32 %v1999, %v2086
  %v2088 = vpop.f32.mrb[0].mxu0
  %v2089 = vpop.f32.mrb[0].mxu0
  %v2090 = vadd.f32 %v2002, %v2089
  %v2091 = vpop.f32.mrb[0].mxu0
  %2092 = vmatprep.mubr.bf16.mxu0 %v741
  %2093 = vmatmul.mubr.bf16.gmra.mrb[0].mxu0 %v740
  %v2094 = vpop.f32.mrb[0].mxu0
  %v2095 = vadd.f32 %v2007, %v2094
  %v2096 = vpop.f32.mrb[0].mxu0
  %v2097 = vpop.f32.mrb[0].mxu0
  %v2098 = vadd.f32 %v2010, %v2097
  %v2099 = vpop.f32.mrb[0].mxu0
  %2100 = vmatprep.mubr.bf16.mxu0 %v757
  %2101 = vmatmul.mubr.bf16.gmra.mrb[0].mxu0 %v756
  %v2102 = vpop.f32.mrb[0].mxu0
  %v2103 = vadd.f32 %v2015, %v2102
  %v2104 = vpop.f32.mrb[0].mxu0
  %v2105 = vpop.f32.mrb[0].mxu0
  %v2106 = vadd.f32 %v2018, %v2105
  %v2107 = vpop.f32.mrb[0].mxu0
  %2108 = vmatprep.mubr.bf16.mxu0 %v773
  %2109 = vmatmul.mubr.bf16.gmra.mrb[0].mxu0 %v772
  %v2110 = vpop.f32.mrb[0].mxu0
  %v2111 = vadd.f32 %v2023, %v2110
  %v2112 = vpop.f32.mrb[0].mxu0
  %v2113 = vpop.f32.mrb[0].mxu0
  %v2114 = vadd.f32 %v2026, %v2113
  %v2115 = vpop.f32.mrb[0].mxu0
  %2116 = vmatprep.mubr.bf16.mxu0 %v789
  %2117 = vmatmul.mubr.bf16.gmra.mrb[0].mxu0 %v788
  %v2118 = vpop.f32.mrb[0].mxu0
  %v2119 = vadd.f32 %v2031, %v2118
  %v2120 = vpop.f32.mrb[0].mxu0
  %v2121 = vpop.f32.mrb[0].mxu0
  %v2122 = vadd.f32 %v2034, %v2121
  %v2123 = vpop.f32.mrb[0].mxu0
  %2124 = vmatprep.mubr.bf16.mxu0 %v805
  %2125 = vmatmul.mubr.bf16.gmra.mrb[0].mxu0 %v804
  %v2126 = vpop.f32.mrb[0].mxu0
  %v2127 = vadd.f32 %v2039, %v2126
  %v2128 = vpop.f32.mrb[0].mxu0
  %v2129 = vpop.f32.mrb[0].mxu0
  %v2130 = vpop.f32.mrb[0].mxu0
  %2131 = vdwg.mxu0
  %2132 = vmatprep.subr.bf16.mxu0 0
  %2133 = vmatpush1.bf16.msra.mxu0 %v1516
  %2134 = vmatprep.subr.bf16.mxu0 0
  %2135 = vmatpush1.bf16.msra.mxu0 %v1517
  %2136 = vmatprep.subr.bf16.mxu0 0
  %2137 = vmatpush1.bf16.msra.mxu0 %v1518
  %2138 = vmatprep.subr.bf16.mxu0 0
  %2139 = vmatpush1.bf16.msra.mxu0 %v1519
  %2140 = vmatprep.subr.bf16.mxu0 0
  %2141 = vmatpush1.bf16.msra.mxu0 %v1520
  %2142 = vmatprep.subr.bf16.mxu0 0
  %2143 = vmatpush1.bf16.msra.mxu0 %v1521
  %2144 = vmatprep.subr.bf16.mxu0 0
  %2145 = vmatpush1.bf16.msra.mxu0 %v1522
  %2146 = vmatprep.subr.bf16.mxu0 0
  %2147 = vmatpush1.bf16.msra.mxu0 %v1523
  %2148 = vmatprep.subr.bf16.mxu0 0
  %2149 = vmatpush1.bf16.msra.mxu0 %v1524
  %2150 = vmatprep.subr.bf16.mxu0 0
  %2151 = vmatpush1.bf16.msra.mxu0 %v1525
  %2152 = vmatprep.subr.bf16.mxu0 0
  %2153 = vmatpush1.bf16.msra.mxu0 %v1526
  %2154 = vmatprep.subr.bf16.mxu0 0
  %2155 = vmatpush1.bf16.msra.mxu0 %v1527
  %2156 = vmatprep.subr.bf16.mxu0 0
  %2157 = vmatpush1.bf16.msra.mxu0 %v1528
  %2158 = vmatprep.subr.bf16.mxu0 0
  %2159 = vmatpush1.bf16.msra.mxu0 %v1529
  %2160 = vmatprep.subr.bf16.mxu0 0
  %2161 = vmatpush1.bf16.msra.mxu0 %v1530
  %2162 = vmatprep.subr.bf16.mxu0 0
  %2163 = vmatpush1.bf16.msra.mxu0 %v1531
  %2164 = vmatprep.mubr.bf16.mxu0 %v711
  %2165 = vmatmul.mubr.bf16.gmra.mrb[0].mxu0 %v710
  %v2166 = vpop.f32.mrb[0].mxu0
  %v2167 = vadd.f32 %v2079, %v2166
  %v2168 = vpop.f32.mrb[0].mxu0
  %v2169 = vpop.f32.mrb[0].mxu0
  %v2170 = vadd.f32 %v2082, %v2169
  %v2171 = vpop.f32.mrb[0].mxu0
  %2172 = vmatprep.mubr.bf16.mxu0 %v727
  %2173 = vmatmul.mubr.bf16.gmra.mrb[0].mxu0 %v726
  %v2174 = vpop.f32.mrb[0].mxu0
  %v2175 = vadd.f32 %v2087, %v2174
  %v2176 = vpop.f32.mrb[0].mxu0
  %v2177 = vpop.f32.mrb[0].mxu0
  %v2178 = vadd.f32 %v2090, %v2177
  %v2179 = vpop.f32.mrb[0].mxu0
  %2180 = vmatprep.mubr.bf16.mxu0 %v743
  %2181 = vmatmul.mubr.bf16.gmra.mrb[0].mxu0 %v742
  %v2182 = vpop.f32.mrb[0].mxu0
  %v2183 = vadd.f32 %v2095, %v2182
  %v2184 = vpop.f32.mrb[0].mxu0
  %v2185 = vpop.f32.mrb[0].mxu0
  %v2186 = vadd.f32 %v2098, %v2185
  %v2187 = vpop.f32.mrb[0].mxu0
  %2188 = vmatprep.mubr.bf16.mxu0 %v759
  %2189 = vmatmul.mubr.bf16.gmra.mrb[0].mxu0 %v758
  %v2190 = vpop.f32.mrb[0].mxu0
  %v2191 = vadd.f32 %v2103, %v2190
  %v2192 = vpop.f32.mrb[0].mxu0
  %v2193 = vpop.f32.mrb[0].mxu0
  %v2194 = vadd.f32 %v2106, %v2193
  %v2195 = vpop.f32.mrb[0].mxu0
  %2196 = vmatprep.mubr.bf16.mxu0 %v775
  %2197 = vmatmul.mubr.bf16.gmra.mrb[0].mxu0 %v774
  %v2198 = vpop.f32.mrb[0].mxu0
  %v2199 = vadd.f32 %v2111, %v2198
  %v2200 = vpop.f32.mrb[0].mxu0
  %v2201 = vpop.f32.mrb[0].mxu0
  %v2202 = vadd.f32 %v2114, %v2201
  %v2203 = vpop.f32.mrb[0].mxu0
  %2204 = vmatprep.mubr.bf16.mxu0 %v791
  %2205 = vmatmul.mubr.bf16.gmra.mrb[0].mxu0 %v790
  %v2206 = vpop.f32.mrb[0].mxu0
  %v2207 = vadd.f32 %v2119, %v2206
  %v2208 = vpop.f32.mrb[0].mxu0
  %v2209 = vpop.f32.mrb[0].mxu0
  %v2210 = vadd.f32 %v2122, %v2209
  %v2211 = vpop.f32.mrb[0].mxu0
  %2212 = vmatprep.mubr.bf16.mxu0 %v807
  %2213 = vmatmul.mubr.bf16.gmra.mrb[0].mxu0 %v806
  %v2214 = vpop.f32.mrb[0].mxu0
  %v2215 = vadd.f32 %v2127, %v2214
  %v2216 = vpop.f32.mrb[0].mxu0
  %v2217 = vpop.f32.mrb[0].mxu0
  %v2218 = vpop.f32.mrb[0].mxu0
  %2219 = vdwg.mxu0
  %2220 = vmatprep.subr.bf16.mxu0 0
  %2221 = vmatpush1.bf16.msra.mxu0 %v1532
  %2222 = vmatprep.subr.bf16.mxu0 0
  %2223 = vmatpush1.bf16.msra.mxu0 %v1533
  %2224 = vmatprep.subr.bf16.mxu0 0
  %2225 = vmatpush1.bf16.msra.mxu0 %v1534
  %2226 = vmatprep.subr.bf16.mxu0 0
  %2227 = vmatpush1.bf16.msra.mxu0 %v1535
  %2228 = vmatprep.subr.bf16.mxu0 0
  %2229 = vmatpush1.bf16.msra.mxu0 %v1536
  %2230 = vmatprep.subr.bf16.mxu0 0
  %2231 = vmatpush1.bf16.msra.mxu0 %v1537
  %2232 = vmatprep.subr.bf16.mxu0 0
  %2233 = vmatpush1.bf16.msra.mxu0 %v1538
  %2234 = vmatprep.subr.bf16.mxu0 0
  %2235 = vmatpush1.bf16.msra.mxu0 %v1539
  %2236 = vmatprep.subr.bf16.mxu0 0
  %2237 = vmatpush1.bf16.msra.mxu0 %v1540
  %2238 = vmatprep.subr.bf16.mxu0 0
  %2239 = vmatpush1.bf16.msra.mxu0 %v1541
  %2240 = vmatprep.subr.bf16.mxu0 0
  %2241 = vmatpush1.bf16.msra.mxu0 %v1542
  %2242 = vmatprep.subr.bf16.mxu0 0
  %2243 = vmatpush1.bf16.msra.mxu0 %v1543
  %2244 = vmatprep.subr.bf16.mxu0 0
  %2245 = vmatpush1.bf16.msra.mxu0 %v1544
  %2246 = vmatprep.subr.bf16.mxu0 0
  %2247 = vmatpush1.bf16.msra.mxu0 %v1545
  %2248 = vmatprep.subr.bf16.mxu0 0
  %2249 = vmatpush1.bf16.msra.mxu0 %v1546
  %2250 = vmatprep.subr.bf16.mxu0 0
  %2251 = vmatpush1.bf16.msra.mxu0 %v1547
  %2252 = vmatprep.mubr.bf16.mxu0 %v713
  %2253 = vmatmul.mubr.bf16.gmra.mrb[0].mxu0 %v712
  %v2254 = vpop.f32.mrb[0].mxu0
  %v2255 = vadd.f32 %v2167, %v2254
  %v2256 = vpop.f32.mrb[0].mxu0
  %v2257 = vpop.f32.mrb[0].mxu0
  %v2258 = vadd.f32 %v2170, %v2257
  %v2259 = vpop.f32.mrb[0].mxu0
  %2260 = vmatprep.mubr.bf16.mxu0 %v729
  %2261 = vmatmul.mubr.bf16.gmra.mrb[0].mxu0 %v728
  %v2262 = vpop.f32.mrb[0].mxu0
  %v2263 = vadd.f32 %v2175, %v2262
  %v2264 = vpop.f32.mrb[0].mxu0
  %v2265 = vpop.f32.mrb[0].mxu0
  %v2266 = vadd.f32 %v2178, %v2265
  %v2267 = vpop.f32.mrb[0].mxu0
  %2268 = vmatprep.mubr.bf16.mxu0 %v745
  %2269 = vmatmul.mubr.bf16.gmra.mrb[0].mxu0 %v744
  %v2270 = vpop.f32.mrb[0].mxu0
  %v2271 = vadd.f32 %v2183, %v2270
  %v2272 = vpop.f32.mrb[0].mxu0
  %v2273 = vpop.f32.mrb[0].mxu0
  %v2274 = vadd.f32 %v2186, %v2273
  %v2275 = vpop.f32.mrb[0].mxu0
  %2276 = vmatprep.mubr.bf16.mxu0 %v761
  %2277 = vmatmul.mubr.bf16.gmra.mrb[0].mxu0 %v760
  %v2278 = vpop.f32.mrb[0].mxu0
  %v2279 = vadd.f32 %v2191, %v2278
  %v2280 = vpop.f32.mrb[0].mxu0
  %v2281 = vpop.f32.mrb[0].mxu0
  %v2282 = vadd.f32 %v2194, %v2281
  %v2283 = vpop.f32.mrb[0].mxu0
  %2284 = vmatprep.mubr.bf16.mxu0 %v777
  %2285 = vmatmul.mubr.bf16.gmra.mrb[0].mxu0 %v776
  %v2286 = vpop.f32.mrb[0].mxu0
  %v2287 = vadd.f32 %v2199, %v2286
  %v2288 = vpop.f32.mrb[0].mxu0
  %v2289 = vpop.f32.mrb[0].mxu0
  %v2290 = vadd.f32 %v2202, %v2289
  %v2291 = vpop.f32.mrb[0].mxu0
  %2292 = vmatprep.mubr.bf16.mxu0 %v793
  %2293 = vmatmul.mubr.bf16.gmra.mrb[0].mxu0 %v792
  %v2294 = vpop.f32.mrb[0].mxu0
  %v2295 = vadd.f32 %v2207, %v2294
  %v2296 = vpop.f32.mrb[0].mxu0
  %v2297 = vpop.f32.mrb[0].mxu0
  %v2298 = vadd.f32 %v2210, %v2297
  %v2299 = vpop.f32.mrb[0].mxu0
  %2300 = vmatprep.mubr.bf16.mxu0 %v809
  %2301 = vmatmul.mubr.bf16.gmra.mrb[0].mxu0 %v808
  %v2302 = vpop.f32.mrb[0].mxu0
  %v2303 = vadd.f32 %v2215, %v2302
  %v2304 = vpop.f32.mrb[0].mxu0
  %v2305 = vpop.f32.mrb[0].mxu0
  %v2306 = vpop.f32.mrb[0].mxu0
  %2307 = vdwg.mxu0
  %2308 = vmatprep.subr.bf16.mxu0 0
  %2309 = vmatpush1.bf16.msra.mxu0 %v1548
  %2310 = vmatprep.subr.bf16.mxu0 0
  %2311 = vmatpush1.bf16.msra.mxu0 %v1549
  %2312 = vmatprep.subr.bf16.mxu0 0
  %2313 = vmatpush1.bf16.msra.mxu0 %v1550
  %2314 = vmatprep.subr.bf16.mxu0 0
  %2315 = vmatpush1.bf16.msra.mxu0 %v1551
  %2316 = vmatprep.subr.bf16.mxu0 0
  %2317 = vmatpush1.bf16.msra.mxu0 %v1552
  %2318 = vmatprep.subr.bf16.mxu0 0
  %2319 = vmatpush1.bf16.msra.mxu0 %v1553
  %2320 = vmatprep.subr.bf16.mxu0 0
  %2321 = vmatpush1.bf16.msra.mxu0 %v1554
  %2322 = vmatprep.subr.bf16.mxu0 0
  %2323 = vmatpush1.bf16.msra.mxu0 %v1555
  %2324 = vmatprep.subr.bf16.mxu0 0
  %2325 = vmatpush1.bf16.msra.mxu0 %v1556
  %2326 = vmatprep.subr.bf16.mxu0 0
  %2327 = vmatpush1.bf16.msra.mxu0 %v1557
  %2328 = vmatprep.subr.bf16.mxu0 0
  %2329 = vmatpush1.bf16.msra.mxu0 %v1558
  %2330 = vmatprep.subr.bf16.mxu0 0
  %2331 = vmatpush1.bf16.msra.mxu0 %v1559
  %2332 = vmatprep.subr.bf16.mxu0 0
  %2333 = vmatpush1.bf16.msra.mxu0 %v1560
  %2334 = vmatprep.subr.bf16.mxu0 0
  %2335 = vmatpush1.bf16.msra.mxu0 %v1561
  %2336 = vmatprep.subr.bf16.mxu0 0
  %2337 = vmatpush1.bf16.msra.mxu0 %v1562
  %2338 = vmatprep.subr.bf16.mxu0 0
  %2339 = vmatpush1.bf16.msra.mxu0 %v1563
  %2340 = vmatprep.mubr.bf16.mxu0 %v715
  %2341 = vmatmul.mubr.bf16.gmra.mrb[0].mxu0 %v714
  %v2342 = vpop.f32.mrb[0].mxu0
  %v2343 = vadd.f32 %v2255, %v2342
  %v2344 = vpop.f32.mrb[0].mxu0
  %v2345 = vpop.f32.mrb[0].mxu0
  %v2346 = vadd.f32 %v2258, %v2345
  %v2347 = vpop.f32.mrb[0].mxu0
  %2348 = vmatprep.mubr.bf16.mxu0 %v731
  %2349 = vmatmul.mubr.bf16.gmra.mrb[0].mxu0 %v730
  %v2350 = vpop.f32.mrb[0].mxu0
  %v2351 = vadd.f32 %v2263, %v2350
  %v2352 = vpop.f32.mrb[0].mxu0
  %v2353 = vpop.f32.mrb[0].mxu0
  %v2354 = vadd.f32 %v2266, %v2353
  %v2355 = vpop.f32.mrb[0].mxu0
  %2356 = vmatprep.mubr.bf16.mxu0 %v747
  %2357 = vmatmul.mubr.bf16.gmra.mrb[0].mxu0 %v746
  %v2358 = vpop.f32.mrb[0].mxu0
  %v2359 = vadd.f32 %v2271, %v2358
  %v2360 = vpop.f32.mrb[0].mxu0
  %v2361 = vpop.f32.mrb[0].mxu0
  %v2362 = vadd.f32 %v2274, %v2361
  %v2363 = vpop.f32.mrb[0].mxu0
  %2364 = vmatprep.mubr.bf16.mxu0 %v763
  %2365 = vmatmul.mubr.bf16.gmra.mrb[0].mxu0 %v762
  %v2366 = vpop.f32.mrb[0].mxu0
  %v2367 = vadd.f32 %v2279, %v2366
  %v2368 = vpop.f32.mrb[0].mxu0
  %v2369 = vpop.f32.mrb[0].mxu0
  %v2370 = vadd.f32 %v2282, %v2369
  %v2371 = vpop.f32.mrb[0].mxu0
  %2372 = vmatprep.mubr.bf16.mxu0 %v779
  %2373 = vmatmul.mubr.bf16.gmra.mrb[0].mxu0 %v778
  %v2374 = vpop.f32.mrb[0].mxu0
  %v2375 = vadd.f32 %v2287, %v2374
  %v2376 = vpop.f32.mrb[0].mxu0
  %v2377 = vpop.f32.mrb[0].mxu0
  %v2378 = vadd.f32 %v2290, %v2377
  %v2379 = vpop.f32.mrb[0].mxu0
  %2380 = vmatprep.mubr.bf16.mxu0 %v795
  %2381 = vmatmul.mubr.bf16.gmra.mrb[0].mxu0 %v794
  %v2382 = vpop.f32.mrb[0].mxu0
  %v2383 = vadd.f32 %v2295, %v2382
  %v2384 = vpop.f32.mrb[0].mxu0
  %v2385 = vpop.f32.mrb[0].mxu0
  %v2386 = vadd.f32 %v2298, %v2385
  %v2387 = vpop.f32.mrb[0].mxu0
  %2388 = vmatprep.mubr.bf16.mxu0 %v811
  %2389 = vmatmul.mubr.bf16.gmra.mrb[0].mxu0 %v810
  %v2390 = vpop.f32.mrb[0].mxu0
  %v2391 = vadd.f32 %v2303, %v2390
  %v2392 = vpop.f32.mrb[0].mxu0
  %v2393 = vpop.f32.mrb[0].mxu0
  %v2394 = vpop.f32.mrb[0].mxu0
  %2395 = vdwg.mxu0
  %v2396 = vadd.f32 %v2343, %v2346
  %v2397 = vadd.f32 %v2396, %v2351
  %v2398 = vadd.f32 %v2397, %v2354
  %v2399 = vadd.f32 %v2398, %v2359
  %v2400 = vadd.f32 %v2399, %v2362
  %v2401 = vadd.f32 %v2400, %v2367
  %v2402 = vadd.f32 %v2401, %v2370
  %v2403 = vadd.f32 %v2402, %v2375
  %v2404 = vadd.f32 %v2403, %v2378
  %v2405 = vadd.f32 %v2404, %v2383
  %v2406 = vadd.f32 %v2405, %v2386
  %vm2407 = vcmask 1041408
  %v2408 = vsel %vm2407, %v2391, 0.0
  %v2409 = vadd.f32 %v2406, %v2408
  %v2410 = vrot.slane %v2409, 4
  %v2411 = vadd.f32 %v2409, %v2410
  %v2412 = vrot.slane %v2411, 2
  %v2413 = vadd.f32 %v2411, %v2412
  %v2414 = vrot.slane %v2413, 1
  %v2415 = vadd.f32 %v2413, %v2414
  %v2416 = vmul.f32 %v2415, 0.010204081
  %v2417 = vmul.f32 %v2343, %v2343
  %v2418 = vmul.f32 %v2346, %v2346
  %v2419 = vmul.f32 %v2351, %v2351
  %v2420 = vmul.f32 %v2354, %v2354
  %v2421 = vmul.f32 %v2359, %v2359
  %v2422 = vmul.f32 %v2362, %v2362
  %v2423 = vmul.f32 %v2367, %v2367
  %v2424 = vmul.f32 %v2370, %v2370
  %v2425 = vmul.f32 %v2375, %v2375
  %v2426 = vmul.f32 %v2378, %v2378
  %v2427 = vmul.f32 %v2383, %v2383
  %v2428 = vmul.f32 %v2386, %v2386
  %v2429 = vmul.f32 %v2391, %v2391
  %v2430 = vadd.f32 %v2417, %v2418
  %v2431 = vadd.f32 %v2430, %v2419
  %v2432 = vadd.f32 %v2431, %v2420
  %v2433 = vadd.f32 %v2432, %v2421
  %v2434 = vadd.f32 %v2433, %v2422
  %v2435 = vadd.f32 %v2434, %v2423
  %v2436 = vadd.f32 %v2435, %v2424
  %v2437 = vadd.f32 %v2436, %v2425
  %v2438 = vadd.f32 %v2437, %v2426
  %v2439 = vadd.f32 %v2438, %v2427
  %v2440 = vadd.f32 %v2439, %v2428
  %v2441 = vsel %vm2407, %v2429, 0.0
  %v2442 = vadd.f32 %v2440, %v2441
  %v2443 = vrot.slane %v2442, 4
  %v2444 = vadd.f32 %v2442, %v2443
  %v2445 = vrot.slane %v2444, 2
  %v2446 = vadd.f32 %v2444, %v2445
  %v2447 = vrot.slane %v2446, 1
  %v2448 = vadd.f32 %v2446, %v2447
  %v2449 = vmul.f32 %v2448, 0.010204081
  %v2450 = vmul.f32 %v2416, %v2416
  %v2451 = vsub.f32 %v2449, %v2450
  %v2452 = vmax.f32 %v2451, 0.0
  %v2453 = vsub.f32 %v2343, %v2416
  %v2454 = vsub.f32 %v2346, %v2416
  %v2455 = vsub.f32 %v2351, %v2416
  %v2456 = vsub.f32 %v2354, %v2416
  %v2457 = vsub.f32 %v2359, %v2416
  %v2458 = vsub.f32 %v2362, %v2416
  %v2459 = vsub.f32 %v2367, %v2416
  %v2460 = vsub.f32 %v2370, %v2416
  %v2461 = vsub.f32 %v2375, %v2416
  %v2462 = vsub.f32 %v2378, %v2416
  %v2463 = vsub.f32 %v2383, %v2416
  %v2464 = vsub.f32 %v2386, %v2416
  %v2465 = vsub.f32 %v2391, %v2416
  %v2466 = vadd.f32 %v2452, 1e-05
  %v2467 = vrsqrt.pop %v2466
  %v2468 = vmul.f32 %v2453, %v2467
  %v2469 = vmul.f32 %v2454, %v2467
  %v2470 = vmul.f32 %v2455, %v2467
  %v2471 = vmul.f32 %v2456, %v2467
  %v2472 = vmul.f32 %v2457, %v2467
  %v2473 = vmul.f32 %v2458, %v2467
  %v2474 = vmul.f32 %v2459, %v2467
  %v2475 = vmul.f32 %v2460, %v2467
  %v2476 = vmul.f32 %v2461, %v2467
  %v2477 = vmul.f32 %v2462, %v2467
  %v2478 = vmul.f32 %v2463, %v2467
  %v2479 = vmul.f32 %v2464, %v2467
  %v2480 = vmul.f32 %v2465, %v2467
  %v2481 = vld [vmem:[%s3] sm:$0x1]
  %v2483 = vlaneseq
  %v2484 = vshrl.u32 %v2483, 7
  %v2485 = vsub.s32 0, %v2484
  %v2486 = vrot.slane %v2481, %v2485
  %v2488 = vmul.f32 %v2468, %v2486
  %v2489 = vmul.f32 %v2469, %v2486
  %v2490 = vmul.f32 %v2470, %v2486
  %v2491 = vmul.f32 %v2471, %v2486
  %v2492 = vmul.f32 %v2472, %v2486
  %v2493 = vmul.f32 %v2473, %v2486
  %v2494 = vmul.f32 %v2474, %v2486
  %v2495 = vmul.f32 %v2475, %v2486
  %v2496 = vmul.f32 %v2476, %v2486
  %v2497 = vmul.f32 %v2477, %v2486
  %v2498 = vmul.f32 %v2478, %v2486
  %v2499 = vmul.f32 %v2479, %v2486
  %v2500 = vmul.f32 %v2480, %v2486
  %v2501 = vld [vmem:[%s4] sm:$0x1]
  %v2503 = vlaneseq
  %v2504 = vshrl.u32 %v2503, 7
  %v2505 = vsub.s32 0, %v2504
  %v2506 = vrot.slane %v2501, %v2505
  %v2508 = vadd.f32 %v2488, %v2506
  %v2509 = vadd.f32 %v2489, %v2506
  %v2510 = vadd.f32 %v2490, %v2506
  %v2511 = vadd.f32 %v2491, %v2506
  %v2512 = vadd.f32 %v2492, %v2506
  %v2513 = vadd.f32 %v2493, %v2506
  %v2514 = vadd.f32 %v2494, %v2506
  %v2515 = vadd.f32 %v2495, %v2506
  %v2516 = vadd.f32 %v2496, %v2506
  %v2517 = vadd.f32 %v2497, %v2506
  %v2518 = vadd.f32 %v2498, %v2506
  %v2519 = vadd.f32 %v2499, %v2506
  %v2520 = vadd.f32 %v2500, %v2506
  %vm2521 = vcmp.gt.f32.partialorder %v2508, 0.0
  %vm2522 = vcmp.gt.f32.partialorder %v2509, 0.0
  %vm2523 = vcmp.gt.f32.partialorder %v2510, 0.0
  %vm2524 = vcmp.gt.f32.partialorder %v2511, 0.0
  %vm2525 = vcmp.gt.f32.partialorder %v2512, 0.0
  %vm2526 = vcmp.gt.f32.partialorder %v2513, 0.0
  %vm2527 = vcmp.gt.f32.partialorder %v2514, 0.0
  %vm2528 = vcmp.gt.f32.partialorder %v2515, 0.0
  %vm2529 = vcmp.gt.f32.partialorder %v2516, 0.0
  %vm2530 = vcmp.gt.f32.partialorder %v2517, 0.0
  %vm2531 = vcmp.gt.f32.partialorder %v2518, 0.0
  %vm2532 = vcmp.gt.f32.partialorder %v2519, 0.0
  %vm2533 = vcmp.gt.f32.partialorder %v2520, 0.0
  %v2534 = vmul.f32 %v2508, 0.2
  %v2535 = vmul.f32 %v2509, 0.2
  %v2536 = vmul.f32 %v2510, 0.2
  %v2537 = vmul.f32 %v2511, 0.2
  %v2538 = vmul.f32 %v2512, 0.2
  %v2539 = vmul.f32 %v2513, 0.2
  %v2540 = vmul.f32 %v2514, 0.2
  %v2541 = vmul.f32 %v2515, 0.2
  %v2542 = vmul.f32 %v2516, 0.2
  %v2543 = vmul.f32 %v2517, 0.2
  %v2544 = vmul.f32 %v2518, 0.2
  %v2545 = vmul.f32 %v2519, 0.2
  %v2546 = vmul.f32 %v2520, 0.2
  %v2547 = vsel %vm2521, %v2508, %v2534
  %v2548 = vsel %vm2522, %v2509, %v2535
  %v2549 = vsel %vm2523, %v2510, %v2536
  %v2550 = vsel %vm2524, %v2511, %v2537
  %v2551 = vsel %vm2525, %v2512, %v2538
  %v2552 = vsel %vm2526, %v2513, %v2539
  %v2553 = vsel %vm2527, %v2514, %v2540
  %v2554 = vsel %vm2528, %v2515, %v2541
  %v2555 = vsel %vm2529, %v2516, %v2542
  %v2556 = vsel %vm2530, %v2517, %v2543
  %v2557 = vsel %vm2531, %v2518, %v2544
  %v2558 = vsel %vm2532, %v2519, %v2545
  %v2559 = vsel %vm2533, %v2520, %v2546
  %v2560 = vpack.c.bf16 %v2548, %v2547
  %v2561 = vpack.c.bf16 %v2550, %v2549
  %v2562 = vpack.c.bf16 %v2552, %v2551
  %v2563 = vpack.c.bf16 %v2554, %v2553
  %v2564 = vpack.c.bf16 %v2556, %v2555
  %v2565 = vpack.c.bf16 %v2558, %v2557
  %v2566 = vpack.c.bf16 %v2559, %v2559
  %v2574 = vunpack.c.l.b16 %v2560
  %v2575 = vunpack.c.h.b16 %v2560
  %v2576 = vunpack.c.l.b16 %v2561
  %v2577 = vunpack.c.h.b16 %v2561
  %v2578 = vunpack.c.l.b16 %v2562
  %v2579 = vunpack.c.h.b16 %v2562
  %v2580 = vunpack.c.l.b16 %v2563
  %v2581 = vunpack.c.h.b16 %v2563
  %v2582 = vunpack.c.l.b16 %v2564
  %v2583 = vunpack.c.h.b16 %v2564
  %v2584 = vunpack.c.l.b16 %v2565
  %v2585 = vunpack.c.h.b16 %v2565
  %v2586 = vunpack.c.l.b16 %v2566
  %v2587 = vpack.c.b16 %v2574, %v2574
  %v2588 = vpack.c.b16 %v2575, %v2575
  %v2589 = vpack.c.b16 %v2576, %v2576
  %v2590 = vpack.c.b16 %v2577, %v2577
  %v2591 = vpack.c.b16 %v2578, %v2578
  %v2592 = vpack.c.b16 %v2579, %v2579
  %v2593 = vpack.c.b16 %v2580, %v2580
  %v2594 = vpack.c.b16 %v2581, %v2581
  %v2595 = vpack.c.b16 %v2582, %v2582
  %v2596 = vpack.c.b16 %v2583, %v2583
  %v2597 = vpack.c.b16 %v2584, %v2584
  %v2598 = vpack.c.b16 %v2585, %v2585
  %v2599 = vpack.c.b16 %v2586, %v2586
  %2613 = vst [vmem:[%s5] sm:$0xf] %v2587
  %2614 = vst [vmem:[%s5 + $0x4] sm:$0xf] %v2588
  %2615 = vst [vmem:[%s5 + $0x8] sm:$0xf] %v2589
  %2616 = vst [vmem:[%s5 + $0xc] sm:$0xf] %v2590
  %2617 = vst [vmem:[%s5 + $0x10] sm:$0xf] %v2591
  %2618 = vst [vmem:[%s5 + $0x14] sm:$0xf] %v2592
  %2619 = vst [vmem:[%s5 + $0x18] sm:$0xf] %v2593
  %2620 = vst [vmem:[%s5 + $0x1c] sm:$0xf] %v2594
  %2621 = vst [vmem:[%s5 + $0x20] sm:$0xf] %v2595
  %2622 = vst [vmem:[%s5 + $0x24] sm:$0xf] %v2596
  %2623 = vst [vmem:[%s5 + $0x28] sm:$0xf] %v2597
  %2624 = vst [vmem:[%s5 + $0x2c] sm:$0xf] %v2598
  %2625 = vst [vmem:[%s5 + $0x30] sm:$0x1] %v2599
  // Predicated region
  $region22: #{vae_forward.7} parent=0 // pred_check
    _
  $region23: #{vae_forward.7} parent=0 // pred_check_branch
    %2627 = sbr.rel (0) target = $region25
  $region24: #{vae_forward.7} parent=0 // pred_region
    _
  $region25: #{vae_forward.7} parent=0 // pred_fallthru
    _
  // Predicated region
  $region26: #{vae_forward.7} parent=0 // pred_check
    _
  $region27: #{vae_forward.7} parent=0 // pred_check_branch
    %2629 = sbr.rel (0) target = $region29
  $region28: #{vae_forward.7} parent=0 // pred_region
    _
  $region29: #{vae_forward.7} parent=0 // pred_fallthru
    _

// kernel: vae_forward.8
$region0: #{vae_forward.8}
  #allocation0 [shape = 'u32[]', space=smem, size = 0x4, offset = 0x4, fixed_abs, tag = 'smem constant byte address 0x4 - core index']
  #allocation1 [shape = 'u32[144,128]{1,0:T(1,128)}', space=vmem, size = 0x12000, scoped, tag = 'internal scratch']
  %s0 = inlined_call_operand.vmem [shape: bf16[98,1152], index: 0, kind: input, shape index: {}]
  %s1 = inlined_call_operand.vmem [shape: bf16[1152,128], index: 1, kind: input, shape index: {}]
  %s2 = inlined_call_operand.vmem [shape: f32[1,128], index: 2, kind: input, shape index: {}]
  %s3 = inlined_call_operand.vmem [shape: f32[1,128], index: 3, kind: input, shape index: {}]
  %s4 = inlined_call_operand.vmem [shape: f32[1,128], index: 4, kind: input, shape index: {}]
  %s5 = inlined_call_operand.vmem [shape: bf16[98,128], index: 5, kind: output, shape index: {}]
  %s6 = sld [smem:[#allocation0]]
  $region30: #{vae_forward.8} parent=0
    _
  %s8 = ssub.s32 1, %s6
  %s9 = scalar_select 0, %s8, %s6
  // Predicated region
  $region2: #{vae_forward.8} parent=0 // pred_check
    _
  $region3: #{vae_forward.8} parent=0 // pred_check_branch
    %11 = sbr.rel (0) target = $region5
  $region4: #{vae_forward.8} parent=0 // pred_region
    _
  $region5: #{vae_forward.8} parent=0 // pred_fallthru
    _
  // Predicated region
  $region6: #{vae_forward.8} parent=0 // pred_check
    _
  $region7: #{vae_forward.8} parent=0 // pred_check_branch
    %13 = sbr.rel (0) target = $region9
  $region8: #{vae_forward.8} parent=0 // pred_region
    _
  $region9: #{vae_forward.8} parent=0 // pred_fallthru
    _
  // Predicated region
  $region10: #{vae_forward.8} parent=0 // pred_check
    _
  $region11: #{vae_forward.8} parent=0 // pred_check_branch
    %15 = sbr.rel (0) target = $region13
  $region12: #{vae_forward.8} parent=0 // pred_region
    _
  $region13: #{vae_forward.8} parent=0 // pred_fallthru
    _
  // Predicated region
  $region14: #{vae_forward.8} parent=0 // pred_check
    _
  $region15: #{vae_forward.8} parent=0 // pred_check_branch
    %17 = sbr.rel (0) target = $region17
  $region16: #{vae_forward.8} parent=0 // pred_region
    _
  $region17: #{vae_forward.8} parent=0 // pred_fallthru
    _
  // Predicated region
  $region18: #{vae_forward.8} parent=0 // pred_check
    _
  $region19: #{vae_forward.8} parent=0 // pred_check_branch
    %19 = sbr.rel (0) target = $region21
  $region20: #{vae_forward.8} parent=0 // pred_region
    _
  $region21: #{vae_forward.8} parent=0 // pred_fallthru
    _
  %v21 = vld [vmem:[%s0] sm:$0xff]
  %v22 = vld [vmem:[%s0 + $0x8] sm:$0xff]
  %v23 = vld [vmem:[%s0 + $0x10] sm:$0xff]
  %v24 = vld [vmem:[%s0 + $0x18] sm:$0xff]
  %v25 = vld [vmem:[%s0 + $0x20] sm:$0xf]
  %v26 = vld [vmem:[%s0 + $0x24] sm:$0xff]
  %v27 = vld [vmem:[%s0 + $0x2c] sm:$0xff]
  %v28 = vld [vmem:[%s0 + $0x34] sm:$0xff]
  %v29 = vld [vmem:[%s0 + $0x3c] sm:$0xff]
  %v30 = vld [vmem:[%s0 + $0x44] sm:$0xf]
  %v31 = vld [vmem:[%s0 + $0x48] sm:$0xff]
  %v32 = vld [vmem:[%s0 + $0x50] sm:$0xff]
  %v33 = vld [vmem:[%s0 + $0x58] sm:$0xff]
  %v34 = vld [vmem:[%s0 + $0x60] sm:$0xff]
  %v35 = vld [vmem:[%s0 + $0x68] sm:$0xf]
  %v36 = vld [vmem:[%s0 + $0x6c] sm:$0xff]
  %v37 = vld [vmem:[%s0 + $0x74] sm:$0xff]
  %v38 = vld [vmem:[%s0 + $0x7c] sm:$0xff]
  %v39 = vld [vmem:[%s0 + $0x84] sm:$0xff]
  %v40 = vld [vmem:[%s0 + $0x8c] sm:$0xf]
  %v41 = vld [vmem:[%s0 + $0x90] sm:$0xff]
  %v42 = vld [vmem:[%s0 + $0x98] sm:$0xff]
  %v43 = vld [vmem:[%s0 + $0xa0] sm:$0xff]
  %v44 = vld [vmem:[%s0 + $0xa8] sm:$0xff]
  %v45 = vld [vmem:[%s0 + $0xb0] sm:$0xf]
  %v46 = vld [vmem:[%s0 + $0xb4] sm:$0xff]
  %v47 = vld [vmem:[%s0 + $0xbc] sm:$0xff]
  %v48 = vld [vmem:[%s0 + $0xc4] sm:$0xff]
  %v49 = vld [vmem:[%s0 + $0xcc] sm:$0xff]
  %v50 = vld [vmem:[%s0 + $0xd4] sm:$0xf]
  %v51 = vld [vmem:[%s0 + $0xd8] sm:$0xff]
  %v52 = vld [vmem:[%s0 + $0xe0] sm:$0xff]
  %v53 = vld [vmem:[%s0 + $0xe8] sm:$0xff]
  %v54 = vld [vmem:[%s0 + $0xf0] sm:$0xff]
  %v55 = vld [vmem:[%s0 + $0xf8] sm:$0xf]
  %v56 = vld [vmem:[%s0 + $0xfc] sm:$0xff]
  %v57 = vld [vmem:[%s0 + $0x104] sm:$0xff]
  %v58 = vld [vmem:[%s0 + $0x10c] sm:$0xff]
  %v59 = vld [vmem:[%s0 + $0x114] sm:$0xff]
  %v60 = vld [vmem:[%s0 + $0x11c] sm:$0xf]
  %v61 = vld [vmem:[%s0 + $0x120] sm:$0xff]
  %v62 = vld [vmem:[%s0 + $0x128] sm:$0xff]
  %v63 = vld [vmem:[%s0 + $0x130] sm:$0xff]
  %v64 = vld [vmem:[%s0 + $0x138] sm:$0xff]
  %v65 = vld [vmem:[%s0 + $0x140] sm:$0xf]
  %v66 = vld [vmem:[%s0 + $0x144] sm:$0xff]
  %v67 = vld [vmem:[%s0 + $0x14c] sm:$0xff]
  %v68 = vld [vmem:[%s0 + $0x154] sm:$0xff]
  %v69 = vld [vmem:[%s0 + $0x15c] sm:$0xff]
  %v70 = vld [vmem:[%s0 + $0x164] sm:$0xf]
  %v71 = vld [vmem:[%s0 + $0x168] sm:$0xff]
  %v72 = vld [vmem:[%s0 + $0x170] sm:$0xff]
  %v73 = vld [vmem:[%s0 + $0x178] sm:$0xff]
  %v74 = vld [vmem:[%s0 + $0x180] sm:$0xff]
  %v75 = vld [vmem:[%s0 + $0x188] sm:$0xf]
  %v76 = vld [vmem:[%s0 + $0x18c] sm:$0xff]
  %v77 = vld [vmem:[%s0 + $0x194] sm:$0xff]
  %v78 = vld [vmem:[%s0 + $0x19c] sm:$0xff]
  %v79 = vld [vmem:[%s0 + $0x1a4] sm:$0xff]
  %v80 = vld [vmem:[%s0 + $0x1ac] sm:$0xf]
  %v81 = vld [vmem:[%s0 + $0x1b0] sm:$0x11]
  %v82 = vld [vmem:[%s0 + $0x1b8] sm:$0x11]
  %v83 = vld [vmem:[%s0 + $0x1c0] sm:$0x11]
  %v84 = vld [vmem:[%s0 + $0x1c8] sm:$0x11]
  %v85 = vld [vmem:[%s0 + $0x1d0] sm:$0x1]
  %v86 = vld [vmem:[%s1] sm:$0xf]
  %v87 = vld [vmem:[%s1 + $0x4] sm:$0xf]
  %v88 = vld [vmem:[%s1 + $0x8] sm:$0xf]
  %v89 = vld [vmem:[%s1 + $0xc] sm:$0xf]
  %v90 = vld [vmem:[%s1 + $0x10] sm:$0xf]
  %v91 = vld [vmem:[%s1 + $0x14] sm:$0xf]
  %v92 = vld [vmem:[%s1 + $0x18] sm:$0xf]
  %v93 = vld [vmem:[%s1 + $0x1c] sm:$0xf]
  %v94 = vld [vmem:[%s1 + $0x20] sm:$0xf]
  %v95 = vld [vmem:[%s1 + $0x24] sm:$0xf]
  %v96 = vld [vmem:[%s1 + $0x28] sm:$0xf]
  %v97 = vld [vmem:[%s1 + $0x2c] sm:$0xf]
  %v98 = vld [vmem:[%s1 + $0x30] sm:$0xf]
  %v99 = vld [vmem:[%s1 + $0x34] sm:$0xf]
  %v100 = vld [vmem:[%s1 + $0x38] sm:$0xf]
  %v101 = vld [vmem:[%s1 + $0x3c] sm:$0xf]
  %v102 = vld [vmem:[%s1 + $0x40] sm:$0xf]
  %v103 = vld [vmem:[%s1 + $0x44] sm:$0xf]
  %v104 = vld [vmem:[%s1 + $0x48] sm:$0xf]
  %v105 = vld [vmem:[%s1 + $0x4c] sm:$0xf]
  %v106 = vld [vmem:[%s1 + $0x50] sm:$0xf]
  %v107 = vld [vmem:[%s1 + $0x54] sm:$0xf]
  %v108 = vld [vmem:[%s1 + $0x58] sm:$0xf]
  %v109 = vld [vmem:[%s1 + $0x5c] sm:$0xf]
  %v110 = vld [vmem:[%s1 + $0x60] sm:$0xf]
  %v111 = vld [vmem:[%s1 + $0x64] sm:$0xf]
  %v112 = vld [vmem:[%s1 + $0x68] sm:$0xf]
  %v113 = vld [vmem:[%s1 + $0x6c] sm:$0xf]
  %v114 = vld [vmem:[%s1 + $0x70] sm:$0xf]
  %v115 = vld [vmem:[%s1 + $0x74] sm:$0xf]
  %v116 = vld [vmem:[%s1 + $0x78] sm:$0xf]
  %v117 = vld [vmem:[%s1 + $0x7c] sm:$0xf]
  %v118 = vld [vmem:[%s1 + $0x80] sm:$0xf]
  %v119 = vld [vmem:[%s1 + $0x84] sm:$0xf]
  %v120 = vld [vmem:[%s1 + $0x88] sm:$0xf]
  %v121 = vld [vmem:[%s1 + $0x8c] sm:$0xf]
  %v122 = vld [vmem:[%s1 + $0x90] sm:$0xf]
  %v123 = vld [vmem:[%s1 + $0x94] sm:$0xf]
  %v124 = vld [vmem:[%s1 + $0x98] sm:$0xf]
  %v125 = vld [vmem:[%s1 + $0x9c] sm:$0xf]
  %v126 = vld [vmem:[%s1 + $0xa0] sm:$0xf]
  %v127 = vld [vmem:[%s1 + $0xa4] sm:$0xf]
  %v128 = vld [vmem:[%s1 + $0xa8] sm:$0xf]
  %v129 = vld [vmem:[%s1 + $0xac] sm:$0xf]
  %v130 = vld [vmem:[%s1 + $0xb0] sm:$0xf]
  %v131 = vld [vmem:[%s1 + $0xb4] sm:$0xf]
  %v132 = vld [vmem:[%s1 + $0xb8] sm:$0xf]
  %v133 = vld [vmem:[%s1 + $0xbc] sm:$0xf]
  %v134 = vld [vmem:[%s1 + $0xc0] sm:$0xf]
  %v135 = vld [vmem:[%s1 + $0xc4] sm:$0xf]
  %v136 = vld [vmem:[%s1 + $0xc8] sm:$0xf]
  %v137 = vld [vmem:[%s1 + $0xcc] sm:$0xf]
  %v138 = vld [vmem:[%s1 + $0xd0] sm:$0xf]
  %v139 = vld [vmem:[%s1 + $0xd4] sm:$0xf]
  %v140 = vld [vmem:[%s1 + $0xd8] sm:$0xf]
  %v141 = vld [vmem:[%s1 + $0xdc] sm:$0xf]
  %v142 = vld [vmem:[%s1 + $0xe0] sm:$0xf]
  %v143 = vld [vmem:[%s1 + $0xe4] sm:$0xf]
  %v144 = vld [vmem:[%s1 + $0xe8] sm:$0xf]
  %v145 = vld [vmem:[%s1 + $0xec] sm:$0xf]
  %v146 = vld [vmem:[%s1 + $0xf0] sm:$0xf]
  %v147 = vld [vmem:[%s1 + $0xf4] sm:$0xf]
  %v148 = vld [vmem:[%s1 + $0xf8] sm:$0xf]
  %v149 = vld [vmem:[%s1 + $0xfc] sm:$0xf]
  %v150 = vld [vmem:[%s1 + $0x100] sm:$0xf]
  %v151 = vld [vmem:[%s1 + $0x104] sm:$0xf]
  %v152 = vld [vmem:[%s1 + $0x108] sm:$0xf]
  %v153 = vld [vmem:[%s1 + $0x10c] sm:$0xf]
  %v154 = vld [vmem:[%s1 + $0x110] sm:$0xf]
  %v155 = vld [vmem:[%s1 + $0x114] sm:$0xf]
  %v156 = vld [vmem:[%s1 + $0x118] sm:$0xf]
  %v157 = vld [vmem:[%s1 + $0x11c] sm:$0xf]
  %v158 = vld [vmem:[%s1 + $0x120] sm:$0xf]
  %v159 = vld [vmem:[%s1 + $0x124] sm:$0xf]
  %v160 = vld [vmem:[%s1 + $0x128] sm:$0xf]
  %v161 = vld [vmem:[%s1 + $0x12c] sm:$0xf]
  %v162 = vld [vmem:[%s1 + $0x130] sm:$0xf]
  %v163 = vld [vmem:[%s1 + $0x134] sm:$0xf]
  %v164 = vld [vmem:[%s1 + $0x138] sm:$0xf]
  %v165 = vld [vmem:[%s1 + $0x13c] sm:$0xf]
  %v166 = vld [vmem:[%s1 + $0x140] sm:$0xf]
  %v167 = vld [vmem:[%s1 + $0x144] sm:$0xf]
  %v168 = vld [vmem:[%s1 + $0x148] sm:$0xf]
  %v169 = vld [vmem:[%s1 + $0x14c] sm:$0xf]
  %v170 = vld [vmem:[%s1 + $0x150] sm:$0xf]
  %v171 = vld [vmem:[%s1 + $0x154] sm:$0xf]
  %v172 = vld [vmem:[%s1 + $0x158] sm:$0xf]
  %v173 = vld [vmem:[%s1 + $0x15c] sm:$0xf]
  %v174 = vld [vmem:[%s1 + $0x160] sm:$0xf]
  %v175 = vld [vmem:[%s1 + $0x164] sm:$0xf]
  %v176 = vld [vmem:[%s1 + $0x168] sm:$0xf]
  %v177 = vld [vmem:[%s1 + $0x16c] sm:$0xf]
  %v178 = vld [vmem:[%s1 + $0x170] sm:$0xf]
  %v179 = vld [vmem:[%s1 + $0x174] sm:$0xf]
  %v180 = vld [vmem:[%s1 + $0x178] sm:$0xf]
  %v181 = vld [vmem:[%s1 + $0x17c] sm:$0xf]
  %v182 = vld [vmem:[%s1 + $0x180] sm:$0xf]
  %v183 = vld [vmem:[%s1 + $0x184] sm:$0xf]
  %v184 = vld [vmem:[%s1 + $0x188] sm:$0xf]
  %v185 = vld [vmem:[%s1 + $0x18c] sm:$0xf]
  %v186 = vld [vmem:[%s1 + $0x190] sm:$0xf]
  %v187 = vld [vmem:[%s1 + $0x194] sm:$0xf]
  %v188 = vld [vmem:[%s1 + $0x198] sm:$0xf]
  %v189 = vld [vmem:[%s1 + $0x19c] sm:$0xf]
  %v190 = vld [vmem:[%s1 + $0x1a0] sm:$0xf]
  %v191 = vld [vmem:[%s1 + $0x1a4] sm:$0xf]
  %v192 = vld [vmem:[%s1 + $0x1a8] sm:$0xf]
  %v193 = vld [vmem:[%s1 + $0x1ac] sm:$0xf]
  %v194 = vld [vmem:[%s1 + $0x1b0] sm:$0xf]
  %v195 = vld [vmem:[%s1 + $0x1b4] sm:$0xf]
  %v196 = vld [vmem:[%s1 + $0x1b8] sm:$0xf]
  %v197 = vld [vmem:[%s1 + $0x1bc] sm:$0xf]
  %v198 = vld [vmem:[%s1 + $0x1c0] sm:$0xf]
  %v199 = vld [vmem:[%s1 + $0x1c4] sm:$0xf]
  %v200 = vld [vmem:[%s1 + $0x1c8] sm:$0xf]
  %v201 = vld [vmem:[%s1 + $0x1cc] sm:$0xf]
  %v202 = vld [vmem:[%s1 + $0x1d0] sm:$0xf]
  %v203 = vld [vmem:[%s1 + $0x1d4] sm:$0xf]
  %v204 = vld [vmem:[%s1 + $0x1d8] sm:$0xf]
  %v205 = vld [vmem:[%s1 + $0x1dc] sm:$0xf]
  %v206 = vld [vmem:[%s1 + $0x1e0] sm:$0xf]
  %v207 = vld [vmem:[%s1 + $0x1e4] sm:$0xf]
  %v208 = vld [vmem:[%s1 + $0x1e8] sm:$0xf]
  %v209 = vld [vmem:[%s1 + $0x1ec] sm:$0xf]
  %v210 = vld [vmem:[%s1 + $0x1f0] sm:$0xf]
  %v211 = vld [vmem:[%s1 + $0x1f4] sm:$0xf]
  %v212 = vld [vmem:[%s1 + $0x1f8] sm:$0xf]
  %v213 = vld [vmem:[%s1 + $0x1fc] sm:$0xf]
  %v214 = vld [vmem:[%s1 + $0x200] sm:$0xf]
  %v215 = vld [vmem:[%s1 + $0x204] sm:$0xf]
  %v216 = vld [vmem:[%s1 + $0x208] sm:$0xf]
  %v217 = vld [vmem:[%s1 + $0x20c] sm:$0xf]
  %v218 = vld [vmem:[%s1 + $0x210] sm:$0xf]
  %v219 = vld [vmem:[%s1 + $0x214] sm:$0xf]
  %v220 = vld [vmem:[%s1 + $0x218] sm:$0xf]
  %v221 = vld [vmem:[%s1 + $0x21c] sm:$0xf]
  %v222 = vld [vmem:[%s1 + $0x220] sm:$0xf]
  %v223 = vld [vmem:[%s1 + $0x224] sm:$0xf]
  %v224 = vld [vmem:[%s1 + $0x228] sm:$0xf]
  %v225 = vld [vmem:[%s1 + $0x22c] sm:$0xf]
  %v226 = vld [vmem:[%s1 + $0x230] sm:$0xf]
  %v227 = vld [vmem:[%s1 + $0x234] sm:$0xf]
  %v228 = vld [vmem:[%s1 + $0x238] sm:$0xf]
  %v229 = vld [vmem:[%s1 + $0x23c] sm:$0xf]
  %v230 = vld [vmem:[%s2] sm:$0x1]
  %v232 = vlaneseq
  %v233 = vshrl.u32 %v232, 7
  %v234 = vsub.s32 0, %v233
  %v235 = vrot.slane %v230, %v234
  %v302 = vunpack.c.l.b16 %v21
  %v303 = vunpack.c.h.b16 %v21
  %v304 = vunpack.c.l.b16 %v22
  %v305 = vunpack.c.h.b16 %v22
  %v306 = vunpack.c.l.b16 %v23
  %v307 = vunpack.c.h.b16 %v23
  %v308 = vunpack.c.l.b16 %v24
  %v309 = vunpack.c.h.b16 %v24
  %v310 = vunpack.c.l.b16 %v25
  %v311 = vunpack.c.l.b16 %v26
  %v312 = vunpack.c.h.b16 %v26
  %v313 = vunpack.c.l.b16 %v27
  %v314 = vunpack.c.h.b16 %v27
  %v315 = vunpack.c.l.b16 %v28
  %v316 = vunpack.c.h.b16 %v28
  %v317 = vunpack.c.l.b16 %v29
  %v318 = vunpack.c.h.b16 %v29
  %v319 = vunpack.c.l.b16 %v30
  %v320 = vunpack.c.l.b16 %v31
  %v321 = vunpack.c.h.b16 %v31
  %v322 = vunpack.c.l.b16 %v32
  %v323 = vunpack.c.h.b16 %v32
  %v324 = vunpack.c.l.b16 %v33
  %v325 = vunpack.c.h.b16 %v33
  %v326 = vunpack.c.l.b16 %v34
  %v327 = vunpack.c.h.b16 %v34
  %v328 = vunpack.c.l.b16 %v35
  %v329 = vunpack.c.l.b16 %v36
  %v330 = vunpack.c.h.b16 %v36
  %v331 = vunpack.c.l.b16 %v37
  %v332 = vunpack.c.h.b16 %v37
  %v333 = vunpack.c.l.b16 %v38
  %v334 = vunpack.c.h.b16 %v38
  %v335 = vunpack.c.l.b16 %v39
  %v336 = vunpack.c.h.b16 %v39
  %v337 = vunpack.c.l.b16 %v40
  %v338 = vunpack.c.l.b16 %v41
  %v339 = vunpack.c.h.b16 %v41
  %v340 = vunpack.c.l.b16 %v42
  %v341 = vunpack.c.h.b16 %v42
  %v342 = vunpack.c.l.b16 %v43
  %v343 = vunpack.c.h.b16 %v43
  %v344 = vunpack.c.l.b16 %v44
  %v345 = vunpack.c.h.b16 %v44
  %v346 = vunpack.c.l.b16 %v45
  %v347 = vunpack.c.l.b16 %v46
  %v348 = vunpack.c.h.b16 %v46
  %v349 = vunpack.c.l.b16 %v47
  %v350 = vunpack.c.h.b16 %v47
  %v351 = vunpack.c.l.b16 %v48
  %v352 = vunpack.c.h.b16 %v48
  %v353 = vunpack.c.l.b16 %v49
  %v354 = vunpack.c.h.b16 %v49
  %v355 = vunpack.c.l.b16 %v50
  %v356 = vunpack.c.l.b16 %v51
  %v357 = vunpack.c.h.b16 %v51
  %v358 = vunpack.c.l.b16 %v52
  %v359 = vunpack.c.h.b16 %v52
  %v360 = vunpack.c.l.b16 %v53
  %v361 = vunpack.c.h.b16 %v53
  %v362 = vunpack.c.l.b16 %v54
  %v363 = vunpack.c.h.b16 %v54
  %v364 = vunpack.c.l.b16 %v55
  %v365 = vunpack.c.l.b16 %v56
  %v366 = vunpack.c.h.b16 %v56
  %v367 = vunpack.c.l.b16 %v57
  %v368 = vunpack.c.h.b16 %v57
  %v369 = vunpack.c.l.b16 %v58
  %v370 = vunpack.c.h.b16 %v58
  %v371 = vunpack.c.l.b16 %v59
  %v372 = vunpack.c.h.b16 %v59
  %v373 = vunpack.c.l.b16 %v60
  %v374 = vunpack.c.l.b16 %v61
  %v375 = vunpack.c.h.b16 %v61
  %v376 = vunpack.c.l.b16 %v62
  %v377 = vunpack.c.h.b16 %v62
  %v378 = vunpack.c.l.b16 %v63
  %v379 = vunpack.c.h.b16 %v63
  %v380 = vunpack.c.l.b16 %v64
  %v381 = vunpack.c.h.b16 %v64
  %v382 = vunpack.c.l.b16 %v65
  %v383 = vunpack.c.l.b16 %v66
  %v384 = vunpack.c.h.b16 %v66
  %v385 = vunpack.c.l.b16 %v67
  %v386 = vunpack.c.h.b16 %v67
  %v387 = vunpack.c.l.b16 %v68
  %v388 = vunpack.c.h.b16 %v68
  %v389 = vunpack.c.l.b16 %v69
  %v390 = vunpack.c.h.b16 %v69
  %v391 = vunpack.c.l.b16 %v70
  %v392 = vunpack.c.l.b16 %v71
  %v393 = vunpack.c.h.b16 %v71
  %v394 = vunpack.c.l.b16 %v72
  %v395 = vunpack.c.h.b16 %v72
  %v396 = vunpack.c.l.b16 %v73
  %v397 = vunpack.c.h.b16 %v73
  %v398 = vunpack.c.l.b16 %v74
  %v399 = vunpack.c.h.b16 %v74
  %v400 = vunpack.c.l.b16 %v75
  %v401 = vunpack.c.l.b16 %v76
  %v402 = vunpack.c.h.b16 %v76
  %v403 = vunpack.c.l.b16 %v77
  %v404 = vunpack.c.h.b16 %v77
  %v405 = vunpack.c.l.b16 %v78
  %v406 = vunpack.c.h.b16 %v78
  %v407 = vunpack.c.l.b16 %v79
  %v408 = vunpack.c.h.b16 %v79
  %v409 = vunpack.c.l.b16 %v80
  %v410 = vunpack.c.l.b16 %v81
  %v411 = vunpack.c.h.b16 %v81
  %v412 = vunpack.c.l.b16 %v82
  %v413 = vunpack.c.h.b16 %v82
  %v414 = vunpack.c.l.b16 %v83
  %v415 = vunpack.c.h.b16 %v83
  %v416 = vunpack.c.l.b16 %v84
  %v417 = vunpack.c.h.b16 %v84
  %v418 = vunpack.c.l.b16 %v85
  %v419 = vpack.c.b16 %v311, %v302
  %v420 = vpack.c.b16 %v312, %v303
  %v421 = vpack.c.b16 %v313, %v304
  %v422 = vpack.c.b16 %v314, %v305
  %v423 = vpack.c.b16 %v315, %v306
  %v424 = vpack.c.b16 %v316, %v307
  %v425 = vpack.c.b16 %v317, %v308
  %v426 = vpack.c.b16 %v318, %v309
  %v427 = vpack.c.b16 %v319, %v310
  %v428 = vpack.c.b16 %v329, %v320
  %v429 = vpack.c.b16 %v330, %v321
  %v430 = vpack.c.b16 %v331, %v322
  %v431 = vpack.c.b16 %v332, %v323
  %v432 = vpack.c.b16 %v333, %v324
  %v433 = vpack.c.b16 %v334, %v325
  %v434 = vpack.c.b16 %v335, %v326
  %v435 = vpack.c.b16 %v336, %v327
  %v436 = vpack.c.b16 %v337, %v328
  %v437 = vpack.c.b16 %v347, %v338
  %v438 = vpack.c.b16 %v348, %v339
  %v439 = vpack.c.b16 %v349, %v340
  %v440 = vpack.c.b16 %v350, %v341
  %v441 = vpack.c.b16 %v351, %v342
  %v442 = vpack.c.b16 %v352, %v343
  %v443 = vpack.c.b16 %v353, %v344
  %v444 = vpack.c.b16 %v354, %v345
  %v445 = vpack.c.b16 %v355, %v346
  %v446 = vpack.c.b16 %v365, %v356
  %v447 = vpack.c.b16 %v366, %v357
  %v448 = vpack.c.b16 %v367, %v358
  %v449 = vpack.c.b16 %v368, %v359
  %v450 = vpack.c.b16 %v369, %v360
  %v451 = vpack.c.b16 %v370, %v361
  %v452 = vpack.c.b16 %v371, %v362
  %v453 = vpack.c.b16 %v372, %v363
  %v454 = vpack.c.b16 %v373, %v364
  %v455 = vpack.c.b16 %v383, %v374
  %v456 = vpack.c.b16 %v384, %v375
  %v457 = vpack.c.b16 %v385, %v376
  %v458 = vpack.c.b16 %v386, %v377
  %v459 = vpack.c.b16 %v387, %v378
  %v460 = vpack.c.b16 %v388, %v379
  %v461 = vpack.c.b16 %v389, %v380
  %v462 = vpack.c.b16 %v390, %v381
  %v463 = vpack.c.b16 %v391, %v382
  %v464 = vpack.c.b16 %v401, %v392
  %v465 = vpack.c.b16 %v402, %v393
  %v466 = vpack.c.b16 %v403, %v394
  %v467 = vpack.c.b16 %v404, %v395
  %v468 = vpack.c.b16 %v405, %v396
  %v469 = vpack.c.b16 %v406, %v397
  %v470 = vpack.c.b16 %v407, %v398
  %v471 = vpack.c.b16 %v408, %v399
  %v472 = vpack.c.b16 %v409, %v400
  %v473 = vpack.c.b16 %v410, %v410
  %v474 = vpack.c.b16 %v411, %v411
  %v475 = vpack.c.b16 %v412, %v412
  %v476 = vpack.c.b16 %v413, %v413
  %v477 = vpack.c.b16 %v414, %v414
  %v478 = vpack.c.b16 %v415, %v415
  %v479 = vpack.c.b16 %v416, %v416
  %v480 = vpack.c.b16 %v417, %v417
  %v481 = vpack.c.b16 %v418, %v418
  %v689 = vunpack.c.l.b16 %v86
  %v690 = vunpack.c.l.b16 %v87
  %v691 = vunpack.c.l.b16 %v88
  %v692 = vunpack.c.l.b16 %v89
  %v693 = vunpack.c.l.b16 %v90
  %v694 = vunpack.c.l.b16 %v91
  %v695 = vunpack.c.l.b16 %v92
  %v696 = vunpack.c.l.b16 %v93
  %v697 = vunpack.c.l.b16 %v94
  %v698 = vunpack.c.l.b16 %v95
  %v699 = vunpack.c.l.b16 %v96
  %v700 = vunpack.c.l.b16 %v97
  %v701 = vunpack.c.l.b16 %v98
  %v702 = vunpack.c.l.b16 %v99
  %v703 = vunpack.c.l.b16 %v100
  %v704 = vunpack.c.l.b16 %v101
  %v705 = vunpack.c.l.b16 %v102
  %v706 = vunpack.c.l.b16 %v103
  %v707 = vunpack.c.l.b16 %v104
  %v708 = vunpack.c.l.b16 %v105
  %v709 = vunpack.c.l.b16 %v106
  %v710 = vunpack.c.l.b16 %v107
  %v711 = vunpack.c.l.b16 %v108
  %v712 = vunpack.c.l.b16 %v109
  %v713 = vunpack.c.l.b16 %v110
  %v714 = vunpack.c.l.b16 %v111
  %v715 = vunpack.c.l.b16 %v112
  %v716 = vunpack.c.l.b16 %v113
  %v717 = vunpack.c.l.b16 %v114
  %v718 = vunpack.c.l.b16 %v115
  %v719 = vunpack.c.l.b16 %v116
  %v720 = vunpack.c.l.b16 %v117
  %v721 = vunpack.c.l.b16 %v118
  %v722 = vunpack.c.l.b16 %v119
  %v723 = vunpack.c.l.b16 %v120
  %v724 = vunpack.c.l.b16 %v121
  %v725 = vunpack.c.l.b16 %v122
  %v726 = vunpack.c.l.b16 %v123
  %v727 = vunpack.c.l.b16 %v124
  %v728 = vunpack.c.l.b16 %v125
  %v729 = vunpack.c.l.b16 %v126
  %v730 = vunpack.c.l.b16 %v127
  %v731 = vunpack.c.l.b16 %v128
  %v732 = vunpack.c.l.b16 %v129
  %v733 = vunpack.c.l.b16 %v130
  %v734 = vunpack.c.l.b16 %v131
  %v735 = vunpack.c.l.b16 %v132
  %v736 = vunpack.c.l.b16 %v133
  %v737 = vunpack.c.l.b16 %v134
  %v738 = vunpack.c.l.b16 %v135
  %v739 = vunpack.c.l.b16 %v136
  %v740 = vunpack.c.l.b16 %v137
  %v741 = vunpack.c.l.b16 %v138
  %v742 = vunpack.c.l.b16 %v139
  %v743 = vunpack.c.l.b16 %v140
  %v744 = vunpack.c.l.b16 %v141
  %v745 = vunpack.c.l.b16 %v142
  %v746 = vunpack.c.l.b16 %v143
  %v747 = vunpack.c.l.b16 %v144
  %v748 = vunpack.c.l.b16 %v145
  %v749 = vunpack.c.l.b16 %v146
  %v750 = vunpack.c.l.b16 %v147
  %v751 = vunpack.c.l.b16 %v148
  %v752 = vunpack.c.l.b16 %v149
  %v753 = vunpack.c.l.b16 %v150
  %v754 = vunpack.c.l.b16 %v151
  %v755 = vunpack.c.l.b16 %v152
  %v756 = vunpack.c.l.b16 %v153
  %v757 = vunpack.c.l.b16 %v154
  %v758 = vunpack.c.l.b16 %v155
  %v759 = vunpack.c.l.b16 %v156
  %v760 = vunpack.c.l.b16 %v157
  %v761 = vunpack.c.l.b16 %v158
  %v762 = vunpack.c.l.b16 %v159
  %v763 = vunpack.c.l.b16 %v160
  %v764 = vunpack.c.l.b16 %v161
  %v765 = vunpack.c.l.b16 %v162
  %v766 = vunpack.c.l.b16 %v163
  %v767 = vunpack.c.l.b16 %v164
  %v768 = vunpack.c.l.b16 %v165
  %v769 = vunpack.c.l.b16 %v166
  %v770 = vunpack.c.l.b16 %v167
  %v771 = vunpack.c.l.b16 %v168
  %v772 = vunpack.c.l.b16 %v169
  %v773 = vunpack.c.l.b16 %v170
  %v774 = vunpack.c.l.b16 %v171
  %v775 = vunpack.c.l.b16 %v172
  %v776 = vunpack.c.l.b16 %v173
  %v777 = vunpack.c.l.b16 %v174
  %v778 = vunpack.c.l.b16 %v175
  %v779 = vunpack.c.l.b16 %v176
  %v780 = vunpack.c.l.b16 %v177
  %v781 = vunpack.c.l.b16 %v178
  %v782 = vunpack.c.l.b16 %v179
  %v783 = vunpack.c.l.b16 %v180
  %v784 = vunpack.c.l.b16 %v181
  %v785 = vunpack.c.l.b16 %v182
  %v786 = vunpack.c.l.b16 %v183
  %v787 = vunpack.c.l.b16 %v184
  %v788 = vunpack.c.l.b16 %v185
  %v789 = vunpack.c.l.b16 %v186
  %v790 = vunpack.c.l.b16 %v187
  %v791 = vunpack.c.l.b16 %v188
  %v792 = vunpack.c.l.b16 %v189
  %v793 = vunpack.c.l.b16 %v190
  %v794 = vunpack.c.l.b16 %v191
  %v795 = vunpack.c.l.b16 %v192
  %v796 = vunpack.c.l.b16 %v193
  %v797 = vunpack.c.l.b16 %v194
  %v798 = vunpack.c.l.b16 %v195
  %v799 = vunpack.c.l.b16 %v196
  %v800 = vunpack.c.l.b16 %v197
  %v801 = vunpack.c.l.b16 %v198
  %v802 = vunpack.c.l.b16 %v199
  %v803 = vunpack.c.l.b16 %v200
  %v804 = vunpack.c.l.b16 %v201
  %v805 = vunpack.c.l.b16 %v202
  %v806 = vunpack.c.l.b16 %v203
  %v807 = vunpack.c.l.b16 %v204
  %v808 = vunpack.c.l.b16 %v205
  %v809 = vunpack.c.l.b16 %v206
  %v810 = vunpack.c.l.b16 %v207
  %v811 = vunpack.c.l.b16 %v208
  %v812 = vunpack.c.l.b16 %v209
  %v813 = vunpack.c.l.b16 %v210
  %v814 = vunpack.c.l.b16 %v211
  %v815 = vunpack.c.l.b16 %v212
  %v816 = vunpack.c.l.b16 %v213
  %v817 = vunpack.c.l.b16 %v214
  %v818 = vunpack.c.l.b16 %v215
  %v819 = vunpack.c.l.b16 %v216
  %v820 = vunpack.c.l.b16 %v217
  %v821 = vunpack.c.l.b16 %v218
  %v822 = vunpack.c.l.b16 %v219
  %v823 = vunpack.c.l.b16 %v220
  %v824 = vunpack.c.l.b16 %v221
  %v825 = vunpack.c.l.b16 %v222
  %v826 = vunpack.c.l.b16 %v223
  %v827 = vunpack.c.l.b16 %v224
  %v828 = vunpack.c.l.b16 %v225
  %v829 = vunpack.c.l.b16 %v226
  %v830 = vunpack.c.l.b16 %v227
  %v831 = vunpack.c.l.b16 %v228
  %v832 = vunpack.c.l.b16 %v229
  %v833 = vpack.c.b16 %v690, %v689
  %v834 = vpack.c.b16 %v692, %v691
  %v835 = vpack.c.b16 %v694, %v693
  %v836 = vpack.c.b16 %v696, %v695
  %v837 = vpack.c.b16 %v698, %v697
  %v838 = vpack.c.b16 %v700, %v699
  %v839 = vpack.c.b16 %v702, %v701
  %v840 = vpack.c.b16 %v704, %v703
  %v841 = vpack.c.b16 %v706, %v705
  %v842 = vpack.c.b16 %v708, %v707
  %v843 = vpack.c.b16 %v710, %v709
  %v844 = vpack.c.b16 %v712, %v711
  %v845 = vpack.c.b16 %v714, %v713
  %v846 = vpack.c.b16 %v716, %v715
  %v847 = vpack.c.b16 %v718, %v717
  %v848 = vpack.c.b16 %v720, %v719
  %v849 = vpack.c.b16 %v722, %v721
  %v850 = vpack.c.b16 %v724, %v723
  %v851 = vpack.c.b16 %v726, %v725
  %v852 = vpack.c.b16 %v728, %v727
  %v853 = vpack.c.b16 %v730, %v729
  %v854 = vpack.c.b16 %v732, %v731
  %v855 = vpack.c.b16 %v734, %v733
  %v856 = vpack.c.b16 %v736, %v735
  %v857 = vpack.c.b16 %v738, %v737
  %v858 = vpack.c.b16 %v740, %v739
  %v859 = vpack.c.b16 %v742, %v741
  %v860 = vpack.c.b16 %v744, %v743
  %v861 = vpack.c.b16 %v746, %v745
  %v862 = vpack.c.b16 %v748, %v747
  %v863 = vpack.c.b16 %v750, %v749
  %v864 = vpack.c.b16 %v752, %v751
  %v865 = vpack.c.b16 %v754, %v753
  %v866 = vpack.c.b16 %v756, %v755
  %v867 = vpack.c.b16 %v758, %v757
  %v868 = vpack.c.b16 %v760, %v759
  %v869 = vpack.c.b16 %v762, %v761
  %v870 = vpack.c.b16 %v764, %v763
  %v871 = vpack.c.b16 %v766, %v765
  %v872 = vpack.c.b16 %v768, %v767
  %v873 = vpack.c.b16 %v770, %v769
  %v874 = vpack.c.b16 %v772, %v771
  %v875 = vpack.c.b16 %v774, %v773
  %v876 = vpack.c.b16 %v776, %v775
  %v877 = vpack.c.b16 %v778, %v777
  %v878 = vpack.c.b16 %v780, %v779
  %v879 = vpack.c.b16 %v782, %v781
  %v880 = vpack.c.b16 %v784, %v783
  %v881 = vpack.c.b16 %v786, %v785
  %v882 = vpack.c.b16 %v788, %v787
  %v883 = vpack.c.b16 %v790, %v789
  %v884 = vpack.c.b16 %v792, %v791
  %v885 = vpack.c.b16 %v794, %v793
  %v886 = vpack.c.b16 %v796, %v795
  %v887 = vpack.c.b16 %v798, %v797
  %v888 = vpack.c.b16 %v800, %v799
  %v889 = vpack.c.b16 %v802, %v801
  %v890 = vpack.c.b16 %v804, %v803
  %v891 = vpack.c.b16 %v806, %v805
  %v892 = vpack.c.b16 %v808, %v807
  %v893 = vpack.c.b16 %v810, %v809
  %v894 = vpack.c.b16 %v812, %v811
  %v895 = vpack.c.b16 %v814, %v813
  %v896 = vpack.c.b16 %v816, %v815
  %v897 = vpack.c.b16 %v818, %v817
  %v898 = vpack.c.b16 %v820, %v819
  %v899 = vpack.c.b16 %v822, %v821
  %v900 = vpack.c.b16 %v824, %v823
  %v901 = vpack.c.b16 %v826, %v825
  %v902 = vpack.c.b16 %v828, %v827
  %v903 = vpack.c.b16 %v830, %v829
  %v904 = vpack.c.b16 %v832, %v831
  %977 = vmatprep.subr.bf16.mxu0 0
  %978 = vmatpush1.bf16.msra.mxu0 %v833
  %979 = vmatprep.subr.bf16.mxu0 0
  %980 = vmatpush1.bf16.msra.mxu0 %v834
  %981 = vmatprep.subr.bf16.mxu0 0
  %982 = vmatpush1.bf16.msra.mxu0 %v835
  %983 = vmatprep.subr.bf16.mxu0 0
  %984 = vmatpush1.bf16.msra.mxu0 %v836
  %985 = vmatprep.subr.bf16.mxu0 0
  %986 = vmatpush1.bf16.msra.mxu0 %v837
  %987 = vmatprep.subr.bf16.mxu0 0
  %988 = vmatpush1.bf16.msra.mxu0 %v838
  %989 = vmatprep.subr.bf16.mxu0 0
  %990 = vmatpush1.bf16.msra.mxu0 %v839
  %991 = vmatprep.subr.bf16.mxu0 0
  %992 = vmatpush1.bf16.msra.mxu0 %v840
  %993 = vmatprep.subr.bf16.mxu0 0
  %994 = vmatpush1.bf16.msra.mxu0 %v841
  %995 = vmatprep.subr.bf16.mxu0 0
  %996 = vmatpush1.bf16.msra.mxu0 %v842
  %997 = vmatprep.subr.bf16.mxu0 0
  %998 = vmatpush1.bf16.msra.mxu0 %v843
  %999 = vmatprep.subr.bf16.mxu0 0
  %1000 = vmatpush1.bf16.msra.mxu0 %v844
  %1001 = vmatprep.subr.bf16.mxu0 0
  %1002 = vmatpush1.bf16.msra.mxu0 %v845
  %1003 = vmatprep.subr.bf16.mxu0 0
  %1004 = vmatpush1.bf16.msra.mxu0 %v846
  %1005 = vmatprep.subr.bf16.mxu0 0
  %1006 = vmatpush1.bf16.msra.mxu0 %v847
  %1007 = vmatprep.subr.bf16.mxu0 0
  %1008 = vmatpush1.bf16.msra.mxu0 %v848
  %1009 = vmatprep.mubr.bf16.mxu0 %v420
  %1010 = vmatmul.mubr.bf16.gmra.mrb[0].mxu0 %v419
  %v1011 = vpop.f32.mrb[0].mxu0
  %v1012 = vadd.f32 %v235, %v1011
  %v1013 = vpop.f32.mrb[0].mxu0
  %v1014 = vpop.f32.mrb[0].mxu0
  %v1015 = vadd.f32 %v235, %v1014
  %v1016 = vpop.f32.mrb[0].mxu0
  %1017 = vmatprep.mubr.bf16.mxu0 %v429
  %1018 = vmatmul.mubr.bf16.gmra.mrb[0].mxu0 %v428
  %v1019 = vpop.f32.mrb[0].mxu0
  %v1020 = vadd.f32 %v235, %v1019
  %v1021 = vpop.f32.mrb[0].mxu0
  %v1022 = vpop.f32.mrb[0].mxu0
  %v1023 = vadd.f32 %v235, %v1022
  %v1024 = vpop.f32.mrb[0].mxu0
  %1025 = vmatprep.mubr.bf16.mxu0 %v438
  %1026 = vmatmul.mubr.bf16.gmra.mrb[0].mxu0 %v437
  %v1027 = vpop.f32.mrb[0].mxu0
  %v1028 = vadd.f32 %v235, %v1027
  %v1029 = vpop.f32.mrb[0].mxu0
  %v1030 = vpop.f32.mrb[0].mxu0
  %v1031 = vadd.f32 %v235, %v1030
  %v1032 = vpop.f32.mrb[0].mxu0
  %1033 = vmatprep.mubr.bf16.mxu0 %v447
  %1034 = vmatmul.mubr.bf16.gmra.mrb[0].mxu0 %v446
  %v1035 = vpop.f32.mrb[0].mxu0
  %v1036 = vadd.f32 %v235, %v1035
  %v1037 = vpop.f32.mrb[0].mxu0
  %v1038 = vpop.f32.mrb[0].mxu0
  %v1039 = vadd.f32 %v235, %v1038
  %v1040 = vpop.f32.mrb[0].mxu0
  %1041 = vmatprep.mubr.bf16.mxu0 %v456
  %1042 = vmatmul.mubr.bf16.gmra.mrb[0].mxu0 %v455
  %v1043 = vpop.f32.mrb[0].mxu0
  %v1044 = vadd.f32 %v235, %v1043
  %v1045 = vpop.f32.mrb[0].mxu0
  %v1046 = vpop.f32.mrb[0].mxu0
  %v1047 = vadd.f32 %v235, %v1046
  %v1048 = vpop.f32.mrb[0].mxu0
  %1049 = vmatprep.mubr.bf16.mxu0 %v465
  %1050 = vmatmul.mubr.bf16.gmra.mrb[0].mxu0 %v464
  %v1051 = vpop.f32.mrb[0].mxu0
  %v1052 = vadd.f32 %v235, %v1051
  %v1053 = vpop.f32.mrb[0].mxu0
  %v1054 = vpop.f32.mrb[0].mxu0
  %v1055 = vadd.f32 %v235, %v1054
  %v1056 = vpop.f32.mrb[0].mxu0
  %1057 = vmatprep.mubr.bf16.mxu0 %v474
  %1058 = vmatmul.mubr.bf16.gmra.mrb[0].mxu0 %v473
  %v1059 = vpop.f32.mrb[0].mxu0
  %v1060 = vadd.f32 %v235, %v1059
  %v1061 = vpop.f32.mrb[0].mxu0
  %v1062 = vpop.f32.mrb[0].mxu0
  %v1063 = vpop.f32.mrb[0].mxu0
  %1064 = vdwg.mxu0
  %1065 = vmatprep.subr.bf16.mxu0 0
  %1066 = vmatpush1.bf16.msra.mxu0 %v849
  %1067 = vmatprep.subr.bf16.mxu0 0
  %1068 = vmatpush1.bf16.msra.mxu0 %v850
  %1069 = vmatprep.subr.bf16.mxu0 0
  %1070 = vmatpush1.bf16.msra.mxu0 %v851
  %1071 = vmatprep.subr.bf16.mxu0 0
  %1072 = vmatpush1.bf16.msra.mxu0 %v852
  %1073 = vmatprep.subr.bf16.mxu0 0
  %1074 = vmatpush1.bf16.msra.mxu0 %v853
  %1075 = vmatprep.subr.bf16.mxu0 0
  %1076 = vmatpush1.bf16.msra.mxu0 %v854
  %1077 = vmatprep.subr.bf16.mxu0 0
  %1078 = vmatpush1.bf16.msra.mxu0 %v855
  %1079 = vmatprep.subr.bf16.mxu0 0
  %1080 = vmatpush1.bf16.msra.mxu0 %v856
  %1081 = vmatprep.subr.bf16.mxu0 0
  %1082 = vmatpush1.bf16.msra.mxu0 %v857
  %1083 = vmatprep.subr.bf16.mxu0 0
  %1084 = vmatpush1.bf16.msra.mxu0 %v858
  %1085 = vmatprep.subr.bf16.mxu0 0
  %1086 = vmatpush1.bf16.msra.mxu0 %v859
  %1087 = vmatprep.subr.bf16.mxu0 0
  %1088 = vmatpush1.bf16.msra.mxu0 %v860
  %1089 = vmatprep.subr.bf16.mxu0 0
  %1090 = vmatpush1.bf16.msra.mxu0 %v861
  %1091 = vmatprep.subr.bf16.mxu0 0
  %1092 = vmatpush1.bf16.msra.mxu0 %v862
  %1093 = vmatprep.subr.bf16.mxu0 0
  %1094 = vmatpush1.bf16.msra.mxu0 %v863
  %1095 = vmatprep.subr.bf16.mxu0 0
  %1096 = vmatpush1.bf16.msra.mxu0 %v864
  %1097 = vmatprep.mubr.bf16.mxu0 %v422
  %1098 = vmatmul.mubr.bf16.gmra.mrb[0].mxu0 %v421
  %v1099 = vpop.f32.mrb[0].mxu0
  %v1100 = vadd.f32 %v1012, %v1099
  %v1101 = vpop.f32.mrb[0].mxu0
  %v1102 = vpop.f32.mrb[0].mxu0
  %v1103 = vadd.f32 %v1015, %v1102
  %v1104 = vpop.f32.mrb[0].mxu0
  %1105 = vmatprep.mubr.bf16.mxu0 %v431
  %1106 = vmatmul.mubr.bf16.gmra.mrb[0].mxu0 %v430
  %v1107 = vpop.f32.mrb[0].mxu0
  %v1108 = vadd.f32 %v1020, %v1107
  %v1109 = vpop.f32.mrb[0].mxu0
  %v1110 = vpop.f32.mrb[0].mxu0
  %v1111 = vadd.f32 %v1023, %v1110
  %v1112 = vpop.f32.mrb[0].mxu0
  %1113 = vmatprep.mubr.bf16.mxu0 %v440
  %1114 = vmatmul.mubr.bf16.gmra.mrb[0].mxu0 %v439
  %v1115 = vpop.f32.mrb[0].mxu0
  %v1116 = vadd.f32 %v1028, %v1115
  %v1117 = vpop.f32.mrb[0].mxu0
  %v1118 = vpop.f32.mrb[0].mxu0
  %v1119 = vadd.f32 %v1031, %v1118
  %v1120 = vpop.f32.mrb[0].mxu0
  %1121 = vmatprep.mubr.bf16.mxu0 %v449
  %1122 = vmatmul.mubr.bf16.gmra.mrb[0].mxu0 %v448
  %v1123 = vpop.f32.mrb[0].mxu0
  %v1124 = vadd.f32 %v1036, %v1123
  %v1125 = vpop.f32.mrb[0].mxu0
  %v1126 = vpop.f32.mrb[0].mxu0
  %v1127 = vadd.f32 %v1039, %v1126
  %v1128 = vpop.f32.mrb[0].mxu0
  %1129 = vmatprep.mubr.bf16.mxu0 %v458
  %1130 = vmatmul.mubr.bf16.gmra.mrb[0].mxu0 %v457
  %v1131 = vpop.f32.mrb[0].mxu0
  %v1132 = vadd.f32 %v1044, %v1131
  %v1133 = vpop.f32.mrb[0].mxu0
  %v1134 = vpop.f32.mrb[0].mxu0
  %v1135 = vadd.f32 %v1047, %v1134
  %v1136 = vpop.f32.mrb[0].mxu0
  %1137 = vmatprep.mubr.bf16.mxu0 %v467
  %1138 = vmatmul.mubr.bf16.gmra.mrb[0].mxu0 %v466
  %v1139 = vpop.f32.mrb[0].mxu0
  %v1140 = vadd.f32 %v1052, %v1139
  %v1141 = vpop.f32.mrb[0].mxu0
  %v1142 = vpop.f32.mrb[0].mxu0
  %v1143 = vadd.f32 %v1055, %v1142
  %v1144 = vpop.f32.mrb[0].mxu0
  %1145 = vmatprep.mubr.bf16.mxu0 %v476
  %1146 = vmatmul.mubr.bf16.gmra.mrb[0].mxu0 %v475
  %v1147 = vpop.f32.mrb[0].mxu0
  %v1148 = vadd.f32 %v1060, %v1147
  %v1149 = vpop.f32.mrb[0].mxu0
  %v1150 = vpop.f32.mrb[0].mxu0
  %v1151 = vpop.f32.mrb[0].mxu0
  %1152 = vdwg.mxu0
  %1153 = vmatprep.subr.bf16.mxu0 0
  %1154 = vmatpush1.bf16.msra.mxu0 %v865
  %1155 = vmatprep.subr.bf16.mxu0 0
  %1156 = vmatpush1.bf16.msra.mxu0 %v866
  %1157 = vmatprep.subr.bf16.mxu0 0
  %1158 = vmatpush1.bf16.msra.mxu0 %v867
  %1159 = vmatprep.subr.bf16.mxu0 0
  %1160 = vmatpush1.bf16.msra.mxu0 %v868
  %1161 = vmatprep.subr.bf16.mxu0 0
  %1162 = vmatpush1.bf16.msra.mxu0 %v869
  %1163 = vmatprep.subr.bf16.mxu0 0
  %1164 = vmatpush1.bf16.msra.mxu0 %v870
  %1165 = vmatprep.subr.bf16.mxu0 0
  %1166 = vmatpush1.bf16.msra.mxu0 %v871
  %1167 = vmatprep.subr.bf16.mxu0 0
  %1168 = vmatpush1.bf16.msra.mxu0 %v872
  %1169 = vmatprep.subr.bf16.mxu0 0
  %1170 = vmatpush1.bf16.msra.mxu0 %v873
  %1171 = vmatprep.subr.bf16.mxu0 0
  %1172 = vmatpush1.bf16.msra.mxu0 %v874
  %1173 = vmatprep.subr.bf16.mxu0 0
  %1174 = vmatpush1.bf16.msra.mxu0 %v875
  %1175 = vmatprep.subr.bf16.mxu0 0
  %1176 = vmatpush1.bf16.msra.mxu0 %v876
  %1177 = vmatprep.subr.bf16.mxu0 0
  %1178 = vmatpush1.bf16.msra.mxu0 %v877
  %1179 = vmatprep.subr.bf16.mxu0 0
  %1180 = vmatpush1.bf16.msra.mxu0 %v878
  %1181 = vmatprep.subr.bf16.mxu0 0
  %1182 = vmatpush1.bf16.msra.mxu0 %v879
  %1183 = vmatprep.subr.bf16.mxu0 0
  %1184 = vmatpush1.bf16.msra.mxu0 %v880
  %1185 = vmatprep.mubr.bf16.mxu0 %v424
  %1186 = vmatmul.mubr.bf16.gmra.mrb[0].mxu0 %v423
  %v1187 = vpop.f32.mrb[0].mxu0
  %v1188 = vadd.f32 %v1100, %v1187
  %v1189 = vpop.f32.mrb[0].mxu0
  %v1190 = vpop.f32.mrb[0].mxu0
  %v1191 = vadd.f32 %v1103, %v1190
  %v1192 = vpop.f32.mrb[0].mxu0
  %1193 = vmatprep.mubr.bf16.mxu0 %v433
  %1194 = vmatmul.mubr.bf16.gmra.mrb[0].mxu0 %v432
  %v1195 = vpop.f32.mrb[0].mxu0
  %v1196 = vadd.f32 %v1108, %v1195
  %v1197 = vpop.f32.mrb[0].mxu0
  %v1198 = vpop.f32.mrb[0].mxu0
  %v1199 = vadd.f32 %v1111, %v1198
  %v1200 = vpop.f32.mrb[0].mxu0
  %1201 = vmatprep.mubr.bf16.mxu0 %v442
  %1202 = vmatmul.mubr.bf16.gmra.mrb[0].mxu0 %v441
  %v1203 = vpop.f32.mrb[0].mxu0
  %v1204 = vadd.f32 %v1116, %v1203
  %v1205 = vpop.f32.mrb[0].mxu0
  %v1206 = vpop.f32.mrb[0].mxu0
  %v1207 = vadd.f32 %v1119, %v1206
  %v1208 = vpop.f32.mrb[0].mxu0
  %1209 = vmatprep.mubr.bf16.mxu0 %v451
  %1210 = vmatmul.mubr.bf16.gmra.mrb[0].mxu0 %v450
  %v1211 = vpop.f32.mrb[0].mxu0
  %v1212 = vadd.f32 %v1124, %v1211
  %v1213 = vpop.f32.mrb[0].mxu0
  %v1214 = vpop.f32.mrb[0].mxu0
  %v1215 = vadd.f32 %v1127, %v1214
  %v1216 = vpop.f32.mrb[0].mxu0
  %1217 = vmatprep.mubr.bf16.mxu0 %v460
  %1218 = vmatmul.mubr.bf16.gmra.mrb[0].mxu0 %v459
  %v1219 = vpop.f32.mrb[0].mxu0
  %v1220 = vadd.f32 %v1132, %v1219
  %v1221 = vpop.f32.mrb[0].mxu0
  %v1222 = vpop.f32.mrb[0].mxu0
  %v1223 = vadd.f32 %v1135, %v1222
  %v1224 = vpop.f32.mrb[0].mxu0
  %1225 = vmatprep.mubr.bf16.mxu0 %v469
  %1226 = vmatmul.mubr.bf16.gmra.mrb[0].mxu0 %v468
  %v1227 = vpop.f32.mrb[0].mxu0
  %v1228 = vadd.f32 %v1140, %v1227
  %v1229 = vpop.f32.mrb[0].mxu0
  %v1230 = vpop.f32.mrb[0].mxu0
  %v1231 = vadd.f32 %v1143, %v1230
  %v1232 = vpop.f32.mrb[0].mxu0
  %1233 = vmatprep.mubr.bf16.mxu0 %v478
  %1234 = vmatmul.mubr.bf16.gmra.mrb[0].mxu0 %v477
  %v1235 = vpop.f32.mrb[0].mxu0
  %v1236 = vadd.f32 %v1148, %v1235
  %v1237 = vpop.f32.mrb[0].mxu0
  %v1238 = vpop.f32.mrb[0].mxu0
  %v1239 = vpop.f32.mrb[0].mxu0
  %1240 = vdwg.mxu0
  %1241 = vmatprep.subr.bf16.mxu0 0
  %1242 = vmatpush1.bf16.msra.mxu0 %v881
  %1243 = vmatprep.subr.bf16.mxu0 0
  %1244 = vmatpush1.bf16.msra.mxu0 %v882
  %1245 = vmatprep.subr.bf16.mxu0 0
  %1246 = vmatpush1.bf16.msra.mxu0 %v883
  %1247 = vmatprep.subr.bf16.mxu0 0
  %1248 = vmatpush1.bf16.msra.mxu0 %v884
  %1249 = vmatprep.subr.bf16.mxu0 0
  %1250 = vmatpush1.bf16.msra.mxu0 %v885
  %1251 = vmatprep.subr.bf16.mxu0 0
  %1252 = vmatpush1.bf16.msra.mxu0 %v886
  %1253 = vmatprep.subr.bf16.mxu0 0
  %1254 = vmatpush1.bf16.msra.mxu0 %v887
  %1255 = vmatprep.subr.bf16.mxu0 0
  %1256 = vmatpush1.bf16.msra.mxu0 %v888
  %1257 = vmatprep.subr.bf16.mxu0 0
  %1258 = vmatpush1.bf16.msra.mxu0 %v889
  %1259 = vmatprep.subr.bf16.mxu0 0
  %1260 = vmatpush1.bf16.msra.mxu0 %v890
  %1261 = vmatprep.subr.bf16.mxu0 0
  %1262 = vmatpush1.bf16.msra.mxu0 %v891
  %1263 = vmatprep.subr.bf16.mxu0 0
  %1264 = vmatpush1.bf16.msra.mxu0 %v892
  %1265 = vmatprep.subr.bf16.mxu0 0
  %1266 = vmatpush1.bf16.msra.mxu0 %v893
  %1267 = vmatprep.subr.bf16.mxu0 0
  %1268 = vmatpush1.bf16.msra.mxu0 %v894
  %1269 = vmatprep.subr.bf16.mxu0 0
  %1270 = vmatpush1.bf16.msra.mxu0 %v895
  %1271 = vmatprep.subr.bf16.mxu0 0
  %1272 = vmatpush1.bf16.msra.mxu0 %v896
  %1273 = vmatprep.mubr.bf16.mxu0 %v426
  %1274 = vmatmul.mubr.bf16.gmra.mrb[0].mxu0 %v425
  %v1275 = vpop.f32.mrb[0].mxu0
  %v1276 = vadd.f32 %v1188, %v1275
  %v1277 = vpop.f32.mrb[0].mxu0
  %v1278 = vpop.f32.mrb[0].mxu0
  %v1279 = vadd.f32 %v1191, %v1278
  %v1280 = vpop.f32.mrb[0].mxu0
  %1281 = vmatprep.mubr.bf16.mxu0 %v435
  %1282 = vmatmul.mubr.bf16.gmra.mrb[0].mxu0 %v434
  %v1283 = vpop.f32.mrb[0].mxu0
  %v1284 = vadd.f32 %v1196, %v1283
  %v1285 = vpop.f32.mrb[0].mxu0
  %v1286 = vpop.f32.mrb[0].mxu0
  %v1287 = vadd.f32 %v1199, %v1286
  %v1288 = vpop.f32.mrb[0].mxu0
  %1289 = vmatprep.mubr.bf16.mxu0 %v444
  %1290 = vmatmul.mubr.bf16.gmra.mrb[0].mxu0 %v443
  %v1291 = vpop.f32.mrb[0].mxu0
  %v1292 = vadd.f32 %v1204, %v1291
  %v1293 = vpop.f32.mrb[0].mxu0
  %v1294 = vpop.f32.mrb[0].mxu0
  %v1295 = vadd.f32 %v1207, %v1294
  %v1296 = vpop.f32.mrb[0].mxu0
  %1297 = vmatprep.mubr.bf16.mxu0 %v453
  %1298 = vmatmul.mubr.bf16.gmra.mrb[0].mxu0 %v452
  %v1299 = vpop.f32.mrb[0].mxu0
  %v1300 = vadd.f32 %v1212, %v1299
  %v1301 = vpop.f32.mrb[0].mxu0
  %v1302 = vpop.f32.mrb[0].mxu0
  %v1303 = vadd.f32 %v1215, %v1302
  %v1304 = vpop.f32.mrb[0].mxu0
  %1305 = vmatprep.mubr.bf16.mxu0 %v462
  %1306 = vmatmul.mubr.bf16.gmra.mrb[0].mxu0 %v461
  %v1307 = vpop.f32.mrb[0].mxu0
  %v1308 = vadd.f32 %v1220, %v1307
  %v1309 = vpop.f32.mrb[0].mxu0
  %v1310 = vpop.f32.mrb[0].mxu0
  %v1311 = vadd.f32 %v1223, %v1310
  %v1312 = vpop.f32.mrb[0].mxu0
  %1313 = vmatprep.mubr.bf16.mxu0 %v471
  %1314 = vmatmul.mubr.bf16.gmra.mrb[0].mxu0 %v470
  %v1315 = vpop.f32.mrb[0].mxu0
  %v1316 = vadd.f32 %v1228, %v1315
  %v1317 = vpop.f32.mrb[0].mxu0
  %v1318 = vpop.f32.mrb[0].mxu0
  %v1319 = vadd.f32 %v1231, %v1318
  %v1320 = vpop.f32.mrb[0].mxu0
  %1321 = vmatprep.mubr.bf16.mxu0 %v480
  %1322 = vmatmul.mubr.bf16.gmra.mrb[0].mxu0 %v479
  %v1323 = vpop.f32.mrb[0].mxu0
  %v1324 = vadd.f32 %v1236, %v1323
  %v1325 = vpop.f32.mrb[0].mxu0
  %v1326 = vpop.f32.mrb[0].mxu0
  %v1327 = vpop.f32.mrb[0].mxu0
  %1328 = vdwg.mxu0
  %1329 = vmatprep.subr.bf16.mxu0 0
  %1330 = vmatpush1.bf16.msra.mxu0 %v897
  %1331 = vmatprep.subr.bf16.mxu0 0
  %1332 = vmatpush1.bf16.msra.mxu0 %v898
  %1333 = vmatprep.subr.bf16.mxu0 0
  %1334 = vmatpush1.bf16.msra.mxu0 %v899
  %1335 = vmatprep.subr.bf16.mxu0 0
  %1336 = vmatpush1.bf16.msra.mxu0 %v900
  %1337 = vmatprep.subr.bf16.mxu0 0
  %1338 = vmatpush1.bf16.msra.mxu0 %v901
  %1339 = vmatprep.subr.bf16.mxu0 0
  %1340 = vmatpush1.bf16.msra.mxu0 %v902
  %1341 = vmatprep.subr.bf16.mxu0 0
  %1342 = vmatpush1.bf16.msra.mxu0 %v903
  %1343 = vmatprep.subr.bf16.mxu0 0
  %1344 = vmatpush1.bf16.msra.mxu0 %v904
  %1345 = vmatprep.subr.bf16.mxu0 0
  %1346 = vmatpush1.bf16.msra.mxu0 0
  %1347 = vmatprep.subr.bf16.mxu0 0
  %1348 = vmatpush1.bf16.msra.mxu0 0
  %1349 = vmatprep.subr.bf16.mxu0 0
  %1350 = vmatpush1.bf16.msra.mxu0 0
  %1351 = vmatprep.subr.bf16.mxu0 0
  %1352 = vmatpush1.bf16.msra.mxu0 0
  %1353 = vmatprep.subr.bf16.mxu0 0
  %1354 = vmatpush1.bf16.msra.mxu0 0
  %1355 = vmatprep.subr.bf16.mxu0 0
  %1356 = vmatpush1.bf16.msra.mxu0 0
  %1357 = vmatprep.subr.bf16.mxu0 0
  %1358 = vmatpush1.bf16.msra.mxu0 0
  %1359 = vmatprep.subr.bf16.mxu0 0
  %1360 = vmatpush1.bf16.msra.mxu0 0
  %1361 = vmatprep.mubr.bf16.mxu0 0
  %1362 = vmatmul.mubr.bf16.gmra.mrb[0].mxu0 %v427
  %v1363 = vpop.f32.mrb[0].mxu0
  %v1364 = vadd.f32 %v1276, %v1363
  %v1365 = vpop.f32.mrb[0].mxu0
  %v1366 = vpop.f32.mrb[0].mxu0
  %v1367 = vadd.f32 %v1279, %v1366
  %v1368 = vpop.f32.mrb[0].mxu0
  %1369 = vmatprep.mubr.bf16.mxu0 0
  %1370 = vmatmul.mubr.bf16.gmra.mrb[0].mxu0 %v436
  %v1371 = vpop.f32.mrb[0].mxu0
  %v1372 = vadd.f32 %v1284, %v1371
  %v1373 = vpop.f32.mrb[0].mxu0
  %v1374 = vpop.f32.mrb[0].mxu0
  %v1375 = vadd.f32 %v1287, %v1374
  %v1376 = vpop.f32.mrb[0].mxu0
  %1377 = vmatprep.mubr.bf16.mxu0 0
  %1378 = vmatmul.mubr.bf16.gmra.mrb[0].mxu0 %v445
  %v1379 = vpop.f32.mrb[0].mxu0
  %v1380 = vadd.f32 %v1292, %v1379
  %v1381 = vpop.f32.mrb[0].mxu0
  %v1382 = vpop.f32.mrb[0].mxu0
  %v1383 = vadd.f32 %v1295, %v1382
  %v1384 = vpop.f32.mrb[0].mxu0
  %1385 = vmatprep.mubr.bf16.mxu0 0
  %1386 = vmatmul.mubr.bf16.gmra.mrb[0].mxu0 %v454
  %v1387 = vpop.f32.mrb[0].mxu0
  %v1388 = vadd.f32 %v1300, %v1387
  %v1389 = vpop.f32.mrb[0].mxu0
  %v1390 = vpop.f32.mrb[0].mxu0
  %v1391 = vadd.f32 %v1303, %v1390
  %v1392 = vpop.f32.mrb[0].mxu0
  %1393 = vmatprep.mubr.bf16.mxu0 0
  %1394 = vmatmul.mubr.bf16.gmra.mrb[0].mxu0 %v463
  %v1395 = vpop.f32.mrb[0].mxu0
  %v1396 = vadd.f32 %v1308, %v1395
  %v1397 = vpop.f32.mrb[0].mxu0
  %v1398 = vpop.f32.mrb[0].mxu0
  %v1399 = vadd.f32 %v1311, %v1398
  %v1400 = vpop.f32.mrb[0].mxu0
  %1401 = vmatprep.mubr.bf16.mxu0 0
  %1402 = vmatmul.mubr.bf16.gmra.mrb[0].mxu0 %v472
  %v1403 = vpop.f32.mrb[0].mxu0
  %v1404 = vadd.f32 %v1316, %v1403
  %v1405 = vpop.f32.mrb[0].mxu0
  %v1406 = vpop.f32.mrb[0].mxu0
  %v1407 = vadd.f32 %v1319, %v1406
  %v1408 = vpop.f32.mrb[0].mxu0
  %1409 = vmatprep.mubr.bf16.mxu0 0
  %1410 = vmatmul.mubr.bf16.gmra.mrb[0].mxu0 %v481
  %v1411 = vpop.f32.mrb[0].mxu0
  %v1412 = vadd.f32 %v1324, %v1411
  %v1413 = vpop.f32.mrb[0].mxu0
  %v1414 = vpop.f32.mrb[0].mxu0
  %v1415 = vpop.f32.mrb[0].mxu0
  %1416 = vdwg.mxu0
  %v1417 = vadd.f32 %v1364, %v1367
  %v1418 = vadd.f32 %v1417, %v1372
  %v1419 = vadd.f32 %v1418, %v1375
  %v1420 = vadd.f32 %v1419, %v1380
  %v1421 = vadd.f32 %v1420, %v1383
  %v1422 = vadd.f32 %v1421, %v1388
  %v1423 = vadd.f32 %v1422, %v1391
  %v1424 = vadd.f32 %v1423, %v1396
  %v1425 = vadd.f32 %v1424, %v1399
  %v1426 = vadd.f32 %v1425, %v1404
  %v1427 = vadd.f32 %v1426, %v1407
  %vm1428 = vcmask 1041408
  %v1429 = vsel %vm1428, %v1412, 0.0
  %v1430 = vadd.f32 %v1427, %v1429
  %v1431 = vrot.slane %v1430, 4
  %v1432 = vadd.f32 %v1430, %v1431
  %v1433 = vrot.slane %v1432, 2
  %v1434 = vadd.f32 %v1432, %v1433
  %v1435 = vrot.slane %v1434, 1
  %v1436 = vadd.f32 %v1434, %v1435
  %v1437 = vmul.f32 %v1436, 0.010204081
  %v1438 = vmul.f32 %v1364, %v1364
  %v1439 = vmul.f32 %v1367, %v1367
  %v1440 = vmul.f32 %v1372, %v1372
  %v1441 = vmul.f32 %v1375, %v1375
  %v1442 = vmul.f32 %v1380, %v1380
  %v1443 = vmul.f32 %v1383, %v1383
  %v1444 = vmul.f32 %v1388, %v1388
  %v1445 = vmul.f32 %v1391, %v1391
  %v1446 = vmul.f32 %v1396, %v1396
  %v1447 = vmul.f32 %v1399, %v1399
  %v1448 = vmul.f32 %v1404, %v1404
  %v1449 = vmul.f32 %v1407, %v1407
  %v1450 = vmul.f32 %v1412, %v1412
  %v1451 = vadd.f32 %v1438, %v1439
  %v1452 = vadd.f32 %v1451, %v1440
  %v1453 = vadd.f32 %v1452, %v1441
  %v1454 = vadd.f32 %v1453, %v1442
  %v1455 = vadd.f32 %v1454, %v1443
  %v1456 = vadd.f32 %v1455, %v1444
  %v1457 = vadd.f32 %v1456, %v1445
  %v1458 = vadd.f32 %v1457, %v1446
  %v1459 = vadd.f32 %v1458, %v1447
  %v1460 = vadd.f32 %v1459, %v1448
  %v1461 = vadd.f32 %v1460, %v1449
  %v1462 = vsel %vm1428, %v1450, 0.0
  %v1463 = vadd.f32 %v1461, %v1462
  %v1464 = vrot.slane %v1463, 4
  %v1465 = vadd.f32 %v1463, %v1464
  %v1466 = vrot.slane %v1465, 2
  %v1467 = vadd.f32 %v1465, %v1466
  %v1468 = vrot.slane %v1467, 1
  %v1469 = vadd.f32 %v1467, %v1468
  %v1470 = vmul.f32 %v1469, 0.010204081
  %v1471 = vmul.f32 %v1437, %v1437
  %v1472 = vsub.f32 %v1470, %v1471
  %v1473 = vmax.f32 %v1472, 0.0
  %v1474 = vsub.f32 %v1364, %v1437
  %v1475 = vsub.f32 %v1367, %v1437
  %v1476 = vsub.f32 %v1372, %v1437
  %v1477 = vsub.f32 %v1375, %v1437
  %v1478 = vsub.f32 %v1380, %v1437
  %v1479 = vsub.f32 %v1383, %v1437
  %v1480 = vsub.f32 %v1388, %v1437
  %v1481 = vsub.f32 %v1391, %v1437
  %v1482 = vsub.f32 %v1396, %v1437
  %v1483 = vsub.f32 %v1399, %v1437
  %v1484 = vsub.f32 %v1404, %v1437
  %v1485 = vsub.f32 %v1407, %v1437
  %v1486 = vsub.f32 %v1412, %v1437
  %v1487 = vadd.f32 %v1473, 1e-05
  %v1488 = vrsqrt.pop %v1487
  %v1489 = vmul.f32 %v1474, %v1488
  %v1490 = vmul.f32 %v1475, %v1488
  %v1491 = vmul.f32 %v1476, %v1488
  %v1492 = vmul.f32 %v1477, %v1488
  %v1493 = vmul.f32 %v1478, %v1488
  %v1494 = vmul.f32 %v1479, %v1488
  %v1495 = vmul.f32 %v1480, %v1488
  %v1496 = vmul.f32 %v1481, %v1488
  %v1497 = vmul.f32 %v1482, %v1488
  %v1498 = vmul.f32 %v1483, %v1488
  %v1499 = vmul.f32 %v1484, %v1488
  %v1500 = vmul.f32 %v1485, %v1488
  %v1501 = vmul.f32 %v1486, %v1488
  %v1502 = vld [vmem:[%s3] sm:$0x1]
  %v1504 = vlaneseq
  %v1505 = vshrl.u32 %v1504, 7
  %v1506 = vsub.s32 0, %v1505
  %v1507 = vrot.slane %v1502, %v1506
  %v1509 = vmul.f32 %v1489, %v1507
  %v1510 = vmul.f32 %v1490, %v1507
  %v1511 = vmul.f32 %v1491, %v1507
  %v1512 = vmul.f32 %v1492, %v1507
  %v1513 = vmul.f32 %v1493, %v1507
  %v1514 = vmul.f32 %v1494, %v1507
  %v1515 = vmul.f32 %v1495, %v1507
  %v1516 = vmul.f32 %v1496, %v1507
  %v1517 = vmul.f32 %v1497, %v1507
  %v1518 = vmul.f32 %v1498, %v1507
  %v1519 = vmul.f32 %v1499, %v1507
  %v1520 = vmul.f32 %v1500, %v1507
  %v1521 = vmul.f32 %v1501, %v1507
  %v1522 = vld [vmem:[%s4] sm:$0x1]
  %v1524 = vlaneseq
  %v1525 = vshrl.u32 %v1524, 7
  %v1526 = vsub.s32 0, %v1525
  %v1527 = vrot.slane %v1522, %v1526
  %v1529 = vadd.f32 %v1509, %v1527
  %v1530 = vadd.f32 %v1510, %v1527
  %v1531 = vadd.f32 %v1511, %v1527
  %v1532 = vadd.f32 %v1512, %v1527
  %v1533 = vadd.f32 %v1513, %v1527
  %v1534 = vadd.f32 %v1514, %v1527
  %v1535 = vadd.f32 %v1515, %v1527
  %v1536 = vadd.f32 %v1516, %v1527
  %v1537 = vadd.f32 %v1517, %v1527
  %v1538 = vadd.f32 %v1518, %v1527
  %v1539 = vadd.f32 %v1519, %v1527
  %v1540 = vadd.f32 %v1520, %v1527
  %v1541 = vadd.f32 %v1521, %v1527
  %vm1542 = vcmp.gt.f32.partialorder %v1529, 0.0
  %vm1543 = vcmp.gt.f32.partialorder %v1530, 0.0
  %vm1544 = vcmp.gt.f32.partialorder %v1531, 0.0
  %vm1545 = vcmp.gt.f32.partialorder %v1532, 0.0
  %vm1546 = vcmp.gt.f32.partialorder %v1533, 0.0
  %vm1547 = vcmp.gt.f32.partialorder %v1534, 0.0
  %vm1548 = vcmp.gt.f32.partialorder %v1535, 0.0
  %vm1549 = vcmp.gt.f32.partialorder %v1536, 0.0
  %vm1550 = vcmp.gt.f32.partialorder %v1537, 0.0
  %vm1551 = vcmp.gt.f32.partialorder %v1538, 0.0
  %vm1552 = vcmp.gt.f32.partialorder %v1539, 0.0
  %vm1553 = vcmp.gt.f32.partialorder %v1540, 0.0
  %vm1554 = vcmp.gt.f32.partialorder %v1541, 0.0
  %v1555 = vmul.f32 %v1529, 0.2
  %v1556 = vmul.f32 %v1530, 0.2
  %v1557 = vmul.f32 %v1531, 0.2
  %v1558 = vmul.f32 %v1532, 0.2
  %v1559 = vmul.f32 %v1533, 0.2
  %v1560 = vmul.f32 %v1534, 0.2
  %v1561 = vmul.f32 %v1535, 0.2
  %v1562 = vmul.f32 %v1536, 0.2
  %v1563 = vmul.f32 %v1537, 0.2
  %v1564 = vmul.f32 %v1538, 0.2
  %v1565 = vmul.f32 %v1539, 0.2
  %v1566 = vmul.f32 %v1540, 0.2
  %v1567 = vmul.f32 %v1541, 0.2
  %v1568 = vsel %vm1542, %v1529, %v1555
  %v1569 = vsel %vm1543, %v1530, %v1556
  %v1570 = vsel %vm1544, %v1531, %v1557
  %v1571 = vsel %vm1545, %v1532, %v1558
  %v1572 = vsel %vm1546, %v1533, %v1559
  %v1573 = vsel %vm1547, %v1534, %v1560
  %v1574 = vsel %vm1548, %v1535, %v1561
  %v1575 = vsel %vm1549, %v1536, %v1562
  %v1576 = vsel %vm1550, %v1537, %v1563
  %v1577 = vsel %vm1551, %v1538, %v1564
  %v1578 = vsel %vm1552, %v1539, %v1565
  %v1579 = vsel %vm1553, %v1540, %v1566
  %v1580 = vsel %vm1554, %v1541, %v1567
  %v1581 = vpack.c.bf16 %v1569, %v1568
  %v1582 = vpack.c.bf16 %v1571, %v1570
  %v1583 = vpack.c.bf16 %v1573, %v1572
  %v1584 = vpack.c.bf16 %v1575, %v1574
  %v1585 = vpack.c.bf16 %v1577, %v1576
  %v1586 = vpack.c.bf16 %v1579, %v1578
  %v1587 = vpack.c.bf16 %v1580, %v1580
  %v1595 = vunpack.c.l.b16 %v1581
  %v1596 = vunpack.c.h.b16 %v1581
  %v1597 = vunpack.c.l.b16 %v1582
  %v1598 = vunpack.c.h.b16 %v1582
  %v1599 = vunpack.c.l.b16 %v1583
  %v1600 = vunpack.c.h.b16 %v1583
  %v1601 = vunpack.c.l.b16 %v1584
  %v1602 = vunpack.c.h.b16 %v1584
  %v1603 = vunpack.c.l.b16 %v1585
  %v1604 = vunpack.c.h.b16 %v1585
  %v1605 = vunpack.c.l.b16 %v1586
  %v1606 = vunpack.c.h.b16 %v1586
  %v1607 = vunpack.c.l.b16 %v1587
  %v1608 = vpack.c.b16 %v1595, %v1595
  %v1609 = vpack.c.b16 %v1596, %v1596
  %v1610 = vpack.c.b16 %v1597, %v1597
  %v1611 = vpack.c.b16 %v1598, %v1598
  %v1612 = vpack.c.b16 %v1599, %v1599
  %v1613 = vpack.c.b16 %v1600, %v1600
  %v1614 = vpack.c.b16 %v1601, %v1601
  %v1615 = vpack.c.b16 %v1602, %v1602
  %v1616 = vpack.c.b16 %v1603, %v1603
  %v1617 = vpack.c.b16 %v1604, %v1604
  %v1618 = vpack.c.b16 %v1605, %v1605
  %v1619 = vpack.c.b16 %v1606, %v1606
  %v1620 = vpack.c.b16 %v1607, %v1607
  %1634 = vst [vmem:[%s5] sm:$0xf] %v1608
  %1635 = vst [vmem:[%s5 + $0x4] sm:$0xf] %v1609
  %1636 = vst [vmem:[%s5 + $0x8] sm:$0xf] %v1610
  %1637 = vst [vmem:[%s5 + $0xc] sm:$0xf] %v1611
  %1638 = vst [vmem:[%s5 + $0x10] sm:$0xf] %v1612
  %1639 = vst [vmem:[%s5 + $0x14] sm:$0xf] %v1613
  %1640 = vst [vmem:[%s5 + $0x18] sm:$0xf] %v1614
  %1641 = vst [vmem:[%s5 + $0x1c] sm:$0xf] %v1615
  %1642 = vst [vmem:[%s5 + $0x20] sm:$0xf] %v1616
  %1643 = vst [vmem:[%s5 + $0x24] sm:$0xf] %v1617
  %1644 = vst [vmem:[%s5 + $0x28] sm:$0xf] %v1618
  %1645 = vst [vmem:[%s5 + $0x2c] sm:$0xf] %v1619
  %1646 = vst [vmem:[%s5 + $0x30] sm:$0x1] %v1620
  // Predicated region
  $region22: #{vae_forward.8} parent=0 // pred_check
    _
  $region23: #{vae_forward.8} parent=0 // pred_check_branch
    %1648 = sbr.rel (0) target = $region25
  $region24: #{vae_forward.8} parent=0 // pred_region
    _
  $region25: #{vae_forward.8} parent=0 // pred_fallthru
    _
  // Predicated region
  $region26: #{vae_forward.8} parent=0 // pred_check
    _
  $region27: #{vae_forward.8} parent=0 // pred_check_branch
    %1650 = sbr.rel (0) target = $region29
  $region28: #{vae_forward.8} parent=0 // pred_region
    _
  $region29: #{vae_forward.8} parent=0 // pred_fallthru
    _

// kernel: vae_forward.10
$region0: #{vae_forward.10}
  #allocation0 [shape = 'u32[]', space=smem, size = 0x4, offset = 0x4, fixed_abs, tag = 'smem constant byte address 0x4 - core index']
  #allocation1 [shape = 'u32[144,128]{1,0:T(1,128)}', space=vmem, size = 0x12000, scoped, tag = 'internal scratch']
  %s0 = inlined_call_operand.vmem [shape: bf16[128,512], index: 0, kind: input, shape index: {}]
  %s1 = inlined_call_operand.vmem [shape: bf16[512,256], index: 1, kind: input, shape index: {}]
  %s2 = inlined_call_operand.vmem [shape: f32[1,256], index: 2, kind: input, shape index: {}]
  %s3 = inlined_call_operand.vmem [shape: bf16[128,256], index: 3, kind: output, shape index: {}]
  %s4 = sld [smem:[#allocation0]]
  $region22: #{vae_forward.10} parent=0
    _
  %s6 = ssub.s32 1, %s4
  %s7 = scalar_select 0, %s6, %s4
  // Predicated region
  $region2: #{vae_forward.10} parent=0 // pred_check
    _
  $region3: #{vae_forward.10} parent=0 // pred_check_branch
    %9 = sbr.rel (0) target = $region5
  $region4: #{vae_forward.10} parent=0 // pred_region
    _
  $region5: #{vae_forward.10} parent=0 // pred_fallthru
    _
  // Predicated region
  $region6: #{vae_forward.10} parent=0 // pred_check
    _
  $region7: #{vae_forward.10} parent=0 // pred_check_branch
    %11 = sbr.rel (0) target = $region9
  $region8: #{vae_forward.10} parent=0 // pred_region
    _
  $region9: #{vae_forward.10} parent=0 // pred_fallthru
    _
  // Predicated region
  $region10: #{vae_forward.10} parent=0 // pred_check
    _
  $region11: #{vae_forward.10} parent=0 // pred_check_branch
    %13 = sbr.rel (0) target = $region13
  $region12: #{vae_forward.10} parent=0 // pred_region
    _
  $region13: #{vae_forward.10} parent=0 // pred_fallthru
    _
  %v14 = vld [vmem:[%s0] sm:$0xff]
  %v15 = vld [vmem:[%s0 + $0x8] sm:$0xff]
  %v16 = vld [vmem:[%s0 + $0x10] sm:$0xff]
  %v17 = vld [vmem:[%s0 + $0x18] sm:$0xff]
  %v18 = vld [vmem:[%s0 + $0x20] sm:$0xff]
  %v19 = vld [vmem:[%s0 + $0x28] sm:$0xff]
  %v20 = vld [vmem:[%s0 + $0x30] sm:$0xff]
  %v21 = vld [vmem:[%s0 + $0x38] sm:$0xff]
  %v22 = vld [vmem:[%s0 + $0x40] sm:$0xff]
  %v23 = vld [vmem:[%s0 + $0x48] sm:$0xff]
  %v24 = vld [vmem:[%s0 + $0x50] sm:$0xff]
  %v25 = vld [vmem:[%s0 + $0x58] sm:$0xff]
  %v26 = vld [vmem:[%s0 + $0x60] sm:$0xff]
  %v27 = vld [vmem:[%s0 + $0x68] sm:$0xff]
  %v28 = vld [vmem:[%s0 + $0x70] sm:$0xff]
  %v29 = vld [vmem:[%s0 + $0x78] sm:$0xff]
  %v30 = vld [vmem:[%s0 + $0x80] sm:$0xff]
  %v31 = vld [vmem:[%s0 + $0x88] sm:$0xff]
  %v32 = vld [vmem:[%s0 + $0x90] sm:$0xff]
  %v33 = vld [vmem:[%s0 + $0x98] sm:$0xff]
  %v34 = vld [vmem:[%s0 + $0xa0] sm:$0xff]
  %v35 = vld [vmem:[%s0 + $0xa8] sm:$0xff]
  %v36 = vld [vmem:[%s0 + $0xb0] sm:$0xff]
  %v37 = vld [vmem:[%s0 + $0xb8] sm:$0xff]
  %v38 = vld [vmem:[%s0 + $0xc0] sm:$0xff]
  %v39 = vld [vmem:[%s0 + $0xc8] sm:$0xff]
  %v40 = vld [vmem:[%s0 + $0xd0] sm:$0xff]
  %v41 = vld [vmem:[%s0 + $0xd8] sm:$0xff]
  %v42 = vld [vmem:[%s0 + $0xe0] sm:$0xff]
  %v43 = vld [vmem:[%s0 + $0xe8] sm:$0xff]
  %v44 = vld [vmem:[%s0 + $0xf0] sm:$0xff]
  %v45 = vld [vmem:[%s0 + $0xf8] sm:$0xff]
  %v46 = vld [vmem:[%s1] sm:$0xff]
  %v47 = vld [vmem:[%s1 + $0x8] sm:$0xff]
  %v48 = vld [vmem:[%s1 + $0x10] sm:$0xff]
  %v49 = vld [vmem:[%s1 + $0x18] sm:$0xff]
  %v50 = vld [vmem:[%s1 + $0x20] sm:$0xff]
  %v51 = vld [vmem:[%s1 + $0x28] sm:$0xff]
  %v52 = vld [vmem:[%s1 + $0x30] sm:$0xff]
  %v53 = vld [vmem:[%s1 + $0x38] sm:$0xff]
  %v54 = vld [vmem:[%s1 + $0x40] sm:$0xff]
  %v55 = vld [vmem:[%s1 + $0x48] sm:$0xff]
  %v56 = vld [vmem:[%s1 + $0x50] sm:$0xff]
  %v57 = vld [vmem:[%s1 + $0x58] sm:$0xff]
  %v58 = vld [vmem:[%s1 + $0x60] sm:$0xff]
  %v59 = vld [vmem:[%s1 + $0x68] sm:$0xff]
  %v60 = vld [vmem:[%s1 + $0x70] sm:$0xff]
  %v61 = vld [vmem:[%s1 + $0x78] sm:$0xff]
  %v62 = vld [vmem:[%s1 + $0x80] sm:$0xff]
  %v63 = vld [vmem:[%s1 + $0x88] sm:$0xff]
  %v64 = vld [vmem:[%s1 + $0x90] sm:$0xff]
  %v65 = vld [vmem:[%s1 + $0x98] sm:$0xff]
  %v66 = vld [vmem:[%s1 + $0xa0] sm:$0xff]
  %v67 = vld [vmem:[%s1 + $0xa8] sm:$0xff]
  %v68 = vld [vmem:[%s1 + $0xb0] sm:$0xff]
  %v69 = vld [vmem:[%s1 + $0xb8] sm:$0xff]
  %v70 = vld [vmem:[%s1 + $0xc0] sm:$0xff]
  %v71 = vld [vmem:[%s1 + $0xc8] sm:$0xff]
  %v72 = vld [vmem:[%s1 + $0xd0] sm:$0xff]
  %v73 = vld [vmem:[%s1 + $0xd8] sm:$0xff]
  %v74 = vld [vmem:[%s1 + $0xe0] sm:$0xff]
  %v75 = vld [vmem:[%s1 + $0xe8] sm:$0xff]
  %v76 = vld [vmem:[%s1 + $0xf0] sm:$0xff]
  %v77 = vld [vmem:[%s1 + $0xf8] sm:$0xff]
  %v78 = vld [vmem:[%s1 + $0x100] sm:$0xff]
  %v79 = vld [vmem:[%s1 + $0x108] sm:$0xff]
  %v80 = vld [vmem:[%s1 + $0x110] sm:$0xff]
  %v81 = vld [vmem:[%s1 + $0x118] sm:$0xff]
  %v82 = vld [vmem:[%s1 + $0x120] sm:$0xff]
  %v83 = vld [vmem:[%s1 + $0x128] sm:$0xff]
  %v84 = vld [vmem:[%s1 + $0x130] sm:$0xff]
  %v85 = vld [vmem:[%s1 + $0x138] sm:$0xff]
  %v86 = vld [vmem:[%s1 + $0x140] sm:$0xff]
  %v87 = vld [vmem:[%s1 + $0x148] sm:$0xff]
  %v88 = vld [vmem:[%s1 + $0x150] sm:$0xff]
  %v89 = vld [vmem:[%s1 + $0x158] sm:$0xff]
  %v90 = vld [vmem:[%s1 + $0x160] sm:$0xff]
  %v91 = vld [vmem:[%s1 + $0x168] sm:$0xff]
  %v92 = vld [vmem:[%s1 + $0x170] sm:$0xff]
  %v93 = vld [vmem:[%s1 + $0x178] sm:$0xff]
  %v94 = vld [vmem:[%s1 + $0x180] sm:$0xff]
  %v95 = vld [vmem:[%s1 + $0x188] sm:$0xff]
  %v96 = vld [vmem:[%s1 + $0x190] sm:$0xff]
  %v97 = vld [vmem:[%s1 + $0x198] sm:$0xff]
  %v98 = vld [vmem:[%s1 + $0x1a0] sm:$0xff]
  %v99 = vld [vmem:[%s1 + $0x1a8] sm:$0xff]
  %v100 = vld [vmem:[%s1 + $0x1b0] sm:$0xff]
  %v101 = vld [vmem:[%s1 + $0x1b8] sm:$0xff]
  %v102 = vld [vmem:[%s1 + $0x1c0] sm:$0xff]
  %v103 = vld [vmem:[%s1 + $0x1c8] sm:$0xff]
  %v104 = vld [vmem:[%s1 + $0x1d0] sm:$0xff]
  %v105 = vld [vmem:[%s1 + $0x1d8] sm:$0xff]
  %v106 = vld [vmem:[%s1 + $0x1e0] sm:$0xff]
  %v107 = vld [vmem:[%s1 + $0x1e8] sm:$0xff]
  %v108 = vld [vmem:[%s1 + $0x1f0] sm:$0xff]
  %v109 = vld [vmem:[%s1 + $0x1f8] sm:$0xff]
  %v110 = vld [vmem:[%s2] sm:$0x3]
  %v112 = vlaneseq
  %v113 = vshrl.u32 %v112, 7
  %v114 = vsub.s32 0, %v113
  %v115 = vrot.slane %v110, %v114
  %v116 = vlaneseq
  %v117 = vshrl.u32 %v116, 7
  %v118 = vsub.s32 1, %v117
  %v119 = vrot.slane %v110, %v118
  %v154 = vunpack.c.l.b16 %v14
  %v155 = vunpack.c.h.b16 %v14
  %v156 = vunpack.c.l.b16 %v15
  %v157 = vunpack.c.h.b16 %v15
  %v158 = vunpack.c.l.b16 %v16
  %v159 = vunpack.c.h.b16 %v16
  %v160 = vunpack.c.l.b16 %v17
  %v161 = vunpack.c.h.b16 %v17
  %v162 = vunpack.c.l.b16 %v18
  %v163 = vunpack.c.h.b16 %v18
  %v164 = vunpack.c.l.b16 %v19
  %v165 = vunpack.c.h.b16 %v19
  %v166 = vunpack.c.l.b16 %v20
  %v167 = vunpack.c.h.b16 %v20
  %v168 = vunpack.c.l.b16 %v21
  %v169 = vunpack.c.h.b16 %v21
  %v170 = vunpack.c.l.b16 %v22
  %v171 = vunpack.c.h.b16 %v22
  %v172 = vunpack.c.l.b16 %v23
  %v173 = vunpack.c.h.b16 %v23
  %v174 = vunpack.c.l.b16 %v24
  %v175 = vunpack.c.h.b16 %v24
  %v176 = vunpack.c.l.b16 %v25
  %v177 = vunpack.c.h.b16 %v25
  %v178 = vunpack.c.l.b16 %v26
  %v179 = vunpack.c.h.b16 %v26
  %v180 = vunpack.c.l.b16 %v27
  %v181 = vunpack.c.h.b16 %v27
  %v182 = vunpack.c.l.b16 %v28
  %v183 = vunpack.c.h.b16 %v28
  %v184 = vunpack.c.l.b16 %v29
  %v185 = vunpack.c.h.b16 %v29
  %v186 = vunpack.c.l.b16 %v30
  %v187 = vunpack.c.h.b16 %v30
  %v188 = vunpack.c.l.b16 %v31
  %v189 = vunpack.c.h.b16 %v31
  %v190 = vunpack.c.l.b16 %v32
  %v191 = vunpack.c.h.b16 %v32
  %v192 = vunpack.c.l.b16 %v33
  %v193 = vunpack.c.h.b16 %v33
  %v194 = vunpack.c.l.b16 %v34
  %v195 = vunpack.c.h.b16 %v34
  %v196 = vunpack.c.l.b16 %v35
  %v197 = vunpack.c.h.b16 %v35
  %v198 = vunpack.c.l.b16 %v36
  %v199 = vunpack.c.h.b16 %v36
  %v200 = vunpack.c.l.b16 %v37
  %v201 = vunpack.c.h.b16 %v37
  %v202 = vunpack.c.l.b16 %v38
  %v203 = vunpack.c.h.b16 %v38
  %v204 = vunpack.c.l.b16 %v39
  %v205 = vunpack.c.h.b16 %v39
  %v206 = vunpack.c.l.b16 %v40
  %v207 = vunpack.c.h.b16 %v40
  %v208 = vunpack.c.l.b16 %v41
  %v209 = vunpack.c.h.b16 %v41
  %v210 = vunpack.c.l.b16 %v42
  %v211 = vunpack.c.h.b16 %v42
  %v212 = vunpack.c.l.b16 %v43
  %v213 = vunpack.c.h.b16 %v43
  %v214 = vunpack.c.l.b16 %v44
  %v215 = vunpack.c.h.b16 %v44
  %v216 = vunpack.c.l.b16 %v45
  %v217 = vunpack.c.h.b16 %v45
  %v218 = vpack.c.b16 %v158, %v154
  %v219 = vpack.c.b16 %v159, %v155
  %v220 = vpack.c.b16 %v160, %v156
  %v221 = vpack.c.b16 %v161, %v157
  %v222 = vpack.c.b16 %v166, %v162
  %v223 = vpack.c.b16 %v167, %v163
  %v224 = vpack.c.b16 %v168, %v164
  %v225 = vpack.c.b16 %v169, %v165
  %v226 = vpack.c.b16 %v174, %v170
  %v227 = vpack.c.b16 %v175, %v171
  %v228 = vpack.c.b16 %v176, %v172
  %v229 = vpack.c.b16 %v177, %v173
  %v230 = vpack.c.b16 %v182, %v178
  %v231 = vpack.c.b16 %v183, %v179
  %v232 = vpack.c.b16 %v184, %v180
  %v233 = vpack.c.b16 %v185, %v181
  %v234 = vpack.c.b16 %v190, %v186
  %v235 = vpack.c.b16 %v191, %v187
  %v236 = vpack.c.b16 %v192, %v188
  %v237 = vpack.c.b16 %v193, %v189
  %v238 = vpack.c.b16 %v198, %v194
  %v239 = vpack.c.b16 %v199, %v195
  %v240 = vpack.c.b16 %v200, %v196
  %v241 = vpack.c.b16 %v201, %v197
  %v242 = vpack.c.b16 %v206, %v202
  %v243 = vpack.c.b16 %v207, %v203
  %v244 = vpack.c.b16 %v208, %v204
  %v245 = vpack.c.b16 %v209, %v205
  %v246 = vpack.c.b16 %v214, %v210
  %v247 = vpack.c.b16 %v215, %v211
  %v248 = vpack.c.b16 %v216, %v212
  %v249 = vpack.c.b16 %v217, %v213
  %v346 = vunpack.c.l.b16 %v46
  %v347 = vunpack.c.h.b16 %v46
  %v348 = vunpack.c.l.b16 %v47
  %v349 = vunpack.c.h.b16 %v47
  %v350 = vunpack.c.l.b16 %v48
  %v351 = vunpack.c.h.b16 %v48
  %v352 = vunpack.c.l.b16 %v49
  %v353 = vunpack.c.h.b16 %v49
  %v354 = vunpack.c.l.b16 %v50
  %v355 = vunpack.c.h.b16 %v50
  %v356 = vunpack.c.l.b16 %v51
  %v357 = vunpack.c.h.b16 %v51
  %v358 = vunpack.c.l.b16 %v52
  %v359 = vunpack.c.h.b16 %v52
  %v360 = vunpack.c.l.b16 %v53
  %v361 = vunpack.c.h.b16 %v53
  %v362 = vunpack.c.l.b16 %v54
  %v363 = vunpack.c.h.b16 %v54
  %v364 = vunpack.c.l.b16 %v55
  %v365 = vunpack.c.h.b16 %v55
  %v366 = vunpack.c.l.b16 %v56
  %v367 = vunpack.c.h.b16 %v56
  %v368 = vunpack.c.l.b16 %v57
  %v369 = vunpack.c.h.b16 %v57
  %v370 = vunpack.c.l.b16 %v58
  %v371 = vunpack.c.h.b16 %v58
  %v372 = vunpack.c.l.b16 %v59
  %v373 = vunpack.c.h.b16 %v59
  %v374 = vunpack.c.l.b16 %v60
  %v375 = vunpack.c.h.b16 %v60
  %v376 = vunpack.c.l.b16 %v61
  %v377 = vunpack.c.h.b16 %v61
  %v378 = vunpack.c.l.b16 %v62
  %v379 = vunpack.c.h.b16 %v62
  %v380 = vunpack.c.l.b16 %v63
  %v381 = vunpack.c.h.b16 %v63
  %v382 = vunpack.c.l.b16 %v64
  %v383 = vunpack.c.h.b16 %v64
  %v384 = vunpack.c.l.b16 %v65
  %v385 = vunpack.c.h.b16 %v65
  %v386 = vunpack.c.l.b16 %v66
  %v387 = vunpack.c.h.b16 %v66
  %v388 = vunpack.c.l.b16 %v67
  %v389 = vunpack.c.h.b16 %v67
  %v390 = vunpack.c.l.b16 %v68
  %v391 = vunpack.c.h.b16 %v68
  %v392 = vunpack.c.l.b16 %v69
  %v393 = vunpack.c.h.b16 %v69
  %v394 = vunpack.c.l.b16 %v70
  %v395 = vunpack.c.h.b16 %v70
  %v396 = vunpack.c.l.b16 %v71
  %v397 = vunpack.c.h.b16 %v71
  %v398 = vunpack.c.l.b16 %v72
  %v399 = vunpack.c.h.b16 %v72
  %v400 = vunpack.c.l.b16 %v73
  %v401 = vunpack.c.h.b16 %v73
  %v402 = vunpack.c.l.b16 %v74
  %v403 = vunpack.c.h.b16 %v74
  %v404 = vunpack.c.l.b16 %v75
  %v405 = vunpack.c.h.b16 %v75
  %v406 = vunpack.c.l.b16 %v76
  %v407 = vunpack.c.h.b16 %v76
  %v408 = vunpack.c.l.b16 %v77
  %v409 = vunpack.c.h.b16 %v77
  %v410 = vunpack.c.l.b16 %v78
  %v411 = vunpack.c.h.b16 %v78
  %v412 = vunpack.c.l.b16 %v79
  %v413 = vunpack.c.h.b16 %v79
  %v414 = vunpack.c.l.b16 %v80
  %v415 = vunpack.c.h.b16 %v80
  %v416 = vunpack.c.l.b16 %v81
  %v417 = vunpack.c.h.b16 %v81
  %v418 = vunpack.c.l.b16 %v82
  %v419 = vunpack.c.h.b16 %v82
  %v420 = vunpack.c.l.b16 %v83
  %v421 = vunpack.c.h.b16 %v83
  %v422 = vunpack.c.l.b16 %v84
  %v423 = vunpack.c.h.b16 %v84
  %v424 = vunpack.c.l.b16 %v85
  %v425 = vunpack.c.h.b16 %v85
  %v426 = vunpack.c.l.b16 %v86
  %v427 = vunpack.c.h.b16 %v86
  %v428 = vunpack.c.l.b16 %v87
  %v429 = vunpack.c.h.b16 %v87
  %v430 = vunpack.c.l.b16 %v88
  %v431 = vunpack.c.h.b16 %v88
  %v432 = vunpack.c.l.b16 %v89
  %v433 = vunpack.c.h.b16 %v89
  %v434 = vunpack.c.l.b16 %v90
  %v435 = vunpack.c.h.b16 %v90
  %v436 = vunpack.c.l.b16 %v91
  %v437 = vunpack.c.h.b16 %v91
  %v438 = vunpack.c.l.b16 %v92
  %v439 = vunpack.c.h.b16 %v92
  %v440 = vunpack.c.l.b16 %v93
  %v441 = vunpack.c.h.b16 %v93
  %v442 = vunpack.c.l.b16 %v94
  %v443 = vunpack.c.h.b16 %v94
  %v444 = vunpack.c.l.b16 %v95
  %v445 = vunpack.c.h.b16 %v95
  %v446 = vunpack.c.l.b16 %v96
  %v447 = vunpack.c.h.b16 %v96
  %v448 = vunpack.c.l.b16 %v97
  %v449 = vunpack.c.h.b16 %v97
  %v450 = vunpack.c.l.b16 %v98
  %v451 = vunpack.c.h.b16 %v98
  %v452 = vunpack.c.l.b16 %v99
  %v453 = vunpack.c.h.b16 %v99
  %v454 = vunpack.c.l.b16 %v100
  %v455 = vunpack.c.h.b16 %v100
  %v456 = vunpack.c.l.b16 %v101
  %v457 = vunpack.c.h.b16 %v101
  %v458 = vunpack.c.l.b16 %v102
  %v459 = vunpack.c.h.b16 %v102
  %v460 = vunpack.c.l.b16 %v103
  %v461 = vunpack.c.h.b16 %v103
  %v462 = vunpack.c.l.b16 %v104
  %v463 = vunpack.c.h.b16 %v104
  %v464 = vunpack.c.l.b16 %v105
  %v465 = vunpack.c.h.b16 %v105
  %v466 = vunpack.c.l.b16 %v106
  %v467 = vunpack.c.h.b16 %v106
  %v468 = vunpack.c.l.b16 %v107
  %v469 = vunpack.c.h.b16 %v107
  %v470 = vunpack.c.l.b16 %v108
  %v471 = vunpack.c.h.b16 %v108
  %v472 = vunpack.c.l.b16 %v109
  %v473 = vunpack.c.h.b16 %v109
  %v474 = vpack.c.b16 %v348, %v346
  %v475 = vpack.c.b16 %v349, %v347
  %v476 = vpack.c.b16 %v352, %v350
  %v477 = vpack.c.b16 %v353, %v351
  %v478 = vpack.c.b16 %v356, %v354
  %v479 = vpack.c.b16 %v357, %v355
  %v480 = vpack.c.b16 %v360, %v358
  %v481 = vpack.c.b16 %v361, %v359
  %v482 = vpack.c.b16 %v364, %v362
  %v483 = vpack.c.b16 %v365, %v363
  %v484 = vpack.c.b16 %v368, %v366
  %v485 = vpack.c.b16 %v369, %v367
  %v486 = vpack.c.b16 %v372, %v370
  %v487 = vpack.c.b16 %v373, %v371
  %v488 = vpack.c.b16 %v376, %v374
  %v489 = vpack.c.b16 %v377, %v375
  %v490 = vpack.c.b16 %v380, %v378
  %v491 = vpack.c.b16 %v381, %v379
  %v492 = vpack.c.b16 %v384, %v382
  %v493 = vpack.c.b16 %v385, %v383
  %v494 = vpack.c.b16 %v388, %v386
  %v495 = vpack.c.b16 %v389, %v387
  %v496 = vpack.c.b16 %v392, %v390
  %v497 = vpack.c.b16 %v393, %v391
  %v498 = vpack.c.b16 %v396, %v394
  %v499 = vpack.c.b16 %v397, %v395
  %v500 = vpack.c.b16 %v400, %v398
  %v501 = vpack.c.b16 %v401, %v399
  %v502 = vpack.c.b16 %v404, %v402
  %v503 = vpack.c.b16 %v405, %v403
  %v504 = vpack.c.b16 %v408, %v406
  %v505 = vpack.c.b16 %v409, %v407
  %v506 = vpack.c.b16 %v412, %v410
  %v507 = vpack.c.b16 %v413, %v411
  %v508 = vpack.c.b16 %v416, %v414
  %v509 = vpack.c.b16 %v417, %v415
  %v510 = vpack.c.b16 %v420, %v418
  %v511 = vpack.c.b16 %v421, %v419
  %v512 = vpack.c.b16 %v424, %v422
  %v513 = vpack.c.b16 %v425, %v423
  %v514 = vpack.c.b16 %v428, %v426
  %v515 = vpack.c.b16 %v429, %v427
  %v516 = vpack.c.b16 %v432, %v430
  %v517 = vpack.c.b16 %v433, %v431
  %v518 = vpack.c.b16 %v436, %v434
  %v519 = vpack.c.b16 %v437, %v435
  %v520 = vpack.c.b16 %v440, %v438
  %v521 = vpack.c.b16 %v441, %v439
  %v522 = vpack.c.b16 %v444, %v442
  %v523 = vpack.c.b16 %v445, %v443
  %v524 = vpack.c.b16 %v448, %v446
  %v525 = vpack.c.b16 %v449, %v447
  %v526 = vpack.c.b16 %v452, %v450
  %v527 = vpack.c.b16 %v453, %v451
  %v528 = vpack.c.b16 %v456, %v454
  %v529 = vpack.c.b16 %v457, %v455
  %v530 = vpack.c.b16 %v460, %v458
  %v531 = vpack.c.b16 %v461, %v459
  %v532 = vpack.c.b16 %v464, %v462
  %v533 = vpack.c.b16 %v465, %v463
  %v534 = vpack.c.b16 %v468, %v466
  %v535 = vpack.c.b16 %v469, %v467
  %v536 = vpack.c.b16 %v472, %v470
  %v537 = vpack.c.b16 %v473, %v471
  %602 = vmatprep.subr.bf16.mxu0 %v475
  %603 = vmatpush1.bf16.msra.mxu0 %v474
  %604 = vmatprep.subr.bf16.mxu0 %v477
  %605 = vmatpush1.bf16.msra.mxu0 %v476
  %606 = vmatprep.subr.bf16.mxu0 %v479
  %607 = vmatpush1.bf16.msra.mxu0 %v478
  %608 = vmatprep.subr.bf16.mxu0 %v481
  %609 = vmatpush1.bf16.msra.mxu0 %v480
  %610 = vmatprep.subr.bf16.mxu0 %v483
  %611 = vmatpush1.bf16.msra.mxu0 %v482
  %612 = vmatprep.subr.bf16.mxu0 %v485
  %613 = vmatpush1.bf16.msra.mxu0 %v484
  %614 = vmatprep.subr.bf16.mxu0 %v487
  %615 = vmatpush1.bf16.msra.mxu0 %v486
  %616 = vmatprep.subr.bf16.mxu0 %v489
  %617 = vmatpush1.bf16.msra.mxu0 %v488
  %618 = vmatprep.subr.bf16.mxu0 %v491
  %619 = vmatpush1.bf16.msra.mxu0 %v490
  %620 = vmatprep.subr.bf16.mxu0 %v493
  %621 = vmatpush1.bf16.msra.mxu0 %v492
  %622 = vmatprep.subr.bf16.mxu0 %v495
  %623 = vmatpush1.bf16.msra.mxu0 %v494
  %624 = vmatprep.subr.bf16.mxu0 %v497
  %625 = vmatpush1.bf16.msra.mxu0 %v496
  %626 = vmatprep.subr.bf16.mxu0 %v499
  %627 = vmatpush1.bf16.msra.mxu0 %v498
  %628 = vmatprep.subr.bf16.mxu0 %v501
  %629 = vmatpush1.bf16.msra.mxu0 %v500
  %630 = vmatprep.subr.bf16.mxu0 %v503
  %631 = vmatpush1.bf16.msra.mxu0 %v502
  %632 = vmatprep.subr.bf16.mxu0 %v505
  %633 = vmatpush1.bf16.msra.mxu0 %v504
  %634 = vmatprep.mubr.bf16.mxu0 %v219
  %635 = vmatmul.mubr.bf16.gmra.mrb[0].mxu0 %v218
  %v636 = vpop.f32.mrb[0].mxu0
  %v637 = vadd.f32 %v115, %v636
  %v638 = vpop.f32.mrb[0].mxu0
  %v639 = vadd.f32 %v119, %v638
  %v640 = vpop.f32.mrb[0].mxu0
  %v641 = vadd.f32 %v115, %v640
  %v642 = vpop.f32.mrb[0].mxu0
  %v643 = vadd.f32 %v119, %v642
  %644 = vmatprep.mubr.bf16.mxu0 %v223
  %645 = vmatmul.mubr.bf16.gmra.mrb[0].mxu0 %v222
  %v646 = vpop.f32.mrb[0].mxu0
  %v647 = vadd.f32 %v115, %v646
  %v648 = vpop.f32.mrb[0].mxu0
  %v649 = vadd.f32 %v119, %v648
  %v650 = vpop.f32.mrb[0].mxu0
  %v651 = vadd.f32 %v115, %v650
  %v652 = vpop.f32.mrb[0].mxu0
  %v653 = vadd.f32 %v119, %v652
  %654 = vmatprep.mubr.bf16.mxu0 %v227
  %655 = vmatmul.mubr.bf16.gmra.mrb[0].mxu0 %v226
  %v656 = vpop.f32.mrb[0].mxu0
  %v657 = vadd.f32 %v115, %v656
  %v658 = vpop.f32.mrb[0].mxu0
  %v659 = vadd.f32 %v119, %v658
  %v660 = vpop.f32.mrb[0].mxu0
  %v661 = vadd.f32 %v115, %v660
  %v662 = vpop.f32.mrb[0].mxu0
  %v663 = vadd.f32 %v119, %v662
  %664 = vmatprep.mubr.bf16.mxu0 %v231
  %665 = vmatmul.mubr.bf16.gmra.mrb[0].mxu0 %v230
  %v666 = vpop.f32.mrb[0].mxu0
  %v667 = vadd.f32 %v115, %v666
  %v668 = vpop.f32.mrb[0].mxu0
  %v669 = vadd.f32 %v119, %v668
  %v670 = vpop.f32.mrb[0].mxu0
  %v671 = vadd.f32 %v115, %v670
  %v672 = vpop.f32.mrb[0].mxu0
  %v673 = vadd.f32 %v119, %v672
  %674 = vmatprep.mubr.bf16.mxu0 %v235
  %675 = vmatmul.mubr.bf16.gmra.mrb[0].mxu0 %v234
  %v676 = vpop.f32.mrb[0].mxu0
  %v677 = vadd.f32 %v115, %v676
  %v678 = vpop.f32.mrb[0].mxu0
  %v679 = vadd.f32 %v119, %v678
  %v680 = vpop.f32.mrb[0].mxu0
  %v681 = vadd.f32 %v115, %v680
  %v682 = vpop.f32.mrb[0].mxu0
  %v683 = vadd.f32 %v119, %v682
  %684 = vmatprep.mubr.bf16.mxu0 %v239
  %685 = vmatmul.mubr.bf16.gmra.mrb[0].mxu0 %v238
  %v686 = vpop.f32.mrb[0].mxu0
  %v687 = vadd.f32 %v115, %v686
  %v688 = vpop.f32.mrb[0].mxu0
  %v689 = vadd.f32 %v119, %v688
  %v690 = vpop.f32.mrb[0].mxu0
  %v691 = vadd.f32 %v115, %v690
  %v692 = vpop.f32.mrb[0].mxu0
  %v693 = vadd.f32 %v119, %v692
  %694 = vmatprep.mubr.bf16.mxu0 %v243
  %695 = vmatmul.mubr.bf16.gmra.mrb[0].mxu0 %v242
  %v696 = vpop.f32.mrb[0].mxu0
  %v697 = vadd.f32 %v115, %v696
  %v698 = vpop.f32.mrb[0].mxu0
  %v699 = vadd.f32 %v119, %v698
  %v700 = vpop.f32.mrb[0].mxu0
  %v701 = vadd.f32 %v115, %v700
  %v702 = vpop.f32.mrb[0].mxu0
  %v703 = vadd.f32 %v119, %v702
  %704 = vmatprep.mubr.bf16.mxu0 %v247
  %705 = vmatmul.mubr.bf16.gmra.mrb[0].mxu0 %v246
  %v706 = vpop.f32.mrb[0].mxu0
  %v707 = vadd.f32 %v115, %v706
  %v708 = vpop.f32.mrb[0].mxu0
  %v709 = vadd.f32 %v119, %v708
  %v710 = vpop.f32.mrb[0].mxu0
  %v711 = vadd.f32 %v115, %v710
  %v712 = vpop.f32.mrb[0].mxu0
  %v713 = vadd.f32 %v119, %v712
  %714 = vdwg.mxu0
  %715 = vmatprep.subr.bf16.mxu0 %v507
  %716 = vmatpush1.bf16.msra.mxu0 %v506
  %717 = vmatprep.subr.bf16.mxu0 %v509
  %718 = vmatpush1.bf16.msra.mxu0 %v508
  %719 = vmatprep.subr.bf16.mxu0 %v511
  %720 = vmatpush1.bf16.msra.mxu0 %v510
  %721 = vmatprep.subr.bf16.mxu0 %v513
  %722 = vmatpush1.bf16.msra.mxu0 %v512
  %723 = vmatprep.subr.bf16.mxu0 %v515
  %724 = vmatpush1.bf16.msra.mxu0 %v514
  %725 = vmatprep.subr.bf16.mxu0 %v517
  %726 = vmatpush1.bf16.msra.mxu0 %v516
  %727 = vmatprep.subr.bf16.mxu0 %v519
  %728 = vmatpush1.bf16.msra.mxu0 %v518
  %729 = vmatprep.subr.bf16.mxu0 %v521
  %730 = vmatpush1.bf16.msra.mxu0 %v520
  %731 = vmatprep.subr.bf16.mxu0 %v523
  %732 = vmatpush1.bf16.msra.mxu0 %v522
  %733 = vmatprep.subr.bf16.mxu0 %v525
  %734 = vmatpush1.bf16.msra.mxu0 %v524
  %735 = vmatprep.subr.bf16.mxu0 %v527
  %736 = vmatpush1.bf16.msra.mxu0 %v526
  %737 = vmatprep.subr.bf16.mxu0 %v529
  %738 = vmatpush1.bf16.msra.mxu0 %v528
  %739 = vmatprep.subr.bf16.mxu0 %v531
  %740 = vmatpush1.bf16.msra.mxu0 %v530
  %741 = vmatprep.subr.bf16.mxu0 %v533
  %742 = vmatpush1.bf16.msra.mxu0 %v532
  %743 = vmatprep.subr.bf16.mxu0 %v535
  %744 = vmatpush1.bf16.msra.mxu0 %v534
  %745 = vmatprep.subr.bf16.mxu0 %v537
  %746 = vmatpush1.bf16.msra.mxu0 %v536
  %747 = vmatprep.mubr.bf16.mxu0 %v221
  %748 = vmatmul.mubr.bf16.gmra.mrb[0].mxu0 %v220
  %v749 = vpop.f32.mrb[0].mxu0
  %v750 = vadd.f32 %v637, %v749
  %v751 = vpop.f32.mrb[0].mxu0
  %v752 = vadd.f32 %v639, %v751
  %v753 = vpop.f32.mrb[0].mxu0
  %v754 = vadd.f32 %v641, %v753
  %v755 = vpop.f32.mrb[0].mxu0
  %v756 = vadd.f32 %v643, %v755
  %757 = vmatprep.mubr.bf16.mxu0 %v225
  %758 = vmatmul.mubr.bf16.gmra.mrb[0].mxu0 %v224
  %v759 = vpop.f32.mrb[0].mxu0
  %v760 = vadd.f32 %v647, %v759
  %v761 = vpop.f32.mrb[0].mxu0
  %v762 = vadd.f32 %v649, %v761
  %v763 = vpop.f32.mrb[0].mxu0
  %v764 = vadd.f32 %v651, %v763
  %v765 = vpop.f32.mrb[0].mxu0
  %v766 = vadd.f32 %v653, %v765
  %767 = vmatprep.mubr.bf16.mxu0 %v229
  %768 = vmatmul.mubr.bf16.gmra.mrb[0].mxu0 %v228
  %v769 = vpop.f32.mrb[0].mxu0
  %v770 = vadd.f32 %v657, %v769
  %v771 = vpop.f32.mrb[0].mxu0
  %v772 = vadd.f32 %v659, %v771
  %v773 = vpop.f32.mrb[0].mxu0
  %v774 = vadd.f32 %v661, %v773
  %v775 = vpop.f32.mrb[0].mxu0
  %v776 = vadd.f32 %v663, %v775
  %777 = vmatprep.mubr.bf16.mxu0 %v233
  %778 = vmatmul.mubr.bf16.gmra.mrb[0].mxu0 %v232
  %v779 = vpop.f32.mrb[0].mxu0
  %v780 = vadd.f32 %v667, %v779
  %v781 = vpop.f32.mrb[0].mxu0
  %v782 = vadd.f32 %v669, %v781
  %v783 = vpop.f32.mrb[0].mxu0
  %v784 = vadd.f32 %v671, %v783
  %v785 = vpop.f32.mrb[0].mxu0
  %v786 = vadd.f32 %v673, %v785
  %787 = vmatprep.mubr.bf16.mxu0 %v237
  %788 = vmatmul.mubr.bf16.gmra.mrb[0].mxu0 %v236
  %v789 = vpop.f32.mrb[0].mxu0
  %v790 = vadd.f32 %v677, %v789
  %v791 = vpop.f32.mrb[0].mxu0
  %v792 = vadd.f32 %v679, %v791
  %v793 = vpop.f32.mrb[0].mxu0
  %v794 = vadd.f32 %v681, %v793
  %v795 = vpop.f32.mrb[0].mxu0
  %v796 = vadd.f32 %v683, %v795
  %797 = vmatprep.mubr.bf16.mxu0 %v241
  %798 = vmatmul.mubr.bf16.gmra.mrb[0].mxu0 %v240
  %v799 = vpop.f32.mrb[0].mxu0
  %v800 = vadd.f32 %v687, %v799
  %v801 = vpop.f32.mrb[0].mxu0
  %v802 = vadd.f32 %v689, %v801
  %v803 = vpop.f32.mrb[0].mxu0
  %v804 = vadd.f32 %v691, %v803
  %v805 = vpop.f32.mrb[0].mxu0
  %v806 = vadd.f32 %v693, %v805
  %807 = vmatprep.mubr.bf16.mxu0 %v245
  %808 = vmatmul.mubr.bf16.gmra.mrb[0].mxu0 %v244
  %v809 = vpop.f32.mrb[0].mxu0
  %v810 = vadd.f32 %v697, %v809
  %v811 = vpop.f32.mrb[0].mxu0
  %v812 = vadd.f32 %v699, %v811
  %v813 = vpop.f32.mrb[0].mxu0
  %v814 = vadd.f32 %v701, %v813
  %v815 = vpop.f32.mrb[0].mxu0
  %v816 = vadd.f32 %v703, %v815
  %817 = vmatprep.mubr.bf16.mxu0 %v249
  %818 = vmatmul.mubr.bf16.gmra.mrb[0].mxu0 %v248
  %v819 = vpop.f32.mrb[0].mxu0
  %v820 = vadd.f32 %v707, %v819
  %v821 = vpop.f32.mrb[0].mxu0
  %v822 = vadd.f32 %v709, %v821
  %v823 = vpop.f32.mrb[0].mxu0
  %v824 = vadd.f32 %v711, %v823
  %v825 = vpop.f32.mrb[0].mxu0
  %v826 = vadd.f32 %v713, %v825
  %827 = vdwg.mxu0
  %v828 = vmax.f32 %v750, 0.0
  %v829 = vmax.f32 %v752, 0.0
  %v830 = vmax.f32 %v754, 0.0
  %v831 = vmax.f32 %v756, 0.0
  %v832 = vmax.f32 %v760, 0.0
  %v833 = vmax.f32 %v762, 0.0
  %v834 = vmax.f32 %v764, 0.0
  %v835 = vmax.f32 %v766, 0.0
  %v836 = vmax.f32 %v770, 0.0
  %v837 = vmax.f32 %v772, 0.0
  %v838 = vmax.f32 %v774, 0.0
  %v839 = vmax.f32 %v776, 0.0
  %v840 = vmax.f32 %v780, 0.0
  %v841 = vmax.f32 %v782, 0.0
  %v842 = vmax.f32 %v784, 0.0
  %v843 = vmax.f32 %v786, 0.0
  %v844 = vmax.f32 %v790, 0.0
  %v845 = vmax.f32 %v792, 0.0
  %v846 = vmax.f32 %v794, 0.0
  %v847 = vmax.f32 %v796, 0.0
  %v848 = vmax.f32 %v800, 0.0
  %v849 = vmax.f32 %v802, 0.0
  %v850 = vmax.f32 %v804, 0.0
  %v851 = vmax.f32 %v806, 0.0
  %v852 = vmax.f32 %v810, 0.0
  %v853 = vmax.f32 %v812, 0.0
  %v854 = vmax.f32 %v814, 0.0
  %v855 = vmax.f32 %v816, 0.0
  %v856 = vmax.f32 %v820, 0.0
  %v857 = vmax.f32 %v822, 0.0
  %v858 = vmax.f32 %v824, 0.0
  %v859 = vmax.f32 %v826, 0.0
  %v860 = vpack.c.bf16 %v830, %v828
  %v861 = vpack.c.bf16 %v831, %v829
  %v862 = vpack.c.bf16 %v834, %v832
  %v863 = vpack.c.bf16 %v835, %v833
  %v864 = vpack.c.bf16 %v838, %v836
  %v865 = vpack.c.bf16 %v839, %v837
  %v866 = vpack.c.bf16 %v842, %v840
  %v867 = vpack.c.bf16 %v843, %v841
  %v868 = vpack.c.bf16 %v846, %v844
  %v869 = vpack.c.bf16 %v847, %v845
  %v870 = vpack.c.bf16 %v850, %v848
  %v871 = vpack.c.bf16 %v851, %v849
  %v872 = vpack.c.bf16 %v854, %v852
  %v873 = vpack.c.bf16 %v855, %v853
  %v874 = vpack.c.bf16 %v858, %v856
  %v875 = vpack.c.bf16 %v859, %v857
  %v892 = vunpack.c.l.b16 %v860
  %v893 = vunpack.c.l.b16 %v861
  %v894 = vunpack.c.h.b16 %v860
  %v895 = vunpack.c.h.b16 %v861
  %v896 = vunpack.c.l.b16 %v862
  %v897 = vunpack.c.l.b16 %v863
  %v898 = vunpack.c.h.b16 %v862
  %v899 = vunpack.c.h.b16 %v863
  %v900 = vunpack.c.l.b16 %v864
  %v901 = vunpack.c.l.b16 %v865
  %v902 = vunpack.c.h.b16 %v864
  %v903 = vunpack.c.h.b16 %v865
  %v904 = vunpack.c.l.b16 %v866
  %v905 = vunpack.c.l.b16 %v867
  %v906 = vunpack.c.h.b16 %v866
  %v907 = vunpack.c.h.b16 %v867
  %v908 = vunpack.c.l.b16 %v868
  %v909 = vunpack.c.l.b16 %v869
  %v910 = vunpack.c.h.b16 %v868
  %v911 = vunpack.c.h.b16 %v869
  %v912 = vunpack.c.l.b16 %v870
  %v913 = vunpack.c.l.b16 %v871
  %v914 = vunpack.c.h.b16 %v870
  %v915 = vunpack.c.h.b16 %v871
  %v916 = vunpack.c.l.b16 %v872
  %v917 = vunpack.c.l.b16 %v873
  %v918 = vunpack.c.h.b16 %v872
  %v919 = vunpack.c.h.b16 %v873
  %v920 = vunpack.c.l.b16 %v874
  %v921 = vunpack.c.l.b16 %v875
  %v922 = vunpack.c.h.b16 %v874
  %v923 = vunpack.c.h.b16 %v875
  %v924 = vpack.c.b16 %v893, %v892
  %v925 = vpack.c.b16 %v895, %v894
  %v926 = vpack.c.b16 %v897, %v896
  %v927 = vpack.c.b16 %v899, %v898
  %v928 = vpack.c.b16 %v901, %v900
  %v929 = vpack.c.b16 %v903, %v902
  %v930 = vpack.c.b16 %v905, %v904
  %v931 = vpack.c.b16 %v907, %v906
  %v932 = vpack.c.b16 %v909, %v908
  %v933 = vpack.c.b16 %v911, %v910
  %v934 = vpack.c.b16 %v913, %v912
  %v935 = vpack.c.b16 %v915, %v914
  %v936 = vpack.c.b16 %v917, %v916
  %v937 = vpack.c.b16 %v919, %v918
  %v938 = vpack.c.b16 %v921, %v920
  %v939 = vpack.c.b16 %v923, %v922
  %956 = vst [vmem:[%s3] sm:$0xff] %v924
  %957 = vst [vmem:[%s3 + $0x8] sm:$0xff] %v925
  %958 = vst [vmem:[%s3 + $0x10] sm:$0xff] %v926
  %959 = vst [vmem:[%s3 + $0x18] sm:$0xff] %v927
  %960 = vst [vmem:[%s3 + $0x20] sm:$0xff] %v928
  %961 = vst [vmem:[%s3 + $0x28] sm:$0xff] %v929
  %962 = vst [vmem:[%s3 + $0x30] sm:$0xff] %v930
  %963 = vst [vmem:[%s3 + $0x38] sm:$0xff] %v931
  %964 = vst [vmem:[%s3 + $0x40] sm:$0xff] %v932
  %965 = vst [vmem:[%s3 + $0x48] sm:$0xff] %v933
  %966 = vst [vmem:[%s3 + $0x50] sm:$0xff] %v934
  %967 = vst [vmem:[%s3 + $0x58] sm:$0xff] %v935
  %968 = vst [vmem:[%s3 + $0x60] sm:$0xff] %v936
  %969 = vst [vmem:[%s3 + $0x68] sm:$0xff] %v937
  %970 = vst [vmem:[%s3 + $0x70] sm:$0xff] %v938
  %971 = vst [vmem:[%s3 + $0x78] sm:$0xff] %v939
  // Predicated region
  $region14: #{vae_forward.10} parent=0 // pred_check
    _
  $region15: #{vae_forward.10} parent=0 // pred_check_branch
    %973 = sbr.rel (0) target = $region17
  $region16: #{vae_forward.10} parent=0 // pred_region
    _
  $region17: #{vae_forward.10} parent=0 // pred_fallthru
    _
  // Predicated region
  $region18: #{vae_forward.10} parent=0 // pred_check
    _
  $region19: #{vae_forward.10} parent=0 // pred_check_branch
    %975 = sbr.rel (0) target = $region21
  $region20: #{vae_forward.10} parent=0 // pred_region
    _
  $region21: #{vae_forward.10} parent=0 // pred_fallthru
    _

// kernel: vae_forward.9
$region0: #{vae_forward.9}
  #allocation0 [shape = 'u32[]', space=smem, size = 0x4, offset = 0x4, fixed_abs, tag = 'smem constant byte address 0x4 - core index']
  #allocation1 [shape = 'u32[144,128]{1,0:T(1,128)}', space=vmem, size = 0x12000, scoped, tag = 'internal scratch']
  %s0 = inlined_call_operand.vmem [shape: bf16[2,6272], index: 0, kind: input, shape index: {}]
  %s1 = inlined_call_operand.vmem [shape: bf16[6272,128], index: 1, kind: input, shape index: {}]
  %s2 = inlined_call_operand.vmem [shape: f32[1,128], index: 2, kind: input, shape index: {}]
  %s3 = inlined_call_operand.vmem [shape: f32[2,32], index: 3, kind: input, shape index: {}]
  %s4 = inlined_call_operand.vmem [shape: bf16[32,6272], index: 4, kind: input, shape index: {}]
  %s5 = inlined_call_operand.vmem [shape: f32[1,6272], index: 5, kind: input, shape index: {}]
  %s6 = inlined_call_operand.vmem [shape: f32[2,128], index: 6, kind: output, shape index: {0}]
  %s7 = inlined_call_operand.vmem [shape: bf16[2,6272], index: 7, kind: output, shape index: {1}]
  %8 = xla_tuple %s6, %s7
  %s9 = sld [smem:[#allocation0]]
  $region42: #{vae_forward.9} parent=0
    _
  %s11 = ssub.s32 1, %s9
  %s12 = scalar_select 0, %s11, %s9
  // Predicated region
  $region2: #{vae_forward.9} parent=0 // pred_check
    _
  $region3: #{vae_forward.9} parent=0 // pred_check_branch
    %14 = sbr.rel (0) target = $region5
  $region4: #{vae_forward.9} parent=0 // pred_region
    _
  $region5: #{vae_forward.9} parent=0 // pred_fallthru
    _
  // Predicated region
  $region6: #{vae_forward.9} parent=0 // pred_check
    _
  $region7: #{vae_forward.9} parent=0 // pred_check_branch
    %16 = sbr.rel (0) target = $region9
  $region8: #{vae_forward.9} parent=0 // pred_region
    _
  $region9: #{vae_forward.9} parent=0 // pred_fallthru
    _
  // Predicated region
  $region10: #{vae_forward.9} parent=0 // pred_check
    _
  $region11: #{vae_forward.9} parent=0 // pred_check_branch
    %18 = sbr.rel (0) target = $region13
  $region12: #{vae_forward.9} parent=0 // pred_region
    _
  $region13: #{vae_forward.9} parent=0 // pred_fallthru
    _
  // Predicated region
  $region14: #{vae_forward.9} parent=0 // pred_check
    _
  $region15: #{vae_forward.9} parent=0 // pred_check_branch
    %20 = sbr.rel (0) target = $region17
  $region16: #{vae_forward.9} parent=0 // pred_region
    _
  $region17: #{vae_forward.9} parent=0 // pred_fallthru
    _
  // Predicated region
  $region18: #{vae_forward.9} parent=0 // pred_check
    _
  $region19: #{vae_forward.9} parent=0 // pred_check_branch
    %22 = sbr.rel (0) target = $region21
  $region20: #{vae_forward.9} parent=0 // pred_region
    _
  $region21: #{vae_forward.9} parent=0 // pred_fallthru
    _
  // Predicated region
  $region22: #{vae_forward.9} parent=0 // pred_check
    _
  $region23: #{vae_forward.9} parent=0 // pred_check_branch
    %24 = sbr.rel (0) target = $region25
  $region24: #{vae_forward.9} parent=0 // pred_region
    _
  $region25: #{vae_forward.9} parent=0 // pred_fallthru
    _
  %v26 = vld [vmem:[%s0] sm:$0xff]
  %v27 = vld [vmem:[%s0 + $0x8] sm:$0xff]
  %v28 = vld [vmem:[%s0 + $0x10] sm:$0xff]
  %v29 = vld [vmem:[%s0 + $0x18] sm:$0xff]
  %v30 = vld [vmem:[%s0 + $0x20] sm:$0xff]
  %v31 = vld [vmem:[%s0 + $0x28] sm:$0xff]
  %v32 = vld [vmem:[%s0 + $0x30] sm:$0x1]
  %v33 = vld [vmem:[%s1] sm:$0xf]
  %v34 = vld [vmem:[%s1 + $0x4] sm:$0xf]
  %v35 = vld [vmem:[%s1 + $0x8] sm:$0xf]
  %v36 = vld [vmem:[%s1 + $0xc] sm:$0xf]
  %v37 = vld [vmem:[%s1 + $0x10] sm:$0xf]
  %v38 = vld [vmem:[%s1 + $0x14] sm:$0xf]
  %v39 = vld [vmem:[%s1 + $0x18] sm:$0xf]
  %v40 = vld [vmem:[%s1 + $0x1c] sm:$0xf]
  %v41 = vld [vmem:[%s1 + $0x20] sm:$0xf]
  %v42 = vld [vmem:[%s1 + $0x24] sm:$0xf]
  %v43 = vld [vmem:[%s1 + $0x28] sm:$0xf]
  %v44 = vld [vmem:[%s1 + $0x2c] sm:$0xf]
  %v45 = vld [vmem:[%s1 + $0x30] sm:$0xf]
  %v46 = vld [vmem:[%s1 + $0x34] sm:$0xf]
  %v47 = vld [vmem:[%s1 + $0x38] sm:$0xf]
  %v48 = vld [vmem:[%s1 + $0x3c] sm:$0xf]
  %v49 = vld [vmem:[%s1 + $0x40] sm:$0xf]
  %v50 = vld [vmem:[%s1 + $0x44] sm:$0xf]
  %v51 = vld [vmem:[%s1 + $0x48] sm:$0xf]
  %v52 = vld [vmem:[%s1 + $0x4c] sm:$0xf]
  %v53 = vld [vmem:[%s1 + $0x50] sm:$0xf]
  %v54 = vld [vmem:[%s1 + $0x54] sm:$0xf]
  %v55 = vld [vmem:[%s1 + $0x58] sm:$0xf]
  %v56 = vld [vmem:[%s1 + $0x5c] sm:$0xf]
  %v57 = vld [vmem:[%s1 + $0x60] sm:$0xf]
  %v58 = vld [vmem:[%s1 + $0x64] sm:$0xf]
  %v59 = vld [vmem:[%s1 + $0x68] sm:$0xf]
  %v60 = vld [vmem:[%s1 + $0x6c] sm:$0xf]
  %v61 = vld [vmem:[%s1 + $0x70] sm:$0xf]
  %v62 = vld [vmem:[%s1 + $0x74] sm:$0xf]
  %v63 = vld [vmem:[%s1 + $0x78] sm:$0xf]
  %v64 = vld [vmem:[%s1 + $0x7c] sm:$0xf]
  %v65 = vld [vmem:[%s1 + $0x80] sm:$0xf]
  %v66 = vld [vmem:[%s1 + $0x84] sm:$0xf]
  %v67 = vld [vmem:[%s1 + $0x88] sm:$0xf]
  %v68 = vld [vmem:[%s1 + $0x8c] sm:$0xf]
  %v69 = vld [vmem:[%s1 + $0x90] sm:$0xf]
  %v70 = vld [vmem:[%s1 + $0x94] sm:$0xf]
  %v71 = vld [vmem:[%s1 + $0x98] sm:$0xf]
  %v72 = vld [vmem:[%s1 + $0x9c] sm:$0xf]
  %v73 = vld [vmem:[%s1 + $0xa0] sm:$0xf]
  %v74 = vld [vmem:[%s1 + $0xa4] sm:$0xf]
  %v75 = vld [vmem:[%s1 + $0xa8] sm:$0xf]
  %v76 = vld [vmem:[%s1 + $0xac] sm:$0xf]
  %v77 = vld [vmem:[%s1 + $0xb0] sm:$0xf]
  %v78 = vld [vmem:[%s1 + $0xb4] sm:$0xf]
  %v79 = vld [vmem:[%s1 + $0xb8] sm:$0xf]
  %v80 = vld [vmem:[%s1 + $0xbc] sm:$0xf]
  %v81 = vld [vmem:[%s1 + $0xc0] sm:$0xf]
  %v82 = vld [vmem:[%s1 + $0xc4] sm:$0xf]
  %v83 = vld [vmem:[%s1 + $0xc8] sm:$0xf]
  %v84 = vld [vmem:[%s1 + $0xcc] sm:$0xf]
  %v85 = vld [vmem:[%s1 + $0xd0] sm:$0xf]
  %v86 = vld [vmem:[%s1 + $0xd4] sm:$0xf]
  %v87 = vld [vmem:[%s1 + $0xd8] sm:$0xf]
  %v88 = vld [vmem:[%s1 + $0xdc] sm:$0xf]
  %v89 = vld [vmem:[%s1 + $0xe0] sm:$0xf]
  %v90 = vld [vmem:[%s1 + $0xe4] sm:$0xf]
  %v91 = vld [vmem:[%s1 + $0xe8] sm:$0xf]
  %v92 = vld [vmem:[%s1 + $0xec] sm:$0xf]
  %v93 = vld [vmem:[%s1 + $0xf0] sm:$0xf]
  %v94 = vld [vmem:[%s1 + $0xf4] sm:$0xf]
  %v95 = vld [vmem:[%s1 + $0xf8] sm:$0xf]
  %v96 = vld [vmem:[%s1 + $0xfc] sm:$0xf]
  %v97 = vld [vmem:[%s1 + $0x100] sm:$0xf]
  %v98 = vld [vmem:[%s1 + $0x104] sm:$0xf]
  %v99 = vld [vmem:[%s1 + $0x108] sm:$0xf]
  %v100 = vld [vmem:[%s1 + $0x10c] sm:$0xf]
  %v101 = vld [vmem:[%s1 + $0x110] sm:$0xf]
  %v102 = vld [vmem:[%s1 + $0x114] sm:$0xf]
  %v103 = vld [vmem:[%s1 + $0x118] sm:$0xf]
  %v104 = vld [vmem:[%s1 + $0x11c] sm:$0xf]
  %v105 = vld [vmem:[%s1 + $0x120] sm:$0xf]
  %v106 = vld [vmem:[%s1 + $0x124] sm:$0xf]
  %v107 = vld [vmem:[%s1 + $0x128] sm:$0xf]
  %v108 = vld [vmem:[%s1 + $0x12c] sm:$0xf]
  %v109 = vld [vmem:[%s1 + $0x130] sm:$0xf]
  %v110 = vld [vmem:[%s1 + $0x134] sm:$0xf]
  %v111 = vld [vmem:[%s1 + $0x138] sm:$0xf]
  %v112 = vld [vmem:[%s1 + $0x13c] sm:$0xf]
  %v113 = vld [vmem:[%s1 + $0x140] sm:$0xf]
  %v114 = vld [vmem:[%s1 + $0x144] sm:$0xf]
  %v115 = vld [vmem:[%s1 + $0x148] sm:$0xf]
  %v116 = vld [vmem:[%s1 + $0x14c] sm:$0xf]
  %v117 = vld [vmem:[%s1 + $0x150] sm:$0xf]
  %v118 = vld [vmem:[%s1 + $0x154] sm:$0xf]
  %v119 = vld [vmem:[%s1 + $0x158] sm:$0xf]
  %v120 = vld [vmem:[%s1 + $0x15c] sm:$0xf]
  %v121 = vld [vmem:[%s1 + $0x160] sm:$0xf]
  %v122 = vld [vmem:[%s1 + $0x164] sm:$0xf]
  %v123 = vld [vmem:[%s1 + $0x168] sm:$0xf]
  %v124 = vld [vmem:[%s1 + $0x16c] sm:$0xf]
  %v125 = vld [vmem:[%s1 + $0x170] sm:$0xf]
  %v126 = vld [vmem:[%s1 + $0x174] sm:$0xf]
  %v127 = vld [vmem:[%s1 + $0x178] sm:$0xf]
  %v128 = vld [vmem:[%s1 + $0x17c] sm:$0xf]
  %v129 = vld [vmem:[%s1 + $0x180] sm:$0xf]
  %v130 = vld [vmem:[%s1 + $0x184] sm:$0xf]
  %v131 = vld [vmem:[%s1 + $0x188] sm:$0xf]
  %v132 = vld [vmem:[%s1 + $0x18c] sm:$0xf]
  %v133 = vld [vmem:[%s1 + $0x190] sm:$0xf]
  %v134 = vld [vmem:[%s1 + $0x194] sm:$0xf]
  %v135 = vld [vmem:[%s1 + $0x198] sm:$0xf]
  %v136 = vld [vmem:[%s1 + $0x19c] sm:$0xf]
  %v137 = vld [vmem:[%s1 + $0x1a0] sm:$0xf]
  %v138 = vld [vmem:[%s1 + $0x1a4] sm:$0xf]
  %v139 = vld [vmem:[%s1 + $0x1a8] sm:$0xf]
  %v140 = vld [vmem:[%s1 + $0x1ac] sm:$0xf]
  %v141 = vld [vmem:[%s1 + $0x1b0] sm:$0xf]
  %v142 = vld [vmem:[%s1 + $0x1b4] sm:$0xf]
  %v143 = vld [vmem:[%s1 + $0x1b8] sm:$0xf]
  %v144 = vld [vmem:[%s1 + $0x1bc] sm:$0xf]
  %v145 = vld [vmem:[%s1 + $0x1c0] sm:$0xf]
  %v146 = vld [vmem:[%s1 + $0x1c4] sm:$0xf]
  %v147 = vld [vmem:[%s1 + $0x1c8] sm:$0xf]
  %v148 = vld [vmem:[%s1 + $0x1cc] sm:$0xf]
  %v149 = vld [vmem:[%s1 + $0x1d0] sm:$0xf]
  %v150 = vld [vmem:[%s1 + $0x1d4] sm:$0xf]
  %v151 = vld [vmem:[%s1 + $0x1d8] sm:$0xf]
  %v152 = vld [vmem:[%s1 + $0x1dc] sm:$0xf]
  %v153 = vld [vmem:[%s1 + $0x1e0] sm:$0xf]
  %v154 = vld [vmem:[%s1 + $0x1e4] sm:$0xf]
  %v155 = vld [vmem:[%s1 + $0x1e8] sm:$0xf]
  %v156 = vld [vmem:[%s1 + $0x1ec] sm:$0xf]
  %v157 = vld [vmem:[%s1 + $0x1f0] sm:$0xf]
  %v158 = vld [vmem:[%s1 + $0x1f4] sm:$0xf]
  %v159 = vld [vmem:[%s1 + $0x1f8] sm:$0xf]
  %v160 = vld [vmem:[%s1 + $0x1fc] sm:$0xf]
  %v161 = vld [vmem:[%s1 + $0x200] sm:$0xf]
  %v162 = vld [vmem:[%s1 + $0x204] sm:$0xf]
  %v163 = vld [vmem:[%s1 + $0x208] sm:$0xf]
  %v164 = vld [vmem:[%s1 + $0x20c] sm:$0xf]
  %v165 = vld [vmem:[%s1 + $0x210] sm:$0xf]
  %v166 = vld [vmem:[%s1 + $0x214] sm:$0xf]
  %v167 = vld [vmem:[%s1 + $0x218] sm:$0xf]
  %v168 = vld [vmem:[%s1 + $0x21c] sm:$0xf]
  %v169 = vld [vmem:[%s1 + $0x220] sm:$0xf]
  %v170 = vld [vmem:[%s1 + $0x224] sm:$0xf]
  %v171 = vld [vmem:[%s1 + $0x228] sm:$0xf]
  %v172 = vld [vmem:[%s1 + $0x22c] sm:$0xf]
  %v173 = vld [vmem:[%s1 + $0x230] sm:$0xf]
  %v174 = vld [vmem:[%s1 + $0x234] sm:$0xf]
  %v175 = vld [vmem:[%s1 + $0x238] sm:$0xf]
  %v176 = vld [vmem:[%s1 + $0x23c] sm:$0xf]
  %v177 = vld [vmem:[%s1 + $0x240] sm:$0xf]
  %v178 = vld [vmem:[%s1 + $0x244] sm:$0xf]
  %v179 = vld [vmem:[%s1 + $0x248] sm:$0xf]
  %v180 = vld [vmem:[%s1 + $0x24c] sm:$0xf]
  %v181 = vld [vmem:[%s1 + $0x250] sm:$0xf]
  %v182 = vld [vmem:[%s1 + $0x254] sm:$0xf]
  %v183 = vld [vmem:[%s1 + $0x258] sm:$0xf]
  %v184 = vld [vmem:[%s1 + $0x25c] sm:$0xf]
  %v185 = vld [vmem:[%s1 + $0x260] sm:$0xf]
  %v186 = vld [vmem:[%s1 + $0x264] sm:$0xf]
  %v187 = vld [vmem:[%s1 + $0x268] sm:$0xf]
  %v188 = vld [vmem:[%s1 + $0x26c] sm:$0xf]
  %v189 = vld [vmem:[%s1 + $0x270] sm:$0xf]
  %v190 = vld [vmem:[%s1 + $0x274] sm:$0xf]
  %v191 = vld [vmem:[%s1 + $0x278] sm:$0xf]
  %v192 = vld [vmem:[%s1 + $0x27c] sm:$0xf]
  %v193 = vld [vmem:[%s1 + $0x280] sm:$0xf]
  %v194 = vld [vmem:[%s1 + $0x284] sm:$0xf]
  %v195 = vld [vmem:[%s1 + $0x288] sm:$0xf]
  %v196 = vld [vmem:[%s1 + $0x28c] sm:$0xf]
  %v197 = vld [vmem:[%s1 + $0x290] sm:$0xf]
  %v198 = vld [vmem:[%s1 + $0x294] sm:$0xf]
  %v199 = vld [vmem:[%s1 + $0x298] sm:$0xf]
  %v200 = vld [vmem:[%s1 + $0x29c] sm:$0xf]
  %v201 = vld [vmem:[%s1 + $0x2a0] sm:$0xf]
  %v202 = vld [vmem:[%s1 + $0x2a4] sm:$0xf]
  %v203 = vld [vmem:[%s1 + $0x2a8] sm:$0xf]
  %v204 = vld [vmem:[%s1 + $0x2ac] sm:$0xf]
  %v205 = vld [vmem:[%s1 + $0x2b0] sm:$0xf]
  %v206 = vld [vmem:[%s1 + $0x2b4] sm:$0xf]
  %v207 = vld [vmem:[%s1 + $0x2b8] sm:$0xf]
  %v208 = vld [vmem:[%s1 + $0x2bc] sm:$0xf]
  %v209 = vld [vmem:[%s1 + $0x2c0] sm:$0xf]
  %v210 = vld [vmem:[%s1 + $0x2c4] sm:$0xf]
  %v211 = vld [vmem:[%s1 + $0x2c8] sm:$0xf]
  %v212 = vld [vmem:[%s1 + $0x2cc] sm:$0xf]
  %v213 = vld [vmem:[%s1 + $0x2d0] sm:$0xf]
  %v214 = vld [vmem:[%s1 + $0x2d4] sm:$0xf]
  %v215 = vld [vmem:[%s1 + $0x2d8] sm:$0xf]
  %v216 = vld [vmem:[%s1 + $0x2dc] sm:$0xf]
  %v217 = vld [vmem:[%s1 + $0x2e0] sm:$0xf]
  %v218 = vld [vmem:[%s1 + $0x2e4] sm:$0xf]
  %v219 = vld [vmem:[%s1 + $0x2e8] sm:$0xf]
  %v220 = vld [vmem:[%s1 + $0x2ec] sm:$0xf]
  %v221 = vld [vmem:[%s1 + $0x2f0] sm:$0xf]
  %v222 = vld [vmem:[%s1 + $0x2f4] sm:$0xf]
  %v223 = vld [vmem:[%s1 + $0x2f8] sm:$0xf]
  %v224 = vld [vmem:[%s1 + $0x2fc] sm:$0xf]
  %v225 = vld [vmem:[%s1 + $0x300] sm:$0xf]
  %v226 = vld [vmem:[%s1 + $0x304] sm:$0xf]
  %v227 = vld [vmem:[%s1 + $0x308] sm:$0xf]
  %v228 = vld [vmem:[%s1 + $0x30c] sm:$0xf]
  %v229 = vld [vmem:[%s1 + $0x310] sm:$0xf]
  %v230 = vld [vmem:[%s1 + $0x314] sm:$0xf]
  %v231 = vld [vmem:[%s1 + $0x318] sm:$0xf]
  %v232 = vld [vmem:[%s1 + $0x31c] sm:$0xf]
  %v233 = vld [vmem:[%s1 + $0x320] sm:$0xf]
  %v234 = vld [vmem:[%s1 + $0x324] sm:$0xf]
  %v235 = vld [vmem:[%s1 + $0x328] sm:$0xf]
  %v236 = vld [vmem:[%s1 + $0x32c] sm:$0xf]
  %v237 = vld [vmem:[%s1 + $0x330] sm:$0xf]
  %v238 = vld [vmem:[%s1 + $0x334] sm:$0xf]
  %v239 = vld [vmem:[%s1 + $0x338] sm:$0xf]
  %v240 = vld [vmem:[%s1 + $0x33c] sm:$0xf]
  %v241 = vld [vmem:[%s1 + $0x340] sm:$0xf]
  %v242 = vld [vmem:[%s1 + $0x344] sm:$0xf]
  %v243 = vld [vmem:[%s1 + $0x348] sm:$0xf]
  %v244 = vld [vmem:[%s1 + $0x34c] sm:$0xf]
  %v245 = vld [vmem:[%s1 + $0x350] sm:$0xf]
  %v246 = vld [vmem:[%s1 + $0x354] sm:$0xf]
  %v247 = vld [vmem:[%s1 + $0x358] sm:$0xf]
  %v248 = vld [vmem:[%s1 + $0x35c] sm:$0xf]
  %v249 = vld [vmem:[%s1 + $0x360] sm:$0xf]
  %v250 = vld [vmem:[%s1 + $0x364] sm:$0xf]
  %v251 = vld [vmem:[%s1 + $0x368] sm:$0xf]
  %v252 = vld [vmem:[%s1 + $0x36c] sm:$0xf]
  %v253 = vld [vmem:[%s1 + $0x370] sm:$0xf]
  %v254 = vld [vmem:[%s1 + $0x374] sm:$0xf]
  %v255 = vld [vmem:[%s1 + $0x378] sm:$0xf]
  %v256 = vld [vmem:[%s1 + $0x37c] sm:$0xf]
  %v257 = vld [vmem:[%s1 + $0x380] sm:$0xf]
  %v258 = vld [vmem:[%s1 + $0x384] sm:$0xf]
  %v259 = vld [vmem:[%s1 + $0x388] sm:$0xf]
  %v260 = vld [vmem:[%s1 + $0x38c] sm:$0xf]
  %v261 = vld [vmem:[%s1 + $0x390] sm:$0xf]
  %v262 = vld [vmem:[%s1 + $0x394] sm:$0xf]
  %v263 = vld [vmem:[%s1 + $0x398] sm:$0xf]
  %v264 = vld [vmem:[%s1 + $0x39c] sm:$0xf]
  %v265 = vld [vmem:[%s1 + $0x3a0] sm:$0xf]
  %v266 = vld [vmem:[%s1 + $0x3a4] sm:$0xf]
  %v267 = vld [vmem:[%s1 + $0x3a8] sm:$0xf]
  %v268 = vld [vmem:[%s1 + $0x3ac] sm:$0xf]
  %v269 = vld [vmem:[%s1 + $0x3b0] sm:$0xf]
  %v270 = vld [vmem:[%s1 + $0x3b4] sm:$0xf]
  %v271 = vld [vmem:[%s1 + $0x3b8] sm:$0xf]
  %v272 = vld [vmem:[%s1 + $0x3bc] sm:$0xf]
  %v273 = vld [vmem:[%s1 + $0x3c0] sm:$0xf]
  %v274 = vld [vmem:[%s1 + $0x3c4] sm:$0xf]
  %v275 = vld [vmem:[%s1 + $0x3c8] sm:$0xf]
  %v276 = vld [vmem:[%s1 + $0x3cc] sm:$0xf]
  %v277 = vld [vmem:[%s1 + $0x3d0] sm:$0xf]
  %v278 = vld [vmem:[%s1 + $0x3d4] sm:$0xf]
  %v279 = vld [vmem:[%s1 + $0x3d8] sm:$0xf]
  %v280 = vld [vmem:[%s1 + $0x3dc] sm:$0xf]
  %v281 = vld [vmem:[%s1 + $0x3e0] sm:$0xf]
  %v282 = vld [vmem:[%s1 + $0x3e4] sm:$0xf]
  %v283 = vld [vmem:[%s1 + $0x3e8] sm:$0xf]
  %v284 = vld [vmem:[%s1 + $0x3ec] sm:$0xf]
  %v285 = vld [vmem:[%s1 + $0x3f0] sm:$0xf]
  %v286 = vld [vmem:[%s1 + $0x3f4] sm:$0xf]
  %v287 = vld [vmem:[%s1 + $0x3f8] sm:$0xf]
  %v288 = vld [vmem:[%s1 + $0x3fc] sm:$0xf]
  %v289 = vld [vmem:[%s1 + $0x400] sm:$0xf]
  %v290 = vld [vmem:[%s1 + $0x404] sm:$0xf]
  %v291 = vld [vmem:[%s1 + $0x408] sm:$0xf]
  %v292 = vld [vmem:[%s1 + $0x40c] sm:$0xf]
  %v293 = vld [vmem:[%s1 + $0x410] sm:$0xf]
  %v294 = vld [vmem:[%s1 + $0x414] sm:$0xf]
  %v295 = vld [vmem:[%s1 + $0x418] sm:$0xf]
  %v296 = vld [vmem:[%s1 + $0x41c] sm:$0xf]
  %v297 = vld [vmem:[%s1 + $0x420] sm:$0xf]
  %v298 = vld [vmem:[%s1 + $0x424] sm:$0xf]
  %v299 = vld [vmem:[%s1 + $0x428] sm:$0xf]
  %v300 = vld [vmem:[%s1 + $0x42c] sm:$0xf]
  %v301 = vld [vmem:[%s1 + $0x430] sm:$0xf]
  %v302 = vld [vmem:[%s1 + $0x434] sm:$0xf]
  %v303 = vld [vmem:[%s1 + $0x438] sm:$0xf]
  %v304 = vld [vmem:[%s1 + $0x43c] sm:$0xf]
  %v305 = vld [vmem:[%s1 + $0x440] sm:$0xf]
  %v306 = vld [vmem:[%s1 + $0x444] sm:$0xf]
  %v307 = vld [vmem:[%s1 + $0x448] sm:$0xf]
  %v308 = vld [vmem:[%s1 + $0x44c] sm:$0xf]
  %v309 = vld [vmem:[%s1 + $0x450] sm:$0xf]
  %v310 = vld [vmem:[%s1 + $0x454] sm:$0xf]
  %v311 = vld [vmem:[%s1 + $0x458] sm:$0xf]
  %v312 = vld [vmem:[%s1 + $0x45c] sm:$0xf]
  %v313 = vld [vmem:[%s1 + $0x460] sm:$0xf]
  %v314 = vld [vmem:[%s1 + $0x464] sm:$0xf]
  %v315 = vld [vmem:[%s1 + $0x468] sm:$0xf]
  %v316 = vld [vmem:[%s1 + $0x46c] sm:$0xf]
  %v317 = vld [vmem:[%s1 + $0x470] sm:$0xf]
  %v318 = vld [vmem:[%s1 + $0x474] sm:$0xf]
  %v319 = vld [vmem:[%s1 + $0x478] sm:$0xf]
  %v320 = vld [vmem:[%s1 + $0x47c] sm:$0xf]
  %v321 = vld [vmem:[%s1 + $0x480] sm:$0xf]
  %v322 = vld [vmem:[%s1 + $0x484] sm:$0xf]
  %v323 = vld [vmem:[%s1 + $0x488] sm:$0xf]
  %v324 = vld [vmem:[%s1 + $0x48c] sm:$0xf]
  %v325 = vld [vmem:[%s1 + $0x490] sm:$0xf]
  %v326 = vld [vmem:[%s1 + $0x494] sm:$0xf]
  %v327 = vld [vmem:[%s1 + $0x498] sm:$0xf]
  %v328 = vld [vmem:[%s1 + $0x49c] sm:$0xf]
  %v329 = vld [vmem:[%s1 + $0x4a0] sm:$0xf]
  %v330 = vld [vmem:[%s1 + $0x4a4] sm:$0xf]
  %v331 = vld [vmem:[%s1 + $0x4a8] sm:$0xf]
  %v332 = vld [vmem:[%s1 + $0x4ac] sm:$0xf]
  %v333 = vld [vmem:[%s1 + $0x4b0] sm:$0xf]
  %v334 = vld [vmem:[%s1 + $0x4b4] sm:$0xf]
  %v335 = vld [vmem:[%s1 + $0x4b8] sm:$0xf]
  %v336 = vld [vmem:[%s1 + $0x4bc] sm:$0xf]
  %v337 = vld [vmem:[%s1 + $0x4c0] sm:$0xf]
  %v338 = vld [vmem:[%s1 + $0x4c4] sm:$0xf]
  %v339 = vld [vmem:[%s1 + $0x4c8] sm:$0xf]
  %v340 = vld [vmem:[%s1 + $0x4cc] sm:$0xf]
  %v341 = vld [vmem:[%s1 + $0x4d0] sm:$0xf]
  %v342 = vld [vmem:[%s1 + $0x4d4] sm:$0xf]
  %v343 = vld [vmem:[%s1 + $0x4d8] sm:$0xf]
  %v344 = vld [vmem:[%s1 + $0x4dc] sm:$0xf]
  %v345 = vld [vmem:[%s1 + $0x4e0] sm:$0xf]
  %v346 = vld [vmem:[%s1 + $0x4e4] sm:$0xf]
  %v347 = vld [vmem:[%s1 + $0x4e8] sm:$0xf]
  %v348 = vld [vmem:[%s1 + $0x4ec] sm:$0xf]
  %v349 = vld [vmem:[%s1 + $0x4f0] sm:$0xf]
  %v350 = vld [vmem:[%s1 + $0x4f4] sm:$0xf]
  %v351 = vld [vmem:[%s1 + $0x4f8] sm:$0xf]
  %v352 = vld [vmem:[%s1 + $0x4fc] sm:$0xf]
  %v353 = vld [vmem:[%s1 + $0x500] sm:$0xf]
  %v354 = vld [vmem:[%s1 + $0x504] sm:$0xf]
  %v355 = vld [vmem:[%s1 + $0x508] sm:$0xf]
  %v356 = vld [vmem:[%s1 + $0x50c] sm:$0xf]
  %v357 = vld [vmem:[%s1 + $0x510] sm:$0xf]
  %v358 = vld [vmem:[%s1 + $0x514] sm:$0xf]
  %v359 = vld [vmem:[%s1 + $0x518] sm:$0xf]
  %v360 = vld [vmem:[%s1 + $0x51c] sm:$0xf]
  %v361 = vld [vmem:[%s1 + $0x520] sm:$0xf]
  %v362 = vld [vmem:[%s1 + $0x524] sm:$0xf]
  %v363 = vld [vmem:[%s1 + $0x528] sm:$0xf]
  %v364 = vld [vmem:[%s1 + $0x52c] sm:$0xf]
  %v365 = vld [vmem:[%s1 + $0x530] sm:$0xf]
  %v366 = vld [vmem:[%s1 + $0x534] sm:$0xf]
  %v367 = vld [vmem:[%s1 + $0x538] sm:$0xf]
  %v368 = vld [vmem:[%s1 + $0x53c] sm:$0xf]
  %v369 = vld [vmem:[%s1 + $0x540] sm:$0xf]
  %v370 = vld [vmem:[%s1 + $0x544] sm:$0xf]
  %v371 = vld [vmem:[%s1 + $0x548] sm:$0xf]
  %v372 = vld [vmem:[%s1 + $0x54c] sm:$0xf]
  %v373 = vld [vmem:[%s1 + $0x550] sm:$0xf]
  %v374 = vld [vmem:[%s1 + $0x554] sm:$0xf]
  %v375 = vld [vmem:[%s1 + $0x558] sm:$0xf]
  %v376 = vld [vmem:[%s1 + $0x55c] sm:$0xf]
  %v377 = vld [vmem:[%s1 + $0x560] sm:$0xf]
  %v378 = vld [vmem:[%s1 + $0x564] sm:$0xf]
  %v379 = vld [vmem:[%s1 + $0x568] sm:$0xf]
  %v380 = vld [vmem:[%s1 + $0x56c] sm:$0xf]
  %v381 = vld [vmem:[%s1 + $0x570] sm:$0xf]
  %v382 = vld [vmem:[%s1 + $0x574] sm:$0xf]
  %v383 = vld [vmem:[%s1 + $0x578] sm:$0xf]
  %v384 = vld [vmem:[%s1 + $0x57c] sm:$0xf]
  %v385 = vld [vmem:[%s1 + $0x580] sm:$0xf]
  %v386 = vld [vmem:[%s1 + $0x584] sm:$0xf]
  %v387 = vld [vmem:[%s1 + $0x588] sm:$0xf]
  %v388 = vld [vmem:[%s1 + $0x58c] sm:$0xf]
  %v389 = vld [vmem:[%s1 + $0x590] sm:$0xf]
  %v390 = vld [vmem:[%s1 + $0x594] sm:$0xf]
  %v391 = vld [vmem:[%s1 + $0x598] sm:$0xf]
  %v392 = vld [vmem:[%s1 + $0x59c] sm:$0xf]
  %v393 = vld [vmem:[%s1 + $0x5a0] sm:$0xf]
  %v394 = vld [vmem:[%s1 + $0x5a4] sm:$0xf]
  %v395 = vld [vmem:[%s1 + $0x5a8] sm:$0xf]
  %v396 = vld [vmem:[%s1 + $0x5ac] sm:$0xf]
  %v397 = vld [vmem:[%s1 + $0x5b0] sm:$0xf]
  %v398 = vld [vmem:[%s1 + $0x5b4] sm:$0xf]
  %v399 = vld [vmem:[%s1 + $0x5b8] sm:$0xf]
  %v400 = vld [vmem:[%s1 + $0x5bc] sm:$0xf]
  %v401 = vld [vmem:[%s1 + $0x5c0] sm:$0xf]
  %v402 = vld [vmem:[%s1 + $0x5c4] sm:$0xf]
  %v403 = vld [vmem:[%s1 + $0x5c8] sm:$0xf]
  %v404 = vld [vmem:[%s1 + $0x5cc] sm:$0xf]
  %v405 = vld [vmem:[%s1 + $0x5d0] sm:$0xf]
  %v406 = vld [vmem:[%s1 + $0x5d4] sm:$0xf]
  %v407 = vld [vmem:[%s1 + $0x5d8] sm:$0xf]
  %v408 = vld [vmem:[%s1 + $0x5dc] sm:$0xf]
  %v409 = vld [vmem:[%s1 + $0x5e0] sm:$0xf]
  %v410 = vld [vmem:[%s1 + $0x5e4] sm:$0xf]
  %v411 = vld [vmem:[%s1 + $0x5e8] sm:$0xf]
  %v412 = vld [vmem:[%s1 + $0x5ec] sm:$0xf]
  %v413 = vld [vmem:[%s1 + $0x5f0] sm:$0xf]
  %v414 = vld [vmem:[%s1 + $0x5f4] sm:$0xf]
  %v415 = vld [vmem:[%s1 + $0x5f8] sm:$0xf]
  %v416 = vld [vmem:[%s1 + $0x5fc] sm:$0xf]
  %v417 = vld [vmem:[%s1 + $0x600] sm:$0xf]
  %v418 = vld [vmem:[%s1 + $0x604] sm:$0xf]
  %v419 = vld [vmem:[%s1 + $0x608] sm:$0xf]
  %v420 = vld [vmem:[%s1 + $0x60c] sm:$0xf]
  %v421 = vld [vmem:[%s1 + $0x610] sm:$0xf]
  %v422 = vld [vmem:[%s1 + $0x614] sm:$0xf]
  %v423 = vld [vmem:[%s1 + $0x618] sm:$0xf]
  %v424 = vld [vmem:[%s1 + $0x61c] sm:$0xf]
  %v425 = vld [vmem:[%s1 + $0x620] sm:$0xf]
  %v426 = vld [vmem:[%s1 + $0x624] sm:$0xf]
  %v427 = vld [vmem:[%s1 + $0x628] sm:$0xf]
  %v428 = vld [vmem:[%s1 + $0x62c] sm:$0xf]
  %v429 = vld [vmem:[%s1 + $0x630] sm:$0xf]
  %v430 = vld [vmem:[%s1 + $0x634] sm:$0xf]
  %v431 = vld [vmem:[%s1 + $0x638] sm:$0xf]
  %v432 = vld [vmem:[%s1 + $0x63c] sm:$0xf]
  %v433 = vld [vmem:[%s1 + $0x640] sm:$0xf]
  %v434 = vld [vmem:[%s1 + $0x644] sm:$0xf]
  %v435 = vld [vmem:[%s1 + $0x648] sm:$0xf]
  %v436 = vld [vmem:[%s1 + $0x64c] sm:$0xf]
  %v437 = vld [vmem:[%s1 + $0x650] sm:$0xf]
  %v438 = vld [vmem:[%s1 + $0x654] sm:$0xf]
  %v439 = vld [vmem:[%s1 + $0x658] sm:$0xf]
  %v440 = vld [vmem:[%s1 + $0x65c] sm:$0xf]
  %v441 = vld [vmem:[%s1 + $0x660] sm:$0xf]
  %v442 = vld [vmem:[%s1 + $0x664] sm:$0xf]
  %v443 = vld [vmem:[%s1 + $0x668] sm:$0xf]
  %v444 = vld [vmem:[%s1 + $0x66c] sm:$0xf]
  %v445 = vld [vmem:[%s1 + $0x670] sm:$0xf]
  %v446 = vld [vmem:[%s1 + $0x674] sm:$0xf]
  %v447 = vld [vmem:[%s1 + $0x678] sm:$0xf]
  %v448 = vld [vmem:[%s1 + $0x67c] sm:$0xf]
  %v449 = vld [vmem:[%s1 + $0x680] sm:$0xf]
  %v450 = vld [vmem:[%s1 + $0x684] sm:$0xf]
  %v451 = vld [vmem:[%s1 + $0x688] sm:$0xf]
  %v452 = vld [vmem:[%s1 + $0x68c] sm:$0xf]
  %v453 = vld [vmem:[%s1 + $0x690] sm:$0xf]
  %v454 = vld [vmem:[%s1 + $0x694] sm:$0xf]
  %v455 = vld [vmem:[%s1 + $0x698] sm:$0xf]
  %v456 = vld [vmem:[%s1 + $0x69c] sm:$0xf]
  %v457 = vld [vmem:[%s1 + $0x6a0] sm:$0xf]
  %v458 = vld [vmem:[%s1 + $0x6a4] sm:$0xf]
  %v459 = vld [vmem:[%s1 + $0x6a8] sm:$0xf]
  %v460 = vld [vmem:[%s1 + $0x6ac] sm:$0xf]
  %v461 = vld [vmem:[%s1 + $0x6b0] sm:$0xf]
  %v462 = vld [vmem:[%s1 + $0x6b4] sm:$0xf]
  %v463 = vld [vmem:[%s1 + $0x6b8] sm:$0xf]
  %v464 = vld [vmem:[%s1 + $0x6bc] sm:$0xf]
  %v465 = vld [vmem:[%s1 + $0x6c0] sm:$0xf]
  %v466 = vld [vmem:[%s1 + $0x6c4] sm:$0xf]
  %v467 = vld [vmem:[%s1 + $0x6c8] sm:$0xf]
  %v468 = vld [vmem:[%s1 + $0x6cc] sm:$0xf]
  %v469 = vld [vmem:[%s1 + $0x6d0] sm:$0xf]
  %v470 = vld [vmem:[%s1 + $0x6d4] sm:$0xf]
  %v471 = vld [vmem:[%s1 + $0x6d8] sm:$0xf]
  %v472 = vld [vmem:[%s1 + $0x6dc] sm:$0xf]
  %v473 = vld [vmem:[%s1 + $0x6e0] sm:$0xf]
  %v474 = vld [vmem:[%s1 + $0x6e4] sm:$0xf]
  %v475 = vld [vmem:[%s1 + $0x6e8] sm:$0xf]
  %v476 = vld [vmem:[%s1 + $0x6ec] sm:$0xf]
  %v477 = vld [vmem:[%s1 + $0x6f0] sm:$0xf]
  %v478 = vld [vmem:[%s1 + $0x6f4] sm:$0xf]
  %v479 = vld [vmem:[%s1 + $0x6f8] sm:$0xf]
  %v480 = vld [vmem:[%s1 + $0x6fc] sm:$0xf]
  %v481 = vld [vmem:[%s1 + $0x700] sm:$0xf]
  %v482 = vld [vmem:[%s1 + $0x704] sm:$0xf]
  %v483 = vld [vmem:[%s1 + $0x708] sm:$0xf]
  %v484 = vld [vmem:[%s1 + $0x70c] sm:$0xf]
  %v485 = vld [vmem:[%s1 + $0x710] sm:$0xf]
  %v486 = vld [vmem:[%s1 + $0x714] sm:$0xf]
  %v487 = vld [vmem:[%s1 + $0x718] sm:$0xf]
  %v488 = vld [vmem:[%s1 + $0x71c] sm:$0xf]
  %v489 = vld [vmem:[%s1 + $0x720] sm:$0xf]
  %v490 = vld [vmem:[%s1 + $0x724] sm:$0xf]
  %v491 = vld [vmem:[%s1 + $0x728] sm:$0xf]
  %v492 = vld [vmem:[%s1 + $0x72c] sm:$0xf]
  %v493 = vld [vmem:[%s1 + $0x730] sm:$0xf]
  %v494 = vld [vmem:[%s1 + $0x734] sm:$0xf]
  %v495 = vld [vmem:[%s1 + $0x738] sm:$0xf]
  %v496 = vld [vmem:[%s1 + $0x73c] sm:$0xf]
  %v497 = vld [vmem:[%s1 + $0x740] sm:$0xf]
  %v498 = vld [vmem:[%s1 + $0x744] sm:$0xf]
  %v499 = vld [vmem:[%s1 + $0x748] sm:$0xf]
  %v500 = vld [vmem:[%s1 + $0x74c] sm:$0xf]
  %v501 = vld [vmem:[%s1 + $0x750] sm:$0xf]
  %v502 = vld [vmem:[%s1 + $0x754] sm:$0xf]
  %v503 = vld [vmem:[%s1 + $0x758] sm:$0xf]
  %v504 = vld [vmem:[%s1 + $0x75c] sm:$0xf]
  %v505 = vld [vmem:[%s1 + $0x760] sm:$0xf]
  %v506 = vld [vmem:[%s1 + $0x764] sm:$0xf]
  %v507 = vld [vmem:[%s1 + $0x768] sm:$0xf]
  %v508 = vld [vmem:[%s1 + $0x76c] sm:$0xf]
  %v509 = vld [vmem:[%s1 + $0x770] sm:$0xf]
  %v510 = vld [vmem:[%s1 + $0x774] sm:$0xf]
  %v511 = vld [vmem:[%s1 + $0x778] sm:$0xf]
  %v512 = vld [vmem:[%s1 + $0x77c] sm:$0xf]
  %v513 = vld [vmem:[%s1 + $0x780] sm:$0xf]
  %v514 = vld [vmem:[%s1 + $0x784] sm:$0xf]
  %v515 = vld [vmem:[%s1 + $0x788] sm:$0xf]
  %v516 = vld [vmem:[%s1 + $0x78c] sm:$0xf]
  %v517 = vld [vmem:[%s1 + $0x790] sm:$0xf]
  %v518 = vld [vmem:[%s1 + $0x794] sm:$0xf]
  %v519 = vld [vmem:[%s1 + $0x798] sm:$0xf]
  %v520 = vld [vmem:[%s1 + $0x79c] sm:$0xf]
  %v521 = vld [vmem:[%s1 + $0x7a0] sm:$0xf]
  %v522 = vld [vmem:[%s1 + $0x7a4] sm:$0xf]
  %v523 = vld [vmem:[%s1 + $0x7a8] sm:$0xf]
  %v524 = vld [vmem:[%s1 + $0x7ac] sm:$0xf]
  %v525 = vld [vmem:[%s1 + $0x7b0] sm:$0xf]
  %v526 = vld [vmem:[%s1 + $0x7b4] sm:$0xf]
  %v527 = vld [vmem:[%s1 + $0x7b8] sm:$0xf]
  %v528 = vld [vmem:[%s1 + $0x7bc] sm:$0xf]
  %v529 = vld [vmem:[%s1 + $0x7c0] sm:$0xf]
  %v530 = vld [vmem:[%s1 + $0x7c4] sm:$0xf]
  %v531 = vld [vmem:[%s1 + $0x7c8] sm:$0xf]
  %v532 = vld [vmem:[%s1 + $0x7cc] sm:$0xf]
  %v533 = vld [vmem:[%s1 + $0x7d0] sm:$0xf]
  %v534 = vld [vmem:[%s1 + $0x7d4] sm:$0xf]
  %v535 = vld [vmem:[%s1 + $0x7d8] sm:$0xf]
  %v536 = vld [vmem:[%s1 + $0x7dc] sm:$0xf]
  %v537 = vld [vmem:[%s1 + $0x7e0] sm:$0xf]
  %v538 = vld [vmem:[%s1 + $0x7e4] sm:$0xf]
  %v539 = vld [vmem:[%s1 + $0x7e8] sm:$0xf]
  %v540 = vld [vmem:[%s1 + $0x7ec] sm:$0xf]
  %v541 = vld [vmem:[%s1 + $0x7f0] sm:$0xf]
  %v542 = vld [vmem:[%s1 + $0x7f4] sm:$0xf]
  %v543 = vld [vmem:[%s1 + $0x7f8] sm:$0xf]
  %v544 = vld [vmem:[%s1 + $0x7fc] sm:$0xf]
  %v545 = vld [vmem:[%s1 + $0x800] sm:$0xf]
  %v546 = vld [vmem:[%s1 + $0x804] sm:$0xf]
  %v547 = vld [vmem:[%s1 + $0x808] sm:$0xf]
  %v548 = vld [vmem:[%s1 + $0x80c] sm:$0xf]
  %v549 = vld [vmem:[%s1 + $0x810] sm:$0xf]
  %v550 = vld [vmem:[%s1 + $0x814] sm:$0xf]
  %v551 = vld [vmem:[%s1 + $0x818] sm:$0xf]
  %v552 = vld [vmem:[%s1 + $0x81c] sm:$0xf]
  %v553 = vld [vmem:[%s1 + $0x820] sm:$0xf]
  %v554 = vld [vmem:[%s1 + $0x824] sm:$0xf]
  %v555 = vld [vmem:[%s1 + $0x828] sm:$0xf]
  %v556 = vld [vmem:[%s1 + $0x82c] sm:$0xf]
  %v557 = vld [vmem:[%s1 + $0x830] sm:$0xf]
  %v558 = vld [vmem:[%s1 + $0x834] sm:$0xf]
  %v559 = vld [vmem:[%s1 + $0x838] sm:$0xf]
  %v560 = vld [vmem:[%s1 + $0x83c] sm:$0xf]
  %v561 = vld [vmem:[%s1 + $0x840] sm:$0xf]
  %v562 = vld [vmem:[%s1 + $0x844] sm:$0xf]
  %v563 = vld [vmem:[%s1 + $0x848] sm:$0xf]
  %v564 = vld [vmem:[%s1 + $0x84c] sm:$0xf]
  %v565 = vld [vmem:[%s1 + $0x850] sm:$0xf]
  %v566 = vld [vmem:[%s1 + $0x854] sm:$0xf]
  %v567 = vld [vmem:[%s1 + $0x858] sm:$0xf]
  %v568 = vld [vmem:[%s1 + $0x85c] sm:$0xf]
  %v569 = vld [vmem:[%s1 + $0x860] sm:$0xf]
  %v570 = vld [vmem:[%s1 + $0x864] sm:$0xf]
  %v571 = vld [vmem:[%s1 + $0x868] sm:$0xf]
  %v572 = vld [vmem:[%s1 + $0x86c] sm:$0xf]
  %v573 = vld [vmem:[%s1 + $0x870] sm:$0xf]
  %v574 = vld [vmem:[%s1 + $0x874] sm:$0xf]
  %v575 = vld [vmem:[%s1 + $0x878] sm:$0xf]
  %v576 = vld [vmem:[%s1 + $0x87c] sm:$0xf]
  %v577 = vld [vmem:[%s1 + $0x880] sm:$0xf]
  %v578 = vld [vmem:[%s1 + $0x884] sm:$0xf]
  %v579 = vld [vmem:[%s1 + $0x888] sm:$0xf]
  %v580 = vld [vmem:[%s1 + $0x88c] sm:$0xf]
  %v581 = vld [vmem:[%s1 + $0x890] sm:$0xf]
  %v582 = vld [vmem:[%s1 + $0x894] sm:$0xf]
  %v583 = vld [vmem:[%s1 + $0x898] sm:$0xf]
  %v584 = vld [vmem:[%s1 + $0x89c] sm:$0xf]
  %v585 = vld [vmem:[%s1 + $0x8a0] sm:$0xf]
  %v586 = vld [vmem:[%s1 + $0x8a4] sm:$0xf]
  %v587 = vld [vmem:[%s1 + $0x8a8] sm:$0xf]
  %v588 = vld [vmem:[%s1 + $0x8ac] sm:$0xf]
  %v589 = vld [vmem:[%s1 + $0x8b0] sm:$0xf]
  %v590 = vld [vmem:[%s1 + $0x8b4] sm:$0xf]
  %v591 = vld [vmem:[%s1 + $0x8b8] sm:$0xf]
  %v592 = vld [vmem:[%s1 + $0x8bc] sm:$0xf]
  %v593 = vld [vmem:[%s1 + $0x8c0] sm:$0xf]
  %v594 = vld [vmem:[%s1 + $0x8c4] sm:$0xf]
  %v595 = vld [vmem:[%s1 + $0x8c8] sm:$0xf]
  %v596 = vld [vmem:[%s1 + $0x8cc] sm:$0xf]
  %v597 = vld [vmem:[%s1 + $0x8d0] sm:$0xf]
  %v598 = vld [vmem:[%s1 + $0x8d4] sm:$0xf]
  %v599 = vld [vmem:[%s1 + $0x8d8] sm:$0xf]
  %v600 = vld [vmem:[%s1 + $0x8dc] sm:$0xf]
  %v601 = vld [vmem:[%s1 + $0x8e0] sm:$0xf]
  %v602 = vld [vmem:[%s1 + $0x8e4] sm:$0xf]
  %v603 = vld [vmem:[%s1 + $0x8e8] sm:$0xf]
  %v604 = vld [vmem:[%s1 + $0x8ec] sm:$0xf]
  %v605 = vld [vmem:[%s1 + $0x8f0] sm:$0xf]
  %v606 = vld [vmem:[%s1 + $0x8f4] sm:$0xf]
  %v607 = vld [vmem:[%s1 + $0x8f8] sm:$0xf]
  %v608 = vld [vmem:[%s1 + $0x8fc] sm:$0xf]
  %v609 = vld [vmem:[%s1 + $0x900] sm:$0xf]
  %v610 = vld [vmem:[%s1 + $0x904] sm:$0xf]
  %v611 = vld [vmem:[%s1 + $0x908] sm:$0xf]
  %v612 = vld [vmem:[%s1 + $0x90c] sm:$0xf]
  %v613 = vld [vmem:[%s1 + $0x910] sm:$0xf]
  %v614 = vld [vmem:[%s1 + $0x914] sm:$0xf]
  %v615 = vld [vmem:[%s1 + $0x918] sm:$0xf]
  %v616 = vld [vmem:[%s1 + $0x91c] sm:$0xf]
  %v617 = vld [vmem:[%s1 + $0x920] sm:$0xf]
  %v618 = vld [vmem:[%s1 + $0x924] sm:$0xf]
  %v619 = vld [vmem:[%s1 + $0x928] sm:$0xf]
  %v620 = vld [vmem:[%s1 + $0x92c] sm:$0xf]
  %v621 = vld [vmem:[%s1 + $0x930] sm:$0xf]
  %v622 = vld [vmem:[%s1 + $0x934] sm:$0xf]
  %v623 = vld [vmem:[%s1 + $0x938] sm:$0xf]
  %v624 = vld [vmem:[%s1 + $0x93c] sm:$0xf]
  %v625 = vld [vmem:[%s1 + $0x940] sm:$0xf]
  %v626 = vld [vmem:[%s1 + $0x944] sm:$0xf]
  %v627 = vld [vmem:[%s1 + $0x948] sm:$0xf]
  %v628 = vld [vmem:[%s1 + $0x94c] sm:$0xf]
  %v629 = vld [vmem:[%s1 + $0x950] sm:$0xf]
  %v630 = vld [vmem:[%s1 + $0x954] sm:$0xf]
  %v631 = vld [vmem:[%s1 + $0x958] sm:$0xf]
  %v632 = vld [vmem:[%s1 + $0x95c] sm:$0xf]
  %v633 = vld [vmem:[%s1 + $0x960] sm:$0xf]
  %v634 = vld [vmem:[%s1 + $0x964] sm:$0xf]
  %v635 = vld [vmem:[%s1 + $0x968] sm:$0xf]
  %v636 = vld [vmem:[%s1 + $0x96c] sm:$0xf]
  %v637 = vld [vmem:[%s1 + $0x970] sm:$0xf]
  %v638 = vld [vmem:[%s1 + $0x974] sm:$0xf]
  %v639 = vld [vmem:[%s1 + $0x978] sm:$0xf]
  %v640 = vld [vmem:[%s1 + $0x97c] sm:$0xf]
  %v641 = vld [vmem:[%s1 + $0x980] sm:$0xf]
  %v642 = vld [vmem:[%s1 + $0x984] sm:$0xf]
  %v643 = vld [vmem:[%s1 + $0x988] sm:$0xf]
  %v644 = vld [vmem:[%s1 + $0x98c] sm:$0xf]
  %v645 = vld [vmem:[%s1 + $0x990] sm:$0xf]
  %v646 = vld [vmem:[%s1 + $0x994] sm:$0xf]
  %v647 = vld [vmem:[%s1 + $0x998] sm:$0xf]
  %v648 = vld [vmem:[%s1 + $0x99c] sm:$0xf]
  %v649 = vld [vmem:[%s1 + $0x9a0] sm:$0xf]
  %v650 = vld [vmem:[%s1 + $0x9a4] sm:$0xf]
  %v651 = vld [vmem:[%s1 + $0x9a8] sm:$0xf]
  %v652 = vld [vmem:[%s1 + $0x9ac] sm:$0xf]
  %v653 = vld [vmem:[%s1 + $0x9b0] sm:$0xf]
  %v654 = vld [vmem:[%s1 + $0x9b4] sm:$0xf]
  %v655 = vld [vmem:[%s1 + $0x9b8] sm:$0xf]
  %v656 = vld [vmem:[%s1 + $0x9bc] sm:$0xf]
  %v657 = vld [vmem:[%s1 + $0x9c0] sm:$0xf]
  %v658 = vld [vmem:[%s1 + $0x9c4] sm:$0xf]
  %v659 = vld [vmem:[%s1 + $0x9c8] sm:$0xf]
  %v660 = vld [vmem:[%s1 + $0x9cc] sm:$0xf]
  %v661 = vld [vmem:[%s1 + $0x9d0] sm:$0xf]
  %v662 = vld [vmem:[%s1 + $0x9d4] sm:$0xf]
  %v663 = vld [vmem:[%s1 + $0x9d8] sm:$0xf]
  %v664 = vld [vmem:[%s1 + $0x9dc] sm:$0xf]
  %v665 = vld [vmem:[%s1 + $0x9e0] sm:$0xf]
  %v666 = vld [vmem:[%s1 + $0x9e4] sm:$0xf]
  %v667 = vld [vmem:[%s1 + $0x9e8] sm:$0xf]
  %v668 = vld [vmem:[%s1 + $0x9ec] sm:$0xf]
  %v669 = vld [vmem:[%s1 + $0x9f0] sm:$0xf]
  %v670 = vld [vmem:[%s1 + $0x9f4] sm:$0xf]
  %v671 = vld [vmem:[%s1 + $0x9f8] sm:$0xf]
  %v672 = vld [vmem:[%s1 + $0x9fc] sm:$0xf]
  %v673 = vld [vmem:[%s1 + $0xa00] sm:$0xf]
  %v674 = vld [vmem:[%s1 + $0xa04] sm:$0xf]
  %v675 = vld [vmem:[%s1 + $0xa08] sm:$0xf]
  %v676 = vld [vmem:[%s1 + $0xa0c] sm:$0xf]
  %v677 = vld [vmem:[%s1 + $0xa10] sm:$0xf]
  %v678 = vld [vmem:[%s1 + $0xa14] sm:$0xf]
  %v679 = vld [vmem:[%s1 + $0xa18] sm:$0xf]
  %v680 = vld [vmem:[%s1 + $0xa1c] sm:$0xf]
  %v681 = vld [vmem:[%s1 + $0xa20] sm:$0xf]
  %v682 = vld [vmem:[%s1 + $0xa24] sm:$0xf]
  %v683 = vld [vmem:[%s1 + $0xa28] sm:$0xf]
  %v684 = vld [vmem:[%s1 + $0xa2c] sm:$0xf]
  %v685 = vld [vmem:[%s1 + $0xa30] sm:$0xf]
  %v686 = vld [vmem:[%s1 + $0xa34] sm:$0xf]
  %v687 = vld [vmem:[%s1 + $0xa38] sm:$0xf]
  %v688 = vld [vmem:[%s1 + $0xa3c] sm:$0xf]
  %v689 = vld [vmem:[%s1 + $0xa40] sm:$0xf]
  %v690 = vld [vmem:[%s1 + $0xa44] sm:$0xf]
  %v691 = vld [vmem:[%s1 + $0xa48] sm:$0xf]
  %v692 = vld [vmem:[%s1 + $0xa4c] sm:$0xf]
  %v693 = vld [vmem:[%s1 + $0xa50] sm:$0xf]
  %v694 = vld [vmem:[%s1 + $0xa54] sm:$0xf]
  %v695 = vld [vmem:[%s1 + $0xa58] sm:$0xf]
  %v696 = vld [vmem:[%s1 + $0xa5c] sm:$0xf]
  %v697 = vld [vmem:[%s1 + $0xa60] sm:$0xf]
  %v698 = vld [vmem:[%s1 + $0xa64] sm:$0xf]
  %v699 = vld [vmem:[%s1 + $0xa68] sm:$0xf]
  %v700 = vld [vmem:[%s1 + $0xa6c] sm:$0xf]
  %v701 = vld [vmem:[%s1 + $0xa70] sm:$0xf]
  %v702 = vld [vmem:[%s1 + $0xa74] sm:$0xf]
  %v703 = vld [vmem:[%s1 + $0xa78] sm:$0xf]
  %v704 = vld [vmem:[%s1 + $0xa7c] sm:$0xf]
  %v705 = vld [vmem:[%s1 + $0xa80] sm:$0xf]
  %v706 = vld [vmem:[%s1 + $0xa84] sm:$0xf]
  %v707 = vld [vmem:[%s1 + $0xa88] sm:$0xf]
  %v708 = vld [vmem:[%s1 + $0xa8c] sm:$0xf]
  %v709 = vld [vmem:[%s1 + $0xa90] sm:$0xf]
  %v710 = vld [vmem:[%s1 + $0xa94] sm:$0xf]
  %v711 = vld [vmem:[%s1 + $0xa98] sm:$0xf]
  %v712 = vld [vmem:[%s1 + $0xa9c] sm:$0xf]
  %v713 = vld [vmem:[%s1 + $0xaa0] sm:$0xf]
  %v714 = vld [vmem:[%s1 + $0xaa4] sm:$0xf]
  %v715 = vld [vmem:[%s1 + $0xaa8] sm:$0xf]
  %v716 = vld [vmem:[%s1 + $0xaac] sm:$0xf]
  %v717 = vld [vmem:[%s1 + $0xab0] sm:$0xf]
  %v718 = vld [vmem:[%s1 + $0xab4] sm:$0xf]
  %v719 = vld [vmem:[%s1 + $0xab8] sm:$0xf]
  %v720 = vld [vmem:[%s1 + $0xabc] sm:$0xf]
  %v721 = vld [vmem:[%s1 + $0xac0] sm:$0xf]
  %v722 = vld [vmem:[%s1 + $0xac4] sm:$0xf]
  %v723 = vld [vmem:[%s1 + $0xac8] sm:$0xf]
  %v724 = vld [vmem:[%s1 + $0xacc] sm:$0xf]
  %v725 = vld [vmem:[%s1 + $0xad0] sm:$0xf]
  %v726 = vld [vmem:[%s1 + $0xad4] sm:$0xf]
  %v727 = vld [vmem:[%s1 + $0xad8] sm:$0xf]
  %v728 = vld [vmem:[%s1 + $0xadc] sm:$0xf]
  %v729 = vld [vmem:[%s1 + $0xae0] sm:$0xf]
  %v730 = vld [vmem:[%s1 + $0xae4] sm:$0xf]
  %v731 = vld [vmem:[%s1 + $0xae8] sm:$0xf]
  %v732 = vld [vmem:[%s1 + $0xaec] sm:$0xf]
  %v733 = vld [vmem:[%s1 + $0xaf0] sm:$0xf]
  %v734 = vld [vmem:[%s1 + $0xaf4] sm:$0xf]
  %v735 = vld [vmem:[%s1 + $0xaf8] sm:$0xf]
  %v736 = vld [vmem:[%s1 + $0xafc] sm:$0xf]
  %v737 = vld [vmem:[%s1 + $0xb00] sm:$0xf]
  %v738 = vld [vmem:[%s1 + $0xb04] sm:$0xf]
  %v739 = vld [vmem:[%s1 + $0xb08] sm:$0xf]
  %v740 = vld [vmem:[%s1 + $0xb0c] sm:$0xf]
  %v741 = vld [vmem:[%s1 + $0xb10] sm:$0xf]
  %v742 = vld [vmem:[%s1 + $0xb14] sm:$0xf]
  %v743 = vld [vmem:[%s1 + $0xb18] sm:$0xf]
  %v744 = vld [vmem:[%s1 + $0xb1c] sm:$0xf]
  %v745 = vld [vmem:[%s1 + $0xb20] sm:$0xf]
  %v746 = vld [vmem:[%s1 + $0xb24] sm:$0xf]
  %v747 = vld [vmem:[%s1 + $0xb28] sm:$0xf]
  %v748 = vld [vmem:[%s1 + $0xb2c] sm:$0xf]
  %v749 = vld [vmem:[%s1 + $0xb30] sm:$0xf]
  %v750 = vld [vmem:[%s1 + $0xb34] sm:$0xf]
  %v751 = vld [vmem:[%s1 + $0xb38] sm:$0xf]
  %v752 = vld [vmem:[%s1 + $0xb3c] sm:$0xf]
  %v753 = vld [vmem:[%s1 + $0xb40] sm:$0xf]
  %v754 = vld [vmem:[%s1 + $0xb44] sm:$0xf]
  %v755 = vld [vmem:[%s1 + $0xb48] sm:$0xf]
  %v756 = vld [vmem:[%s1 + $0xb4c] sm:$0xf]
  %v757 = vld [vmem:[%s1 + $0xb50] sm:$0xf]
  %v758 = vld [vmem:[%s1 + $0xb54] sm:$0xf]
  %v759 = vld [vmem:[%s1 + $0xb58] sm:$0xf]
  %v760 = vld [vmem:[%s1 + $0xb5c] sm:$0xf]
  %v761 = vld [vmem:[%s1 + $0xb60] sm:$0xf]
  %v762 = vld [vmem:[%s1 + $0xb64] sm:$0xf]
  %v763 = vld [vmem:[%s1 + $0xb68] sm:$0xf]
  %v764 = vld [vmem:[%s1 + $0xb6c] sm:$0xf]
  %v765 = vld [vmem:[%s1 + $0xb70] sm:$0xf]
  %v766 = vld [vmem:[%s1 + $0xb74] sm:$0xf]
  %v767 = vld [vmem:[%s1 + $0xb78] sm:$0xf]
  %v768 = vld [vmem:[%s1 + $0xb7c] sm:$0xf]
  %v769 = vld [vmem:[%s1 + $0xb80] sm:$0xf]
  %v770 = vld [vmem:[%s1 + $0xb84] sm:$0xf]
  %v771 = vld [vmem:[%s1 + $0xb88] sm:$0xf]
  %v772 = vld [vmem:[%s1 + $0xb8c] sm:$0xf]
  %v773 = vld [vmem:[%s1 + $0xb90] sm:$0xf]
  %v774 = vld [vmem:[%s1 + $0xb94] sm:$0xf]
  %v775 = vld [vmem:[%s1 + $0xb98] sm:$0xf]
  %v776 = vld [vmem:[%s1 + $0xb9c] sm:$0xf]
  %v777 = vld [vmem:[%s1 + $0xba0] sm:$0xf]
  %v778 = vld [vmem:[%s1 + $0xba4] sm:$0xf]
  %v779 = vld [vmem:[%s1 + $0xba8] sm:$0xf]
  %v780 = vld [vmem:[%s1 + $0xbac] sm:$0xf]
  %v781 = vld [vmem:[%s1 + $0xbb0] sm:$0xf]
  %v782 = vld [vmem:[%s1 + $0xbb4] sm:$0xf]
  %v783 = vld [vmem:[%s1 + $0xbb8] sm:$0xf]
  %v784 = vld [vmem:[%s1 + $0xbbc] sm:$0xf]
  %v785 = vld [vmem:[%s1 + $0xbc0] sm:$0xf]
  %v786 = vld [vmem:[%s1 + $0xbc4] sm:$0xf]
  %v787 = vld [vmem:[%s1 + $0xbc8] sm:$0xf]
  %v788 = vld [vmem:[%s1 + $0xbcc] sm:$0xf]
  %v789 = vld [vmem:[%s1 + $0xbd0] sm:$0xf]
  %v790 = vld [vmem:[%s1 + $0xbd4] sm:$0xf]
  %v791 = vld [vmem:[%s1 + $0xbd8] sm:$0xf]
  %v792 = vld [vmem:[%s1 + $0xbdc] sm:$0xf]
  %v793 = vld [vmem:[%s1 + $0xbe0] sm:$0xf]
  %v794 = vld [vmem:[%s1 + $0xbe4] sm:$0xf]
  %v795 = vld [vmem:[%s1 + $0xbe8] sm:$0xf]
  %v796 = vld [vmem:[%s1 + $0xbec] sm:$0xf]
  %v797 = vld [vmem:[%s1 + $0xbf0] sm:$0xf]
  %v798 = vld [vmem:[%s1 + $0xbf4] sm:$0xf]
  %v799 = vld [vmem:[%s1 + $0xbf8] sm:$0xf]
  %v800 = vld [vmem:[%s1 + $0xbfc] sm:$0xf]
  %v801 = vld [vmem:[%s1 + $0xc00] sm:$0xf]
  %v802 = vld [vmem:[%s1 + $0xc04] sm:$0xf]
  %v803 = vld [vmem:[%s1 + $0xc08] sm:$0xf]
  %v804 = vld [vmem:[%s1 + $0xc0c] sm:$0xf]
  %v805 = vld [vmem:[%s1 + $0xc10] sm:$0xf]
  %v806 = vld [vmem:[%s1 + $0xc14] sm:$0xf]
  %v807 = vld [vmem:[%s1 + $0xc18] sm:$0xf]
  %v808 = vld [vmem:[%s1 + $0xc1c] sm:$0xf]
  %v809 = vld [vmem:[%s1 + $0xc20] sm:$0xf]
  %v810 = vld [vmem:[%s1 + $0xc24] sm:$0xf]
  %v811 = vld [vmem:[%s1 + $0xc28] sm:$0xf]
  %v812 = vld [vmem:[%s1 + $0xc2c] sm:$0xf]
  %v813 = vld [vmem:[%s1 + $0xc30] sm:$0xf]
  %v814 = vld [vmem:[%s1 + $0xc34] sm:$0xf]
  %v815 = vld [vmem:[%s1 + $0xc38] sm:$0xf]
  %v816 = vld [vmem:[%s1 + $0xc3c] sm:$0xf]
  %v817 = vld [vmem:[%s2] sm:$0x1]
  %v819 = vlaneseq
  %v820 = vshrl.u32 %v819, 7
  %v821 = vsub.s32 0, %v820
  %v822 = vrot.slane %v817, %v821
  %v831 = vcombine.high %v26, %v26
  %v833 = vunpack.c.l.s4 1966171168
  %v834 = vunpack.c.0.s8 %v833
  %v835 = vlaneseq
  %v836 = vshrl.u32 %v835, 7
  %v837 = vsub.s32 %v834, %v836
  %v838 = vrot.slane %v26, %v837
  %v840 = vunpack.c.l.s4 1966171168
  %v841 = vunpack.c.0.s8 %v840
  %v842 = vlaneseq
  %v843 = vshrl.u32 %v842, 7
  %v844 = vsub.s32 %v841, %v843
  %v845 = vrot.slane %v831, %v844
  %v846 = vcombine.high %v838, %v838
  %v847 = vcombine.high %v845, %v845
  %v849 = vunpack.c.l.s4 1966171168
  %v850 = vunpack.c.0.s8 %v849
  %v851 = vlaneseq
  %v852 = vshrl.u32 %v851, 7
  %v853 = vsub.s32 %v850, %v852
  %v854 = vrot.slane %v838, %v853
  %v856 = vunpack.c.l.s4 1966171168
  %v857 = vunpack.c.0.s8 %v856
  %v858 = vlaneseq
  %v859 = vshrl.u32 %v858, 7
  %v860 = vsub.s32 %v857, %v859
  %v861 = vrot.slane %v845, %v860
  %v863 = vunpack.c.l.s4 1966171168
  %v864 = vunpack.c.0.s8 %v863
  %v865 = vlaneseq
  %v866 = vshrl.u32 %v865, 7
  %v867 = vsub.s32 %v864, %v866
  %v868 = vrot.slane %v846, %v867
  %v870 = vunpack.c.l.s4 1966171168
  %v871 = vunpack.c.0.s8 %v870
  %v872 = vlaneseq
  %v873 = vshrl.u32 %v872, 7
  %v874 = vsub.s32 %v871, %v873
  %v875 = vrot.slane %v847, %v874
  %v876 = vcombine.high %v854, %v854
  %v877 = vcombine.high %v861, %v861
  %v878 = vcombine.high %v868, %v868
  %v879 = vcombine.high %v875, %v875
  %v880 = vcombine.high %v27, %v27
  %v882 = vunpack.c.l.s4 1966171168
  %v883 = vunpack.c.0.s8 %v882
  %v884 = vlaneseq
  %v885 = vshrl.u32 %v884, 7
  %v886 = vsub.s32 %v883, %v885
  %v887 = vrot.slane %v27, %v886
  %v889 = vunpack.c.l.s4 1966171168
  %v890 = vunpack.c.0.s8 %v889
  %v891 = vlaneseq
  %v892 = vshrl.u32 %v891, 7
  %v893 = vsub.s32 %v890, %v892
  %v894 = vrot.slane %v880, %v893
  %v895 = vcombine.high %v887, %v887
  %v896 = vcombine.high %v894, %v894
  %v898 = vunpack.c.l.s4 1966171168
  %v899 = vunpack.c.0.s8 %v898
  %v900 = vlaneseq
  %v901 = vshrl.u32 %v900, 7
  %v902 = vsub.s32 %v899, %v901
  %v903 = vrot.slane %v887, %v902
  %v905 = vunpack.c.l.s4 1966171168
  %v906 = vunpack.c.0.s8 %v905
  %v907 = vlaneseq
  %v908 = vshrl.u32 %v907, 7
  %v909 = vsub.s32 %v906, %v908
  %v910 = vrot.slane %v894, %v909
  %v912 = vunpack.c.l.s4 1966171168
  %v913 = vunpack.c.0.s8 %v912
  %v914 = vlaneseq
  %v915 = vshrl.u32 %v914, 7
  %v916 = vsub.s32 %v913, %v915
  %v917 = vrot.slane %v895, %v916
  %v919 = vunpack.c.l.s4 1966171168
  %v920 = vunpack.c.0.s8 %v919
  %v921 = vlaneseq
  %v922 = vshrl.u32 %v921, 7
  %v923 = vsub.s32 %v920, %v922
  %v924 = vrot.slane %v896, %v923
  %v925 = vcombine.high %v903, %v903
  %v926 = vcombine.high %v910, %v910
  %v927 = vcombine.high %v917, %v917
  %v928 = vcombine.high %v924, %v924
  %v929 = vcombine.high %v28, %v28
  %v931 = vunpack.c.l.s4 1966171168
  %v932 = vunpack.c.0.s8 %v931
  %v933 = vlaneseq
  %v934 = vshrl.u32 %v933, 7
  %v935 = vsub.s32 %v932, %v934
  %v936 = vrot.slane %v28, %v935
  %v938 = vunpack.c.l.s4 1966171168
  %v939 = vunpack.c.0.s8 %v938
  %v940 = vlaneseq
  %v941 = vshrl.u32 %v940, 7
  %v942 = vsub.s32 %v939, %v941
  %v943 = vrot.slane %v929, %v942
  %v944 = vcombine.high %v936, %v936
  %v945 = vcombine.high %v943, %v943
  %v947 = vunpack.c.l.s4 1966171168
  %v948 = vunpack.c.0.s8 %v947
  %v949 = vlaneseq
  %v950 = vshrl.u32 %v949, 7
  %v951 = vsub.s32 %v948, %v950
  %v952 = vrot.slane %v936, %v951
  %v954 = vunpack.c.l.s4 1966171168
  %v955 = vunpack.c.0.s8 %v954
  %v956 = vlaneseq
  %v957 = vshrl.u32 %v956, 7
  %v958 = vsub.s32 %v955, %v957
  %v959 = vrot.slane %v943, %v958
  %v961 = vunpack.c.l.s4 1966171168
  %v962 = vunpack.c.0.s8 %v961
  %v963 = vlaneseq
  %v964 = vshrl.u32 %v963, 7
  %v965 = vsub.s32 %v962, %v964
  %v966 = vrot.slane %v944, %v965
  %v968 = vunpack.c.l.s4 1966171168
  %v969 = vunpack.c.0.s8 %v968
  %v970 = vlaneseq
  %v971 = vshrl.u32 %v970, 7
  %v972 = vsub.s32 %v969, %v971
  %v973 = vrot.slane %v945, %v972
  %v974 = vcombine.high %v952, %v952
  %v975 = vcombine.high %v959, %v959
  %v976 = vcombine.high %v966, %v966
  %v977 = vcombine.high %v973, %v973
  %v978 = vcombine.high %v29, %v29
  %v980 = vunpack.c.l.s4 1966171168
  %v981 = vunpack.c.0.s8 %v980
  %v982 = vlaneseq
  %v983 = vshrl.u32 %v982, 7
  %v984 = vsub.s32 %v981, %v983
  %v985 = vrot.slane %v29, %v984
  %v987 = vunpack.c.l.s4 1966171168
  %v988 = vunpack.c.0.s8 %v987
  %v989 = vlaneseq
  %v990 = vshrl.u32 %v989, 7
  %v991 = vsub.s32 %v988, %v990
  %v992 = vrot.slane %v978, %v991
  %v993 = vcombine.high %v985, %v985
  %v994 = vcombine.high %v992, %v992
  %v996 = vunpack.c.l.s4 1966171168
  %v997 = vunpack.c.0.s8 %v996
  %v998 = vlaneseq
  %v999 = vshrl.u32 %v998, 7
  %v1000 = vsub.s32 %v997, %v999
  %v1001 = vrot.slane %v985, %v1000
  %v1003 = vunpack.c.l.s4 1966171168
  %v1004 = vunpack.c.0.s8 %v1003
  %v1005 = vlaneseq
  %v1006 = vshrl.u32 %v1005, 7
  %v1007 = vsub.s32 %v1004, %v1006
  %v1008 = vrot.slane %v992, %v1007
  %v1010 = vunpack.c.l.s4 1966171168
  %v1011 = vunpack.c.0.s8 %v1010
  %v1012 = vlaneseq
  %v1013 = vshrl.u32 %v1012, 7
  %v1014 = vsub.s32 %v1011, %v1013
  %v1015 = vrot.slane %v993, %v1014
  %v1017 = vunpack.c.l.s4 1966171168
  %v1018 = vunpack.c.0.s8 %v1017
  %v1019 = vlaneseq
  %v1020 = vshrl.u32 %v1019, 7
  %v1021 = vsub.s32 %v1018, %v1020
  %v1022 = vrot.slane %v994, %v1021
  %v1023 = vcombine.high %v1001, %v1001
  %v1024 = vcombine.high %v1008, %v1008
  %v1025 = vcombine.high %v1015, %v1015
  %v1026 = vcombine.high %v1022, %v1022
  %v1027 = vcombine.high %v30, %v30
  %v1029 = vunpack.c.l.s4 1966171168
  %v1030 = vunpack.c.0.s8 %v1029
  %v1031 = vlaneseq
  %v1032 = vshrl.u32 %v1031, 7
  %v1033 = vsub.s32 %v1030, %v1032
  %v1034 = vrot.slane %v30, %v1033
  %v1036 = vunpack.c.l.s4 1966171168
  %v1037 = vunpack.c.0.s8 %v1036
  %v1038 = vlaneseq
  %v1039 = vshrl.u32 %v1038, 7
  %v1040 = vsub.s32 %v1037, %v1039
  %v1041 = vrot.slane %v1027, %v1040
  %v1042 = vcombine.high %v1034, %v1034
  %v1043 = vcombine.high %v1041, %v1041
  %v1045 = vunpack.c.l.s4 1966171168
  %v1046 = vunpack.c.0.s8 %v1045
  %v1047 = vlaneseq
  %v1048 = vshrl.u32 %v1047, 7
  %v1049 = vsub.s32 %v1046, %v1048
  %v1050 = vrot.slane %v1034, %v1049
  %v1052 = vunpack.c.l.s4 1966171168
  %v1053 = vunpack.c.0.s8 %v1052
  %v1054 = vlaneseq
  %v1055 = vshrl.u32 %v1054, 7
  %v1056 = vsub.s32 %v1053, %v1055
  %v1057 = vrot.slane %v1041, %v1056
  %v1059 = vunpack.c.l.s4 1966171168
  %v1060 = vunpack.c.0.s8 %v1059
  %v1061 = vlaneseq
  %v1062 = vshrl.u32 %v1061, 7
  %v1063 = vsub.s32 %v1060, %v1062
  %v1064 = vrot.slane %v1042, %v1063
  %v1066 = vunpack.c.l.s4 1966171168
  %v1067 = vunpack.c.0.s8 %v1066
  %v1068 = vlaneseq
  %v1069 = vshrl.u32 %v1068, 7
  %v1070 = vsub.s32 %v1067, %v1069
  %v1071 = vrot.slane %v1043, %v1070
  %v1072 = vcombine.high %v1050, %v1050
  %v1073 = vcombine.high %v1057, %v1057
  %v1074 = vcombine.high %v1064, %v1064
  %v1075 = vcombine.high %v1071, %v1071
  %v1076 = vcombine.high %v31, %v31
  %v1078 = vunpack.c.l.s4 1966171168
  %v1079 = vunpack.c.0.s8 %v1078
  %v1080 = vlaneseq
  %v1081 = vshrl.u32 %v1080, 7
  %v1082 = vsub.s32 %v1079, %v1081
  %v1083 = vrot.slane %v31, %v1082
  %v1085 = vunpack.c.l.s4 1966171168
  %v1086 = vunpack.c.0.s8 %v1085
  %v1087 = vlaneseq
  %v1088 = vshrl.u32 %v1087, 7
  %v1089 = vsub.s32 %v1086, %v1088
  %v1090 = vrot.slane %v1076, %v1089
  %v1091 = vcombine.high %v1083, %v1083
  %v1092 = vcombine.high %v1090, %v1090
  %v1094 = vunpack.c.l.s4 1966171168
  %v1095 = vunpack.c.0.s8 %v1094
  %v1096 = vlaneseq
  %v1097 = vshrl.u32 %v1096, 7
  %v1098 = vsub.s32 %v1095, %v1097
  %v1099 = vrot.slane %v1083, %v1098
  %v1101 = vunpack.c.l.s4 1966171168
  %v1102 = vunpack.c.0.s8 %v1101
  %v1103 = vlaneseq
  %v1104 = vshrl.u32 %v1103, 7
  %v1105 = vsub.s32 %v1102, %v1104
  %v1106 = vrot.slane %v1090, %v1105
  %v1108 = vunpack.c.l.s4 1966171168
  %v1109 = vunpack.c.0.s8 %v1108
  %v1110 = vlaneseq
  %v1111 = vshrl.u32 %v1110, 7
  %v1112 = vsub.s32 %v1109, %v1111
  %v1113 = vrot.slane %v1091, %v1112
  %v1115 = vunpack.c.l.s4 1966171168
  %v1116 = vunpack.c.0.s8 %v1115
  %v1117 = vlaneseq
  %v1118 = vshrl.u32 %v1117, 7
  %v1119 = vsub.s32 %v1116, %v1118
  %v1120 = vrot.slane %v1092, %v1119
  %v1121 = vcombine.high %v1099, %v1099
  %v1122 = vcombine.high %v1106, %v1106
  %v1123 = vcombine.high %v1113, %v1113
  %v1124 = vcombine.high %v1120, %v1120
  %v1126 = vunpack.c.l.s4 1966171168
  %v1127 = vunpack.c.0.s8 %v1126
  %v1128 = vlaneseq
  %v1129 = vshrl.u32 %v1128, 7
  %v1130 = vsub.s32 %v1127, %v1129
  %v1131 = vrot.slane %v32, %v1130
  %v1133 = vunpack.c.l.s4 1966171168
  %v1134 = vunpack.c.0.s8 %v1133
  %v1135 = vlaneseq
  %v1136 = vshrl.u32 %v1135, 7
  %v1137 = vsub.s32 %v1134, %v1136
  %v1138 = vrot.slane %v1131, %v1137
  %v1972 = vunpack.c.l.b16 %v33
  %v1973 = vunpack.c.l.b16 %v34
  %v1974 = vunpack.c.l.b16 %v35
  %v1975 = vunpack.c.l.b16 %v36
  %v1976 = vunpack.c.l.b16 %v37
  %v1977 = vunpack.c.l.b16 %v38
  %v1978 = vunpack.c.l.b16 %v39
  %v1979 = vunpack.c.l.b16 %v40
  %v1980 = vunpack.c.l.b16 %v41
  %v1981 = vunpack.c.l.b16 %v42
  %v1982 = vunpack.c.l.b16 %v43
  %v1983 = vunpack.c.l.b16 %v44
  %v1984 = vunpack.c.l.b16 %v45
  %v1985 = vunpack.c.l.b16 %v46
  %v1986 = vunpack.c.l.b16 %v47
  %v1987 = vunpack.c.l.b16 %v48
  %v1988 = vunpack.c.l.b16 %v49
  %v1989 = vunpack.c.l.b16 %v50
  %v1990 = vunpack.c.l.b16 %v51
  %v1991 = vunpack.c.l.b16 %v52
  %v1992 = vunpack.c.l.b16 %v53
  %v1993 = vunpack.c.l.b16 %v54
  %v1994 = vunpack.c.l.b16 %v55
  %v1995 = vunpack.c.l.b16 %v56
  %v1996 = vunpack.c.l.b16 %v57
  %v1997 = vunpack.c.l.b16 %v58
  %v1998 = vunpack.c.l.b16 %v59
  %v1999 = vunpack.c.l.b16 %v60
  %v2000 = vunpack.c.l.b16 %v61
  %v2001 = vunpack.c.l.b16 %v62
  %v2002 = vunpack.c.l.b16 %v63
  %v2003 = vunpack.c.l.b16 %v64
  %v2004 = vunpack.c.l.b16 %v65
  %v2005 = vunpack.c.l.b16 %v66
  %v2006 = vunpack.c.l.b16 %v67
  %v2007 = vunpack.c.l.b16 %v68
  %v2008 = vunpack.c.l.b16 %v69
  %v2009 = vunpack.c.l.b16 %v70
  %v2010 = vunpack.c.l.b16 %v71
  %v2011 = vunpack.c.l.b16 %v72
  %v2012 = vunpack.c.l.b16 %v73
  %v2013 = vunpack.c.l.b16 %v74
  %v2014 = vunpack.c.l.b16 %v75
  %v2015 = vunpack.c.l.b16 %v76
  %v2016 = vunpack.c.l.b16 %v77
  %v2017 = vunpack.c.l.b16 %v78
  %v2018 = vunpack.c.l.b16 %v79
  %v2019 = vunpack.c.l.b16 %v80
  %v2020 = vunpack.c.l.b16 %v81
  %v2021 = vunpack.c.l.b16 %v82
  %v2022 = vunpack.c.l.b16 %v83
  %v2023 = vunpack.c.l.b16 %v84
  %v2024 = vunpack.c.l.b16 %v85
  %v2025 = vunpack.c.l.b16 %v86
  %v2026 = vunpack.c.l.b16 %v87
  %v2027 = vunpack.c.l.b16 %v88
  %v2028 = vunpack.c.l.b16 %v89
  %v2029 = vunpack.c.l.b16 %v90
  %v2030 = vunpack.c.l.b16 %v91
  %v2031 = vunpack.c.l.b16 %v92
  %v2032 = vunpack.c.l.b16 %v93
  %v2033 = vunpack.c.l.b16 %v94
  %v2034 = vunpack.c.l.b16 %v95
  %v2035 = vunpack.c.l.b16 %v96
  %v2036 = vunpack.c.l.b16 %v97
  %v2037 = vunpack.c.l.b16 %v98
  %v2038 = vunpack.c.l.b16 %v99
  %v2039 = vunpack.c.l.b16 %v100
  %v2040 = vunpack.c.l.b16 %v101
  %v2041 = vunpack.c.l.b16 %v102
  %v2042 = vunpack.c.l.b16 %v103
  %v2043 = vunpack.c.l.b16 %v104
  %v2044 = vunpack.c.l.b16 %v105
  %v2045 = vunpack.c.l.b16 %v106
  %v2046 = vunpack.c.l.b16 %v107
  %v2047 = vunpack.c.l.b16 %v108
  %v2048 = vunpack.c.l.b16 %v109
  %v2049 = vunpack.c.l.b16 %v110
  %v2050 = vunpack.c.l.b16 %v111
  %v2051 = vunpack.c.l.b16 %v112
  %v2052 = vunpack.c.l.b16 %v113
  %v2053 = vunpack.c.l.b16 %v114
  %v2054 = vunpack.c.l.b16 %v115
  %v2055 = vunpack.c.l.b16 %v116
  %v2056 = vunpack.c.l.b16 %v117
  %v2057 = vunpack.c.l.b16 %v118
  %v2058 = vunpack.c.l.b16 %v119
  %v2059 = vunpack.c.l.b16 %v120
  %v2060 = vunpack.c.l.b16 %v121
  %v2061 = vunpack.c.l.b16 %v122
  %v2062 = vunpack.c.l.b16 %v123
  %v2063 = vunpack.c.l.b16 %v124
  %v2064 = vunpack.c.l.b16 %v125
  %v2065 = vunpack.c.l.b16 %v126
  %v2066 = vunpack.c.l.b16 %v127
  %v2067 = vunpack.c.l.b16 %v128
  %v2068 = vunpack.c.l.b16 %v129
  %v2069 = vunpack.c.l.b16 %v130
  %v2070 = vunpack.c.l.b16 %v131
  %v2071 = vunpack.c.l.b16 %v132
  %v2072 = vunpack.c.l.b16 %v133
  %v2073 = vunpack.c.l.b16 %v134
  %v2074 = vunpack.c.l.b16 %v135
  %v2075 = vunpack.c.l.b16 %v136
  %v2076 = vunpack.c.l.b16 %v137
  %v2077 = vunpack.c.l.b16 %v138
  %v2078 = vunpack.c.l.b16 %v139
  %v2079 = vunpack.c.l.b16 %v140
  %v2080 = vunpack.c.l.b16 %v141
  %v2081 = vunpack.c.l.b16 %v142
  %v2082 = vunpack.c.l.b16 %v143
  %v2083 = vunpack.c.l.b16 %v144
  %v2084 = vunpack.c.l.b16 %v145
  %v2085 = vunpack.c.l.b16 %v146
  %v2086 = vunpack.c.l.b16 %v147
  %v2087 = vunpack.c.l.b16 %v148
  %v2088 = vunpack.c.l.b16 %v149
  %v2089 = vunpack.c.l.b16 %v150
  %v2090 = vunpack.c.l.b16 %v151
  %v2091 = vunpack.c.l.b16 %v152
  %v2092 = vunpack.c.l.b16 %v153
  %v2093 = vunpack.c.l.b16 %v154
  %v2094 = vunpack.c.l.b16 %v155
  %v2095 = vunpack.c.l.b16 %v156
  %v2096 = vunpack.c.l.b16 %v157
  %v2097 = vunpack.c.l.b16 %v158
  %v2098 = vunpack.c.l.b16 %v159
  %v2099 = vunpack.c.l.b16 %v160
  %v2100 = vunpack.c.l.b16 %v161
  %v2101 = vunpack.c.l.b16 %v162
  %v2102 = vunpack.c.l.b16 %v163
  %v2103 = vunpack.c.l.b16 %v164
  %v2104 = vunpack.c.l.b16 %v165
  %v2105 = vunpack.c.l.b16 %v166
  %v2106 = vunpack.c.l.b16 %v167
  %v2107 = vunpack.c.l.b16 %v168
  %v2108 = vunpack.c.l.b16 %v169
  %v2109 = vunpack.c.l.b16 %v170
  %v2110 = vunpack.c.l.b16 %v171
  %v2111 = vunpack.c.l.b16 %v172
  %v2112 = vunpack.c.l.b16 %v173
  %v2113 = vunpack.c.l.b16 %v174
  %v2114 = vunpack.c.l.b16 %v175
  %v2115 = vunpack.c.l.b16 %v176
  %v2116 = vunpack.c.l.b16 %v177
  %v2117 = vunpack.c.l.b16 %v178
  %v2118 = vunpack.c.l.b16 %v179
  %v2119 = vunpack.c.l.b16 %v180
  %v2120 = vunpack.c.l.b16 %v181
  %v2121 = vunpack.c.l.b16 %v182
  %v2122 = vunpack.c.l.b16 %v183
  %v2123 = vunpack.c.l.b16 %v184
  %v2124 = vunpack.c.l.b16 %v185
  %v2125 = vunpack.c.l.b16 %v186
  %v2126 = vunpack.c.l.b16 %v187
  %v2127 = vunpack.c.l.b16 %v188
  %v2128 = vunpack.c.l.b16 %v189
  %v2129 = vunpack.c.l.b16 %v190
  %v2130 = vunpack.c.l.b16 %v191
  %v2131 = vunpack.c.l.b16 %v192
  %v2132 = vunpack.c.l.b16 %v193
  %v2133 = vunpack.c.l.b16 %v194
  %v2134 = vunpack.c.l.b16 %v195
  %v2135 = vunpack.c.l.b16 %v196
  %v2136 = vunpack.c.l.b16 %v197
  %v2137 = vunpack.c.l.b16 %v198
  %v2138 = vunpack.c.l.b16 %v199
  %v2139 = vunpack.c.l.b16 %v200
  %v2140 = vunpack.c.l.b16 %v201
  %v2141 = vunpack.c.l.b16 %v202
  %v2142 = vunpack.c.l.b16 %v203
  %v2143 = vunpack.c.l.b16 %v204
  %v2144 = vunpack.c.l.b16 %v205
  %v2145 = vunpack.c.l.b16 %v206
  %v2146 = vunpack.c.l.b16 %v207
  %v2147 = vunpack.c.l.b16 %v208
  %v2148 = vunpack.c.l.b16 %v209
  %v2149 = vunpack.c.l.b16 %v210
  %v2150 = vunpack.c.l.b16 %v211
  %v2151 = vunpack.c.l.b16 %v212
  %v2152 = vunpack.c.l.b16 %v213
  %v2153 = vunpack.c.l.b16 %v214
  %v2154 = vunpack.c.l.b16 %v215
  %v2155 = vunpack.c.l.b16 %v216
  %v2156 = vunpack.c.l.b16 %v217
  %v2157 = vunpack.c.l.b16 %v218
  %v2158 = vunpack.c.l.b16 %v219
  %v2159 = vunpack.c.l.b16 %v220
  %v2160 = vunpack.c.l.b16 %v221
  %v2161 = vunpack.c.l.b16 %v222
  %v2162 = vunpack.c.l.b16 %v223
  %v2163 = vunpack.c.l.b16 %v224
  %v2164 = vunpack.c.l.b16 %v225
  %v2165 = vunpack.c.l.b16 %v226
  %v2166 = vunpack.c.l.b16 %v227
  %v2167 = vunpack.c.l.b16 %v228
  %v2168 = vunpack.c.l.b16 %v229
  %v2169 = vunpack.c.l.b16 %v230
  %v2170 = vunpack.c.l.b16 %v231
  %v2171 = vunpack.c.l.b16 %v232
  %v2172 = vunpack.c.l.b16 %v233
  %v2173 = vunpack.c.l.b16 %v234
  %v2174 = vunpack.c.l.b16 %v235
  %v2175 = vunpack.c.l.b16 %v236
  %v2176 = vunpack.c.l.b16 %v237
  %v2177 = vunpack.c.l.b16 %v238
  %v2178 = vunpack.c.l.b16 %v239
  %v2179 = vunpack.c.l.b16 %v240
  %v2180 = vunpack.c.l.b16 %v241
  %v2181 = vunpack.c.l.b16 %v242
  %v2182 = vunpack.c.l.b16 %v243
  %v2183 = vunpack.c.l.b16 %v244
  %v2184 = vunpack.c.l.b16 %v245
  %v2185 = vunpack.c.l.b16 %v246
  %v2186 = vunpack.c.l.b16 %v247
  %v2187 = vunpack.c.l.b16 %v248
  %v2188 = vunpack.c.l.b16 %v249
  %v2189 = vunpack.c.l.b16 %v250
  %v2190 = vunpack.c.l.b16 %v251
  %v2191 = vunpack.c.l.b16 %v252
  %v2192 = vunpack.c.l.b16 %v253
  %v2193 = vunpack.c.l.b16 %v254
  %v2194 = vunpack.c.l.b16 %v255
  %v2195 = vunpack.c.l.b16 %v256
  %v2196 = vunpack.c.l.b16 %v257
  %v2197 = vunpack.c.l.b16 %v258
  %v2198 = vunpack.c.l.b16 %v259
  %v2199 = vunpack.c.l.b16 %v260
  %v2200 = vunpack.c.l.b16 %v261
  %v2201 = vunpack.c.l.b16 %v262
  %v2202 = vunpack.c.l.b16 %v263
  %v2203 = vunpack.c.l.b16 %v264
  %v2204 = vunpack.c.l.b16 %v265
  %v2205 = vunpack.c.l.b16 %v266
  %v2206 = vunpack.c.l.b16 %v267
  %v2207 = vunpack.c.l.b16 %v268
  %v2208 = vunpack.c.l.b16 %v269
  %v2209 = vunpack.c.l.b16 %v270
  %v2210 = vunpack.c.l.b16 %v271
  %v2211 = vunpack.c.l.b16 %v272
  %v2212 = vunpack.c.l.b16 %v273
  %v2213 = vunpack.c.l.b16 %v274
  %v2214 = vunpack.c.l.b16 %v275
  %v2215 = vunpack.c.l.b16 %v276
  %v2216 = vunpack.c.l.b16 %v277
  %v2217 = vunpack.c.l.b16 %v278
  %v2218 = vunpack.c.l.b16 %v279
  %v2219 = vunpack.c.l.b16 %v280
  %v2220 = vunpack.c.l.b16 %v281
  %v2221 = vunpack.c.l.b16 %v282
  %v2222 = vunpack.c.l.b16 %v283
  %v2223 = vunpack.c.l.b16 %v284
  %v2224 = vunpack.c.l.b16 %v285
  %v2225 = vunpack.c.l.b16 %v286
  %v2226 = vunpack.c.l.b16 %v287
  %v2227 = vunpack.c.l.b16 %v288
  %v2228 = vunpack.c.l.b16 %v289
  %v2229 = vunpack.c.l.b16 %v290
  %v2230 = vunpack.c.l.b16 %v291
  %v2231 = vunpack.c.l.b16 %v292
  %v2232 = vunpack.c.l.b16 %v293
  %v2233 = vunpack.c.l.b16 %v294
  %v2234 = vunpack.c.l.b16 %v295
  %v2235 = vunpack.c.l.b16 %v296
  %v2236 = vunpack.c.l.b16 %v297
  %v2237 = vunpack.c.l.b16 %v298
  %v2238 = vunpack.c.l.b16 %v299
  %v2239 = vunpack.c.l.b16 %v300
  %v2240 = vunpack.c.l.b16 %v301
  %v2241 = vunpack.c.l.b16 %v302
  %v2242 = vunpack.c.l.b16 %v303
  %v2243 = vunpack.c.l.b16 %v304
  %v2244 = vunpack.c.l.b16 %v305
  %v2245 = vunpack.c.l.b16 %v306
  %v2246 = vunpack.c.l.b16 %v307
  %v2247 = vunpack.c.l.b16 %v308
  %v2248 = vunpack.c.l.b16 %v309
  %v2249 = vunpack.c.l.b16 %v310
  %v2250 = vunpack.c.l.b16 %v311
  %v2251 = vunpack.c.l.b16 %v312
  %v2252 = vunpack.c.l.b16 %v313
  %v2253 = vunpack.c.l.b16 %v314
  %v2254 = vunpack.c.l.b16 %v315
  %v2255 = vunpack.c.l.b16 %v316
  %v2256 = vunpack.c.l.b16 %v317
  %v2257 = vunpack.c.l.b16 %v318
  %v2258 = vunpack.c.l.b16 %v319
  %v2259 = vunpack.c.l.b16 %v320
  %v2260 = vunpack.c.l.b16 %v321
  %v2261 = vunpack.c.l.b16 %v322
  %v2262 = vunpack.c.l.b16 %v323
  %v2263 = vunpack.c.l.b16 %v324
  %v2264 = vunpack.c.l.b16 %v325
  %v2265 = vunpack.c.l.b16 %v326
  %v2266 = vunpack.c.l.b16 %v327
  %v2267 = vunpack.c.l.b16 %v328
  %v2268 = vunpack.c.l.b16 %v329
  %v2269 = vunpack.c.l.b16 %v330
  %v2270 = vunpack.c.l.b16 %v331
  %v2271 = vunpack.c.l.b16 %v332
  %v2272 = vunpack.c.l.b16 %v333
  %v2273 = vunpack.c.l.b16 %v334
  %v2274 = vunpack.c.l.b16 %v335
  %v2275 = vunpack.c.l.b16 %v336
  %v2276 = vunpack.c.l.b16 %v337
  %v2277 = vunpack.c.l.b16 %v338
  %v2278 = vunpack.c.l.b16 %v339
  %v2279 = vunpack.c.l.b16 %v340
  %v2280 = vunpack.c.l.b16 %v341
  %v2281 = vunpack.c.l.b16 %v342
  %v2282 = vunpack.c.l.b16 %v343
  %v2283 = vunpack.c.l.b16 %v344
  %v2284 = vunpack.c.l.b16 %v345
  %v2285 = vunpack.c.l.b16 %v346
  %v2286 = vunpack.c.l.b16 %v347
  %v2287 = vunpack.c.l.b16 %v348
  %v2288 = vunpack.c.l.b16 %v349
  %v2289 = vunpack.c.l.b16 %v350
  %v2290 = vunpack.c.l.b16 %v351
  %v2291 = vunpack.c.l.b16 %v352
  %v2292 = vunpack.c.l.b16 %v353
  %v2293 = vunpack.c.l.b16 %v354
  %v2294 = vunpack.c.l.b16 %v355
  %v2295 = vunpack.c.l.b16 %v356
  %v2296 = vunpack.c.l.b16 %v357
  %v2297 = vunpack.c.l.b16 %v358
  %v2298 = vunpack.c.l.b16 %v359
  %v2299 = vunpack.c.l.b16 %v360
  %v2300 = vunpack.c.l.b16 %v361
  %v2301 = vunpack.c.l.b16 %v362
  %v2302 = vunpack.c.l.b16 %v363
  %v2303 = vunpack.c.l.b16 %v364
  %v2304 = vunpack.c.l.b16 %v365
  %v2305 = vunpack.c.l.b16 %v366
  %v2306 = vunpack.c.l.b16 %v367
  %v2307 = vunpack.c.l.b16 %v368
  %v2308 = vunpack.c.l.b16 %v369
  %v2309 = vunpack.c.l.b16 %v370
  %v2310 = vunpack.c.l.b16 %v371
  %v2311 = vunpack.c.l.b16 %v372
  %v2312 = vunpack.c.l.b16 %v373
  %v2313 = vunpack.c.l.b16 %v374
  %v2314 = vunpack.c.l.b16 %v375
  %v2315 = vunpack.c.l.b16 %v376
  %v2316 = vunpack.c.l.b16 %v377
  %v2317 = vunpack.c.l.b16 %v378
  %v2318 = vunpack.c.l.b16 %v379
  %v2319 = vunpack.c.l.b16 %v380
  %v2320 = vunpack.c.l.b16 %v381
  %v2321 = vunpack.c.l.b16 %v382
  %v2322 = vunpack.c.l.b16 %v383
  %v2323 = vunpack.c.l.b16 %v384
  %v2324 = vunpack.c.l.b16 %v385
  %v2325 = vunpack.c.l.b16 %v386
  %v2326 = vunpack.c.l.b16 %v387
  %v2327 = vunpack.c.l.b16 %v388
  %v2328 = vunpack.c.l.b16 %v389
  %v2329 = vunpack.c.l.b16 %v390
  %v2330 = vunpack.c.l.b16 %v391
  %v2331 = vunpack.c.l.b16 %v392
  %v2332 = vunpack.c.l.b16 %v393
  %v2333 = vunpack.c.l.b16 %v394
  %v2334 = vunpack.c.l.b16 %v395
  %v2335 = vunpack.c.l.b16 %v396
  %v2336 = vunpack.c.l.b16 %v397
  %v2337 = vunpack.c.l.b16 %v398
  %v2338 = vunpack.c.l.b16 %v399
  %v2339 = vunpack.c.l.b16 %v400
  %v2340 = vunpack.c.l.b16 %v401
  %v2341 = vunpack.c.l.b16 %v402
  %v2342 = vunpack.c.l.b16 %v403
  %v2343 = vunpack.c.l.b16 %v404
  %v2344 = vunpack.c.l.b16 %v405
  %v2345 = vunpack.c.l.b16 %v406
  %v2346 = vunpack.c.l.b16 %v407
  %v2347 = vunpack.c.l.b16 %v408
  %v2348 = vunpack.c.l.b16 %v409
  %v2349 = vunpack.c.l.b16 %v410
  %v2350 = vunpack.c.l.b16 %v411
  %v2351 = vunpack.c.l.b16 %v412
  %v2352 = vunpack.c.l.b16 %v413
  %v2353 = vunpack.c.l.b16 %v414
  %v2354 = vunpack.c.l.b16 %v415
  %v2355 = vunpack.c.l.b16 %v416
  %v2356 = vunpack.c.l.b16 %v417
  %v2357 = vunpack.c.l.b16 %v418
  %v2358 = vunpack.c.l.b16 %v419
  %v2359 = vunpack.c.l.b16 %v420
  %v2360 = vunpack.c.l.b16 %v421
  %v2361 = vunpack.c.l.b16 %v422
  %v2362 = vunpack.c.l.b16 %v423
  %v2363 = vunpack.c.l.b16 %v424
  %v2364 = vunpack.c.l.b16 %v425
  %v2365 = vunpack.c.l.b16 %v426
  %v2366 = vunpack.c.l.b16 %v427
  %v2367 = vunpack.c.l.b16 %v428
  %v2368 = vunpack.c.l.b16 %v429
  %v2369 = vunpack.c.l.b16 %v430
  %v2370 = vunpack.c.l.b16 %v431
  %v2371 = vunpack.c.l.b16 %v432
  %v2372 = vunpack.c.l.b16 %v433
  %v2373 = vunpack.c.l.b16 %v434
  %v2374 = vunpack.c.l.b16 %v435
  %v2375 = vunpack.c.l.b16 %v436
  %v2376 = vunpack.c.l.b16 %v437
  %v2377 = vunpack.c.l.b16 %v438
  %v2378 = vunpack.c.l.b16 %v439
  %v2379 = vunpack.c.l.b16 %v440
  %v2380 = vunpack.c.l.b16 %v441
  %v2381 = vunpack.c.l.b16 %v442
  %v2382 = vunpack.c.l.b16 %v443
  %v2383 = vunpack.c.l.b16 %v444
  %v2384 = vunpack.c.l.b16 %v445
  %v2385 = vunpack.c.l.b16 %v446
  %v2386 = vunpack.c.l.b16 %v447
  %v2387 = vunpack.c.l.b16 %v448
  %v2388 = vunpack.c.l.b16 %v449
  %v2389 = vunpack.c.l.b16 %v450
  %v2390 = vunpack.c.l.b16 %v451
  %v2391 = vunpack.c.l.b16 %v452
  %v2392 = vunpack.c.l.b16 %v453
  %v2393 = vunpack.c.l.b16 %v454
  %v2394 = vunpack.c.l.b16 %v455
  %v2395 = vunpack.c.l.b16 %v456
  %v2396 = vunpack.c.l.b16 %v457
  %v2397 = vunpack.c.l.b16 %v458
  %v2398 = vunpack.c.l.b16 %v459
  %v2399 = vunpack.c.l.b16 %v460
  %v2400 = vunpack.c.l.b16 %v461
  %v2401 = vunpack.c.l.b16 %v462
  %v2402 = vunpack.c.l.b16 %v463
  %v2403 = vunpack.c.l.b16 %v464
  %v2404 = vunpack.c.l.b16 %v465
  %v2405 = vunpack.c.l.b16 %v466
  %v2406 = vunpack.c.l.b16 %v467
  %v2407 = vunpack.c.l.b16 %v468
  %v2408 = vunpack.c.l.b16 %v469
  %v2409 = vunpack.c.l.b16 %v470
  %v2410 = vunpack.c.l.b16 %v471
  %v2411 = vunpack.c.l.b16 %v472
  %v2412 = vunpack.c.l.b16 %v473
  %v2413 = vunpack.c.l.b16 %v474
  %v2414 = vunpack.c.l.b16 %v475
  %v2415 = vunpack.c.l.b16 %v476
  %v2416 = vunpack.c.l.b16 %v477
  %v2417 = vunpack.c.l.b16 %v478
  %v2418 = vunpack.c.l.b16 %v479
  %v2419 = vunpack.c.l.b16 %v480
  %v2420 = vunpack.c.l.b16 %v481
  %v2421 = vunpack.c.l.b16 %v482
  %v2422 = vunpack.c.l.b16 %v483
  %v2423 = vunpack.c.l.b16 %v484
  %v2424 = vunpack.c.l.b16 %v485
  %v2425 = vunpack.c.l.b16 %v486
  %v2426 = vunpack.c.l.b16 %v487
  %v2427 = vunpack.c.l.b16 %v488
  %v2428 = vunpack.c.l.b16 %v489
  %v2429 = vunpack.c.l.b16 %v490
  %v2430 = vunpack.c.l.b16 %v491
  %v2431 = vunpack.c.l.b16 %v492
  %v2432 = vunpack.c.l.b16 %v493
  %v2433 = vunpack.c.l.b16 %v494
  %v2434 = vunpack.c.l.b16 %v495
  %v2435 = vunpack.c.l.b16 %v496
  %v2436 = vunpack.c.l.b16 %v497
  %v2437 = vunpack.c.l.b16 %v498
  %v2438 = vunpack.c.l.b16 %v499
  %v2439 = vunpack.c.l.b16 %v500
  %v2440 = vunpack.c.l.b16 %v501
  %v2441 = vunpack.c.l.b16 %v502
  %v2442 = vunpack.c.l.b16 %v503
  %v2443 = vunpack.c.l.b16 %v504
  %v2444 = vunpack.c.l.b16 %v505
  %v2445 = vunpack.c.l.b16 %v506
  %v2446 = vunpack.c.l.b16 %v507
  %v2447 = vunpack.c.l.b16 %v508
  %v2448 = vunpack.c.l.b16 %v509
  %v2449 = vunpack.c.l.b16 %v510
  %v2450 = vunpack.c.l.b16 %v511
  %v2451 = vunpack.c.l.b16 %v512
  %v2452 = vunpack.c.l.b16 %v513
  %v2453 = vunpack.c.l.b16 %v514
  %v2454 = vunpack.c.l.b16 %v515
  %v2455 = vunpack.c.l.b16 %v516
  %v2456 = vunpack.c.l.b16 %v517
  %v2457 = vunpack.c.l.b16 %v518
  %v2458 = vunpack.c.l.b16 %v519
  %v2459 = vunpack.c.l.b16 %v520
  %v2460 = vunpack.c.l.b16 %v521
  %v2461 = vunpack.c.l.b16 %v522
  %v2462 = vunpack.c.l.b16 %v523
  %v2463 = vunpack.c.l.b16 %v524
  %v2464 = vunpack.c.l.b16 %v525
  %v2465 = vunpack.c.l.b16 %v526
  %v2466 = vunpack.c.l.b16 %v527
  %v2467 = vunpack.c.l.b16 %v528
  %v2468 = vunpack.c.l.b16 %v529
  %v2469 = vunpack.c.l.b16 %v530
  %v2470 = vunpack.c.l.b16 %v531
  %v2471 = vunpack.c.l.b16 %v532
  %v2472 = vunpack.c.l.b16 %v533
  %v2473 = vunpack.c.l.b16 %v534
  %v2474 = vunpack.c.l.b16 %v535
  %v2475 = vunpack.c.l.b16 %v536
  %v2476 = vunpack.c.l.b16 %v537
  %v2477 = vunpack.c.l.b16 %v538
  %v2478 = vunpack.c.l.b16 %v539
  %v2479 = vunpack.c.l.b16 %v540
  %v2480 = vunpack.c.l.b16 %v541
  %v2481 = vunpack.c.l.b16 %v542
  %v2482 = vunpack.c.l.b16 %v543
  %v2483 = vunpack.c.l.b16 %v544
  %v2484 = vunpack.c.l.b16 %v545
  %v2485 = vunpack.c.l.b16 %v546
  %v2486 = vunpack.c.l.b16 %v547
  %v2487 = vunpack.c.l.b16 %v548
  %v2488 = vunpack.c.l.b16 %v549
  %v2489 = vunpack.c.l.b16 %v550
  %v2490 = vunpack.c.l.b16 %v551
  %v2491 = vunpack.c.l.b16 %v552
  %v2492 = vunpack.c.l.b16 %v553
  %v2493 = vunpack.c.l.b16 %v554
  %v2494 = vunpack.c.l.b16 %v555
  %v2495 = vunpack.c.l.b16 %v556
  %v2496 = vunpack.c.l.b16 %v557
  %v2497 = vunpack.c.l.b16 %v558
  %v2498 = vunpack.c.l.b16 %v559
  %v2499 = vunpack.c.l.b16 %v560
  %v2500 = vunpack.c.l.b16 %v561
  %v2501 = vunpack.c.l.b16 %v562
  %v2502 = vunpack.c.l.b16 %v563
  %v2503 = vunpack.c.l.b16 %v564
  %v2504 = vunpack.c.l.b16 %v565
  %v2505 = vunpack.c.l.b16 %v566
  %v2506 = vunpack.c.l.b16 %v567
  %v2507 = vunpack.c.l.b16 %v568
  %v2508 = vunpack.c.l.b16 %v569
  %v2509 = vunpack.c.l.b16 %v570
  %v2510 = vunpack.c.l.b16 %v571
  %v2511 = vunpack.c.l.b16 %v572
  %v2512 = vunpack.c.l.b16 %v573
  %v2513 = vunpack.c.l.b16 %v574
  %v2514 = vunpack.c.l.b16 %v575
  %v2515 = vunpack.c.l.b16 %v576
  %v2516 = vunpack.c.l.b16 %v577
  %v2517 = vunpack.c.l.b16 %v578
  %v2518 = vunpack.c.l.b16 %v579
  %v2519 = vunpack.c.l.b16 %v580
  %v2520 = vunpack.c.l.b16 %v581
  %v2521 = vunpack.c.l.b16 %v582
  %v2522 = vunpack.c.l.b16 %v583
  %v2523 = vunpack.c.l.b16 %v584
  %v2524 = vunpack.c.l.b16 %v585
  %v2525 = vunpack.c.l.b16 %v586
  %v2526 = vunpack.c.l.b16 %v587
  %v2527 = vunpack.c.l.b16 %v588
  %v2528 = vunpack.c.l.b16 %v589
  %v2529 = vunpack.c.l.b16 %v590
  %v2530 = vunpack.c.l.b16 %v591
  %v2531 = vunpack.c.l.b16 %v592
  %v2532 = vunpack.c.l.b16 %v593
  %v2533 = vunpack.c.l.b16 %v594
  %v2534 = vunpack.c.l.b16 %v595
  %v2535 = vunpack.c.l.b16 %v596
  %v2536 = vunpack.c.l.b16 %v597
  %v2537 = vunpack.c.l.b16 %v598
  %v2538 = vunpack.c.l.b16 %v599
  %v2539 = vunpack.c.l.b16 %v600
  %v2540 = vunpack.c.l.b16 %v601
  %v2541 = vunpack.c.l.b16 %v602
  %v2542 = vunpack.c.l.b16 %v603
  %v2543 = vunpack.c.l.b16 %v604
  %v2544 = vunpack.c.l.b16 %v605
  %v2545 = vunpack.c.l.b16 %v606
  %v2546 = vunpack.c.l.b16 %v607
  %v2547 = vunpack.c.l.b16 %v608
  %v2548 = vunpack.c.l.b16 %v609
  %v2549 = vunpack.c.l.b16 %v610
  %v2550 = vunpack.c.l.b16 %v611
  %v2551 = vunpack.c.l.b16 %v612
  %v2552 = vunpack.c.l.b16 %v613
  %v2553 = vunpack.c.l.b16 %v614
  %v2554 = vunpack.c.l.b16 %v615
  %v2555 = vunpack.c.l.b16 %v616
  %v2556 = vunpack.c.l.b16 %v617
  %v2557 = vunpack.c.l.b16 %v618
  %v2558 = vunpack.c.l.b16 %v619
  %v2559 = vunpack.c.l.b16 %v620
  %v2560 = vunpack.c.l.b16 %v621
  %v2561 = vunpack.c.l.b16 %v622
  %v2562 = vunpack.c.l.b16 %v623
  %v2563 = vunpack.c.l.b16 %v624
  %v2564 = vunpack.c.l.b16 %v625
  %v2565 = vunpack.c.l.b16 %v626
  %v2566 = vunpack.c.l.b16 %v627
  %v2567 = vunpack.c.l.b16 %v628
  %v2568 = vunpack.c.l.b16 %v629
  %v2569 = vunpack.c.l.b16 %v630
  %v2570 = vunpack.c.l.b16 %v631
  %v2571 = vunpack.c.l.b16 %v632
  %v2572 = vunpack.c.l.b16 %v633
  %v2573 = vunpack.c.l.b16 %v634
  %v2574 = vunpack.c.l.b16 %v635
  %v2575 = vunpack.c.l.b16 %v636
  %v2576 = vunpack.c.l.b16 %v637
  %v2577 = vunpack.c.l.b16 %v638
  %v2578 = vunpack.c.l.b16 %v639
  %v2579 = vunpack.c.l.b16 %v640
  %v2580 = vunpack.c.l.b16 %v641
  %v2581 = vunpack.c.l.b16 %v642
  %v2582 = vunpack.c.l.b16 %v643
  %v2583 = vunpack.c.l.b16 %v644
  %v2584 = vunpack.c.l.b16 %v645
  %v2585 = vunpack.c.l.b16 %v646
  %v2586 = vunpack.c.l.b16 %v647
  %v2587 = vunpack.c.l.b16 %v648
  %v2588 = vunpack.c.l.b16 %v649
  %v2589 = vunpack.c.l.b16 %v650
  %v2590 = vunpack.c.l.b16 %v651
  %v2591 = vunpack.c.l.b16 %v652
  %v2592 = vunpack.c.l.b16 %v653
  %v2593 = vunpack.c.l.b16 %v654
  %v2594 = vunpack.c.l.b16 %v655
  %v2595 = vunpack.c.l.b16 %v656
  %v2596 = vunpack.c.l.b16 %v657
  %v2597 = vunpack.c.l.b16 %v658
  %v2598 = vunpack.c.l.b16 %v659
  %v2599 = vunpack.c.l.b16 %v660
  %v2600 = vunpack.c.l.b16 %v661
  %v2601 = vunpack.c.l.b16 %v662
  %v2602 = vunpack.c.l.b16 %v663
  %v2603 = vunpack.c.l.b16 %v664
  %v2604 = vunpack.c.l.b16 %v665
  %v2605 = vunpack.c.l.b16 %v666
  %v2606 = vunpack.c.l.b16 %v667
  %v2607 = vunpack.c.l.b16 %v668
  %v2608 = vunpack.c.l.b16 %v669
  %v2609 = vunpack.c.l.b16 %v670
  %v2610 = vunpack.c.l.b16 %v671
  %v2611 = vunpack.c.l.b16 %v672
  %v2612 = vunpack.c.l.b16 %v673
  %v2613 = vunpack.c.l.b16 %v674
  %v2614 = vunpack.c.l.b16 %v675
  %v2615 = vunpack.c.l.b16 %v676
  %v2616 = vunpack.c.l.b16 %v677
  %v2617 = vunpack.c.l.b16 %v678
  %v2618 = vunpack.c.l.b16 %v679
  %v2619 = vunpack.c.l.b16 %v680
  %v2620 = vunpack.c.l.b16 %v681
  %v2621 = vunpack.c.l.b16 %v682
  %v2622 = vunpack.c.l.b16 %v683
  %v2623 = vunpack.c.l.b16 %v684
  %v2624 = vunpack.c.l.b16 %v685
  %v2625 = vunpack.c.l.b16 %v686
  %v2626 = vunpack.c.l.b16 %v687
  %v2627 = vunpack.c.l.b16 %v688
  %v2628 = vunpack.c.l.b16 %v689
  %v2629 = vunpack.c.l.b16 %v690
  %v2630 = vunpack.c.l.b16 %v691
  %v2631 = vunpack.c.l.b16 %v692
  %v2632 = vunpack.c.l.b16 %v693
  %v2633 = vunpack.c.l.b16 %v694
  %v2634 = vunpack.c.l.b16 %v695
  %v2635 = vunpack.c.l.b16 %v696
  %v2636 = vunpack.c.l.b16 %v697
  %v2637 = vunpack.c.l.b16 %v698
  %v2638 = vunpack.c.l.b16 %v699
  %v2639 = vunpack.c.l.b16 %v700
  %v2640 = vunpack.c.l.b16 %v701
  %v2641 = vunpack.c.l.b16 %v702
  %v2642 = vunpack.c.l.b16 %v703
  %v2643 = vunpack.c.l.b16 %v704
  %v2644 = vunpack.c.l.b16 %v705
  %v2645 = vunpack.c.l.b16 %v706
  %v2646 = vunpack.c.l.b16 %v707
  %v2647 = vunpack.c.l.b16 %v708
  %v2648 = vunpack.c.l.b16 %v709
  %v2649 = vunpack.c.l.b16 %v710
  %v2650 = vunpack.c.l.b16 %v711
  %v2651 = vunpack.c.l.b16 %v712
  %v2652 = vunpack.c.l.b16 %v713
  %v2653 = vunpack.c.l.b16 %v714
  %v2654 = vunpack.c.l.b16 %v715
  %v2655 = vunpack.c.l.b16 %v716
  %v2656 = vunpack.c.l.b16 %v717
  %v2657 = vunpack.c.l.b16 %v718
  %v2658 = vunpack.c.l.b16 %v719
  %v2659 = vunpack.c.l.b16 %v720
  %v2660 = vunpack.c.l.b16 %v721
  %v2661 = vunpack.c.l.b16 %v722
  %v2662 = vunpack.c.l.b16 %v723
  %v2663 = vunpack.c.l.b16 %v724
  %v2664 = vunpack.c.l.b16 %v725
  %v2665 = vunpack.c.l.b16 %v726
  %v2666 = vunpack.c.l.b16 %v727
  %v2667 = vunpack.c.l.b16 %v728
  %v2668 = vunpack.c.l.b16 %v729
  %v2669 = vunpack.c.l.b16 %v730
  %v2670 = vunpack.c.l.b16 %v731
  %v2671 = vunpack.c.l.b16 %v732
  %v2672 = vunpack.c.l.b16 %v733
  %v2673 = vunpack.c.l.b16 %v734
  %v2674 = vunpack.c.l.b16 %v735
  %v2675 = vunpack.c.l.b16 %v736
  %v2676 = vunpack.c.l.b16 %v737
  %v2677 = vunpack.c.l.b16 %v738
  %v2678 = vunpack.c.l.b16 %v739
  %v2679 = vunpack.c.l.b16 %v740
  %v2680 = vunpack.c.l.b16 %v741
  %v2681 = vunpack.c.l.b16 %v742
  %v2682 = vunpack.c.l.b16 %v743
  %v2683 = vunpack.c.l.b16 %v744
  %v2684 = vunpack.c.l.b16 %v745
  %v2685 = vunpack.c.l.b16 %v746
  %v2686 = vunpack.c.l.b16 %v747
  %v2687 = vunpack.c.l.b16 %v748
  %v2688 = vunpack.c.l.b16 %v749
  %v2689 = vunpack.c.l.b16 %v750
  %v2690 = vunpack.c.l.b16 %v751
  %v2691 = vunpack.c.l.b16 %v752
  %v2692 = vunpack.c.l.b16 %v753
  %v2693 = vunpack.c.l.b16 %v754
  %v2694 = vunpack.c.l.b16 %v755
  %v2695 = vunpack.c.l.b16 %v756
  %v2696 = vunpack.c.l.b16 %v757
  %v2697 = vunpack.c.l.b16 %v758
  %v2698 = vunpack.c.l.b16 %v759
  %v2699 = vunpack.c.l.b16 %v760
  %v2700 = vunpack.c.l.b16 %v761
  %v2701 = vunpack.c.l.b16 %v762
  %v2702 = vunpack.c.l.b16 %v763
  %v2703 = vunpack.c.l.b16 %v764
  %v2704 = vunpack.c.l.b16 %v765
  %v2705 = vunpack.c.l.b16 %v766
  %v2706 = vunpack.c.l.b16 %v767
  %v2707 = vunpack.c.l.b16 %v768
  %v2708 = vunpack.c.l.b16 %v769
  %v2709 = vunpack.c.l.b16 %v770
  %v2710 = vunpack.c.l.b16 %v771
  %v2711 = vunpack.c.l.b16 %v772
  %v2712 = vunpack.c.l.b16 %v773
  %v2713 = vunpack.c.l.b16 %v774
  %v2714 = vunpack.c.l.b16 %v775
  %v2715 = vunpack.c.l.b16 %v776
  %v2716 = vunpack.c.l.b16 %v777
  %v2717 = vunpack.c.l.b16 %v778
  %v2718 = vunpack.c.l.b16 %v779
  %v2719 = vunpack.c.l.b16 %v780
  %v2720 = vunpack.c.l.b16 %v781
  %v2721 = vunpack.c.l.b16 %v782
  %v2722 = vunpack.c.l.b16 %v783
  %v2723 = vunpack.c.l.b16 %v784
  %v2724 = vunpack.c.l.b16 %v785
  %v2725 = vunpack.c.l.b16 %v786
  %v2726 = vunpack.c.l.b16 %v787
  %v2727 = vunpack.c.l.b16 %v788
  %v2728 = vunpack.c.l.b16 %v789
  %v2729 = vunpack.c.l.b16 %v790
  %v2730 = vunpack.c.l.b16 %v791
  %v2731 = vunpack.c.l.b16 %v792
  %v2732 = vunpack.c.l.b16 %v793
  %v2733 = vunpack.c.l.b16 %v794
  %v2734 = vunpack.c.l.b16 %v795
  %v2735 = vunpack.c.l.b16 %v796
  %v2736 = vunpack.c.l.b16 %v797
  %v2737 = vunpack.c.l.b16 %v798
  %v2738 = vunpack.c.l.b16 %v799
  %v2739 = vunpack.c.l.b16 %v800
  %v2740 = vunpack.c.l.b16 %v801
  %v2741 = vunpack.c.l.b16 %v802
  %v2742 = vunpack.c.l.b16 %v803
  %v2743 = vunpack.c.l.b16 %v804
  %v2744 = vunpack.c.l.b16 %v805
  %v2745 = vunpack.c.l.b16 %v806
  %v2746 = vunpack.c.l.b16 %v807
  %v2747 = vunpack.c.l.b16 %v808
  %v2748 = vunpack.c.l.b16 %v809
  %v2749 = vunpack.c.l.b16 %v810
  %v2750 = vunpack.c.l.b16 %v811
  %v2751 = vunpack.c.l.b16 %v812
  %v2752 = vunpack.c.l.b16 %v813
  %v2753 = vunpack.c.l.b16 %v814
  %v2754 = vunpack.c.l.b16 %v815
  %v2755 = vunpack.c.l.b16 %v816
  %v2756 = vpack.c.b16 %v1973, %v1972
  %v2757 = vpack.c.b16 %v1975, %v1974
  %v2758 = vpack.c.b16 %v1977, %v1976
  %v2759 = vpack.c.b16 %v1979, %v1978
  %v2760 = vpack.c.b16 %v1981, %v1980
  %v2761 = vpack.c.b16 %v1983, %v1982
  %v2762 = vpack.c.b16 %v1985, %v1984
  %v2763 = vpack.c.b16 %v1987, %v1986
  %v2764 = vpack.c.b16 %v1989, %v1988
  %v2765 = vpack.c.b16 %v1991, %v1990
  %v2766 = vpack.c.b16 %v1993, %v1992
  %v2767 = vpack.c.b16 %v1995, %v1994
  %v2768 = vpack.c.b16 %v1997, %v1996
  %v2769 = vpack.c.b16 %v1999, %v1998
  %v2770 = vpack.c.b16 %v2001, %v2000
  %v2771 = vpack.c.b16 %v2003, %v2002
  %v2772 = vpack.c.b16 %v2005, %v2004
  %v2773 = vpack.c.b16 %v2007, %v2006
  %v2774 = vpack.c.b16 %v2009, %v2008
  %v2775 = vpack.c.b16 %v2011, %v2010
  %v2776 = vpack.c.b16 %v2013, %v2012
  %v2777 = vpack.c.b16 %v2015, %v2014
  %v2778 = vpack.c.b16 %v2017, %v2016
  %v2779 = vpack.c.b16 %v2019, %v2018
  %v2780 = vpack.c.b16 %v2021, %v2020
  %v2781 = vpack.c.b16 %v2023, %v2022
  %v2782 = vpack.c.b16 %v2025, %v2024
  %v2783 = vpack.c.b16 %v2027, %v2026
  %v2784 = vpack.c.b16 %v2029, %v2028
  %v2785 = vpack.c.b16 %v2031, %v2030
  %v2786 = vpack.c.b16 %v2033, %v2032
  %v2787 = vpack.c.b16 %v2035, %v2034
  %v2788 = vpack.c.b16 %v2037, %v2036
  %v2789 = vpack.c.b16 %v2039, %v2038
  %v2790 = vpack.c.b16 %v2041, %v2040
  %v2791 = vpack.c.b16 %v2043, %v2042
  %v2792 = vpack.c.b16 %v2045, %v2044
  %v2793 = vpack.c.b16 %v2047, %v2046
  %v2794 = vpack.c.b16 %v2049, %v2048
  %v2795 = vpack.c.b16 %v2051, %v2050
  %v2796 = vpack.c.b16 %v2053, %v2052
  %v2797 = vpack.c.b16 %v2055, %v2054
  %v2798 = vpack.c.b16 %v2057, %v2056
  %v2799 = vpack.c.b16 %v2059, %v2058
  %v2800 = vpack.c.b16 %v2061, %v2060
  %v2801 = vpack.c.b16 %v2063, %v2062
  %v2802 = vpack.c.b16 %v2065, %v2064
  %v2803 = vpack.c.b16 %v2067, %v2066
  %v2804 = vpack.c.b16 %v2069, %v2068
  %v2805 = vpack.c.b16 %v2071, %v2070
  %v2806 = vpack.c.b16 %v2073, %v2072
  %v2807 = vpack.c.b16 %v2075, %v2074
  %v2808 = vpack.c.b16 %v2077, %v2076
  %v2809 = vpack.c.b16 %v2079, %v2078
  %v2810 = vpack.c.b16 %v2081, %v2080
  %v2811 = vpack.c.b16 %v2083, %v2082
  %v2812 = vpack.c.b16 %v2085, %v2084
  %v2813 = vpack.c.b16 %v2087, %v2086
  %v2814 = vpack.c.b16 %v2089, %v2088
  %v2815 = vpack.c.b16 %v2091, %v2090
  %v2816 = vpack.c.b16 %v2093, %v2092
  %v2817 = vpack.c.b16 %v2095, %v2094
  %v2818 = vpack.c.b16 %v2097, %v2096
  %v2819 = vpack.c.b16 %v2099, %v2098
  %v2820 = vpack.c.b16 %v2101, %v2100
  %v2821 = vpack.c.b16 %v2103, %v2102
  %v2822 = vpack.c.b16 %v2105, %v2104
  %v2823 = vpack.c.b16 %v2107, %v2106
  %v2824 = vpack.c.b16 %v2109, %v2108
  %v2825 = vpack.c.b16 %v2111, %v2110
  %v2826 = vpack.c.b16 %v2113, %v2112
  %v2827 = vpack.c.b16 %v2115, %v2114
  %v2828 = vpack.c.b16 %v2117, %v2116
  %v2829 = vpack.c.b16 %v2119, %v2118
  %v2830 = vpack.c.b16 %v2121, %v2120
  %v2831 = vpack.c.b16 %v2123, %v2122
  %v2832 = vpack.c.b16 %v2125, %v2124
  %v2833 = vpack.c.b16 %v2127, %v2126
  %v2834 = vpack.c.b16 %v2129, %v2128
  %v2835 = vpack.c.b16 %v2131, %v2130
  %v2836 = vpack.c.b16 %v2133, %v2132
  %v2837 = vpack.c.b16 %v2135, %v2134
  %v2838 = vpack.c.b16 %v2137, %v2136
  %v2839 = vpack.c.b16 %v2139, %v2138
  %v2840 = vpack.c.b16 %v2141, %v2140
  %v2841 = vpack.c.b16 %v2143, %v2142
  %v2842 = vpack.c.b16 %v2145, %v2144
  %v2843 = vpack.c.b16 %v2147, %v2146
  %v2844 = vpack.c.b16 %v2149, %v2148
  %v2845 = vpack.c.b16 %v2151, %v2150
  %v2846 = vpack.c.b16 %v2153, %v2152
  %v2847 = vpack.c.b16 %v2155, %v2154
  %v2848 = vpack.c.b16 %v2157, %v2156
  %v2849 = vpack.c.b16 %v2159, %v2158
  %v2850 = vpack.c.b16 %v2161, %v2160
  %v2851 = vpack.c.b16 %v2163, %v2162
  %v2852 = vpack.c.b16 %v2165, %v2164
  %v2853 = vpack.c.b16 %v2167, %v2166
  %v2854 = vpack.c.b16 %v2169, %v2168
  %v2855 = vpack.c.b16 %v2171, %v2170
  %v2856 = vpack.c.b16 %v2173, %v2172
  %v2857 = vpack.c.b16 %v2175, %v2174
  %v2858 = vpack.c.b16 %v2177, %v2176
  %v2859 = vpack.c.b16 %v2179, %v2178
  %v2860 = vpack.c.b16 %v2181, %v2180
  %v2861 = vpack.c.b16 %v2183, %v2182
  %v2862 = vpack.c.b16 %v2185, %v2184
  %v2863 = vpack.c.b16 %v2187, %v2186
  %v2864 = vpack.c.b16 %v2189, %v2188
  %v2865 = vpack.c.b16 %v2191, %v2190
  %v2866 = vpack.c.b16 %v2193, %v2192
  %v2867 = vpack.c.b16 %v2195, %v2194
  %v2868 = vpack.c.b16 %v2197, %v2196
  %v2869 = vpack.c.b16 %v2199, %v2198
  %v2870 = vpack.c.b16 %v2201, %v2200
  %v2871 = vpack.c.b16 %v2203, %v2202
  %v2872 = vpack.c.b16 %v2205, %v2204
  %v2873 = vpack.c.b16 %v2207, %v2206
  %v2874 = vpack.c.b16 %v2209, %v2208
  %v2875 = vpack.c.b16 %v2211, %v2210
  %v2876 = vpack.c.b16 %v2213, %v2212
  %v2877 = vpack.c.b16 %v2215, %v2214
  %v2878 = vpack.c.b16 %v2217, %v2216
  %v2879 = vpack.c.b16 %v2219, %v2218
  %v2880 = vpack.c.b16 %v2221, %v2220
  %v2881 = vpack.c.b16 %v2223, %v2222
  %v2882 = vpack.c.b16 %v2225, %v2224
  %v2883 = vpack.c.b16 %v2227, %v2226
  %v2884 = vpack.c.b16 %v2229, %v2228
  %v2885 = vpack.c.b16 %v2231, %v2230
  %v2886 = vpack.c.b16 %v2233, %v2232
  %v2887 = vpack.c.b16 %v2235, %v2234
  %v2888 = vpack.c.b16 %v2237, %v2236
  %v2889 = vpack.c.b16 %v2239, %v2238
  %v2890 = vpack.c.b16 %v2241, %v2240
  %v2891 = vpack.c.b16 %v2243, %v2242
  %v2892 = vpack.c.b16 %v2245, %v2244
  %v2893 = vpack.c.b16 %v2247, %v2246
  %v2894 = vpack.c.b16 %v2249, %v2248
  %v2895 = vpack.c.b16 %v2251, %v2250
  %v2896 = vpack.c.b16 %v2253, %v2252
  %v2897 = vpack.c.b16 %v2255, %v2254
  %v2898 = vpack.c.b16 %v2257, %v2256
  %v2899 = vpack.c.b16 %v2259, %v2258
  %v2900 = vpack.c.b16 %v2261, %v2260
  %v2901 = vpack.c.b16 %v2263, %v2262
  %v2902 = vpack.c.b16 %v2265, %v2264
  %v2903 = vpack.c.b16 %v2267, %v2266
  %v2904 = vpack.c.b16 %v2269, %v2268
  %v2905 = vpack.c.b16 %v2271, %v2270
  %v2906 = vpack.c.b16 %v2273, %v2272
  %v2907 = vpack.c.b16 %v2275, %v2274
  %v2908 = vpack.c.b16 %v2277, %v2276
  %v2909 = vpack.c.b16 %v2279, %v2278
  %v2910 = vpack.c.b16 %v2281, %v2280
  %v2911 = vpack.c.b16 %v2283, %v2282
  %v2912 = vpack.c.b16 %v2285, %v2284
  %v2913 = vpack.c.b16 %v2287, %v2286
  %v2914 = vpack.c.b16 %v2289, %v2288
  %v2915 = vpack.c.b16 %v2291, %v2290
  %v2916 = vpack.c.b16 %v2293, %v2292
  %v2917 = vpack.c.b16 %v2295, %v2294
  %v2918 = vpack.c.b16 %v2297, %v2296
  %v2919 = vpack.c.b16 %v2299, %v2298
  %v2920 = vpack.c.b16 %v2301, %v2300
  %v2921 = vpack.c.b16 %v2303, %v2302
  %v2922 = vpack.c.b16 %v2305, %v2304
  %v2923 = vpack.c.b16 %v2307, %v2306
  %v2924 = vpack.c.b16 %v2309, %v2308
  %v2925 = vpack.c.b16 %v2311, %v2310
  %v2926 = vpack.c.b16 %v2313, %v2312
  %v2927 = vpack.c.b16 %v2315, %v2314
  %v2928 = vpack.c.b16 %v2317, %v2316
  %v2929 = vpack.c.b16 %v2319, %v2318
  %v2930 = vpack.c.b16 %v2321, %v2320
  %v2931 = vpack.c.b16 %v2323, %v2322
  %v2932 = vpack.c.b16 %v2325, %v2324
  %v2933 = vpack.c.b16 %v2327, %v2326
  %v2934 = vpack.c.b16 %v2329, %v2328
  %v2935 = vpack.c.b16 %v2331, %v2330
  %v2936 = vpack.c.b16 %v2333, %v2332
  %v2937 = vpack.c.b16 %v2335, %v2334
  %v2938 = vpack.c.b16 %v2337, %v2336
  %v2939 = vpack.c.b16 %v2339, %v2338
  %v2940 = vpack.c.b16 %v2341, %v2340
  %v2941 = vpack.c.b16 %v2343, %v2342
  %v2942 = vpack.c.b16 %v2345, %v2344
  %v2943 = vpack.c.b16 %v2347, %v2346
  %v2944 = vpack.c.b16 %v2349, %v2348
  %v2945 = vpack.c.b16 %v2351, %v2350
  %v2946 = vpack.c.b16 %v2353, %v2352
  %v2947 = vpack.c.b16 %v2355, %v2354
  %v2948 = vpack.c.b16 %v2357, %v2356
  %v2949 = vpack.c.b16 %v2359, %v2358
  %v2950 = vpack.c.b16 %v2361, %v2360
  %v2951 = vpack.c.b16 %v2363, %v2362
  %v2952 = vpack.c.b16 %v2365, %v2364
  %v2953 = vpack.c.b16 %v2367, %v2366
  %v2954 = vpack.c.b16 %v2369, %v2368
  %v2955 = vpack.c.b16 %v2371, %v2370
  %v2956 = vpack.c.b16 %v2373, %v2372
  %v2957 = vpack.c.b16 %v2375, %v2374
  %v2958 = vpack.c.b16 %v2377, %v2376
  %v2959 = vpack.c.b16 %v2379, %v2378
  %v2960 = vpack.c.b16 %v2381, %v2380
  %v2961 = vpack.c.b16 %v2383, %v2382
  %v2962 = vpack.c.b16 %v2385, %v2384
  %v2963 = vpack.c.b16 %v2387, %v2386
  %v2964 = vpack.c.b16 %v2389, %v2388
  %v2965 = vpack.c.b16 %v2391, %v2390
  %v2966 = vpack.c.b16 %v2393, %v2392
  %v2967 = vpack.c.b16 %v2395, %v2394
  %v2968 = vpack.c.b16 %v2397, %v2396
  %v2969 = vpack.c.b16 %v2399, %v2398
  %v2970 = vpack.c.b16 %v2401, %v2400
  %v2971 = vpack.c.b16 %v2403, %v2402
  %v2972 = vpack.c.b16 %v2405, %v2404
  %v2973 = vpack.c.b16 %v2407, %v2406
  %v2974 = vpack.c.b16 %v2409, %v2408
  %v2975 = vpack.c.b16 %v2411, %v2410
  %v2976 = vpack.c.b16 %v2413, %v2412
  %v2977 = vpack.c.b16 %v2415, %v2414
  %v2978 = vpack.c.b16 %v2417, %v2416
  %v2979 = vpack.c.b16 %v2419, %v2418
  %v2980 = vpack.c.b16 %v2421, %v2420
  %v2981 = vpack.c.b16 %v2423, %v2422
  %v2982 = vpack.c.b16 %v2425, %v2424
  %v2983 = vpack.c.b16 %v2427, %v2426
  %v2984 = vpack.c.b16 %v2429, %v2428
  %v2985 = vpack.c.b16 %v2431, %v2430
  %v2986 = vpack.c.b16 %v2433, %v2432
  %v2987 = vpack.c.b16 %v2435, %v2434
  %v2988 = vpack.c.b16 %v2437, %v2436
  %v2989 = vpack.c.b16 %v2439, %v2438
  %v2990 = vpack.c.b16 %v2441, %v2440
  %v2991 = vpack.c.b16 %v2443, %v2442
  %v2992 = vpack.c.b16 %v2445, %v2444
  %v2993 = vpack.c.b16 %v2447, %v2446
  %v2994 = vpack.c.b16 %v2449, %v2448
  %v2995 = vpack.c.b16 %v2451, %v2450
  %v2996 = vpack.c.b16 %v2453, %v2452
  %v2997 = vpack.c.b16 %v2455, %v2454
  %v2998 = vpack.c.b16 %v2457, %v2456
  %v2999 = vpack.c.b16 %v2459, %v2458
  %v3000 = vpack.c.b16 %v2461, %v2460
  %v3001 = vpack.c.b16 %v2463, %v2462
  %v3002 = vpack.c.b16 %v2465, %v2464
  %v3003 = vpack.c.b16 %v2467, %v2466
  %v3004 = vpack.c.b16 %v2469, %v2468
  %v3005 = vpack.c.b16 %v2471, %v2470
  %v3006 = vpack.c.b16 %v2473, %v2472
  %v3007 = vpack.c.b16 %v2475, %v2474
  %v3008 = vpack.c.b16 %v2477, %v2476
  %v3009 = vpack.c.b16 %v2479, %v2478
  %v3010 = vpack.c.b16 %v2481, %v2480
  %v3011 = vpack.c.b16 %v2483, %v2482
  %v3012 = vpack.c.b16 %v2485, %v2484
  %v3013 = vpack.c.b16 %v2487, %v2486
  %v3014 = vpack.c.b16 %v2489, %v2488
  %v3015 = vpack.c.b16 %v2491, %v2490
  %v3016 = vpack.c.b16 %v2493, %v2492
  %v3017 = vpack.c.b16 %v2495, %v2494
  %v3018 = vpack.c.b16 %v2497, %v2496
  %v3019 = vpack.c.b16 %v2499, %v2498
  %v3020 = vpack.c.b16 %v2501, %v2500
  %v3021 = vpack.c.b16 %v2503, %v2502
  %v3022 = vpack.c.b16 %v2505, %v2504
  %v3023 = vpack.c.b16 %v2507, %v2506
  %v3024 = vpack.c.b16 %v2509, %v2508
  %v3025 = vpack.c.b16 %v2511, %v2510
  %v3026 = vpack.c.b16 %v2513, %v2512
  %v3027 = vpack.c.b16 %v2515, %v2514
  %v3028 = vpack.c.b16 %v2517, %v2516
  %v3029 = vpack.c.b16 %v2519, %v2518
  %v3030 = vpack.c.b16 %v2521, %v2520
  %v3031 = vpack.c.b16 %v2523, %v2522
  %v3032 = vpack.c.b16 %v2525, %v2524
  %v3033 = vpack.c.b16 %v2527, %v2526
  %v3034 = vpack.c.b16 %v2529, %v2528
  %v3035 = vpack.c.b16 %v2531, %v2530
  %v3036 = vpack.c.b16 %v2533, %v2532
  %v3037 = vpack.c.b16 %v2535, %v2534
  %v3038 = vpack.c.b16 %v2537, %v2536
  %v3039 = vpack.c.b16 %v2539, %v2538
  %v3040 = vpack.c.b16 %v2541, %v2540
  %v3041 = vpack.c.b16 %v2543, %v2542
  %v3042 = vpack.c.b16 %v2545, %v2544
  %v3043 = vpack.c.b16 %v2547, %v2546
  %v3044 = vpack.c.b16 %v2549, %v2548
  %v3045 = vpack.c.b16 %v2551, %v2550
  %v3046 = vpack.c.b16 %v2553, %v2552
  %v3047 = vpack.c.b16 %v2555, %v2554
  %v3048 = vpack.c.b16 %v2557, %v2556
  %v3049 = vpack.c.b16 %v2559, %v2558
  %v3050 = vpack.c.b16 %v2561, %v2560
  %v3051 = vpack.c.b16 %v2563, %v2562
  %v3052 = vpack.c.b16 %v2565, %v2564
  %v3053 = vpack.c.b16 %v2567, %v2566
  %v3054 = vpack.c.b16 %v2569, %v2568
  %v3055 = vpack.c.b16 %v2571, %v2570
  %v3056 = vpack.c.b16 %v2573, %v2572
  %v3057 = vpack.c.b16 %v2575, %v2574
  %v3058 = vpack.c.b16 %v2577, %v2576
  %v3059 = vpack.c.b16 %v2579, %v2578
  %v3060 = vpack.c.b16 %v2581, %v2580
  %v3061 = vpack.c.b16 %v2583, %v2582
  %v3062 = vpack.c.b16 %v2585, %v2584
  %v3063 = vpack.c.b16 %v2587, %v2586
  %v3064 = vpack.c.b16 %v2589, %v2588
  %v3065 = vpack.c.b16 %v2591, %v2590
  %v3066 = vpack.c.b16 %v2593, %v2592
  %v3067 = vpack.c.b16 %v2595, %v2594
  %v3068 = vpack.c.b16 %v2597, %v2596
  %v3069 = vpack.c.b16 %v2599, %v2598
  %v3070 = vpack.c.b16 %v2601, %v2600
  %v3071 = vpack.c.b16 %v2603, %v2602
  %v3072 = vpack.c.b16 %v2605, %v2604
  %v3073 = vpack.c.b16 %v2607, %v2606
  %v3074 = vpack.c.b16 %v2609, %v2608
  %v3075 = vpack.c.b16 %v2611, %v2610
  %v3076 = vpack.c.b16 %v2613, %v2612
  %v3077 = vpack.c.b16 %v2615, %v2614
  %v3078 = vpack.c.b16 %v2617, %v2616
  %v3079 = vpack.c.b16 %v2619, %v2618
  %v3080 = vpack.c.b16 %v2621, %v2620
  %v3081 = vpack.c.b16 %v2623, %v2622
  %v3082 = vpack.c.b16 %v2625, %v2624
  %v3083 = vpack.c.b16 %v2627, %v2626
  %v3084 = vpack.c.b16 %v2629, %v2628
  %v3085 = vpack.c.b16 %v2631, %v2630
  %v3086 = vpack.c.b16 %v2633, %v2632
  %v3087 = vpack.c.b16 %v2635, %v2634
  %v3088 = vpack.c.b16 %v2637, %v2636
  %v3089 = vpack.c.b16 %v2639, %v2638
  %v3090 = vpack.c.b16 %v2641, %v2640
  %v3091 = vpack.c.b16 %v2643, %v2642
  %v3092 = vpack.c.b16 %v2645, %v2644
  %v3093 = vpack.c.b16 %v2647, %v2646
  %v3094 = vpack.c.b16 %v2649, %v2648
  %v3095 = vpack.c.b16 %v2651, %v2650
  %v3096 = vpack.c.b16 %v2653, %v2652
  %v3097 = vpack.c.b16 %v2655, %v2654
  %v3098 = vpack.c.b16 %v2657, %v2656
  %v3099 = vpack.c.b16 %v2659, %v2658
  %v3100 = vpack.c.b16 %v2661, %v2660
  %v3101 = vpack.c.b16 %v2663, %v2662
  %v3102 = vpack.c.b16 %v2665, %v2664
  %v3103 = vpack.c.b16 %v2667, %v2666
  %v3104 = vpack.c.b16 %v2669, %v2668
  %v3105 = vpack.c.b16 %v2671, %v2670
  %v3106 = vpack.c.b16 %v2673, %v2672
  %v3107 = vpack.c.b16 %v2675, %v2674
  %v3108 = vpack.c.b16 %v2677, %v2676
  %v3109 = vpack.c.b16 %v2679, %v2678
  %v3110 = vpack.c.b16 %v2681, %v2680
  %v3111 = vpack.c.b16 %v2683, %v2682
  %v3112 = vpack.c.b16 %v2685, %v2684
  %v3113 = vpack.c.b16 %v2687, %v2686
  %v3114 = vpack.c.b16 %v2689, %v2688
  %v3115 = vpack.c.b16 %v2691, %v2690
  %v3116 = vpack.c.b16 %v2693, %v2692
  %v3117 = vpack.c.b16 %v2695, %v2694
  %v3118 = vpack.c.b16 %v2697, %v2696
  %v3119 = vpack.c.b16 %v2699, %v2698
  %v3120 = vpack.c.b16 %v2701, %v2700
  %v3121 = vpack.c.b16 %v2703, %v2702
  %v3122 = vpack.c.b16 %v2705, %v2704
  %v3123 = vpack.c.b16 %v2707, %v2706
  %v3124 = vpack.c.b16 %v2709, %v2708
  %v3125 = vpack.c.b16 %v2711, %v2710
  %v3126 = vpack.c.b16 %v2713, %v2712
  %v3127 = vpack.c.b16 %v2715, %v2714
  %v3128 = vpack.c.b16 %v2717, %v2716
  %v3129 = vpack.c.b16 %v2719, %v2718
  %v3130 = vpack.c.b16 %v2721, %v2720
  %v3131 = vpack.c.b16 %v2723, %v2722
  %v3132 = vpack.c.b16 %v2725, %v2724
  %v3133 = vpack.c.b16 %v2727, %v2726
  %v3134 = vpack.c.b16 %v2729, %v2728
  %v3135 = vpack.c.b16 %v2731, %v2730
  %v3136 = vpack.c.b16 %v2733, %v2732
  %v3137 = vpack.c.b16 %v2735, %v2734
  %v3138 = vpack.c.b16 %v2737, %v2736
  %v3139 = vpack.c.b16 %v2739, %v2738
  %v3140 = vpack.c.b16 %v2741, %v2740
  %v3141 = vpack.c.b16 %v2743, %v2742
  %v3142 = vpack.c.b16 %v2745, %v2744
  %v3143 = vpack.c.b16 %v2747, %v2746
  %v3144 = vpack.c.b16 %v2749, %v2748
  %v3145 = vpack.c.b16 %v2751, %v2750
  %v3146 = vpack.c.b16 %v2753, %v2752
  %v3147 = vpack.c.b16 %v2755, %v2754
  %3540 = vmatprep.subr.bf16.mxu0 0
  %3541 = vmatpush1.bf16.msra.mxu0 %v2756
  %3542 = vmatprep.subr.bf16.mxu0 0
  %3543 = vmatpush1.bf16.msra.mxu0 %v2757
  %3544 = vmatprep.subr.bf16.mxu0 0
  %3545 = vmatpush1.bf16.msra.mxu0 %v2758
  %3546 = vmatprep.subr.bf16.mxu0 0
  %3547 = vmatpush1.bf16.msra.mxu0 %v2759
  %3548 = vmatprep.subr.bf16.mxu0 0
  %3549 = vmatpush1.bf16.msra.mxu0 %v2760
  %3550 = vmatprep.subr.bf16.mxu0 0
  %3551 = vmatpush1.bf16.msra.mxu0 %v2761
  %3552 = vmatprep.subr.bf16.mxu0 0
  %3553 = vmatpush1.bf16.msra.mxu0 %v2762
  %3554 = vmatprep.subr.bf16.mxu0 0
  %3555 = vmatpush1.bf16.msra.mxu0 %v2763
  %3556 = vmatprep.subr.bf16.mxu0 0
  %3557 = vmatpush1.bf16.msra.mxu0 %v2764
  %3558 = vmatprep.subr.bf16.mxu0 0
  %3559 = vmatpush1.bf16.msra.mxu0 %v2765
  %3560 = vmatprep.subr.bf16.mxu0 0
  %3561 = vmatpush1.bf16.msra.mxu0 %v2766
  %3562 = vmatprep.subr.bf16.mxu0 0
  %3563 = vmatpush1.bf16.msra.mxu0 %v2767
  %3564 = vmatprep.subr.bf16.mxu0 0
  %3565 = vmatpush1.bf16.msra.mxu0 %v2768
  %3566 = vmatprep.subr.bf16.mxu0 0
  %3567 = vmatpush1.bf16.msra.mxu0 %v2769
  %3568 = vmatprep.subr.bf16.mxu0 0
  %3569 = vmatpush1.bf16.msra.mxu0 %v2770
  %3570 = vmatprep.subr.bf16.mxu0 0
  %3571 = vmatpush1.bf16.msra.mxu0 %v2771
  %3572 = vmatprep.mubr.bf16.mxu0 %v868
  %3573 = vmatmul.mubr.bf16.gmra.mrb[0].mxu0 %v854
  %v3574 = vpop.f32.mrb[0].mxu0
  %v3575 = vadd.f32 %v822, %v3574
  %v3576 = vpop.f32.mrb[0].mxu0
  %v3577 = vpop.f32.mrb[0].mxu0
  %v3578 = vpop.f32.mrb[0].mxu0
  %3579 = vdwg.mxu0
  %3580 = vmatprep.subr.bf16.mxu0 0
  %3581 = vmatpush1.bf16.msra.mxu0 %v2772
  %3582 = vmatprep.subr.bf16.mxu0 0
  %3583 = vmatpush1.bf16.msra.mxu0 %v2773
  %3584 = vmatprep.subr.bf16.mxu0 0
  %3585 = vmatpush1.bf16.msra.mxu0 %v2774
  %3586 = vmatprep.subr.bf16.mxu0 0
  %3587 = vmatpush1.bf16.msra.mxu0 %v2775
  %3588 = vmatprep.subr.bf16.mxu0 0
  %3589 = vmatpush1.bf16.msra.mxu0 %v2776
  %3590 = vmatprep.subr.bf16.mxu0 0
  %3591 = vmatpush1.bf16.msra.mxu0 %v2777
  %3592 = vmatprep.subr.bf16.mxu0 0
  %3593 = vmatpush1.bf16.msra.mxu0 %v2778
  %3594 = vmatprep.subr.bf16.mxu0 0
  %3595 = vmatpush1.bf16.msra.mxu0 %v2779
  %3596 = vmatprep.subr.bf16.mxu0 0
  %3597 = vmatpush1.bf16.msra.mxu0 %v2780
  %3598 = vmatprep.subr.bf16.mxu0 0
  %3599 = vmatpush1.bf16.msra.mxu0 %v2781
  %3600 = vmatprep.subr.bf16.mxu0 0
  %3601 = vmatpush1.bf16.msra.mxu0 %v2782
  %3602 = vmatprep.subr.bf16.mxu0 0
  %3603 = vmatpush1.bf16.msra.mxu0 %v2783
  %3604 = vmatprep.subr.bf16.mxu0 0
  %3605 = vmatpush1.bf16.msra.mxu0 %v2784
  %3606 = vmatprep.subr.bf16.mxu0 0
  %3607 = vmatpush1.bf16.msra.mxu0 %v2785
  %3608 = vmatprep.subr.bf16.mxu0 0
  %3609 = vmatpush1.bf16.msra.mxu0 %v2786
  %3610 = vmatprep.subr.bf16.mxu0 0
  %3611 = vmatpush1.bf16.msra.mxu0 %v2787
  %3612 = vmatprep.mubr.bf16.mxu0 %v878
  %3613 = vmatmul.mubr.bf16.gmra.mrb[0].mxu0 %v876
  %v3614 = vpop.f32.mrb[0].mxu0
  %v3615 = vadd.f32 %v3575, %v3614
  %v3616 = vpop.f32.mrb[0].mxu0
  %v3617 = vpop.f32.mrb[0].mxu0
  %v3618 = vpop.f32.mrb[0].mxu0
  %3619 = vdwg.mxu0
  %3620 = vmatprep.subr.bf16.mxu0 0
  %3621 = vmatpush1.bf16.msra.mxu0 %v2788
  %3622 = vmatprep.subr.bf16.mxu0 0
  %3623 = vmatpush1.bf16.msra.mxu0 %v2789
  %3624 = vmatprep.subr.bf16.mxu0 0
  %3625 = vmatpush1.bf16.msra.mxu0 %v2790
  %3626 = vmatprep.subr.bf16.mxu0 0
  %3627 = vmatpush1.bf16.msra.mxu0 %v2791
  %3628 = vmatprep.subr.bf16.mxu0 0
  %3629 = vmatpush1.bf16.msra.mxu0 %v2792
  %3630 = vmatprep.subr.bf16.mxu0 0
  %3631 = vmatpush1.bf16.msra.mxu0 %v2793
  %3632 = vmatprep.subr.bf16.mxu0 0
  %3633 = vmatpush1.bf16.msra.mxu0 %v2794
  %3634 = vmatprep.subr.bf16.mxu0 0
  %3635 = vmatpush1.bf16.msra.mxu0 %v2795
  %3636 = vmatprep.subr.bf16.mxu0 0
  %3637 = vmatpush1.bf16.msra.mxu0 %v2796
  %3638 = vmatprep.subr.bf16.mxu0 0
  %3639 = vmatpush1.bf16.msra.mxu0 %v2797
  %3640 = vmatprep.subr.bf16.mxu0 0
  %3641 = vmatpush1.bf16.msra.mxu0 %v2798
  %3642 = vmatprep.subr.bf16.mxu0 0
  %3643 = vmatpush1.bf16.msra.mxu0 %v2799
  %3644 = vmatprep.subr.bf16.mxu0 0
  %3645 = vmatpush1.bf16.msra.mxu0 %v2800
  %3646 = vmatprep.subr.bf16.mxu0 0
  %3647 = vmatpush1.bf16.msra.mxu0 %v2801
  %3648 = vmatprep.subr.bf16.mxu0 0
  %3649 = vmatpush1.bf16.msra.mxu0 %v2802
  %3650 = vmatprep.subr.bf16.mxu0 0
  %3651 = vmatpush1.bf16.msra.mxu0 %v2803
  %3652 = vmatprep.mubr.bf16.mxu0 %v875
  %3653 = vmatmul.mubr.bf16.gmra.mrb[0].mxu0 %v861
  %v3654 = vpop.f32.mrb[0].mxu0
  %v3655 = vadd.f32 %v3615, %v3654
  %v3656 = vpop.f32.mrb[0].mxu0
  %v3657 = vpop.f32.mrb[0].mxu0
  %v3658 = vpop.f32.mrb[0].mxu0
  %3659 = vdwg.mxu0
  %3660 = vmatprep.subr.bf16.mxu0 0
  %3661 = vmatpush1.bf16.msra.mxu0 %v2804
  %3662 = vmatprep.subr.bf16.mxu0 0
  %3663 = vmatpush1.bf16.msra.mxu0 %v2805
  %3664 = vmatprep.subr.bf16.mxu0 0
  %3665 = vmatpush1.bf16.msra.mxu0 %v2806
  %3666 = vmatprep.subr.bf16.mxu0 0
  %3667 = vmatpush1.bf16.msra.mxu0 %v2807
  %3668 = vmatprep.subr.bf16.mxu0 0
  %3669 = vmatpush1.bf16.msra.mxu0 %v2808
  %3670 = vmatprep.subr.bf16.mxu0 0
  %3671 = vmatpush1.bf16.msra.mxu0 %v2809
  %3672 = vmatprep.subr.bf16.mxu0 0
  %3673 = vmatpush1.bf16.msra.mxu0 %v2810
  %3674 = vmatprep.subr.bf16.mxu0 0
  %3675 = vmatpush1.bf16.msra.mxu0 %v2811
  %3676 = vmatprep.subr.bf16.mxu0 0
  %3677 = vmatpush1.bf16.msra.mxu0 %v2812
  %3678 = vmatprep.subr.bf16.mxu0 0
  %3679 = vmatpush1.bf16.msra.mxu0 %v2813
  %3680 = vmatprep.subr.bf16.mxu0 0
  %3681 = vmatpush1.bf16.msra.mxu0 %v2814
  %3682 = vmatprep.subr.bf16.mxu0 0
  %3683 = vmatpush1.bf16.msra.mxu0 %v2815
  %3684 = vmatprep.subr.bf16.mxu0 0
  %3685 = vmatpush1.bf16.msra.mxu0 %v2816
  %3686 = vmatprep.subr.bf16.mxu0 0
  %3687 = vmatpush1.bf16.msra.mxu0 %v2817
  %3688 = vmatprep.subr.bf16.mxu0 0
  %3689 = vmatpush1.bf16.msra.mxu0 %v2818
  %3690 = vmatprep.subr.bf16.mxu0 0
  %3691 = vmatpush1.bf16.msra.mxu0 %v2819
  %3692 = vmatprep.mubr.bf16.mxu0 %v879
  %3693 = vmatmul.mubr.bf16.gmra.mrb[0].mxu0 %v877
  %v3694 = vpop.f32.mrb[0].mxu0
  %v3695 = vadd.f32 %v3655, %v3694
  %v3696 = vpop.f32.mrb[0].mxu0
  %v3697 = vpop.f32.mrb[0].mxu0
  %v3698 = vpop.f32.mrb[0].mxu0
  %3699 = vdwg.mxu0
  %3700 = vmatprep.subr.bf16.mxu0 0
  %3701 = vmatpush1.bf16.msra.mxu0 %v2820
  %3702 = vmatprep.subr.bf16.mxu0 0
  %3703 = vmatpush1.bf16.msra.mxu0 %v2821
  %3704 = vmatprep.subr.bf16.mxu0 0
  %3705 = vmatpush1.bf16.msra.mxu0 %v2822
  %3706 = vmatprep.subr.bf16.mxu0 0
  %3707 = vmatpush1.bf16.msra.mxu0 %v2823
  %3708 = vmatprep.subr.bf16.mxu0 0
  %3709 = vmatpush1.bf16.msra.mxu0 %v2824
  %3710 = vmatprep.subr.bf16.mxu0 0
  %3711 = vmatpush1.bf16.msra.mxu0 %v2825
  %3712 = vmatprep.subr.bf16.mxu0 0
  %3713 = vmatpush1.bf16.msra.mxu0 %v2826
  %3714 = vmatprep.subr.bf16.mxu0 0
  %3715 = vmatpush1.bf16.msra.mxu0 %v2827
  %3716 = vmatprep.subr.bf16.mxu0 0
  %3717 = vmatpush1.bf16.msra.mxu0 %v2828
  %3718 = vmatprep.subr.bf16.mxu0 0
  %3719 = vmatpush1.bf16.msra.mxu0 %v2829
  %3720 = vmatprep.subr.bf16.mxu0 0
  %3721 = vmatpush1.bf16.msra.mxu0 %v2830
  %3722 = vmatprep.subr.bf16.mxu0 0
  %3723 = vmatpush1.bf16.msra.mxu0 %v2831
  %3724 = vmatprep.subr.bf16.mxu0 0
  %3725 = vmatpush1.bf16.msra.mxu0 %v2832
  %3726 = vmatprep.subr.bf16.mxu0 0
  %3727 = vmatpush1.bf16.msra.mxu0 %v2833
  %3728 = vmatprep.subr.bf16.mxu0 0
  %3729 = vmatpush1.bf16.msra.mxu0 %v2834
  %3730 = vmatprep.subr.bf16.mxu0 0
  %3731 = vmatpush1.bf16.msra.mxu0 %v2835
  %3732 = vmatprep.mubr.bf16.mxu0 %v917
  %3733 = vmatmul.mubr.bf16.gmra.mrb[0].mxu0 %v903
  %v3734 = vpop.f32.mrb[0].mxu0
  %v3735 = vadd.f32 %v3695, %v3734
  %v3736 = vpop.f32.mrb[0].mxu0
  %v3737 = vpop.f32.mrb[0].mxu0
  %v3738 = vpop.f32.mrb[0].mxu0
  %3739 = vdwg.mxu0
  %3740 = vmatprep.subr.bf16.mxu0 0
  %3741 = vmatpush1.bf16.msra.mxu0 %v2836
  %3742 = vmatprep.subr.bf16.mxu0 0
  %3743 = vmatpush1.bf16.msra.mxu0 %v2837
  %3744 = vmatprep.subr.bf16.mxu0 0
  %3745 = vmatpush1.bf16.msra.mxu0 %v2838
  %3746 = vmatprep.subr.bf16.mxu0 0
  %3747 = vmatpush1.bf16.msra.mxu0 %v2839
  %3748 = vmatprep.subr.bf16.mxu0 0
  %3749 = vmatpush1.bf16.msra.mxu0 %v2840
  %3750 = vmatprep.subr.bf16.mxu0 0
  %3751 = vmatpush1.bf16.msra.mxu0 %v2841
  %3752 = vmatprep.subr.bf16.mxu0 0
  %3753 = vmatpush1.bf16.msra.mxu0 %v2842
  %3754 = vmatprep.subr.bf16.mxu0 0
  %3755 = vmatpush1.bf16.msra.mxu0 %v2843
  %3756 = vmatprep.subr.bf16.mxu0 0
  %3757 = vmatpush1.bf16.msra.mxu0 %v2844
  %3758 = vmatprep.subr.bf16.mxu0 0
  %3759 = vmatpush1.bf16.msra.mxu0 %v2845
  %3760 = vmatprep.subr.bf16.mxu0 0
  %3761 = vmatpush1.bf16.msra.mxu0 %v2846
  %3762 = vmatprep.subr.bf16.mxu0 0
  %3763 = vmatpush1.bf16.msra.mxu0 %v2847
  %3764 = vmatprep.subr.bf16.mxu0 0
  %3765 = vmatpush1.bf16.msra.mxu0 %v2848
  %3766 = vmatprep.subr.bf16.mxu0 0
  %3767 = vmatpush1.bf16.msra.mxu0 %v2849
  %3768 = vmatprep.subr.bf16.mxu0 0
  %3769 = vmatpush1.bf16.msra.mxu0 %v2850
  %3770 = vmatprep.subr.bf16.mxu0 0
  %3771 = vmatpush1.bf16.msra.mxu0 %v2851
  %3772 = vmatprep.mubr.bf16.mxu0 %v927
  %3773 = vmatmul.mubr.bf16.gmra.mrb[0].mxu0 %v925
  %v3774 = vpop.f32.mrb[0].mxu0
  %v3775 = vadd.f32 %v3735, %v3774
  %v3776 = vpop.f32.mrb[0].mxu0
  %v3777 = vpop.f32.mrb[0].mxu0
  %v3778 = vpop.f32.mrb[0].mxu0
  %3779 = vdwg.mxu0
  %3780 = vmatprep.subr.bf16.mxu0 0
  %3781 = vmatpush1.bf16.msra.mxu0 %v2852
  %3782 = vmatprep.subr.bf16.mxu0 0
  %3783 = vmatpush1.bf16.msra.mxu0 %v2853
  %3784 = vmatprep.subr.bf16.mxu0 0
  %3785 = vmatpush1.bf16.msra.mxu0 %v2854
  %3786 = vmatprep.subr.bf16.mxu0 0
  %3787 = vmatpush1.bf16.msra.mxu0 %v2855
  %3788 = vmatprep.subr.bf16.mxu0 0
  %3789 = vmatpush1.bf16.msra.mxu0 %v2856
  %3790 = vmatprep.subr.bf16.mxu0 0
  %3791 = vmatpush1.bf16.msra.mxu0 %v2857
  %3792 = vmatprep.subr.bf16.mxu0 0
  %3793 = vmatpush1.bf16.msra.mxu0 %v2858
  %3794 = vmatprep.subr.bf16.mxu0 0
  %3795 = vmatpush1.bf16.msra.mxu0 %v2859
  %3796 = vmatprep.subr.bf16.mxu0 0
  %3797 = vmatpush1.bf16.msra.mxu0 %v2860
  %3798 = vmatprep.subr.bf16.mxu0 0
  %3799 = vmatpush1.bf16.msra.mxu0 %v2861
  %3800 = vmatprep.subr.bf16.mxu0 0
  %3801 = vmatpush1.bf16.msra.mxu0 %v2862
  %3802 = vmatprep.subr.bf16.mxu0 0
  %3803 = vmatpush1.bf16.msra.mxu0 %v2863
  %3804 = vmatprep.subr.bf16.mxu0 0
  %3805 = vmatpush1.bf16.msra.mxu0 %v2864
  %3806 = vmatprep.subr.bf16.mxu0 0
  %3807 = vmatpush1.bf16.msra.mxu0 %v2865
  %3808 = vmatprep.subr.bf16.mxu0 0
  %3809 = vmatpush1.bf16.msra.mxu0 %v2866
  %3810 = vmatprep.subr.bf16.mxu0 0
  %3811 = vmatpush1.bf16.msra.mxu0 %v2867
  %3812 = vmatprep.mubr.bf16.mxu0 %v924
  %3813 = vmatmul.mubr.bf16.gmra.mrb[0].mxu0 %v910
  %v3814 = vpop.f32.mrb[0].mxu0
  %v3815 = vadd.f32 %v3775, %v3814
  %v3816 = vpop.f32.mrb[0].mxu0
  %v3817 = vpop.f32.mrb[0].mxu0
  %v3818 = vpop.f32.mrb[0].mxu0
  %3819 = vdwg.mxu0
  %3820 = vmatprep.subr.bf16.mxu0 0
  %3821 = vmatpush1.bf16.msra.mxu0 %v2868
  %3822 = vmatprep.subr.bf16.mxu0 0
  %3823 = vmatpush1.bf16.msra.mxu0 %v2869
  %3824 = vmatprep.subr.bf16.mxu0 0
  %3825 = vmatpush1.bf16.msra.mxu0 %v2870
  %3826 = vmatprep.subr.bf16.mxu0 0
  %3827 = vmatpush1.bf16.msra.mxu0 %v2871
  %3828 = vmatprep.subr.bf16.mxu0 0
  %3829 = vmatpush1.bf16.msra.mxu0 %v2872
  %3830 = vmatprep.subr.bf16.mxu0 0
  %3831 = vmatpush1.bf16.msra.mxu0 %v2873
  %3832 = vmatprep.subr.bf16.mxu0 0
  %3833 = vmatpush1.bf16.msra.mxu0 %v2874
  %3834 = vmatprep.subr.bf16.mxu0 0
  %3835 = vmatpush1.bf16.msra.mxu0 %v2875
  %3836 = vmatprep.subr.bf16.mxu0 0
  %3837 = vmatpush1.bf16.msra.mxu0 %v2876
  %3838 = vmatprep.subr.bf16.mxu0 0
  %3839 = vmatpush1.bf16.msra.mxu0 %v2877
  %3840 = vmatprep.subr.bf16.mxu0 0
  %3841 = vmatpush1.bf16.msra.mxu0 %v2878
  %3842 = vmatprep.subr.bf16.mxu0 0
  %3843 = vmatpush1.bf16.msra.mxu0 %v2879
  %3844 = vmatprep.subr.bf16.mxu0 0
  %3845 = vmatpush1.bf16.msra.mxu0 %v2880
  %3846 = vmatprep.subr.bf16.mxu0 0
  %3847 = vmatpush1.bf16.msra.mxu0 %v2881
  %3848 = vmatprep.subr.bf16.mxu0 0
  %3849 = vmatpush1.bf16.msra.mxu0 %v2882
  %3850 = vmatprep.subr.bf16.mxu0 0
  %3851 = vmatpush1.bf16.msra.mxu0 %v2883
  %3852 = vmatprep.mubr.bf16.mxu0 %v928
  %3853 = vmatmul.mubr.bf16.gmra.mrb[0].mxu0 %v926
  %v3854 = vpop.f32.mrb[0].mxu0
  %v3855 = vadd.f32 %v3815, %v3854
  %v3856 = vpop.f32.mrb[0].mxu0
  %v3857 = vpop.f32.mrb[0].mxu0
  %v3858 = vpop.f32.mrb[0].mxu0
  %3859 = vdwg.mxu0
  %3860 = vmatprep.subr.bf16.mxu0 0
  %3861 = vmatpush1.bf16.msra.mxu0 %v2884
  %3862 = vmatprep.subr.bf16.mxu0 0
  %3863 = vmatpush1.bf16.msra.mxu0 %v2885
  %3864 = vmatprep.subr.bf16.mxu0 0
  %3865 = vmatpush1.bf16.msra.mxu0 %v2886
  %3866 = vmatprep.subr.bf16.mxu0 0
  %3867 = vmatpush1.bf16.msra.mxu0 %v2887
  %3868 = vmatprep.subr.bf16.mxu0 0
  %3869 = vmatpush1.bf16.msra.mxu0 %v2888
  %3870 = vmatprep.subr.bf16.mxu0 0
  %3871 = vmatpush1.bf16.msra.mxu0 %v2889
  %3872 = vmatprep.subr.bf16.mxu0 0
  %3873 = vmatpush1.bf16.msra.mxu0 %v2890
  %3874 = vmatprep.subr.bf16.mxu0 0
  %3875 = vmatpush1.bf16.msra.mxu0 %v2891
  %3876 = vmatprep.subr.bf16.mxu0 0
  %3877 = vmatpush1.bf16.msra.mxu0 %v2892
  %3878 = vmatprep.subr.bf16.mxu0 0
  %3879 = vmatpush1.bf16.msra.mxu0 %v2893
  %3880 = vmatprep.subr.bf16.mxu0 0
  %3881 = vmatpush1.bf16.msra.mxu0 %v2894
  %3882 = vmatprep.subr.bf16.mxu0 0
  %3883 = vmatpush1.bf16.msra.mxu0 %v2895
  %3884 = vmatprep.subr.bf16.mxu0 0
  %3885 = vmatpush1.bf16.msra.mxu0 %v2896
  %3886 = vmatprep.subr.bf16.mxu0 0
  %3887 = vmatpush1.bf16.msra.mxu0 %v2897
  %3888 = vmatprep.subr.bf16.mxu0 0
  %3889 = vmatpush1.bf16.msra.mxu0 %v2898
  %3890 = vmatprep.subr.bf16.mxu0 0
  %3891 = vmatpush1.bf16.msra.mxu0 %v2899
  %3892 = vmatprep.mubr.bf16.mxu0 %v966
  %3893 = vmatmul.mubr.bf16.gmra.mrb[0].mxu0 %v952
  %v3894 = vpop.f32.mrb[0].mxu0
  %v3895 = vadd.f32 %v3855, %v3894
  %v3896 = vpop.f32.mrb[0].mxu0
  %v3897 = vpop.f32.mrb[0].mxu0
  %v3898 = vpop.f32.mrb[0].mxu0
  %3899 = vdwg.mxu0
  %3900 = vmatprep.subr.bf16.mxu0 0
  %3901 = vmatpush1.bf16.msra.mxu0 %v2900
  %3902 = vmatprep.subr.bf16.mxu0 0
  %3903 = vmatpush1.bf16.msra.mxu0 %v2901
  %3904 = vmatprep.subr.bf16.mxu0 0
  %3905 = vmatpush1.bf16.msra.mxu0 %v2902
  %3906 = vmatprep.subr.bf16.mxu0 0
  %3907 = vmatpush1.bf16.msra.mxu0 %v2903
  %3908 = vmatprep.subr.bf16.mxu0 0
  %3909 = vmatpush1.bf16.msra.mxu0 %v2904
  %3910 = vmatprep.subr.bf16.mxu0 0
  %3911 = vmatpush1.bf16.msra.mxu0 %v2905
  %3912 = vmatprep.subr.bf16.mxu0 0
  %3913 = vmatpush1.bf16.msra.mxu0 %v2906
  %3914 = vmatprep.subr.bf16.mxu0 0
  %3915 = vmatpush1.bf16.msra.mxu0 %v2907
  %3916 = vmatprep.subr.bf16.mxu0 0
  %3917 = vmatpush1.bf16.msra.mxu0 %v2908
  %3918 = vmatprep.subr.bf16.mxu0 0
  %3919 = vmatpush1.bf16.msra.mxu0 %v2909
  %3920 = vmatprep.subr.bf16.mxu0 0
  %3921 = vmatpush1.bf16.msra.mxu0 %v2910
  %3922 = vmatprep.subr.bf16.mxu0 0
  %3923 = vmatpush1.bf16.msra.mxu0 %v2911
  %3924 = vmatprep.subr.bf16.mxu0 0
  %3925 = vmatpush1.bf16.msra.mxu0 %v2912
  %3926 = vmatprep.subr.bf16.mxu0 0
  %3927 = vmatpush1.bf16.msra.mxu0 %v2913
  %3928 = vmatprep.subr.bf16.mxu0 0
  %3929 = vmatpush1.bf16.msra.mxu0 %v2914
  %3930 = vmatprep.subr.bf16.mxu0 0
  %3931 = vmatpush1.bf16.msra.mxu0 %v2915
  %3932 = vmatprep.mubr.bf16.mxu0 %v976
  %3933 = vmatmul.mubr.bf16.gmra.mrb[0].mxu0 %v974
  %v3934 = vpop.f32.mrb[0].mxu0
  %v3935 = vadd.f32 %v3895, %v3934
  %v3936 = vpop.f32.mrb[0].mxu0
  %v3937 = vpop.f32.mrb[0].mxu0
  %v3938 = vpop.f32.mrb[0].mxu0
  %3939 = vdwg.mxu0
  %3940 = vmatprep.subr.bf16.mxu0 0
  %3941 = vmatpush1.bf16.msra.mxu0 %v2916
  %3942 = vmatprep.subr.bf16.mxu0 0
  %3943 = vmatpush1.bf16.msra.mxu0 %v2917
  %3944 = vmatprep.subr.bf16.mxu0 0
  %3945 = vmatpush1.bf16.msra.mxu0 %v2918
  %3946 = vmatprep.subr.bf16.mxu0 0
  %3947 = vmatpush1.bf16.msra.mxu0 %v2919
  %3948 = vmatprep.subr.bf16.mxu0 0
  %3949 = vmatpush1.bf16.msra.mxu0 %v2920
  %3950 = vmatprep.subr.bf16.mxu0 0
  %3951 = vmatpush1.bf16.msra.mxu0 %v2921
  %3952 = vmatprep.subr.bf16.mxu0 0
  %3953 = vmatpush1.bf16.msra.mxu0 %v2922
  %3954 = vmatprep.subr.bf16.mxu0 0
  %3955 = vmatpush1.bf16.msra.mxu0 %v2923
  %3956 = vmatprep.subr.bf16.mxu0 0
  %3957 = vmatpush1.bf16.msra.mxu0 %v2924
  %3958 = vmatprep.subr.bf16.mxu0 0
  %3959 = vmatpush1.bf16.msra.mxu0 %v2925
  %3960 = vmatprep.subr.bf16.mxu0 0
  %3961 = vmatpush1.bf16.msra.mxu0 %v2926
  %3962 = vmatprep.subr.bf16.mxu0 0
  %3963 = vmatpush1.bf16.msra.mxu0 %v2927
  %3964 = vmatprep.subr.bf16.mxu0 0
  %3965 = vmatpush1.bf16.msra.mxu0 %v2928
  %3966 = vmatprep.subr.bf16.mxu0 0
  %3967 = vmatpush1.bf16.msra.mxu0 %v2929
  %3968 = vmatprep.subr.bf16.mxu0 0
  %3969 = vmatpush1.bf16.msra.mxu0 %v2930
  %3970 = vmatprep.subr.bf16.mxu0 0
  %3971 = vmatpush1.bf16.msra.mxu0 %v2931
  %3972 = vmatprep.mubr.bf16.mxu0 %v973
  %3973 = vmatmul.mubr.bf16.gmra.mrb[0].mxu0 %v959
  %v3974 = vpop.f32.mrb[0].mxu0
  %v3975 = vadd.f32 %v3935, %v3974
  %v3976 = vpop.f32.mrb[0].mxu0
  %v3977 = vpop.f32.mrb[0].mxu0
  %v3978 = vpop.f32.mrb[0].mxu0
  %3979 = vdwg.mxu0
  %3980 = vmatprep.subr.bf16.mxu0 0
  %3981 = vmatpush1.bf16.msra.mxu0 %v2932
  %3982 = vmatprep.subr.bf16.mxu0 0
  %3983 = vmatpush1.bf16.msra.mxu0 %v2933
  %3984 = vmatprep.subr.bf16.mxu0 0
  %3985 = vmatpush1.bf16.msra.mxu0 %v2934
  %3986 = vmatprep.subr.bf16.mxu0 0
  %3987 = vmatpush1.bf16.msra.mxu0 %v2935
  %3988 = vmatprep.subr.bf16.mxu0 0
  %3989 = vmatpush1.bf16.msra.mxu0 %v2936
  %3990 = vmatprep.subr.bf16.mxu0 0
  %3991 = vmatpush1.bf16.msra.mxu0 %v2937
  %3992 = vmatprep.subr.bf16.mxu0 0
  %3993 = vmatpush1.bf16.msra.mxu0 %v2938
  %3994 = vmatprep.subr.bf16.mxu0 0
  %3995 = vmatpush1.bf16.msra.mxu0 %v2939
  %3996 = vmatprep.subr.bf16.mxu0 0
  %3997 = vmatpush1.bf16.msra.mxu0 %v2940
  %3998 = vmatprep.subr.bf16.mxu0 0
  %3999 = vmatpush1.bf16.msra.mxu0 %v2941
  %4000 = vmatprep.subr.bf16.mxu0 0
  %4001 = vmatpush1.bf16.msra.mxu0 %v2942
  %4002 = vmatprep.subr.bf16.mxu0 0
  %4003 = vmatpush1.bf16.msra.mxu0 %v2943
  %4004 = vmatprep.subr.bf16.mxu0 0
  %4005 = vmatpush1.bf16.msra.mxu0 %v2944
  %4006 = vmatprep.subr.bf16.mxu0 0
  %4007 = vmatpush1.bf16.msra.mxu0 %v2945
  %4008 = vmatprep.subr.bf16.mxu0 0
  %4009 = vmatpush1.bf16.msra.mxu0 %v2946
  %4010 = vmatprep.subr.bf16.mxu0 0
  %4011 = vmatpush1.bf16.msra.mxu0 %v2947
  %4012 = vmatprep.mubr.bf16.mxu0 %v977
  %4013 = vmatmul.mubr.bf16.gmra.mrb[0].mxu0 %v975
  %v4014 = vpop.f32.mrb[0].mxu0
  %v4015 = vadd.f32 %v3975, %v4014
  %v4016 = vpop.f32.mrb[0].mxu0
  %v4017 = vpop.f32.mrb[0].mxu0
  %v4018 = vpop.f32.mrb[0].mxu0
  %4019 = vdwg.mxu0
  %4020 = vmatprep.subr.bf16.mxu0 0
  %4021 = vmatpush1.bf16.msra.mxu0 %v2948
  %4022 = vmatprep.subr.bf16.mxu0 0
  %4023 = vmatpush1.bf16.msra.mxu0 %v2949
  %4024 = vmatprep.subr.bf16.mxu0 0
  %4025 = vmatpush1.bf16.msra.mxu0 %v2950
  %4026 = vmatprep.subr.bf16.mxu0 0
  %4027 = vmatpush1.bf16.msra.mxu0 %v2951
  %4028 = vmatprep.subr.bf16.mxu0 0
  %4029 = vmatpush1.bf16.msra.mxu0 %v2952
  %4030 = vmatprep.subr.bf16.mxu0 0
  %4031 = vmatpush1.bf16.msra.mxu0 %v2953
  %4032 = vmatprep.subr.bf16.mxu0 0
  %4033 = vmatpush1.bf16.msra.mxu0 %v2954
  %4034 = vmatprep.subr.bf16.mxu0 0
  %4035 = vmatpush1.bf16.msra.mxu0 %v2955
  %4036 = vmatprep.subr.bf16.mxu0 0
  %4037 = vmatpush1.bf16.msra.mxu0 %v2956
  %4038 = vmatprep.subr.bf16.mxu0 0
  %4039 = vmatpush1.bf16.msra.mxu0 %v2957
  %4040 = vmatprep.subr.bf16.mxu0 0
  %4041 = vmatpush1.bf16.msra.mxu0 %v2958
  %4042 = vmatprep.subr.bf16.mxu0 0
  %4043 = vmatpush1.bf16.msra.mxu0 %v2959
  %4044 = vmatprep.subr.bf16.mxu0 0
  %4045 = vmatpush1.bf16.msra.mxu0 %v2960
  %4046 = vmatprep.subr.bf16.mxu0 0
  %4047 = vmatpush1.bf16.msra.mxu0 %v2961
  %4048 = vmatprep.subr.bf16.mxu0 0
  %4049 = vmatpush1.bf16.msra.mxu0 %v2962
  %4050 = vmatprep.subr.bf16.mxu0 0
  %4051 = vmatpush1.bf16.msra.mxu0 %v2963
  %4052 = vmatprep.mubr.bf16.mxu0 %v1015
  %4053 = vmatmul.mubr.bf16.gmra.mrb[0].mxu0 %v1001
  %v4054 = vpop.f32.mrb[0].mxu0
  %v4055 = vadd.f32 %v4015, %v4054
  %v4056 = vpop.f32.mrb[0].mxu0
  %v4057 = vpop.f32.mrb[0].mxu0
  %v4058 = vpop.f32.mrb[0].mxu0
  %4059 = vdwg.mxu0
  %4060 = vmatprep.subr.bf16.mxu0 0
  %4061 = vmatpush1.bf16.msra.mxu0 %v2964
  %4062 = vmatprep.subr.bf16.mxu0 0
  %4063 = vmatpush1.bf16.msra.mxu0 %v2965
  %4064 = vmatprep.subr.bf16.mxu0 0
  %4065 = vmatpush1.bf16.msra.mxu0 %v2966
  %4066 = vmatprep.subr.bf16.mxu0 0
  %4067 = vmatpush1.bf16.msra.mxu0 %v2967
  %4068 = vmatprep.subr.bf16.mxu0 0
  %4069 = vmatpush1.bf16.msra.mxu0 %v2968
  %4070 = vmatprep.subr.bf16.mxu0 0
  %4071 = vmatpush1.bf16.msra.mxu0 %v2969
  %4072 = vmatprep.subr.bf16.mxu0 0
  %4073 = vmatpush1.bf16.msra.mxu0 %v2970
  %4074 = vmatprep.subr.bf16.mxu0 0
  %4075 = vmatpush1.bf16.msra.mxu0 %v2971
  %4076 = vmatprep.subr.bf16.mxu0 0
  %4077 = vmatpush1.bf16.msra.mxu0 %v2972
  %4078 = vmatprep.subr.bf16.mxu0 0
  %4079 = vmatpush1.bf16.msra.mxu0 %v2973
  %4080 = vmatprep.subr.bf16.mxu0 0
  %4081 = vmatpush1.bf16.msra.mxu0 %v2974
  %4082 = vmatprep.subr.bf16.mxu0 0
  %4083 = vmatpush1.bf16.msra.mxu0 %v2975
  %4084 = vmatprep.subr.bf16.mxu0 0
  %4085 = vmatpush1.bf16.msra.mxu0 %v2976
  %4086 = vmatprep.subr.bf16.mxu0 0
  %4087 = vmatpush1.bf16.msra.mxu0 %v2977
  %4088 = vmatprep.subr.bf16.mxu0 0
  %4089 = vmatpush1.bf16.msra.mxu0 %v2978
  %4090 = vmatprep.subr.bf16.mxu0 0
  %4091 = vmatpush1.bf16.msra.mxu0 %v2979
  %4092 = vmatprep.mubr.bf16.mxu0 %v1025
  %4093 = vmatmul.mubr.bf16.gmra.mrb[0].mxu0 %v1023
  %v4094 = vpop.f32.mrb[0].mxu0
  %v4095 = vadd.f32 %v4055, %v4094
  %v4096 = vpop.f32.mrb[0].mxu0
  %v4097 = vpop.f32.mrb[0].mxu0
  %v4098 = vpop.f32.mrb[0].mxu0
  %4099 = vdwg.mxu0
  %4100 = vmatprep.subr.bf16.mxu0 0
  %4101 = vmatpush1.bf16.msra.mxu0 %v2980
  %4102 = vmatprep.subr.bf16.mxu0 0
  %4103 = vmatpush1.bf16.msra.mxu0 %v2981
  %4104 = vmatprep.subr.bf16.mxu0 0
  %4105 = vmatpush1.bf16.msra.mxu0 %v2982
  %4106 = vmatprep.subr.bf16.mxu0 0
  %4107 = vmatpush1.bf16.msra.mxu0 %v2983
  %4108 = vmatprep.subr.bf16.mxu0 0
  %4109 = vmatpush1.bf16.msra.mxu0 %v2984
  %4110 = vmatprep.subr.bf16.mxu0 0
  %4111 = vmatpush1.bf16.msra.mxu0 %v2985
  %4112 = vmatprep.subr.bf16.mxu0 0
  %4113 = vmatpush1.bf16.msra.mxu0 %v2986
  %4114 = vmatprep.subr.bf16.mxu0 0
  %4115 = vmatpush1.bf16.msra.mxu0 %v2987
  %4116 = vmatprep.subr.bf16.mxu0 0
  %4117 = vmatpush1.bf16.msra.mxu0 %v2988
  %4118 = vmatprep.subr.bf16.mxu0 0
  %4119 = vmatpush1.bf16.msra.mxu0 %v2989
  %4120 = vmatprep.subr.bf16.mxu0 0
  %4121 = vmatpush1.bf16.msra.mxu0 %v2990
  %4122 = vmatprep.subr.bf16.mxu0 0
  %4123 = vmatpush1.bf16.msra.mxu0 %v2991
  %4124 = vmatprep.subr.bf16.mxu0 0
  %4125 = vmatpush1.bf16.msra.mxu0 %v2992
  %4126 = vmatprep.subr.bf16.mxu0 0
  %4127 = vmatpush1.bf16.msra.mxu0 %v2993
  %4128 = vmatprep.subr.bf16.mxu0 0
  %4129 = vmatpush1.bf16.msra.mxu0 %v2994
  %4130 = vmatprep.subr.bf16.mxu0 0
  %4131 = vmatpush1.bf16.msra.mxu0 %v2995
  %4132 = vmatprep.mubr.bf16.mxu0 %v1022
  %4133 = vmatmul.mubr.bf16.gmra.mrb[0].mxu0 %v1008
  %v4134 = vpop.f32.mrb[0].mxu0
  %v4135 = vadd.f32 %v4095, %v4134
  %v4136 = vpop.f32.mrb[0].mxu0
  %v4137 = vpop.f32.mrb[0].mxu0
  %v4138 = vpop.f32.mrb[0].mxu0
  %4139 = vdwg.mxu0
  %4140 = vmatprep.subr.bf16.mxu0 0
  %4141 = vmatpush1.bf16.msra.mxu0 %v2996
  %4142 = vmatprep.subr.bf16.mxu0 0
  %4143 = vmatpush1.bf16.msra.mxu0 %v2997
  %4144 = vmatprep.subr.bf16.mxu0 0
  %4145 = vmatpush1.bf16.msra.mxu0 %v2998
  %4146 = vmatprep.subr.bf16.mxu0 0
  %4147 = vmatpush1.bf16.msra.mxu0 %v2999
  %4148 = vmatprep.subr.bf16.mxu0 0
  %4149 = vmatpush1.bf16.msra.mxu0 %v3000
  %4150 = vmatprep.subr.bf16.mxu0 0
  %4151 = vmatpush1.bf16.msra.mxu0 %v3001
  %4152 = vmatprep.subr.bf16.mxu0 0
  %4153 = vmatpush1.bf16.msra.mxu0 %v3002
  %4154 = vmatprep.subr.bf16.mxu0 0
  %4155 = vmatpush1.bf16.msra.mxu0 %v3003
  %4156 = vmatprep.subr.bf16.mxu0 0
  %4157 = vmatpush1.bf16.msra.mxu0 %v3004
  %4158 = vmatprep.subr.bf16.mxu0 0
  %4159 = vmatpush1.bf16.msra.mxu0 %v3005
  %4160 = vmatprep.subr.bf16.mxu0 0
  %4161 = vmatpush1.bf16.msra.mxu0 %v3006
  %4162 = vmatprep.subr.bf16.mxu0 0
  %4163 = vmatpush1.bf16.msra.mxu0 %v3007
  %4164 = vmatprep.subr.bf16.mxu0 0
  %4165 = vmatpush1.bf16.msra.mxu0 %v3008
  %4166 = vmatprep.subr.bf16.mxu0 0
  %4167 = vmatpush1.bf16.msra.mxu0 %v3009
  %4168 = vmatprep.subr.bf16.mxu0 0
  %4169 = vmatpush1.bf16.msra.mxu0 %v3010
  %4170 = vmatprep.subr.bf16.mxu0 0
  %4171 = vmatpush1.bf16.msra.mxu0 %v3011
  %4172 = vmatprep.mubr.bf16.mxu0 %v1026
  %4173 = vmatmul.mubr.bf16.gmra.mrb[0].mxu0 %v1024
  %v4174 = vpop.f32.mrb[0].mxu0
  %v4175 = vadd.f32 %v4135, %v4174
  %v4176 = vpop.f32.mrb[0].mxu0
  %v4177 = vpop.f32.mrb[0].mxu0
  %v4178 = vpop.f32.mrb[0].mxu0
  %4179 = vdwg.mxu0
  %4180 = vmatprep.subr.bf16.mxu0 0
  %4181 = vmatpush1.bf16.msra.mxu0 %v3012
  %4182 = vmatprep.subr.bf16.mxu0 0
  %4183 = vmatpush1.bf16.msra.mxu0 %v3013
  %4184 = vmatprep.subr.bf16.mxu0 0
  %4185 = vmatpush1.bf16.msra.mxu0 %v3014
  %4186 = vmatprep.subr.bf16.mxu0 0
  %4187 = vmatpush1.bf16.msra.mxu0 %v3015
  %4188 = vmatprep.subr.bf16.mxu0 0
  %4189 = vmatpush1.bf16.msra.mxu0 %v3016
  %4190 = vmatprep.subr.bf16.mxu0 0
  %4191 = vmatpush1.bf16.msra.mxu0 %v3017
  %4192 = vmatprep.subr.bf16.mxu0 0
  %4193 = vmatpush1.bf16.msra.mxu0 %v3018
  %4194 = vmatprep.subr.bf16.mxu0 0
  %4195 = vmatpush1.bf16.msra.mxu0 %v3019
  %4196 = vmatprep.subr.bf16.mxu0 0
  %4197 = vmatpush1.bf16.msra.mxu0 %v3020
  %4198 = vmatprep.subr.bf16.mxu0 0
  %4199 = vmatpush1.bf16.msra.mxu0 %v3021
  %4200 = vmatprep.subr.bf16.mxu0 0
  %4201 = vmatpush1.bf16.msra.mxu0 %v3022
  %4202 = vmatprep.subr.bf16.mxu0 0
  %4203 = vmatpush1.bf16.msra.mxu0 %v3023
  %4204 = vmatprep.subr.bf16.mxu0 0
  %4205 = vmatpush1.bf16.msra.mxu0 %v3024
  %4206 = vmatprep.subr.bf16.mxu0 0
  %4207 = vmatpush1.bf16.msra.mxu0 %v3025
  %4208 = vmatprep.subr.bf16.mxu0 0
  %4209 = vmatpush1.bf16.msra.mxu0 %v3026
  %4210 = vmatprep.subr.bf16.mxu0 0
  %4211 = vmatpush1.bf16.msra.mxu0 %v3027
  %4212 = vmatprep.mubr.bf16.mxu0 %v1064
  %4213 = vmatmul.mubr.bf16.gmra.mrb[0].mxu0 %v1050
  %v4214 = vpop.f32.mrb[0].mxu0
  %v4215 = vadd.f32 %v4175, %v4214
  %v4216 = vpop.f32.mrb[0].mxu0
  %v4217 = vpop.f32.mrb[0].mxu0
  %v4218 = vpop.f32.mrb[0].mxu0
  %4219 = vdwg.mxu0
  %4220 = vmatprep.subr.bf16.mxu0 0
  %4221 = vmatpush1.bf16.msra.mxu0 %v3028
  %4222 = vmatprep.subr.bf16.mxu0 0
  %4223 = vmatpush1.bf16.msra.mxu0 %v3029
  %4224 = vmatprep.subr.bf16.mxu0 0
  %4225 = vmatpush1.bf16.msra.mxu0 %v3030
  %4226 = vmatprep.subr.bf16.mxu0 0
  %4227 = vmatpush1.bf16.msra.mxu0 %v3031
  %4228 = vmatprep.subr.bf16.mxu0 0
  %4229 = vmatpush1.bf16.msra.mxu0 %v3032
  %4230 = vmatprep.subr.bf16.mxu0 0
  %4231 = vmatpush1.bf16.msra.mxu0 %v3033
  %4232 = vmatprep.subr.bf16.mxu0 0
  %4233 = vmatpush1.bf16.msra.mxu0 %v3034
  %4234 = vmatprep.subr.bf16.mxu0 0
  %4235 = vmatpush1.bf16.msra.mxu0 %v3035
  %4236 = vmatprep.subr.bf16.mxu0 0
  %4237 = vmatpush1.bf16.msra.mxu0 %v3036
  %4238 = vmatprep.subr.bf16.mxu0 0
  %4239 = vmatpush1.bf16.msra.mxu0 %v3037
  %4240 = vmatprep.subr.bf16.mxu0 0
  %4241 = vmatpush1.bf16.msra.mxu0 %v3038
  %4242 = vmatprep.subr.bf16.mxu0 0
  %4243 = vmatpush1.bf16.msra.mxu0 %v3039
  %4244 = vmatprep.subr.bf16.mxu0 0
  %4245 = vmatpush1.bf16.msra.mxu0 %v3040
  %4246 = vmatprep.subr.bf16.mxu0 0
  %4247 = vmatpush1.bf16.msra.mxu0 %v3041
  %4248 = vmatprep.subr.bf16.mxu0 0
  %4249 = vmatpush1.bf16.msra.mxu0 %v3042
  %4250 = vmatprep.subr.bf16.mxu0 0
  %4251 = vmatpush1.bf16.msra.mxu0 %v3043
  %4252 = vmatprep.mubr.bf16.mxu0 %v1074
  %4253 = vmatmul.mubr.bf16.gmra.mrb[0].mxu0 %v1072
  %v4254 = vpop.f32.mrb[0].mxu0
  %v4255 = vadd.f32 %v4215, %v4254
  %v4256 = vpop.f32.mrb[0].mxu0
  %v4257 = vpop.f32.mrb[0].mxu0
  %v4258 = vpop.f32.mrb[0].mxu0
  %4259 = vdwg.mxu0
  %4260 = vmatprep.subr.bf16.mxu0 0
  %4261 = vmatpush1.bf16.msra.mxu0 %v3044
  %4262 = vmatprep.subr.bf16.mxu0 0
  %4263 = vmatpush1.bf16.msra.mxu0 %v3045
  %4264 = vmatprep.subr.bf16.mxu0 0
  %4265 = vmatpush1.bf16.msra.mxu0 %v3046
  %4266 = vmatprep.subr.bf16.mxu0 0
  %4267 = vmatpush1.bf16.msra.mxu0 %v3047
  %4268 = vmatprep.subr.bf16.mxu0 0
  %4269 = vmatpush1.bf16.msra.mxu0 %v3048
  %4270 = vmatprep.subr.bf16.mxu0 0
  %4271 = vmatpush1.bf16.msra.mxu0 %v3049
  %4272 = vmatprep.subr.bf16.mxu0 0
  %4273 = vmatpush1.bf16.msra.mxu0 %v3050
  %4274 = vmatprep.subr.bf16.mxu0 0
  %4275 = vmatpush1.bf16.msra.mxu0 %v3051
  %4276 = vmatprep.subr.bf16.mxu0 0
  %4277 = vmatpush1.bf16.msra.mxu0 %v3052
  %4278 = vmatprep.subr.bf16.mxu0 0
  %4279 = vmatpush1.bf16.msra.mxu0 %v3053
  %4280 = vmatprep.subr.bf16.mxu0 0
  %4281 = vmatpush1.bf16.msra.mxu0 %v3054
  %4282 = vmatprep.subr.bf16.mxu0 0
  %4283 = vmatpush1.bf16.msra.mxu0 %v3055
  %4284 = vmatprep.subr.bf16.mxu0 0
  %4285 = vmatpush1.bf16.msra.mxu0 %v3056
  %4286 = vmatprep.subr.bf16.mxu0 0
  %4287 = vmatpush1.bf16.msra.mxu0 %v3057
  %4288 = vmatprep.subr.bf16.mxu0 0
  %4289 = vmatpush1.bf16.msra.mxu0 %v3058
  %4290 = vmatprep.subr.bf16.mxu0 0
  %4291 = vmatpush1.bf16.msra.mxu0 %v3059
  %4292 = vmatprep.mubr.bf16.mxu0 %v1071
  %4293 = vmatmul.mubr.bf16.gmra.mrb[0].mxu0 %v1057
  %v4294 = vpop.f32.mrb[0].mxu0
  %v4295 = vadd.f32 %v4255, %v4294
  %v4296 = vpop.f32.mrb[0].mxu0
  %v4297 = vpop.f32.mrb[0].mxu0
  %v4298 = vpop.f32.mrb[0].mxu0
  %4299 = vdwg.mxu0
  %4300 = vmatprep.subr.bf16.mxu0 0
  %4301 = vmatpush1.bf16.msra.mxu0 %v3060
  %4302 = vmatprep.subr.bf16.mxu0 0
  %4303 = vmatpush1.bf16.msra.mxu0 %v3061
  %4304 = vmatprep.subr.bf16.mxu0 0
  %4305 = vmatpush1.bf16.msra.mxu0 %v3062
  %4306 = vmatprep.subr.bf16.mxu0 0
  %4307 = vmatpush1.bf16.msra.mxu0 %v3063
  %4308 = vmatprep.subr.bf16.mxu0 0
  %4309 = vmatpush1.bf16.msra.mxu0 %v3064
  %4310 = vmatprep.subr.bf16.mxu0 0
  %4311 = vmatpush1.bf16.msra.mxu0 %v3065
  %4312 = vmatprep.subr.bf16.mxu0 0
  %4313 = vmatpush1.bf16.msra.mxu0 %v3066
  %4314 = vmatprep.subr.bf16.mxu0 0
  %4315 = vmatpush1.bf16.msra.mxu0 %v3067
  %4316 = vmatprep.subr.bf16.mxu0 0
  %4317 = vmatpush1.bf16.msra.mxu0 %v3068
  %4318 = vmatprep.subr.bf16.mxu0 0
  %4319 = vmatpush1.bf16.msra.mxu0 %v3069
  %4320 = vmatprep.subr.bf16.mxu0 0
  %4321 = vmatpush1.bf16.msra.mxu0 %v3070
  %4322 = vmatprep.subr.bf16.mxu0 0
  %4323 = vmatpush1.bf16.msra.mxu0 %v3071
  %4324 = vmatprep.subr.bf16.mxu0 0
  %4325 = vmatpush1.bf16.msra.mxu0 %v3072
  %4326 = vmatprep.subr.bf16.mxu0 0
  %4327 = vmatpush1.bf16.msra.mxu0 %v3073
  %4328 = vmatprep.subr.bf16.mxu0 0
  %4329 = vmatpush1.bf16.msra.mxu0 %v3074
  %4330 = vmatprep.subr.bf16.mxu0 0
  %4331 = vmatpush1.bf16.msra.mxu0 %v3075
  %4332 = vmatprep.mubr.bf16.mxu0 %v1075
  %4333 = vmatmul.mubr.bf16.gmra.mrb[0].mxu0 %v1073
  %v4334 = vpop.f32.mrb[0].mxu0
  %v4335 = vadd.f32 %v4295, %v4334
  %v4336 = vpop.f32.mrb[0].mxu0
  %v4337 = vpop.f32.mrb[0].mxu0
  %v4338 = vpop.f32.mrb[0].mxu0
  %4339 = vdwg.mxu0
  %4340 = vmatprep.subr.bf16.mxu0 0
  %4341 = vmatpush1.bf16.msra.mxu0 %v3076
  %4342 = vmatprep.subr.bf16.mxu0 0
  %4343 = vmatpush1.bf16.msra.mxu0 %v3077
  %4344 = vmatprep.subr.bf16.mxu0 0
  %4345 = vmatpush1.bf16.msra.mxu0 %v3078
  %4346 = vmatprep.subr.bf16.mxu0 0
  %4347 = vmatpush1.bf16.msra.mxu0 %v3079
  %4348 = vmatprep.subr.bf16.mxu0 0
  %4349 = vmatpush1.bf16.msra.mxu0 %v3080
  %4350 = vmatprep.subr.bf16.mxu0 0
  %4351 = vmatpush1.bf16.msra.mxu0 %v3081
  %4352 = vmatprep.subr.bf16.mxu0 0
  %4353 = vmatpush1.bf16.msra.mxu0 %v3082
  %4354 = vmatprep.subr.bf16.mxu0 0
  %4355 = vmatpush1.bf16.msra.mxu0 %v3083
  %4356 = vmatprep.subr.bf16.mxu0 0
  %4357 = vmatpush1.bf16.msra.mxu0 %v3084
  %4358 = vmatprep.subr.bf16.mxu0 0
  %4359 = vmatpush1.bf16.msra.mxu0 %v3085
  %4360 = vmatprep.subr.bf16.mxu0 0
  %4361 = vmatpush1.bf16.msra.mxu0 %v3086
  %4362 = vmatprep.subr.bf16.mxu0 0
  %4363 = vmatpush1.bf16.msra.mxu0 %v3087
  %4364 = vmatprep.subr.bf16.mxu0 0
  %4365 = vmatpush1.bf16.msra.mxu0 %v3088
  %4366 = vmatprep.subr.bf16.mxu0 0
  %4367 = vmatpush1.bf16.msra.mxu0 %v3089
  %4368 = vmatprep.subr.bf16.mxu0 0
  %4369 = vmatpush1.bf16.msra.mxu0 %v3090
  %4370 = vmatprep.subr.bf16.mxu0 0
  %4371 = vmatpush1.bf16.msra.mxu0 %v3091
  %4372 = vmatprep.mubr.bf16.mxu0 %v1113
  %4373 = vmatmul.mubr.bf16.gmra.mrb[0].mxu0 %v1099
  %v4374 = vpop.f32.mrb[0].mxu0
  %v4375 = vadd.f32 %v4335, %v4374
  %v4376 = vpop.f32.mrb[0].mxu0
  %v4377 = vpop.f32.mrb[0].mxu0
  %v4378 = vpop.f32.mrb[0].mxu0
  %4379 = vdwg.mxu0
  %4380 = vmatprep.subr.bf16.mxu0 0
  %4381 = vmatpush1.bf16.msra.mxu0 %v3092
  %4382 = vmatprep.subr.bf16.mxu0 0
  %4383 = vmatpush1.bf16.msra.mxu0 %v3093
  %4384 = vmatprep.subr.bf16.mxu0 0
  %4385 = vmatpush1.bf16.msra.mxu0 %v3094
  %4386 = vmatprep.subr.bf16.mxu0 0
  %4387 = vmatpush1.bf16.msra.mxu0 %v3095
  %4388 = vmatprep.subr.bf16.mxu0 0
  %4389 = vmatpush1.bf16.msra.mxu0 %v3096
  %4390 = vmatprep.subr.bf16.mxu0 0
  %4391 = vmatpush1.bf16.msra.mxu0 %v3097
  %4392 = vmatprep.subr.bf16.mxu0 0
  %4393 = vmatpush1.bf16.msra.mxu0 %v3098
  %4394 = vmatprep.subr.bf16.mxu0 0
  %4395 = vmatpush1.bf16.msra.mxu0 %v3099
  %4396 = vmatprep.subr.bf16.mxu0 0
  %4397 = vmatpush1.bf16.msra.mxu0 %v3100
  %4398 = vmatprep.subr.bf16.mxu0 0
  %4399 = vmatpush1.bf16.msra.mxu0 %v3101
  %4400 = vmatprep.subr.bf16.mxu0 0
  %4401 = vmatpush1.bf16.msra.mxu0 %v3102
  %4402 = vmatprep.subr.bf16.mxu0 0
  %4403 = vmatpush1.bf16.msra.mxu0 %v3103
  %4404 = vmatprep.subr.bf16.mxu0 0
  %4405 = vmatpush1.bf16.msra.mxu0 %v3104
  %4406 = vmatprep.subr.bf16.mxu0 0
  %4407 = vmatpush1.bf16.msra.mxu0 %v3105
  %4408 = vmatprep.subr.bf16.mxu0 0
  %4409 = vmatpush1.bf16.msra.mxu0 %v3106
  %4410 = vmatprep.subr.bf16.mxu0 0
  %4411 = vmatpush1.bf16.msra.mxu0 %v3107
  %4412 = vmatprep.mubr.bf16.mxu0 %v1123
  %4413 = vmatmul.mubr.bf16.gmra.mrb[0].mxu0 %v1121
  %v4414 = vpop.f32.mrb[0].mxu0
  %v4415 = vadd.f32 %v4375, %v4414
  %v4416 = vpop.f32.mrb[0].mxu0
  %v4417 = vpop.f32.mrb[0].mxu0
  %v4418 = vpop.f32.mrb[0].mxu0
  %4419 = vdwg.mxu0
  %4420 = vmatprep.subr.bf16.mxu0 0
  %4421 = vmatpush1.bf16.msra.mxu0 %v3108
  %4422 = vmatprep.subr.bf16.mxu0 0
  %4423 = vmatpush1.bf16.msra.mxu0 %v3109
  %4424 = vmatprep.subr.bf16.mxu0 0
  %4425 = vmatpush1.bf16.msra.mxu0 %v3110
  %4426 = vmatprep.subr.bf16.mxu0 0
  %4427 = vmatpush1.bf16.msra.mxu0 %v3111
  %4428 = vmatprep.subr.bf16.mxu0 0
  %4429 = vmatpush1.bf16.msra.mxu0 %v3112
  %4430 = vmatprep.subr.bf16.mxu0 0
  %4431 = vmatpush1.bf16.msra.mxu0 %v3113
  %4432 = vmatprep.subr.bf16.mxu0 0
  %4433 = vmatpush1.bf16.msra.mxu0 %v3114
  %4434 = vmatprep.subr.bf16.mxu0 0
  %4435 = vmatpush1.bf16.msra.mxu0 %v3115
  %4436 = vmatprep.subr.bf16.mxu0 0
  %4437 = vmatpush1.bf16.msra.mxu0 %v3116
  %4438 = vmatprep.subr.bf16.mxu0 0
  %4439 = vmatpush1.bf16.msra.mxu0 %v3117
  %4440 = vmatprep.subr.bf16.mxu0 0
  %4441 = vmatpush1.bf16.msra.mxu0 %v3118
  %4442 = vmatprep.subr.bf16.mxu0 0
  %4443 = vmatpush1.bf16.msra.mxu0 %v3119
  %4444 = vmatprep.subr.bf16.mxu0 0
  %4445 = vmatpush1.bf16.msra.mxu0 %v3120
  %4446 = vmatprep.subr.bf16.mxu0 0
  %4447 = vmatpush1.bf16.msra.mxu0 %v3121
  %4448 = vmatprep.subr.bf16.mxu0 0
  %4449 = vmatpush1.bf16.msra.mxu0 %v3122
  %4450 = vmatprep.subr.bf16.mxu0 0
  %4451 = vmatpush1.bf16.msra.mxu0 %v3123
  %4452 = vmatprep.mubr.bf16.mxu0 %v1120
  %4453 = vmatmul.mubr.bf16.gmra.mrb[0].mxu0 %v1106
  %v4454 = vpop.f32.mrb[0].mxu0
  %v4455 = vadd.f32 %v4415, %v4454
  %v4456 = vpop.f32.mrb[0].mxu0
  %v4457 = vpop.f32.mrb[0].mxu0
  %v4458 = vpop.f32.mrb[0].mxu0
  %4459 = vdwg.mxu0
  %4460 = vmatprep.subr.bf16.mxu0 0
  %4461 = vmatpush1.bf16.msra.mxu0 %v3124
  %4462 = vmatprep.subr.bf16.mxu0 0
  %4463 = vmatpush1.bf16.msra.mxu0 %v3125
  %4464 = vmatprep.subr.bf16.mxu0 0
  %4465 = vmatpush1.bf16.msra.mxu0 %v3126
  %4466 = vmatprep.subr.bf16.mxu0 0
  %4467 = vmatpush1.bf16.msra.mxu0 %v3127
  %4468 = vmatprep.subr.bf16.mxu0 0
  %4469 = vmatpush1.bf16.msra.mxu0 %v3128
  %4470 = vmatprep.subr.bf16.mxu0 0
  %4471 = vmatpush1.bf16.msra.mxu0 %v3129
  %4472 = vmatprep.subr.bf16.mxu0 0
  %4473 = vmatpush1.bf16.msra.mxu0 %v3130
  %4474 = vmatprep.subr.bf16.mxu0 0
  %4475 = vmatpush1.bf16.msra.mxu0 %v3131
  %4476 = vmatprep.subr.bf16.mxu0 0
  %4477 = vmatpush1.bf16.msra.mxu0 %v3132
  %4478 = vmatprep.subr.bf16.mxu0 0
  %4479 = vmatpush1.bf16.msra.mxu0 %v3133
  %4480 = vmatprep.subr.bf16.mxu0 0
  %4481 = vmatpush1.bf16.msra.mxu0 %v3134
  %4482 = vmatprep.subr.bf16.mxu0 0
  %4483 = vmatpush1.bf16.msra.mxu0 %v3135
  %4484 = vmatprep.subr.bf16.mxu0 0
  %4485 = vmatpush1.bf16.msra.mxu0 %v3136
  %4486 = vmatprep.subr.bf16.mxu0 0
  %4487 = vmatpush1.bf16.msra.mxu0 %v3137
  %4488 = vmatprep.subr.bf16.mxu0 0
  %4489 = vmatpush1.bf16.msra.mxu0 %v3138
  %4490 = vmatprep.subr.bf16.mxu0 0
  %4491 = vmatpush1.bf16.msra.mxu0 %v3139
  %4492 = vmatprep.mubr.bf16.mxu0 %v1124
  %4493 = vmatmul.mubr.bf16.gmra.mrb[0].mxu0 %v1122
  %v4494 = vpop.f32.mrb[0].mxu0
  %v4495 = vadd.f32 %v4455, %v4494
  %v4496 = vpop.f32.mrb[0].mxu0
  %v4497 = vpop.f32.mrb[0].mxu0
  %v4498 = vpop.f32.mrb[0].mxu0
  %4499 = vdwg.mxu0
  %4500 = vmatprep.subr.bf16.mxu0 0
  %4501 = vmatpush1.bf16.msra.mxu0 %v3140
  %4502 = vmatprep.subr.bf16.mxu0 0
  %4503 = vmatpush1.bf16.msra.mxu0 %v3141
  %4504 = vmatprep.subr.bf16.mxu0 0
  %4505 = vmatpush1.bf16.msra.mxu0 %v3142
  %4506 = vmatprep.subr.bf16.mxu0 0
  %4507 = vmatpush1.bf16.msra.mxu0 %v3143
  %4508 = vmatprep.subr.bf16.mxu0 0
  %4509 = vmatpush1.bf16.msra.mxu0 %v3144
  %4510 = vmatprep.subr.bf16.mxu0 0
  %4511 = vmatpush1.bf16.msra.mxu0 %v3145
  %4512 = vmatprep.subr.bf16.mxu0 0
  %4513 = vmatpush1.bf16.msra.mxu0 %v3146
  %4514 = vmatprep.subr.bf16.mxu0 0
  %4515 = vmatpush1.bf16.msra.mxu0 %v3147
  %4516 = vmatprep.subr.bf16.mxu0 0
  %4517 = vmatpush1.bf16.msra.mxu0 0
  %4518 = vmatprep.subr.bf16.mxu0 0
  %4519 = vmatpush1.bf16.msra.mxu0 0
  %4520 = vmatprep.subr.bf16.mxu0 0
  %4521 = vmatpush1.bf16.msra.mxu0 0
  %4522 = vmatprep.subr.bf16.mxu0 0
  %4523 = vmatpush1.bf16.msra.mxu0 0
  %4524 = vmatprep.subr.bf16.mxu0 0
  %4525 = vmatpush1.bf16.msra.mxu0 0
  %4526 = vmatprep.subr.bf16.mxu0 0
  %4527 = vmatpush1.bf16.msra.mxu0 0
  %4528 = vmatprep.subr.bf16.mxu0 0
  %4529 = vmatpush1.bf16.msra.mxu0 0
  %4530 = vmatprep.subr.bf16.mxu0 0
  %4531 = vmatpush1.bf16.msra.mxu0 0
  %4532 = vmatprep.mubr.bf16.mxu0 0
  %4533 = vmatmul.mubr.bf16.gmra.mrb[0].mxu0 %v1138
  %v4534 = vpop.f32.mrb[0].mxu0
  %v4535 = vadd.f32 %v4495, %v4534
  %v4536 = vpop.f32.mrb[0].mxu0
  %v4537 = vpop.f32.mrb[0].mxu0
  %v4538 = vpop.f32.mrb[0].mxu0
  %4539 = vdwg.mxu0
  %v4540 = vld [vmem:[%s3] sm:$0x3]
  %v4541 = vmul.f32 %v4535, 0.5
  %v4542 = vmul.f32 %v4541, 1.442695
  %v4543 = vpow.pop %v4542
  %4545 = vrot.lane.b32.xlu0 %v4543, 96
  %v4546 = vpop.permute.xlu0 %4545
  %v4548 = vmul.f32 %v4540, %v4546
  %v4549 = vadd.f32 %v4535, %v4548
  %4551 = vrot.lane.b32.xlu0 %v4549, 64
  %v4552 = vpop.permute.xlu0 %4551
  %vm4554 = vcmask 523264
  %v4555 = vsel %vm4554, %v4535, %v4552
  %vm4556 = vcmask 785408
  %v4557 = vsel %vm4556, %v4555, 0.0
  %4558 = vst [vmem:[%s6] sm:$0x3] %v4557
  %v4559 = vpack.c.bf16 %v4549, %v4549
  %v4560 = vld [vmem:[%s4] sm:$0xff]
  %v4561 = vld [vmem:[%s4 + $0x8] sm:$0xff]
  %v4562 = vld [vmem:[%s4 + $0x10] sm:$0xff]
  %v4563 = vld [vmem:[%s4 + $0x18] sm:$0xff]
  %v4564 = vld [vmem:[%s4 + $0x20] sm:$0xff]
  %v4565 = vld [vmem:[%s4 + $0x28] sm:$0xff]
  %v4566 = vld [vmem:[%s4 + $0x30] sm:$0xff]
  %v4567 = vld [vmem:[%s4 + $0x38] sm:$0xff]
  %v4568 = vld [vmem:[%s4 + $0x40] sm:$0xff]
  %v4569 = vld [vmem:[%s4 + $0x48] sm:$0xff]
  %v4570 = vld [vmem:[%s4 + $0x50] sm:$0xff]
  %v4571 = vld [vmem:[%s4 + $0x58] sm:$0xff]
  %v4572 = vld [vmem:[%s4 + $0x60] sm:$0xff]
  %v4573 = vld [vmem:[%s4 + $0x68] sm:$0xff]
  %v4574 = vld [vmem:[%s4 + $0x70] sm:$0xff]
  %v4575 = vld [vmem:[%s4 + $0x78] sm:$0xff]
  %v4576 = vld [vmem:[%s4 + $0x80] sm:$0xff]
  %v4577 = vld [vmem:[%s4 + $0x88] sm:$0xff]
  %v4578 = vld [vmem:[%s4 + $0x90] sm:$0xff]
  %v4579 = vld [vmem:[%s4 + $0x98] sm:$0xff]
  %v4580 = vld [vmem:[%s4 + $0xa0] sm:$0xff]
  %v4581 = vld [vmem:[%s4 + $0xa8] sm:$0xff]
  %v4582 = vld [vmem:[%s4 + $0xb0] sm:$0xff]
  %v4583 = vld [vmem:[%s4 + $0xb8] sm:$0xff]
  %v4584 = vld [vmem:[%s4 + $0xc0] sm:$0xf]
  %v4585 = vld [vmem:[%s4 + $0xc4] sm:$0xff]
  %v4586 = vld [vmem:[%s4 + $0xcc] sm:$0xff]
  %v4587 = vld [vmem:[%s4 + $0xd4] sm:$0xff]
  %v4588 = vld [vmem:[%s4 + $0xdc] sm:$0xff]
  %v4589 = vld [vmem:[%s4 + $0xe4] sm:$0xff]
  %v4590 = vld [vmem:[%s4 + $0xec] sm:$0xff]
  %v4591 = vld [vmem:[%s4 + $0xf4] sm:$0xff]
  %v4592 = vld [vmem:[%s4 + $0xfc] sm:$0xff]
  %v4593 = vld [vmem:[%s4 + $0x104] sm:$0xff]
  %v4594 = vld [vmem:[%s4 + $0x10c] sm:$0xff]
  %v4595 = vld [vmem:[%s4 + $0x114] sm:$0xff]
  %v4596 = vld [vmem:[%s4 + $0x11c] sm:$0xff]
  %v4597 = vld [vmem:[%s4 + $0x124] sm:$0xff]
  %v4598 = vld [vmem:[%s4 + $0x12c] sm:$0xff]
  %v4599 = vld [vmem:[%s4 + $0x134] sm:$0xff]
  %v4600 = vld [vmem:[%s4 + $0x13c] sm:$0xff]
  %v4601 = vld [vmem:[%s4 + $0x144] sm:$0xff]
  %v4602 = vld [vmem:[%s4 + $0x14c] sm:$0xff]
  %v4603 = vld [vmem:[%s4 + $0x154] sm:$0xff]
  %v4604 = vld [vmem:[%s4 + $0x15c] sm:$0xff]
  %v4605 = vld [vmem:[%s4 + $0x164] sm:$0xff]
  %v4606 = vld [vmem:[%s4 + $0x16c] sm:$0xff]
  %v4607 = vld [vmem:[%s4 + $0x174] sm:$0xff]
  %v4608 = vld [vmem:[%s4 + $0x17c] sm:$0xff]
  %v4609 = vld [vmem:[%s4 + $0x184] sm:$0xf]
  %v4610 = vld [vmem:[%s4 + $0x188] sm:$0xff]
  %v4611 = vld [vmem:[%s4 + $0x190] sm:$0xff]
  %v4612 = vld [vmem:[%s4 + $0x198] sm:$0xff]
  %v4613 = vld [vmem:[%s4 + $0x1a0] sm:$0xff]
  %v4614 = vld [vmem:[%s4 + $0x1a8] sm:$0xff]
  %v4615 = vld [vmem:[%s4 + $0x1b0] sm:$0xff]
  %v4616 = vld [vmem:[%s4 + $0x1b8] sm:$0xff]
  %v4617 = vld [vmem:[%s4 + $0x1c0] sm:$0xff]
  %v4618 = vld [vmem:[%s4 + $0x1c8] sm:$0xff]
  %v4619 = vld [vmem:[%s4 + $0x1d0] sm:$0xff]
  %v4620 = vld [vmem:[%s4 + $0x1d8] sm:$0xff]
  %v4621 = vld [vmem:[%s4 + $0x1e0] sm:$0xff]
  %v4622 = vld [vmem:[%s4 + $0x1e8] sm:$0xff]
  %v4623 = vld [vmem:[%s4 + $0x1f0] sm:$0xff]
  %v4624 = vld [vmem:[%s4 + $0x1f8] sm:$0xff]
  %v4625 = vld [vmem:[%s4 + $0x200] sm:$0xff]
  %v4626 = vld [vmem:[%s4 + $0x208] sm:$0xff]
  %v4627 = vld [vmem:[%s4 + $0x210] sm:$0xff]
  %v4628 = vld [vmem:[%s4 + $0x218] sm:$0xff]
  %v4629 = vld [vmem:[%s4 + $0x220] sm:$0xff]
  %v4630 = vld [vmem:[%s4 + $0x228] sm:$0xff]
  %v4631 = vld [vmem:[%s4 + $0x230] sm:$0xff]
  %v4632 = vld [vmem:[%s4 + $0x238] sm:$0xff]
  %v4633 = vld [vmem:[%s4 + $0x240] sm:$0xff]
  %v4634 = vld [vmem:[%s4 + $0x248] sm:$0xf]
  %v4635 = vld [vmem:[%s4 + $0x24c] sm:$0xff]
  %v4636 = vld [vmem:[%s4 + $0x254] sm:$0xff]
  %v4637 = vld [vmem:[%s4 + $0x25c] sm:$0xff]
  %v4638 = vld [vmem:[%s4 + $0x264] sm:$0xff]
  %v4639 = vld [vmem:[%s4 + $0x26c] sm:$0xff]
  %v4640 = vld [vmem:[%s4 + $0x274] sm:$0xff]
  %v4641 = vld [vmem:[%s4 + $0x27c] sm:$0xff]
  %v4642 = vld [vmem:[%s4 + $0x284] sm:$0xff]
  %v4643 = vld [vmem:[%s4 + $0x28c] sm:$0xff]
  %v4644 = vld [vmem:[%s4 + $0x294] sm:$0xff]
  %v4645 = vld [vmem:[%s4 + $0x29c] sm:$0xff]
  %v4646 = vld [vmem:[%s4 + $0x2a4] sm:$0xff]
  %v4647 = vld [vmem:[%s4 + $0x2ac] sm:$0xff]
  %v4648 = vld [vmem:[%s4 + $0x2b4] sm:$0xff]
  %v4649 = vld [vmem:[%s4 + $0x2bc] sm:$0xff]
  %v4650 = vld [vmem:[%s4 + $0x2c4] sm:$0xff]
  %v4651 = vld [vmem:[%s4 + $0x2cc] sm:$0xff]
  %v4652 = vld [vmem:[%s4 + $0x2d4] sm:$0xff]
  %v4653 = vld [vmem:[%s4 + $0x2dc] sm:$0xff]
  %v4654 = vld [vmem:[%s4 + $0x2e4] sm:$0xff]
  %v4655 = vld [vmem:[%s4 + $0x2ec] sm:$0xff]
  %v4656 = vld [vmem:[%s4 + $0x2f4] sm:$0xff]
  %v4657 = vld [vmem:[%s4 + $0x2fc] sm:$0xff]
  %v4658 = vld [vmem:[%s4 + $0x304] sm:$0xff]
  %v4659 = vld [vmem:[%s4 + $0x30c] sm:$0xf]
  %v4660 = vld [vmem:[%s5] sm:$0xff]
  %v4661 = vld [vmem:[%s5 + $0x8] sm:$0xff]
  %v4662 = vld [vmem:[%s5 + $0x10] sm:$0xff]
  %v4663 = vld [vmem:[%s5 + $0x18] sm:$0xff]
  %v4664 = vld [vmem:[%s5 + $0x20] sm:$0xff]
  %v4665 = vld [vmem:[%s5 + $0x28] sm:$0xff]
  %v4666 = vld [vmem:[%s5 + $0x30] sm:$0x1]
  %v4674 = vlaneseq
  %v4675 = vshrl.u32 %v4674, 7
  %v4676 = vsub.s32 0, %v4675
  %v4677 = vrot.slane %v4660, %v4676
  %v4678 = vlaneseq
  %v4679 = vshrl.u32 %v4678, 7
  %v4680 = vsub.s32 1, %v4679
  %v4681 = vrot.slane %v4660, %v4680
  %v4682 = vlaneseq
  %v4683 = vshrl.u32 %v4682, 7
  %v4684 = vsub.s32 2, %v4683
  %v4685 = vrot.slane %v4660, %v4684
  %v4686 = vlaneseq
  %v4687 = vshrl.u32 %v4686, 7
  %v4688 = vsub.s32 3, %v4687
  %v4689 = vrot.slane %v4660, %v4688
  %v4690 = vlaneseq
  %v4691 = vshrl.u32 %v4690, 7
  %v4692 = vsub.s32 4, %v4691
  %v4693 = vrot.slane %v4660, %v4692
  %v4694 = vlaneseq
  %v4695 = vshrl.u32 %v4694, 7
  %v4696 = vsub.s32 5, %v4695
  %v4697 = vrot.slane %v4660, %v4696
  %v4698 = vlaneseq
  %v4699 = vshrl.u32 %v4698, 7
  %v4700 = vsub.s32 6, %v4699
  %v4701 = vrot.slane %v4660, %v4700
  %v4702 = vlaneseq
  %v4703 = vshrl.u32 %v4702, 7
  %v4704 = vsub.s32 7, %v4703
  %v4705 = vrot.slane %v4660, %v4704
  %v4706 = vlaneseq
  %v4707 = vshrl.u32 %v4706, 7
  %v4708 = vsub.s32 0, %v4707
  %v4709 = vrot.slane %v4661, %v4708
  %v4710 = vlaneseq
  %v4711 = vshrl.u32 %v4710, 7
  %v4712 = vsub.s32 1, %v4711
  %v4713 = vrot.slane %v4661, %v4712
  %v4714 = vlaneseq
  %v4715 = vshrl.u32 %v4714, 7
  %v4716 = vsub.s32 2, %v4715
  %v4717 = vrot.slane %v4661, %v4716
  %v4718 = vlaneseq
  %v4719 = vshrl.u32 %v4718, 7
  %v4720 = vsub.s32 3, %v4719
  %v4721 = vrot.slane %v4661, %v4720
  %v4722 = vlaneseq
  %v4723 = vshrl.u32 %v4722, 7
  %v4724 = vsub.s32 4, %v4723
  %v4725 = vrot.slane %v4661, %v4724
  %v4726 = vlaneseq
  %v4727 = vshrl.u32 %v4726, 7
  %v4728 = vsub.s32 5, %v4727
  %v4729 = vrot.slane %v4661, %v4728
  %v4730 = vlaneseq
  %v4731 = vshrl.u32 %v4730, 7
  %v4732 = vsub.s32 6, %v4731
  %v4733 = vrot.slane %v4661, %v4732
  %v4734 = vlaneseq
  %v4735 = vshrl.u32 %v4734, 7
  %v4736 = vsub.s32 7, %v4735
  %v4737 = vrot.slane %v4661, %v4736
  %v4738 = vlaneseq
  %v4739 = vshrl.u32 %v4738, 7
  %v4740 = vsub.s32 0, %v4739
  %v4741 = vrot.slane %v4662, %v4740
  %v4742 = vlaneseq
  %v4743 = vshrl.u32 %v4742, 7
  %v4744 = vsub.s32 1, %v4743
  %v4745 = vrot.slane %v4662, %v4744
  %v4746 = vlaneseq
  %v4747 = vshrl.u32 %v4746, 7
  %v4748 = vsub.s32 2, %v4747
  %v4749 = vrot.slane %v4662, %v4748
  %v4750 = vlaneseq
  %v4751 = vshrl.u32 %v4750, 7
  %v4752 = vsub.s32 3, %v4751
  %v4753 = vrot.slane %v4662, %v4752
  %v4754 = vlaneseq
  %v4755 = vshrl.u32 %v4754, 7
  %v4756 = vsub.s32 4, %v4755
  %v4757 = vrot.slane %v4662, %v4756
  %v4758 = vlaneseq
  %v4759 = vshrl.u32 %v4758, 7
  %v4760 = vsub.s32 5, %v4759
  %v4761 = vrot.slane %v4662, %v4760
  %v4762 = vlaneseq
  %v4763 = vshrl.u32 %v4762, 7
  %v4764 = vsub.s32 6, %v4763
  %v4765 = vrot.slane %v4662, %v4764
  %v4766 = vlaneseq
  %v4767 = vshrl.u32 %v4766, 7
  %v4768 = vsub.s32 7, %v4767
  %v4769 = vrot.slane %v4662, %v4768
  %v4770 = vlaneseq
  %v4771 = vshrl.u32 %v4770, 7
  %v4772 = vsub.s32 0, %v4771
  %v4773 = vrot.slane %v4663, %v4772
  %v4774 = vlaneseq
  %v4775 = vshrl.u32 %v4774, 7
  %v4776 = vsub.s32 1, %v4775
  %v4777 = vrot.slane %v4663, %v4776
  %v4778 = vlaneseq
  %v4779 = vshrl.u32 %v4778, 7
  %v4780 = vsub.s32 2, %v4779
  %v4781 = vrot.slane %v4663, %v4780
  %v4782 = vlaneseq
  %v4783 = vshrl.u32 %v4782, 7
  %v4784 = vsub.s32 3, %v4783
  %v4785 = vrot.slane %v4663, %v4784
  %v4786 = vlaneseq
  %v4787 = vshrl.u32 %v4786, 7
  %v4788 = vsub.s32 4, %v4787
  %v4789 = vrot.slane %v4663, %v4788
  %v4790 = vlaneseq
  %v4791 = vshrl.u32 %v4790, 7
  %v4792 = vsub.s32 5, %v4791
  %v4793 = vrot.slane %v4663, %v4792
  %v4794 = vlaneseq
  %v4795 = vshrl.u32 %v4794, 7
  %v4796 = vsub.s32 6, %v4795
  %v4797 = vrot.slane %v4663, %v4796
  %v4798 = vlaneseq
  %v4799 = vshrl.u32 %v4798, 7
  %v4800 = vsub.s32 7, %v4799
  %v4801 = vrot.slane %v4663, %v4800
  %v4802 = vlaneseq
  %v4803 = vshrl.u32 %v4802, 7
  %v4804 = vsub.s32 0, %v4803
  %v4805 = vrot.slane %v4664, %v4804
  %v4806 = vlaneseq
  %v4807 = vshrl.u32 %v4806, 7
  %v4808 = vsub.s32 1, %v4807
  %v4809 = vrot.slane %v4664, %v4808
  %v4810 = vlaneseq
  %v4811 = vshrl.u32 %v4810, 7
  %v4812 = vsub.s32 2, %v4811
  %v4813 = vrot.slane %v4664, %v4812
  %v4814 = vlaneseq
  %v4815 = vshrl.u32 %v4814, 7
  %v4816 = vsub.s32 3, %v4815
  %v4817 = vrot.slane %v4664, %v4816
  %v4818 = vlaneseq
  %v4819 = vshrl.u32 %v4818, 7
  %v4820 = vsub.s32 4, %v4819
  %v4821 = vrot.slane %v4664, %v4820
  %v4822 = vlaneseq
  %v4823 = vshrl.u32 %v4822, 7
  %v4824 = vsub.s32 5, %v4823
  %v4825 = vrot.slane %v4664, %v4824
  %v4826 = vlaneseq
  %v4827 = vshrl.u32 %v4826, 7
  %v4828 = vsub.s32 6, %v4827
  %v4829 = vrot.slane %v4664, %v4828
  %v4830 = vlaneseq
  %v4831 = vshrl.u32 %v4830, 7
  %v4832 = vsub.s32 7, %v4831
  %v4833 = vrot.slane %v4664, %v4832
  %v4834 = vlaneseq
  %v4835 = vshrl.u32 %v4834, 7
  %v4836 = vsub.s32 0, %v4835
  %v4837 = vrot.slane %v4665, %v4836
  %v4838 = vlaneseq
  %v4839 = vshrl.u32 %v4838, 7
  %v4840 = vsub.s32 1, %v4839
  %v4841 = vrot.slane %v4665, %v4840
  %v4842 = vlaneseq
  %v4843 = vshrl.u32 %v4842, 7
  %v4844 = vsub.s32 2, %v4843
  %v4845 = vrot.slane %v4665, %v4844
  %v4846 = vlaneseq
  %v4847 = vshrl.u32 %v4846, 7
  %v4848 = vsub.s32 3, %v4847
  %v4849 = vrot.slane %v4665, %v4848
  %v4850 = vlaneseq
  %v4851 = vshrl.u32 %v4850, 7
  %v4852 = vsub.s32 4, %v4851
  %v4853 = vrot.slane %v4665, %v4852
  %v4854 = vlaneseq
  %v4855 = vshrl.u32 %v4854, 7
  %v4856 = vsub.s32 5, %v4855
  %v4857 = vrot.slane %v4665, %v4856
  %v4858 = vlaneseq
  %v4859 = vshrl.u32 %v4858, 7
  %v4860 = vsub.s32 6, %v4859
  %v4861 = vrot.slane %v4665, %v4860
  %v4862 = vlaneseq
  %v4863 = vshrl.u32 %v4862, 7
  %v4864 = vsub.s32 7, %v4863
  %v4865 = vrot.slane %v4665, %v4864
  %v4866 = vlaneseq
  %v4867 = vshrl.u32 %v4866, 7
  %v4868 = vsub.s32 0, %v4867
  %v4869 = vrot.slane %v4666, %v4868
  %v5019 = vunpack.c.l.b16 %v4560
  %v5020 = vunpack.c.h.b16 %v4560
  %v5021 = vunpack.c.l.b16 %v4561
  %v5022 = vunpack.c.h.b16 %v4561
  %v5023 = vunpack.c.l.b16 %v4562
  %v5024 = vunpack.c.h.b16 %v4562
  %v5025 = vunpack.c.l.b16 %v4563
  %v5026 = vunpack.c.h.b16 %v4563
  %v5027 = vunpack.c.l.b16 %v4564
  %v5028 = vunpack.c.h.b16 %v4564
  %v5029 = vunpack.c.l.b16 %v4565
  %v5030 = vunpack.c.h.b16 %v4565
  %v5031 = vunpack.c.l.b16 %v4566
  %v5032 = vunpack.c.h.b16 %v4566
  %v5033 = vunpack.c.l.b16 %v4567
  %v5034 = vunpack.c.h.b16 %v4567
  %v5035 = vunpack.c.l.b16 %v4568
  %v5036 = vunpack.c.h.b16 %v4568
  %v5037 = vunpack.c.l.b16 %v4569
  %v5038 = vunpack.c.h.b16 %v4569
  %v5039 = vunpack.c.l.b16 %v4570
  %v5040 = vunpack.c.h.b16 %v4570
  %v5041 = vunpack.c.l.b16 %v4571
  %v5042 = vunpack.c.h.b16 %v4571
  %v5043 = vunpack.c.l.b16 %v4572
  %v5044 = vunpack.c.h.b16 %v4572
  %v5045 = vunpack.c.l.b16 %v4573
  %v5046 = vunpack.c.h.b16 %v4573
  %v5047 = vunpack.c.l.b16 %v4574
  %v5048 = vunpack.c.h.b16 %v4574
  %v5049 = vunpack.c.l.b16 %v4575
  %v5050 = vunpack.c.h.b16 %v4575
  %v5051 = vunpack.c.l.b16 %v4576
  %v5052 = vunpack.c.h.b16 %v4576
  %v5053 = vunpack.c.l.b16 %v4577
  %v5054 = vunpack.c.h.b16 %v4577
  %v5055 = vunpack.c.l.b16 %v4578
  %v5056 = vunpack.c.h.b16 %v4578
  %v5057 = vunpack.c.l.b16 %v4579
  %v5058 = vunpack.c.h.b16 %v4579
  %v5059 = vunpack.c.l.b16 %v4580
  %v5060 = vunpack.c.h.b16 %v4580
  %v5061 = vunpack.c.l.b16 %v4581
  %v5062 = vunpack.c.h.b16 %v4581
  %v5063 = vunpack.c.l.b16 %v4582
  %v5064 = vunpack.c.h.b16 %v4582
  %v5065 = vunpack.c.l.b16 %v4583
  %v5066 = vunpack.c.h.b16 %v4583
  %v5067 = vunpack.c.l.b16 %v4584
  %v5068 = vunpack.c.l.b16 %v4585
  %v5069 = vunpack.c.h.b16 %v4585
  %v5070 = vunpack.c.l.b16 %v4586
  %v5071 = vunpack.c.h.b16 %v4586
  %v5072 = vunpack.c.l.b16 %v4587
  %v5073 = vunpack.c.h.b16 %v4587
  %v5074 = vunpack.c.l.b16 %v4588
  %v5075 = vunpack.c.h.b16 %v4588
  %v5076 = vunpack.c.l.b16 %v4589
  %v5077 = vunpack.c.h.b16 %v4589
  %v5078 = vunpack.c.l.b16 %v4590
  %v5079 = vunpack.c.h.b16 %v4590
  %v5080 = vunpack.c.l.b16 %v4591
  %v5081 = vunpack.c.h.b16 %v4591
  %v5082 = vunpack.c.l.b16 %v4592
  %v5083 = vunpack.c.h.b16 %v4592
  %v5084 = vunpack.c.l.b16 %v4593
  %v5085 = vunpack.c.h.b16 %v4593
  %v5086 = vunpack.c.l.b16 %v4594
  %v5087 = vunpack.c.h.b16 %v4594
  %v5088 = vunpack.c.l.b16 %v4595
  %v5089 = vunpack.c.h.b16 %v4595
  %v5090 = vunpack.c.l.b16 %v4596
  %v5091 = vunpack.c.h.b16 %v4596
  %v5092 = vunpack.c.l.b16 %v4597
  %v5093 = vunpack.c.h.b16 %v4597
  %v5094 = vunpack.c.l.b16 %v4598
  %v5095 = vunpack.c.h.b16 %v4598
  %v5096 = vunpack.c.l.b16 %v4599
  %v5097 = vunpack.c.h.b16 %v4599
  %v5098 = vunpack.c.l.b16 %v4600
  %v5099 = vunpack.c.h.b16 %v4600
  %v5100 = vunpack.c.l.b16 %v4601
  %v5101 = vunpack.c.h.b16 %v4601
  %v5102 = vunpack.c.l.b16 %v4602
  %v5103 = vunpack.c.h.b16 %v4602
  %v5104 = vunpack.c.l.b16 %v4603
  %v5105 = vunpack.c.h.b16 %v4603
  %v5106 = vunpack.c.l.b16 %v4604
  %v5107 = vunpack.c.h.b16 %v4604
  %v5108 = vunpack.c.l.b16 %v4605
  %v5109 = vunpack.c.h.b16 %v4605
  %v5110 = vunpack.c.l.b16 %v4606
  %v5111 = vunpack.c.h.b16 %v4606
  %v5112 = vunpack.c.l.b16 %v4607
  %v5113 = vunpack.c.h.b16 %v4607
  %v5114 = vunpack.c.l.b16 %v4608
  %v5115 = vunpack.c.h.b16 %v4608
  %v5116 = vunpack.c.l.b16 %v4609
  %v5117 = vunpack.c.l.b16 %v4610
  %v5118 = vunpack.c.h.b16 %v4610
  %v5119 = vunpack.c.l.b16 %v4611
  %v5120 = vunpack.c.h.b16 %v4611
  %v5121 = vunpack.c.l.b16 %v4612
  %v5122 = vunpack.c.h.b16 %v4612
  %v5123 = vunpack.c.l.b16 %v4613
  %v5124 = vunpack.c.h.b16 %v4613
  %v5125 = vunpack.c.l.b16 %v4614
  %v5126 = vunpack.c.h.b16 %v4614
  %v5127 = vunpack.c.l.b16 %v4615
  %v5128 = vunpack.c.h.b16 %v4615
  %v5129 = vunpack.c.l.b16 %v4616
  %v5130 = vunpack.c.h.b16 %v4616
  %v5131 = vunpack.c.l.b16 %v4617
  %v5132 = vunpack.c.h.b16 %v4617
  %v5133 = vunpack.c.l.b16 %v4618
  %v5134 = vunpack.c.h.b16 %v4618
  %v5135 = vunpack.c.l.b16 %v4619
  %v5136 = vunpack.c.h.b16 %v4619
  %v5137 = vunpack.c.l.b16 %v4620
  %v5138 = vunpack.c.h.b16 %v4620
  %v5139 = vunpack.c.l.b16 %v4621
  %v5140 = vunpack.c.h.b16 %v4621
  %v5141 = vunpack.c.l.b16 %v4622
  %v5142 = vunpack.c.h.b16 %v4622
  %v5143 = vunpack.c.l.b16 %v4623
  %v5144 = vunpack.c.h.b16 %v4623
  %v5145 = vunpack.c.l.b16 %v4624
  %v5146 = vunpack.c.h.b16 %v4624
  %v5147 = vunpack.c.l.b16 %v4625
  %v5148 = vunpack.c.h.b16 %v4625
  %v5149 = vunpack.c.l.b16 %v4626
  %v5150 = vunpack.c.h.b16 %v4626
  %v5151 = vunpack.c.l.b16 %v4627
  %v5152 = vunpack.c.h.b16 %v4627
  %v5153 = vunpack.c.l.b16 %v4628
  %v5154 = vunpack.c.h.b16 %v4628
  %v5155 = vunpack.c.l.b16 %v4629
  %v5156 = vunpack.c.h.b16 %v4629
  %v5157 = vunpack.c.l.b16 %v4630
  %v5158 = vunpack.c.h.b16 %v4630
  %v5159 = vunpack.c.l.b16 %v4631
  %v5160 = vunpack.c.h.b16 %v4631
  %v5161 = vunpack.c.l.b16 %v4632
  %v5162 = vunpack.c.h.b16 %v4632
  %v5163 = vunpack.c.l.b16 %v4633
  %v5164 = vunpack.c.h.b16 %v4633
  %v5165 = vunpack.c.l.b16 %v4634
  %v5166 = vunpack.c.l.b16 %v4635
  %v5167 = vunpack.c.h.b16 %v4635
  %v5168 = vunpack.c.l.b16 %v4636
  %v5169 = vunpack.c.h.b16 %v4636
  %v5170 = vunpack.c.l.b16 %v4637
  %v5171 = vunpack.c.h.b16 %v4637
  %v5172 = vunpack.c.l.b16 %v4638
  %v5173 = vunpack.c.h.b16 %v4638
  %v5174 = vunpack.c.l.b16 %v4639
  %v5175 = vunpack.c.h.b16 %v4639
  %v5176 = vunpack.c.l.b16 %v4640
  %v5177 = vunpack.c.h.b16 %v4640
  %v5178 = vunpack.c.l.b16 %v4641
  %v5179 = vunpack.c.h.b16 %v4641
  %v5180 = vunpack.c.l.b16 %v4642
  %v5181 = vunpack.c.h.b16 %v4642
  %v5182 = vunpack.c.l.b16 %v4643
  %v5183 = vunpack.c.h.b16 %v4643
  %v5184 = vunpack.c.l.b16 %v4644
  %v5185 = vunpack.c.h.b16 %v4644
  %v5186 = vunpack.c.l.b16 %v4645
  %v5187 = vunpack.c.h.b16 %v4645
  %v5188 = vunpack.c.l.b16 %v4646
  %v5189 = vunpack.c.h.b16 %v4646
  %v5190 = vunpack.c.l.b16 %v4647
  %v5191 = vunpack.c.h.b16 %v4647
  %v5192 = vunpack.c.l.b16 %v4648
  %v5193 = vunpack.c.h.b16 %v4648
  %v5194 = vunpack.c.l.b16 %v4649
  %v5195 = vunpack.c.h.b16 %v4649
  %v5196 = vunpack.c.l.b16 %v4650
  %v5197 = vunpack.c.h.b16 %v4650
  %v5198 = vunpack.c.l.b16 %v4651
  %v5199 = vunpack.c.h.b16 %v4651
  %v5200 = vunpack.c.l.b16 %v4652
  %v5201 = vunpack.c.h.b16 %v4652
  %v5202 = vunpack.c.l.b16 %v4653
  %v5203 = vunpack.c.h.b16 %v4653
  %v5204 = vunpack.c.l.b16 %v4654
  %v5205 = vunpack.c.h.b16 %v4654
  %v5206 = vunpack.c.l.b16 %v4655
  %v5207 = vunpack.c.h.b16 %v4655
  %v5208 = vunpack.c.l.b16 %v4656
  %v5209 = vunpack.c.h.b16 %v4656
  %v5210 = vunpack.c.l.b16 %v4657
  %v5211 = vunpack.c.h.b16 %v4657
  %v5212 = vunpack.c.l.b16 %v4658
  %v5213 = vunpack.c.h.b16 %v4658
  %v5214 = vunpack.c.l.b16 %v4659
  %v5215 = vpack.c.b16 %v5068, %v5019
  %v5216 = vpack.c.b16 %v5069, %v5020
  %v5217 = vpack.c.b16 %v5070, %v5021
  %v5218 = vpack.c.b16 %v5071, %v5022
  %v5219 = vpack.c.b16 %v5072, %v5023
  %v5220 = vpack.c.b16 %v5073, %v5024
  %v5221 = vpack.c.b16 %v5074, %v5025
  %v5222 = vpack.c.b16 %v5075, %v5026
  %v5223 = vpack.c.b16 %v5076, %v5027
  %v5224 = vpack.c.b16 %v5077, %v5028
  %v5225 = vpack.c.b16 %v5078, %v5029
  %v5226 = vpack.c.b16 %v5079, %v5030
  %v5227 = vpack.c.b16 %v5080, %v5031
  %v5228 = vpack.c.b16 %v5081, %v5032
  %v5229 = vpack.c.b16 %v5082, %v5033
  %v5230 = vpack.c.b16 %v5083, %v5034
  %v5231 = vpack.c.b16 %v5084, %v5035
  %v5232 = vpack.c.b16 %v5085, %v5036
  %v5233 = vpack.c.b16 %v5086, %v5037
  %v5234 = vpack.c.b16 %v5087, %v5038
  %v5235 = vpack.c.b16 %v5088, %v5039
  %v5236 = vpack.c.b16 %v5089, %v5040
  %v5237 = vpack.c.b16 %v5090, %v5041
  %v5238 = vpack.c.b16 %v5091, %v5042
  %v5239 = vpack.c.b16 %v5092, %v5043
  %v5240 = vpack.c.b16 %v5093, %v5044
  %v5241 = vpack.c.b16 %v5094, %v5045
  %v5242 = vpack.c.b16 %v5095, %v5046
  %v5243 = vpack.c.b16 %v5096, %v5047
  %v5244 = vpack.c.b16 %v5097, %v5048
  %v5245 = vpack.c.b16 %v5098, %v5049
  %v5246 = vpack.c.b16 %v5099, %v5050
  %v5247 = vpack.c.b16 %v5100, %v5051
  %v5248 = vpack.c.b16 %v5101, %v5052
  %v5249 = vpack.c.b16 %v5102, %v5053
  %v5250 = vpack.c.b16 %v5103, %v5054
  %v5251 = vpack.c.b16 %v5104, %v5055
  %v5252 = vpack.c.b16 %v5105, %v5056
  %v5253 = vpack.c.b16 %v5106, %v5057
  %v5254 = vpack.c.b16 %v5107, %v5058
  %v5255 = vpack.c.b16 %v5108, %v5059
  %v5256 = vpack.c.b16 %v5109, %v5060
  %v5257 = vpack.c.b16 %v5110, %v5061
  %v5258 = vpack.c.b16 %v5111, %v5062
  %v5259 = vpack.c.b16 %v5112, %v5063
  %v5260 = vpack.c.b16 %v5113, %v5064
  %v5261 = vpack.c.b16 %v5114, %v5065
  %v5262 = vpack.c.b16 %v5115, %v5066
  %v5263 = vpack.c.b16 %v5116, %v5067
  %v5264 = vpack.c.b16 %v5166, %v5117
  %v5265 = vpack.c.b16 %v5167, %v5118
  %v5266 = vpack.c.b16 %v5168, %v5119
  %v5267 = vpack.c.b16 %v5169, %v5120
  %v5268 = vpack.c.b16 %v5170, %v5121
  %v5269 = vpack.c.b16 %v5171, %v5122
  %v5270 = vpack.c.b16 %v5172, %v5123
  %v5271 = vpack.c.b16 %v5173, %v5124
  %v5272 = vpack.c.b16 %v5174, %v5125
  %v5273 = vpack.c.b16 %v5175, %v5126
  %v5274 = vpack.c.b16 %v5176, %v5127
  %v5275 = vpack.c.b16 %v5177, %v5128
  %v5276 = vpack.c.b16 %v5178, %v5129
  %v5277 = vpack.c.b16 %v5179, %v5130
  %v5278 = vpack.c.b16 %v5180, %v5131
  %v5279 = vpack.c.b16 %v5181, %v5132
  %v5280 = vpack.c.b16 %v5182, %v5133
  %v5281 = vpack.c.b16 %v5183, %v5134
  %v5282 = vpack.c.b16 %v5184, %v5135
  %v5283 = vpack.c.b16 %v5185, %v5136
  %v5284 = vpack.c.b16 %v5186, %v5137
  %v5285 = vpack.c.b16 %v5187, %v5138
  %v5286 = vpack.c.b16 %v5188, %v5139
  %v5287 = vpack.c.b16 %v5189, %v5140
  %v5288 = vpack.c.b16 %v5190, %v5141
  %v5289 = vpack.c.b16 %v5191, %v5142
  %v5290 = vpack.c.b16 %v5192, %v5143
  %v5291 = vpack.c.b16 %v5193, %v5144
  %v5292 = vpack.c.b16 %v5194, %v5145
  %v5293 = vpack.c.b16 %v5195, %v5146
  %v5294 = vpack.c.b16 %v5196, %v5147
  %v5295 = vpack.c.b16 %v5197, %v5148
  %v5296 = vpack.c.b16 %v5198, %v5149
  %v5297 = vpack.c.b16 %v5199, %v5150
  %v5298 = vpack.c.b16 %v5200, %v5151
  %v5299 = vpack.c.b16 %v5201, %v5152
  %v5300 = vpack.c.b16 %v5202, %v5153
  %v5301 = vpack.c.b16 %v5203, %v5154
  %v5302 = vpack.c.b16 %v5204, %v5155
  %v5303 = vpack.c.b16 %v5205, %v5156
  %v5304 = vpack.c.b16 %v5206, %v5157
  %v5305 = vpack.c.b16 %v5207, %v5158
  %v5306 = vpack.c.b16 %v5208, %v5159
  %v5307 = vpack.c.b16 %v5209, %v5160
  %v5308 = vpack.c.b16 %v5210, %v5161
  %v5309 = vpack.c.b16 %v5211, %v5162
  %v5310 = vpack.c.b16 %v5212, %v5163
  %v5311 = vpack.c.b16 %v5213, %v5164
  %v5312 = vpack.c.b16 %v5214, %v5165
  %vm5411 = vcmask 261120
  %v5413 = vsel %vm5411, %v4559, 0
  %5415 = vmatprep.subr.bf16.mxu0 %v5216
  %5416 = vmatpush1.bf16.msra.mxu0 %v5215
  %5417 = vmatprep.subr.bf16.mxu0 %v5265
  %5418 = vmatpush1.bf16.msra.mxu0 %v5264
  %5419 = vmatprep.subr.bf16.mxu0 0
  %5420 = vmatpush1.bf16.msra.mxu0 0
  %5421 = vmatprep.subr.bf16.mxu0 0
  %5422 = vmatpush1.bf16.msra.mxu0 0
  %5423 = vmatprep.subr.bf16.mxu0 0
  %5424 = vmatpush1.bf16.msra.mxu0 0
  %5425 = vmatprep.subr.bf16.mxu0 0
  %5426 = vmatpush1.bf16.msra.mxu0 0
  %5427 = vmatprep.subr.bf16.mxu0 0
  %5428 = vmatpush1.bf16.msra.mxu0 0
  %5429 = vmatprep.subr.bf16.mxu0 0
  %5430 = vmatpush1.bf16.msra.mxu0 0
  %5431 = vmatprep.subr.bf16.mxu0 0
  %5432 = vmatpush1.bf16.msra.mxu0 0
  %5433 = vmatprep.subr.bf16.mxu0 0
  %5434 = vmatpush1.bf16.msra.mxu0 0
  %5435 = vmatprep.subr.bf16.mxu0 0
  %5436 = vmatpush1.bf16.msra.mxu0 0
  %5437 = vmatprep.subr.bf16.mxu0 0
  %5438 = vmatpush1.bf16.msra.mxu0 0
  %5439 = vmatprep.subr.bf16.mxu0 0
  %5440 = vmatpush1.bf16.msra.mxu0 0
  %5441 = vmatprep.subr.bf16.mxu0 0
  %5442 = vmatpush1.bf16.msra.mxu0 0
  %5443 = vmatprep.subr.bf16.mxu0 0
  %5444 = vmatpush1.bf16.msra.mxu0 0
  %5445 = vmatprep.subr.bf16.mxu0 0
  %5446 = vmatpush1.bf16.msra.mxu0 0
  %5447 = vmatprep.mubr.bf16.mxu0 0
  %5448 = vmatmul.mubr.bf16.gmra.mrb[0].mxu0 %v5413
  %v5449 = vpop.f32.mrb[0].mxu0
  %v5450 = vadd.f32 %v4677, %v5449
  %v5451 = vpop.f32.mrb[0].mxu0
  %v5452 = vadd.f32 %v4681, %v5451
  %v5453 = vpop.f32.mrb[0].mxu0
  %v5454 = vpop.f32.mrb[0].mxu0
  %5455 = vdwg.mxu0
  %5456 = vmatprep.subr.bf16.mxu0 %v5218
  %5457 = vmatpush1.bf16.msra.mxu0 %v5217
  %5458 = vmatprep.subr.bf16.mxu0 %v5267
  %5459 = vmatpush1.bf16.msra.mxu0 %v5266
  %5460 = vmatprep.subr.bf16.mxu0 0
  %5461 = vmatpush1.bf16.msra.mxu0 0
  %5462 = vmatprep.subr.bf16.mxu0 0
  %5463 = vmatpush1.bf16.msra.mxu0 0
  %5464 = vmatprep.subr.bf16.mxu0 0
  %5465 = vmatpush1.bf16.msra.mxu0 0
  %5466 = vmatprep.subr.bf16.mxu0 0
  %5467 = vmatpush1.bf16.msra.mxu0 0
  %5468 = vmatprep.subr.bf16.mxu0 0
  %5469 = vmatpush1.bf16.msra.mxu0 0
  %5470 = vmatprep.subr.bf16.mxu0 0
  %5471 = vmatpush1.bf16.msra.mxu0 0
  %5472 = vmatprep.subr.bf16.mxu0 0
  %5473 = vmatpush1.bf16.msra.mxu0 0
  %5474 = vmatprep.subr.bf16.mxu0 0
  %5475 = vmatpush1.bf16.msra.mxu0 0
  %5476 = vmatprep.subr.bf16.mxu0 0
  %5477 = vmatpush1.bf16.msra.mxu0 0
  %5478 = vmatprep.subr.bf16.mxu0 0
  %5479 = vmatpush1.bf16.msra.mxu0 0
  %5480 = vmatprep.subr.bf16.mxu0 0
  %5481 = vmatpush1.bf16.msra.mxu0 0
  %5482 = vmatprep.subr.bf16.mxu0 0
  %5483 = vmatpush1.bf16.msra.mxu0 0
  %5484 = vmatprep.subr.bf16.mxu0 0
  %5485 = vmatpush1.bf16.msra.mxu0 0
  %5486 = vmatprep.subr.bf16.mxu0 0
  %5487 = vmatpush1.bf16.msra.mxu0 0
  %5488 = vmatprep.mubr.bf16.mxu0 0
  %5489 = vmatmul.mubr.bf16.gmra.mrb[0].mxu0 %v5413
  %v5490 = vpop.f32.mrb[0].mxu0
  %v5491 = vadd.f32 %v4685, %v5490
  %v5492 = vpop.f32.mrb[0].mxu0
  %v5493 = vadd.f32 %v4689, %v5492
  %v5494 = vpop.f32.mrb[0].mxu0
  %v5495 = vpop.f32.mrb[0].mxu0
  %5496 = vdwg.mxu0
  %5497 = vmatprep.subr.bf16.mxu0 %v5220
  %5498 = vmatpush1.bf16.msra.mxu0 %v5219
  %5499 = vmatprep.subr.bf16.mxu0 %v5269
  %5500 = vmatpush1.bf16.msra.mxu0 %v5268
  %5501 = vmatprep.subr.bf16.mxu0 0
  %5502 = vmatpush1.bf16.msra.mxu0 0
  %5503 = vmatprep.subr.bf16.mxu0 0
  %5504 = vmatpush1.bf16.msra.mxu0 0
  %5505 = vmatprep.subr.bf16.mxu0 0
  %5506 = vmatpush1.bf16.msra.mxu0 0
  %5507 = vmatprep.subr.bf16.mxu0 0
  %5508 = vmatpush1.bf16.msra.mxu0 0
  %5509 = vmatprep.subr.bf16.mxu0 0
  %5510 = vmatpush1.bf16.msra.mxu0 0
  %5511 = vmatprep.subr.bf16.mxu0 0
  %5512 = vmatpush1.bf16.msra.mxu0 0
  %5513 = vmatprep.subr.bf16.mxu0 0
  %5514 = vmatpush1.bf16.msra.mxu0 0
  %5515 = vmatprep.subr.bf16.mxu0 0
  %5516 = vmatpush1.bf16.msra.mxu0 0
  %5517 = vmatprep.subr.bf16.mxu0 0
  %5518 = vmatpush1.bf16.msra.mxu0 0
  %5519 = vmatprep.subr.bf16.mxu0 0
  %5520 = vmatpush1.bf16.msra.mxu0 0
  %5521 = vmatprep.subr.bf16.mxu0 0
  %5522 = vmatpush1.bf16.msra.mxu0 0
  %5523 = vmatprep.subr.bf16.mxu0 0
  %5524 = vmatpush1.bf16.msra.mxu0 0
  %5525 = vmatprep.subr.bf16.mxu0 0
  %5526 = vmatpush1.bf16.msra.mxu0 0
  %5527 = vmatprep.subr.bf16.mxu0 0
  %5528 = vmatpush1.bf16.msra.mxu0 0
  %5529 = vmatprep.mubr.bf16.mxu0 0
  %5530 = vmatmul.mubr.bf16.gmra.mrb[0].mxu0 %v5413
  %v5531 = vpop.f32.mrb[0].mxu0
  %v5532 = vadd.f32 %v4693, %v5531
  %v5533 = vpop.f32.mrb[0].mxu0
  %v5534 = vadd.f32 %v4697, %v5533
  %v5535 = vpop.f32.mrb[0].mxu0
  %v5536 = vpop.f32.mrb[0].mxu0
  %5537 = vdwg.mxu0
  %5538 = vmatprep.subr.bf16.mxu0 %v5222
  %5539 = vmatpush1.bf16.msra.mxu0 %v5221
  %5540 = vmatprep.subr.bf16.mxu0 %v5271
  %5541 = vmatpush1.bf16.msra.mxu0 %v5270
  %5542 = vmatprep.subr.bf16.mxu0 0
  %5543 = vmatpush1.bf16.msra.mxu0 0
  %5544 = vmatprep.subr.bf16.mxu0 0
  %5545 = vmatpush1.bf16.msra.mxu0 0
  %5546 = vmatprep.subr.bf16.mxu0 0
  %5547 = vmatpush1.bf16.msra.mxu0 0
  %5548 = vmatprep.subr.bf16.mxu0 0
  %5549 = vmatpush1.bf16.msra.mxu0 0
  %5550 = vmatprep.subr.bf16.mxu0 0
  %5551 = vmatpush1.bf16.msra.mxu0 0
  %5552 = vmatprep.subr.bf16.mxu0 0
  %5553 = vmatpush1.bf16.msra.mxu0 0
  %5554 = vmatprep.subr.bf16.mxu0 0
  %5555 = vmatpush1.bf16.msra.mxu0 0
  %5556 = vmatprep.subr.bf16.mxu0 0
  %5557 = vmatpush1.bf16.msra.mxu0 0
  %5558 = vmatprep.subr.bf16.mxu0 0
  %5559 = vmatpush1.bf16.msra.mxu0 0
  %5560 = vmatprep.subr.bf16.mxu0 0
  %5561 = vmatpush1.bf16.msra.mxu0 0
  %5562 = vmatprep.subr.bf16.mxu0 0
  %5563 = vmatpush1.bf16.msra.mxu0 0
  %5564 = vmatprep.subr.bf16.mxu0 0
  %5565 = vmatpush1.bf16.msra.mxu0 0
  %5566 = vmatprep.subr.bf16.mxu0 0
  %5567 = vmatpush1.bf16.msra.mxu0 0
  %5568 = vmatprep.subr.bf16.mxu0 0
  %5569 = vmatpush1.bf16.msra.mxu0 0
  %5570 = vmatprep.mubr.bf16.mxu0 0
  %5571 = vmatmul.mubr.bf16.gmra.mrb[0].mxu0 %v5413
  %v5572 = vpop.f32.mrb[0].mxu0
  %v5573 = vadd.f32 %v4701, %v5572
  %v5574 = vpop.f32.mrb[0].mxu0
  %v5575 = vadd.f32 %v4705, %v5574
  %v5576 = vpop.f32.mrb[0].mxu0
  %v5577 = vpop.f32.mrb[0].mxu0
  %5578 = vdwg.mxu0
  %5579 = vmatprep.subr.bf16.mxu0 %v5224
  %5580 = vmatpush1.bf16.msra.mxu0 %v5223
  %5581 = vmatprep.subr.bf16.mxu0 %v5273
  %5582 = vmatpush1.bf16.msra.mxu0 %v5272
  %5583 = vmatprep.subr.bf16.mxu0 0
  %5584 = vmatpush1.bf16.msra.mxu0 0
  %5585 = vmatprep.subr.bf16.mxu0 0
  %5586 = vmatpush1.bf16.msra.mxu0 0
  %5587 = vmatprep.subr.bf16.mxu0 0
  %5588 = vmatpush1.bf16.msra.mxu0 0
  %5589 = vmatprep.subr.bf16.mxu0 0
  %5590 = vmatpush1.bf16.msra.mxu0 0
  %5591 = vmatprep.subr.bf16.mxu0 0
  %5592 = vmatpush1.bf16.msra.mxu0 0
  %5593 = vmatprep.subr.bf16.mxu0 0
  %5594 = vmatpush1.bf16.msra.mxu0 0
  %5595 = vmatprep.subr.bf16.mxu0 0
  %5596 = vmatpush1.bf16.msra.mxu0 0
  %5597 = vmatprep.subr.bf16.mxu0 0
  %5598 = vmatpush1.bf16.msra.mxu0 0
  %5599 = vmatprep.subr.bf16.mxu0 0
  %5600 = vmatpush1.bf16.msra.mxu0 0
  %5601 = vmatprep.subr.bf16.mxu0 0
  %5602 = vmatpush1.bf16.msra.mxu0 0
  %5603 = vmatprep.subr.bf16.mxu0 0
  %5604 = vmatpush1.bf16.msra.mxu0 0
  %5605 = vmatprep.subr.bf16.mxu0 0
  %5606 = vmatpush1.bf16.msra.mxu0 0
  %5607 = vmatprep.subr.bf16.mxu0 0
  %5608 = vmatpush1.bf16.msra.mxu0 0
  %5609 = vmatprep.subr.bf16.mxu0 0
  %5610 = vmatpush1.bf16.msra.mxu0 0
  %5611 = vmatprep.mubr.bf16.mxu0 0
  %5612 = vmatmul.mubr.bf16.gmra.mrb[0].mxu0 %v5413
  %v5613 = vpop.f32.mrb[0].mxu0
  %v5614 = vadd.f32 %v4709, %v5613
  %v5615 = vpop.f32.mrb[0].mxu0
  %v5616 = vadd.f32 %v4713, %v5615
  %v5617 = vpop.f32.mrb[0].mxu0
  %v5618 = vpop.f32.mrb[0].mxu0
  %5619 = vdwg.mxu0
  %5620 = vmatprep.subr.bf16.mxu0 %v5226
  %5621 = vmatpush1.bf16.msra.mxu0 %v5225
  %5622 = vmatprep.subr.bf16.mxu0 %v5275
  %5623 = vmatpush1.bf16.msra.mxu0 %v5274
  %5624 = vmatprep.subr.bf16.mxu0 0
  %5625 = vmatpush1.bf16.msra.mxu0 0
  %5626 = vmatprep.subr.bf16.mxu0 0
  %5627 = vmatpush1.bf16.msra.mxu0 0
  %5628 = vmatprep.subr.bf16.mxu0 0
  %5629 = vmatpush1.bf16.msra.mxu0 0
  %5630 = vmatprep.subr.bf16.mxu0 0
  %5631 = vmatpush1.bf16.msra.mxu0 0
  %5632 = vmatprep.subr.bf16.mxu0 0
  %5633 = vmatpush1.bf16.msra.mxu0 0
  %5634 = vmatprep.subr.bf16.mxu0 0
  %5635 = vmatpush1.bf16.msra.mxu0 0
  %5636 = vmatprep.subr.bf16.mxu0 0
  %5637 = vmatpush1.bf16.msra.mxu0 0
  %5638 = vmatprep.subr.bf16.mxu0 0
  %5639 = vmatpush1.bf16.msra.mxu0 0
  %5640 = vmatprep.subr.bf16.mxu0 0
  %5641 = vmatpush1.bf16.msra.mxu0 0
  %5642 = vmatprep.subr.bf16.mxu0 0
  %5643 = vmatpush1.bf16.msra.mxu0 0
  %5644 = vmatprep.subr.bf16.mxu0 0
  %5645 = vmatpush1.bf16.msra.mxu0 0
  %5646 = vmatprep.subr.bf16.mxu0 0
  %5647 = vmatpush1.bf16.msra.mxu0 0
  %5648 = vmatprep.subr.bf16.mxu0 0
  %5649 = vmatpush1.bf16.msra.mxu0 0
  %5650 = vmatprep.subr.bf16.mxu0 0
  %5651 = vmatpush1.bf16.msra.mxu0 0
  %5652 = vmatprep.mubr.bf16.mxu0 0
  %5653 = vmatmul.mubr.bf16.gmra.mrb[0].mxu0 %v5413
  %v5654 = vpop.f32.mrb[0].mxu0
  %v5655 = vadd.f32 %v4717, %v5654
  %v5656 = vpop.f32.mrb[0].mxu0
  %v5657 = vadd.f32 %v4721, %v5656
  %v5658 = vpop.f32.mrb[0].mxu0
  %v5659 = vpop.f32.mrb[0].mxu0
  %5660 = vdwg.mxu0
  %5661 = vmatprep.subr.bf16.mxu0 %v5228
  %5662 = vmatpush1.bf16.msra.mxu0 %v5227
  %5663 = vmatprep.subr.bf16.mxu0 %v5277
  %5664 = vmatpush1.bf16.msra.mxu0 %v5276
  %5665 = vmatprep.subr.bf16.mxu0 0
  %5666 = vmatpush1.bf16.msra.mxu0 0
  %5667 = vmatprep.subr.bf16.mxu0 0
  %5668 = vmatpush1.bf16.msra.mxu0 0
  %5669 = vmatprep.subr.bf16.mxu0 0
  %5670 = vmatpush1.bf16.msra.mxu0 0
  %5671 = vmatprep.subr.bf16.mxu0 0
  %5672 = vmatpush1.bf16.msra.mxu0 0
  %5673 = vmatprep.subr.bf16.mxu0 0
  %5674 = vmatpush1.bf16.msra.mxu0 0
  %5675 = vmatprep.subr.bf16.mxu0 0
  %5676 = vmatpush1.bf16.msra.mxu0 0
  %5677 = vmatprep.subr.bf16.mxu0 0
  %5678 = vmatpush1.bf16.msra.mxu0 0
  %5679 = vmatprep.subr.bf16.mxu0 0
  %5680 = vmatpush1.bf16.msra.mxu0 0
  %5681 = vmatprep.subr.bf16.mxu0 0
  %5682 = vmatpush1.bf16.msra.mxu0 0
  %5683 = vmatprep.subr.bf16.mxu0 0
  %5684 = vmatpush1.bf16.msra.mxu0 0
  %5685 = vmatprep.subr.bf16.mxu0 0
  %5686 = vmatpush1.bf16.msra.mxu0 0
  %5687 = vmatprep.subr.bf16.mxu0 0
  %5688 = vmatpush1.bf16.msra.mxu0 0
  %5689 = vmatprep.subr.bf16.mxu0 0
  %5690 = vmatpush1.bf16.msra.mxu0 0
  %5691 = vmatprep.subr.bf16.mxu0 0
  %5692 = vmatpush1.bf16.msra.mxu0 0
  %5693 = vmatprep.mubr.bf16.mxu0 0
  %5694 = vmatmul.mubr.bf16.gmra.mrb[0].mxu0 %v5413
  %v5695 = vpop.f32.mrb[0].mxu0
  %v5696 = vadd.f32 %v4725, %v5695
  %v5697 = vpop.f32.mrb[0].mxu0
  %v5698 = vadd.f32 %v4729, %v5697
  %v5699 = vpop.f32.mrb[0].mxu0
  %v5700 = vpop.f32.mrb[0].mxu0
  %5701 = vdwg.mxu0
  %5702 = vmatprep.subr.bf16.mxu0 %v5230
  %5703 = vmatpush1.bf16.msra.mxu0 %v5229
  %5704 = vmatprep.subr.bf16.mxu0 %v5279
  %5705 = vmatpush1.bf16.msra.mxu0 %v5278
  %5706 = vmatprep.subr.bf16.mxu0 0
  %5707 = vmatpush1.bf16.msra.mxu0 0
  %5708 = vmatprep.subr.bf16.mxu0 0
  %5709 = vmatpush1.bf16.msra.mxu0 0
  %5710 = vmatprep.subr.bf16.mxu0 0
  %5711 = vmatpush1.bf16.msra.mxu0 0
  %5712 = vmatprep.subr.bf16.mxu0 0
  %5713 = vmatpush1.bf16.msra.mxu0 0
  %5714 = vmatprep.subr.bf16.mxu0 0
  %5715 = vmatpush1.bf16.msra.mxu0 0
  %5716 = vmatprep.subr.bf16.mxu0 0
  %5717 = vmatpush1.bf16.msra.mxu0 0
  %5718 = vmatprep.subr.bf16.mxu0 0
  %5719 = vmatpush1.bf16.msra.mxu0 0
  %5720 = vmatprep.subr.bf16.mxu0 0
  %5721 = vmatpush1.bf16.msra.mxu0 0
  %5722 = vmatprep.subr.bf16.mxu0 0
  %5723 = vmatpush1.bf16.msra.mxu0 0
  %5724 = vmatprep.subr.bf16.mxu0 0
  %5725 = vmatpush1.bf16.msra.mxu0 0
  %5726 = vmatprep.subr.bf16.mxu0 0
  %5727 = vmatpush1.bf16.msra.mxu0 0
  %5728 = vmatprep.subr.bf16.mxu0 0
  %5729 = vmatpush1.bf16.msra.mxu0 0
  %5730 = vmatprep.subr.bf16.mxu0 0
  %5731 = vmatpush1.bf16.msra.mxu0 0
  %5732 = vmatprep.subr.bf16.mxu0 0
  %5733 = vmatpush1.bf16.msra.mxu0 0
  %5734 = vmatprep.mubr.bf16.mxu0 0
  %5735 = vmatmul.mubr.bf16.gmra.mrb[0].mxu0 %v5413
  %v5736 = vpop.f32.mrb[0].mxu0
  %v5737 = vadd.f32 %v4733, %v5736
  %v5738 = vpop.f32.mrb[0].mxu0
  %v5739 = vadd.f32 %v4737, %v5738
  %v5740 = vpop.f32.mrb[0].mxu0
  %v5741 = vpop.f32.mrb[0].mxu0
  %5742 = vdwg.mxu0
  %5743 = vmatprep.subr.bf16.mxu0 %v5232
  %5744 = vmatpush1.bf16.msra.mxu0 %v5231
  %5745 = vmatprep.subr.bf16.mxu0 %v5281
  %5746 = vmatpush1.bf16.msra.mxu0 %v5280
  %5747 = vmatprep.subr.bf16.mxu0 0
  %5748 = vmatpush1.bf16.msra.mxu0 0
  %5749 = vmatprep.subr.bf16.mxu0 0
  %5750 = vmatpush1.bf16.msra.mxu0 0
  %5751 = vmatprep.subr.bf16.mxu0 0
  %5752 = vmatpush1.bf16.msra.mxu0 0
  %5753 = vmatprep.subr.bf16.mxu0 0
  %5754 = vmatpush1.bf16.msra.mxu0 0
  %5755 = vmatprep.subr.bf16.mxu0 0
  %5756 = vmatpush1.bf16.msra.mxu0 0
  %5757 = vmatprep.subr.bf16.mxu0 0
  %5758 = vmatpush1.bf16.msra.mxu0 0
  %5759 = vmatprep.subr.bf16.mxu0 0
  %5760 = vmatpush1.bf16.msra.mxu0 0
  %5761 = vmatprep.subr.bf16.mxu0 0
  %5762 = vmatpush1.bf16.msra.mxu0 0
  %5763 = vmatprep.subr.bf16.mxu0 0
  %5764 = vmatpush1.bf16.msra.mxu0 0
  %5765 = vmatprep.subr.bf16.mxu0 0
  %5766 = vmatpush1.bf16.msra.mxu0 0
  %5767 = vmatprep.subr.bf16.mxu0 0
  %5768 = vmatpush1.bf16.msra.mxu0 0
  %5769 = vmatprep.subr.bf16.mxu0 0
  %5770 = vmatpush1.bf16.msra.mxu0 0
  %5771 = vmatprep.subr.bf16.mxu0 0
  %5772 = vmatpush1.bf16.msra.mxu0 0
  %5773 = vmatprep.subr.bf16.mxu0 0
  %5774 = vmatpush1.bf16.msra.mxu0 0
  %5775 = vmatprep.mubr.bf16.mxu0 0
  %5776 = vmatmul.mubr.bf16.gmra.mrb[0].mxu0 %v5413
  %v5777 = vpop.f32.mrb[0].mxu0
  %v5778 = vadd.f32 %v4741, %v5777
  %v5779 = vpop.f32.mrb[0].mxu0
  %v5780 = vadd.f32 %v4745, %v5779
  %v5781 = vpop.f32.mrb[0].mxu0
  %v5782 = vpop.f32.mrb[0].mxu0
  %5783 = vdwg.mxu0
  %5784 = vmatprep.subr.bf16.mxu0 %v5234
  %5785 = vmatpush1.bf16.msra.mxu0 %v5233
  %5786 = vmatprep.subr.bf16.mxu0 %v5283
  %5787 = vmatpush1.bf16.msra.mxu0 %v5282
  %5788 = vmatprep.subr.bf16.mxu0 0
  %5789 = vmatpush1.bf16.msra.mxu0 0
  %5790 = vmatprep.subr.bf16.mxu0 0
  %5791 = vmatpush1.bf16.msra.mxu0 0
  %5792 = vmatprep.subr.bf16.mxu0 0
  %5793 = vmatpush1.bf16.msra.mxu0 0
  %5794 = vmatprep.subr.bf16.mxu0 0
  %5795 = vmatpush1.bf16.msra.mxu0 0
  %5796 = vmatprep.subr.bf16.mxu0 0
  %5797 = vmatpush1.bf16.msra.mxu0 0
  %5798 = vmatprep.subr.bf16.mxu0 0
  %5799 = vmatpush1.bf16.msra.mxu0 0
  %5800 = vmatprep.subr.bf16.mxu0 0
  %5801 = vmatpush1.bf16.msra.mxu0 0
  %5802 = vmatprep.subr.bf16.mxu0 0
  %5803 = vmatpush1.bf16.msra.mxu0 0
  %5804 = vmatprep.subr.bf16.mxu0 0
  %5805 = vmatpush1.bf16.msra.mxu0 0
  %5806 = vmatprep.subr.bf16.mxu0 0
  %5807 = vmatpush1.bf16.msra.mxu0 0
  %5808 = vmatprep.subr.bf16.mxu0 0
  %5809 = vmatpush1.bf16.msra.mxu0 0
  %5810 = vmatprep.subr.bf16.mxu0 0
  %5811 = vmatpush1.bf16.msra.mxu0 0
  %5812 = vmatprep.subr.bf16.mxu0 0
  %5813 = vmatpush1.bf16.msra.mxu0 0
  %5814 = vmatprep.subr.bf16.mxu0 0
  %5815 = vmatpush1.bf16.msra.mxu0 0
  %5816 = vmatprep.mubr.bf16.mxu0 0
  %5817 = vmatmul.mubr.bf16.gmra.mrb[0].mxu0 %v5413
  %v5818 = vpop.f32.mrb[0].mxu0
  %v5819 = vadd.f32 %v4749, %v5818
  %v5820 = vpop.f32.mrb[0].mxu0
  %v5821 = vadd.f32 %v4753, %v5820
  %v5822 = vpop.f32.mrb[0].mxu0
  %v5823 = vpop.f32.mrb[0].mxu0
  %5824 = vdwg.mxu0
  %5825 = vmatprep.subr.bf16.mxu0 %v5236
  %5826 = vmatpush1.bf16.msra.mxu0 %v5235
  %5827 = vmatprep.subr.bf16.mxu0 %v5285
  %5828 = vmatpush1.bf16.msra.mxu0 %v5284
  %5829 = vmatprep.subr.bf16.mxu0 0
  %5830 = vmatpush1.bf16.msra.mxu0 0
  %5831 = vmatprep.subr.bf16.mxu0 0
  %5832 = vmatpush1.bf16.msra.mxu0 0
  %5833 = vmatprep.subr.bf16.mxu0 0
  %5834 = vmatpush1.bf16.msra.mxu0 0
  %5835 = vmatprep.subr.bf16.mxu0 0
  %5836 = vmatpush1.bf16.msra.mxu0 0
  %5837 = vmatprep.subr.bf16.mxu0 0
  %5838 = vmatpush1.bf16.msra.mxu0 0
  %5839 = vmatprep.subr.bf16.mxu0 0
  %5840 = vmatpush1.bf16.msra.mxu0 0
  %5841 = vmatprep.subr.bf16.mxu0 0
  %5842 = vmatpush1.bf16.msra.mxu0 0
  %5843 = vmatprep.subr.bf16.mxu0 0
  %5844 = vmatpush1.bf16.msra.mxu0 0
  %5845 = vmatprep.subr.bf16.mxu0 0
  %5846 = vmatpush1.bf16.msra.mxu0 0
  %5847 = vmatprep.subr.bf16.mxu0 0
  %5848 = vmatpush1.bf16.msra.mxu0 0
  %5849 = vmatprep.subr.bf16.mxu0 0
  %5850 = vmatpush1.bf16.msra.mxu0 0
  %5851 = vmatprep.subr.bf16.mxu0 0
  %5852 = vmatpush1.bf16.msra.mxu0 0
  %5853 = vmatprep.subr.bf16.mxu0 0
  %5854 = vmatpush1.bf16.msra.mxu0 0
  %5855 = vmatprep.subr.bf16.mxu0 0
  %5856 = vmatpush1.bf16.msra.mxu0 0
  %5857 = vmatprep.mubr.bf16.mxu0 0
  %5858 = vmatmul.mubr.bf16.gmra.mrb[0].mxu0 %v5413
  %v5859 = vpop.f32.mrb[0].mxu0
  %v5860 = vadd.f32 %v4757, %v5859
  %v5861 = vpop.f32.mrb[0].mxu0
  %v5862 = vadd.f32 %v4761, %v5861
  %v5863 = vpop.f32.mrb[0].mxu0
  %v5864 = vpop.f32.mrb[0].mxu0
  %5865 = vdwg.mxu0
  %5866 = vmatprep.subr.bf16.mxu0 %v5238
  %5867 = vmatpush1.bf16.msra.mxu0 %v5237
  %5868 = vmatprep.subr.bf16.mxu0 %v5287
  %5869 = vmatpush1.bf16.msra.mxu0 %v5286
  %5870 = vmatprep.subr.bf16.mxu0 0
  %5871 = vmatpush1.bf16.msra.mxu0 0
  %5872 = vmatprep.subr.bf16.mxu0 0
  %5873 = vmatpush1.bf16.msra.mxu0 0
  %5874 = vmatprep.subr.bf16.mxu0 0
  %5875 = vmatpush1.bf16.msra.mxu0 0
  %5876 = vmatprep.subr.bf16.mxu0 0
  %5877 = vmatpush1.bf16.msra.mxu0 0
  %5878 = vmatprep.subr.bf16.mxu0 0
  %5879 = vmatpush1.bf16.msra.mxu0 0
  %5880 = vmatprep.subr.bf16.mxu0 0
  %5881 = vmatpush1.bf16.msra.mxu0 0
  %5882 = vmatprep.subr.bf16.mxu0 0
  %5883 = vmatpush1.bf16.msra.mxu0 0
  %5884 = vmatprep.subr.bf16.mxu0 0
  %5885 = vmatpush1.bf16.msra.mxu0 0
  %5886 = vmatprep.subr.bf16.mxu0 0
  %5887 = vmatpush1.bf16.msra.mxu0 0
  %5888 = vmatprep.subr.bf16.mxu0 0
  %5889 = vmatpush1.bf16.msra.mxu0 0
  %5890 = vmatprep.subr.bf16.mxu0 0
  %5891 = vmatpush1.bf16.msra.mxu0 0
  %5892 = vmatprep.subr.bf16.mxu0 0
  %5893 = vmatpush1.bf16.msra.mxu0 0
  %5894 = vmatprep.subr.bf16.mxu0 0
  %5895 = vmatpush1.bf16.msra.mxu0 0
  %5896 = vmatprep.subr.bf16.mxu0 0
  %5897 = vmatpush1.bf16.msra.mxu0 0
  %5898 = vmatprep.mubr.bf16.mxu0 0
  %5899 = vmatmul.mubr.bf16.gmra.mrb[0].mxu0 %v5413
  %v5900 = vpop.f32.mrb[0].mxu0
  %v5901 = vadd.f32 %v4765, %v5900
  %v5902 = vpop.f32.mrb[0].mxu0
  %v5903 = vadd.f32 %v4769, %v5902
  %v5904 = vpop.f32.mrb[0].mxu0
  %v5905 = vpop.f32.mrb[0].mxu0
  %5906 = vdwg.mxu0
  %5907 = vmatprep.subr.bf16.mxu0 %v5240
  %5908 = vmatpush1.bf16.msra.mxu0 %v5239
  %5909 = vmatprep.subr.bf16.mxu0 %v5289
  %5910 = vmatpush1.bf16.msra.mxu0 %v5288
  %5911 = vmatprep.subr.bf16.mxu0 0
  %5912 = vmatpush1.bf16.msra.mxu0 0
  %5913 = vmatprep.subr.bf16.mxu0 0
  %5914 = vmatpush1.bf16.msra.mxu0 0
  %5915 = vmatprep.subr.bf16.mxu0 0
  %5916 = vmatpush1.bf16.msra.mxu0 0
  %5917 = vmatprep.subr.bf16.mxu0 0
  %5918 = vmatpush1.bf16.msra.mxu0 0
  %5919 = vmatprep.subr.bf16.mxu0 0
  %5920 = vmatpush1.bf16.msra.mxu0 0
  %5921 = vmatprep.subr.bf16.mxu0 0
  %5922 = vmatpush1.bf16.msra.mxu0 0
  %5923 = vmatprep.subr.bf16.mxu0 0
  %5924 = vmatpush1.bf16.msra.mxu0 0
  %5925 = vmatprep.subr.bf16.mxu0 0
  %5926 = vmatpush1.bf16.msra.mxu0 0
  %5927 = vmatprep.subr.bf16.mxu0 0
  %5928 = vmatpush1.bf16.msra.mxu0 0
  %5929 = vmatprep.subr.bf16.mxu0 0
  %5930 = vmatpush1.bf16.msra.mxu0 0
  %5931 = vmatprep.subr.bf16.mxu0 0
  %5932 = vmatpush1.bf16.msra.mxu0 0
  %5933 = vmatprep.subr.bf16.mxu0 0
  %5934 = vmatpush1.bf16.msra.mxu0 0
  %5935 = vmatprep.subr.bf16.mxu0 0
  %5936 = vmatpush1.bf16.msra.mxu0 0
  %5937 = vmatprep.subr.bf16.mxu0 0
  %5938 = vmatpush1.bf16.msra.mxu0 0
  %5939 = vmatprep.mubr.bf16.mxu0 0
  %5940 = vmatmul.mubr.bf16.gmra.mrb[0].mxu0 %v5413
  %v5941 = vpop.f32.mrb[0].mxu0
  %v5942 = vadd.f32 %v4773, %v5941
  %v5943 = vpop.f32.mrb[0].mxu0
  %v5944 = vadd.f32 %v4777, %v5943
  %v5945 = vpop.f32.mrb[0].mxu0
  %v5946 = vpop.f32.mrb[0].mxu0
  %5947 = vdwg.mxu0
  %5948 = vmatprep.subr.bf16.mxu0 %v5242
  %5949 = vmatpush1.bf16.msra.mxu0 %v5241
  %5950 = vmatprep.subr.bf16.mxu0 %v5291
  %5951 = vmatpush1.bf16.msra.mxu0 %v5290
  %5952 = vmatprep.subr.bf16.mxu0 0
  %5953 = vmatpush1.bf16.msra.mxu0 0
  %5954 = vmatprep.subr.bf16.mxu0 0
  %5955 = vmatpush1.bf16.msra.mxu0 0
  %5956 = vmatprep.subr.bf16.mxu0 0
  %5957 = vmatpush1.bf16.msra.mxu0 0
  %5958 = vmatprep.subr.bf16.mxu0 0
  %5959 = vmatpush1.bf16.msra.mxu0 0
  %5960 = vmatprep.subr.bf16.mxu0 0
  %5961 = vmatpush1.bf16.msra.mxu0 0
  %5962 = vmatprep.subr.bf16.mxu0 0
  %5963 = vmatpush1.bf16.msra.mxu0 0
  %5964 = vmatprep.subr.bf16.mxu0 0
  %5965 = vmatpush1.bf16.msra.mxu0 0
  %5966 = vmatprep.subr.bf16.mxu0 0
  %5967 = vmatpush1.bf16.msra.mxu0 0
  %5968 = vmatprep.subr.bf16.mxu0 0
  %5969 = vmatpush1.bf16.msra.mxu0 0
  %5970 = vmatprep.subr.bf16.mxu0 0
  %5971 = vmatpush1.bf16.msra.mxu0 0
  %5972 = vmatprep.subr.bf16.mxu0 0
  %5973 = vmatpush1.bf16.msra.mxu0 0
  %5974 = vmatprep.subr.bf16.mxu0 0
  %5975 = vmatpush1.bf16.msra.mxu0 0
  %5976 = vmatprep.subr.bf16.mxu0 0
  %5977 = vmatpush1.bf16.msra.mxu0 0
  %5978 = vmatprep.subr.bf16.mxu0 0
  %5979 = vmatpush1.bf16.msra.mxu0 0
  %5980 = vmatprep.mubr.bf16.mxu0 0
  %5981 = vmatmul.mubr.bf16.gmra.mrb[0].mxu0 %v5413
  %v5982 = vpop.f32.mrb[0].mxu0
  %v5983 = vadd.f32 %v4781, %v5982
  %v5984 = vpop.f32.mrb[0].mxu0
  %v5985 = vadd.f32 %v4785, %v5984
  %v5986 = vpop.f32.mrb[0].mxu0
  %v5987 = vpop.f32.mrb[0].mxu0
  %5988 = vdwg.mxu0
  %5989 = vmatprep.subr.bf16.mxu0 %v5244
  %5990 = vmatpush1.bf16.msra.mxu0 %v5243
  %5991 = vmatprep.subr.bf16.mxu0 %v5293
  %5992 = vmatpush1.bf16.msra.mxu0 %v5292
  %5993 = vmatprep.subr.bf16.mxu0 0
  %5994 = vmatpush1.bf16.msra.mxu0 0
  %5995 = vmatprep.subr.bf16.mxu0 0
  %5996 = vmatpush1.bf16.msra.mxu0 0
  %5997 = vmatprep.subr.bf16.mxu0 0
  %5998 = vmatpush1.bf16.msra.mxu0 0
  %5999 = vmatprep.subr.bf16.mxu0 0
  %6000 = vmatpush1.bf16.msra.mxu0 0
  %6001 = vmatprep.subr.bf16.mxu0 0
  %6002 = vmatpush1.bf16.msra.mxu0 0
  %6003 = vmatprep.subr.bf16.mxu0 0
  %6004 = vmatpush1.bf16.msra.mxu0 0
  %6005 = vmatprep.subr.bf16.mxu0 0
  %6006 = vmatpush1.bf16.msra.mxu0 0
  %6007 = vmatprep.subr.bf16.mxu0 0
  %6008 = vmatpush1.bf16.msra.mxu0 0
  %6009 = vmatprep.subr.bf16.mxu0 0
  %6010 = vmatpush1.bf16.msra.mxu0 0
  %6011 = vmatprep.subr.bf16.mxu0 0
  %6012 = vmatpush1.bf16.msra.mxu0 0
  %6013 = vmatprep.subr.bf16.mxu0 0
  %6014 = vmatpush1.bf16.msra.mxu0 0
  %6015 = vmatprep.subr.bf16.mxu0 0
  %6016 = vmatpush1.bf16.msra.mxu0 0
  %6017 = vmatprep.subr.bf16.mxu0 0
  %6018 = vmatpush1.bf16.msra.mxu0 0
  %6019 = vmatprep.subr.bf16.mxu0 0
  %6020 = vmatpush1.bf16.msra.mxu0 0
  %6021 = vmatprep.mubr.bf16.mxu0 0
  %6022 = vmatmul.mubr.bf16.gmra.mrb[0].mxu0 %v5413
  %v6023 = vpop.f32.mrb[0].mxu0
  %v6024 = vadd.f32 %v4789, %v6023
  %v6025 = vpop.f32.mrb[0].mxu0
  %v6026 = vadd.f32 %v4793, %v6025
  %v6027 = vpop.f32.mrb[0].mxu0
  %v6028 = vpop.f32.mrb[0].mxu0
  %6029 = vdwg.mxu0
  %6030 = vmatprep.subr.bf16.mxu0 %v5246
  %6031 = vmatpush1.bf16.msra.mxu0 %v5245
  %6032 = vmatprep.subr.bf16.mxu0 %v5295
  %6033 = vmatpush1.bf16.msra.mxu0 %v5294
  %6034 = vmatprep.subr.bf16.mxu0 0
  %6035 = vmatpush1.bf16.msra.mxu0 0
  %6036 = vmatprep.subr.bf16.mxu0 0
  %6037 = vmatpush1.bf16.msra.mxu0 0
  %6038 = vmatprep.subr.bf16.mxu0 0
  %6039 = vmatpush1.bf16.msra.mxu0 0
  %6040 = vmatprep.subr.bf16.mxu0 0
  %6041 = vmatpush1.bf16.msra.mxu0 0
  %6042 = vmatprep.subr.bf16.mxu0 0
  %6043 = vmatpush1.bf16.msra.mxu0 0
  %6044 = vmatprep.subr.bf16.mxu0 0
  %6045 = vmatpush1.bf16.msra.mxu0 0
  %6046 = vmatprep.subr.bf16.mxu0 0
  %6047 = vmatpush1.bf16.msra.mxu0 0
  %6048 = vmatprep.subr.bf16.mxu0 0
  %6049 = vmatpush1.bf16.msra.mxu0 0
  %6050 = vmatprep.subr.bf16.mxu0 0
  %6051 = vmatpush1.bf16.msra.mxu0 0
  %6052 = vmatprep.subr.bf16.mxu0 0
  %6053 = vmatpush1.bf16.msra.mxu0 0
  %6054 = vmatprep.subr.bf16.mxu0 0
  %6055 = vmatpush1.bf16.msra.mxu0 0
  %6056 = vmatprep.subr.bf16.mxu0 0
  %6057 = vmatpush1.bf16.msra.mxu0 0
  %6058 = vmatprep.subr.bf16.mxu0 0
  %6059 = vmatpush1.bf16.msra.mxu0 0
  %6060 = vmatprep.subr.bf16.mxu0 0
  %6061 = vmatpush1.bf16.msra.mxu0 0
  %6062 = vmatprep.mubr.bf16.mxu0 0
  %6063 = vmatmul.mubr.bf16.gmra.mrb[0].mxu0 %v5413
  %v6064 = vpop.f32.mrb[0].mxu0
  %v6065 = vadd.f32 %v4797, %v6064
  %v6066 = vpop.f32.mrb[0].mxu0
  %v6067 = vadd.f32 %v4801, %v6066
  %v6068 = vpop.f32.mrb[0].mxu0
  %v6069 = vpop.f32.mrb[0].mxu0
  %6070 = vdwg.mxu0
  %6071 = vmatprep.subr.bf16.mxu0 %v5248
  %6072 = vmatpush1.bf16.msra.mxu0 %v5247
  %6073 = vmatprep.subr.bf16.mxu0 %v5297
  %6074 = vmatpush1.bf16.msra.mxu0 %v5296
  %6075 = vmatprep.subr.bf16.mxu0 0
  %6076 = vmatpush1.bf16.msra.mxu0 0
  %6077 = vmatprep.subr.bf16.mxu0 0
  %6078 = vmatpush1.bf16.msra.mxu0 0
  %6079 = vmatprep.subr.bf16.mxu0 0
  %6080 = vmatpush1.bf16.msra.mxu0 0
  %6081 = vmatprep.subr.bf16.mxu0 0
  %6082 = vmatpush1.bf16.msra.mxu0 0
  %6083 = vmatprep.subr.bf16.mxu0 0
  %6084 = vmatpush1.bf16.msra.mxu0 0
  %6085 = vmatprep.subr.bf16.mxu0 0
  %6086 = vmatpush1.bf16.msra.mxu0 0
  %6087 = vmatprep.subr.bf16.mxu0 0
  %6088 = vmatpush1.bf16.msra.mxu0 0
  %6089 = vmatprep.subr.bf16.mxu0 0
  %6090 = vmatpush1.bf16.msra.mxu0 0
  %6091 = vmatprep.subr.bf16.mxu0 0
  %6092 = vmatpush1.bf16.msra.mxu0 0
  %6093 = vmatprep.subr.bf16.mxu0 0
  %6094 = vmatpush1.bf16.msra.mxu0 0
  %6095 = vmatprep.subr.bf16.mxu0 0
  %6096 = vmatpush1.bf16.msra.mxu0 0
  %6097 = vmatprep.subr.bf16.mxu0 0
  %6098 = vmatpush1.bf16.msra.mxu0 0
  %6099 = vmatprep.subr.bf16.mxu0 0
  %6100 = vmatpush1.bf16.msra.mxu0 0
  %6101 = vmatprep.subr.bf16.mxu0 0
  %6102 = vmatpush1.bf16.msra.mxu0 0
  %6103 = vmatprep.mubr.bf16.mxu0 0
  %6104 = vmatmul.mubr.bf16.gmra.mrb[0].mxu0 %v5413
  %v6105 = vpop.f32.mrb[0].mxu0
  %v6106 = vadd.f32 %v4805, %v6105
  %v6107 = vpop.f32.mrb[0].mxu0
  %v6108 = vadd.f32 %v4809, %v6107
  %v6109 = vpop.f32.mrb[0].mxu0
  %v6110 = vpop.f32.mrb[0].mxu0
  %6111 = vdwg.mxu0
  %6112 = vmatprep.subr.bf16.mxu0 %v5250
  %6113 = vmatpush1.bf16.msra.mxu0 %v5249
  %6114 = vmatprep.subr.bf16.mxu0 %v5299
  %6115 = vmatpush1.bf16.msra.mxu0 %v5298
  %6116 = vmatprep.subr.bf16.mxu0 0
  %6117 = vmatpush1.bf16.msra.mxu0 0
  %6118 = vmatprep.subr.bf16.mxu0 0
  %6119 = vmatpush1.bf16.msra.mxu0 0
  %6120 = vmatprep.subr.bf16.mxu0 0
  %6121 = vmatpush1.bf16.msra.mxu0 0
  %6122 = vmatprep.subr.bf16.mxu0 0
  %6123 = vmatpush1.bf16.msra.mxu0 0
  %6124 = vmatprep.subr.bf16.mxu0 0
  %6125 = vmatpush1.bf16.msra.mxu0 0
  %6126 = vmatprep.subr.bf16.mxu0 0
  %6127 = vmatpush1.bf16.msra.mxu0 0
  %6128 = vmatprep.subr.bf16.mxu0 0
  %6129 = vmatpush1.bf16.msra.mxu0 0
  %6130 = vmatprep.subr.bf16.mxu0 0
  %6131 = vmatpush1.bf16.msra.mxu0 0
  %6132 = vmatprep.subr.bf16.mxu0 0
  %6133 = vmatpush1.bf16.msra.mxu0 0
  %6134 = vmatprep.subr.bf16.mxu0 0
  %6135 = vmatpush1.bf16.msra.mxu0 0
  %6136 = vmatprep.subr.bf16.mxu0 0
  %6137 = vmatpush1.bf16.msra.mxu0 0
  %6138 = vmatprep.subr.bf16.mxu0 0
  %6139 = vmatpush1.bf16.msra.mxu0 0
  %6140 = vmatprep.subr.bf16.mxu0 0
  %6141 = vmatpush1.bf16.msra.mxu0 0
  %6142 = vmatprep.subr.bf16.mxu0 0
  %6143 = vmatpush1.bf16.msra.mxu0 0
  %6144 = vmatprep.mubr.bf16.mxu0 0
  %6145 = vmatmul.mubr.bf16.gmra.mrb[0].mxu0 %v5413
  %v6146 = vpop.f32.mrb[0].mxu0
  %v6147 = vadd.f32 %v4813, %v6146
  %v6148 = vpop.f32.mrb[0].mxu0
  %v6149 = vadd.f32 %v4817, %v6148
  %v6150 = vpop.f32.mrb[0].mxu0
  %v6151 = vpop.f32.mrb[0].mxu0
  %6152 = vdwg.mxu0
  %6153 = vmatprep.subr.bf16.mxu0 %v5252
  %6154 = vmatpush1.bf16.msra.mxu0 %v5251
  %6155 = vmatprep.subr.bf16.mxu0 %v5301
  %6156 = vmatpush1.bf16.msra.mxu0 %v5300
  %6157 = vmatprep.subr.bf16.mxu0 0
  %6158 = vmatpush1.bf16.msra.mxu0 0
  %6159 = vmatprep.subr.bf16.mxu0 0
  %6160 = vmatpush1.bf16.msra.mxu0 0
  %6161 = vmatprep.subr.bf16.mxu0 0
  %6162 = vmatpush1.bf16.msra.mxu0 0
  %6163 = vmatprep.subr.bf16.mxu0 0
  %6164 = vmatpush1.bf16.msra.mxu0 0
  %6165 = vmatprep.subr.bf16.mxu0 0
  %6166 = vmatpush1.bf16.msra.mxu0 0
  %6167 = vmatprep.subr.bf16.mxu0 0
  %6168 = vmatpush1.bf16.msra.mxu0 0
  %6169 = vmatprep.subr.bf16.mxu0 0
  %6170 = vmatpush1.bf16.msra.mxu0 0
  %6171 = vmatprep.subr.bf16.mxu0 0
  %6172 = vmatpush1.bf16.msra.mxu0 0
  %6173 = vmatprep.subr.bf16.mxu0 0
  %6174 = vmatpush1.bf16.msra.mxu0 0
  %6175 = vmatprep.subr.bf16.mxu0 0
  %6176 = vmatpush1.bf16.msra.mxu0 0
  %6177 = vmatprep.subr.bf16.mxu0 0
  %6178 = vmatpush1.bf16.msra.mxu0 0
  %6179 = vmatprep.subr.bf16.mxu0 0
  %6180 = vmatpush1.bf16.msra.mxu0 0
  %6181 = vmatprep.subr.bf16.mxu0 0
  %6182 = vmatpush1.bf16.msra.mxu0 0
  %6183 = vmatprep.subr.bf16.mxu0 0
  %6184 = vmatpush1.bf16.msra.mxu0 0
  %6185 = vmatprep.mubr.bf16.mxu0 0
  %6186 = vmatmul.mubr.bf16.gmra.mrb[0].mxu0 %v5413
  %v6187 = vpop.f32.mrb[0].mxu0
  %v6188 = vadd.f32 %v4821, %v6187
  %v6189 = vpop.f32.mrb[0].mxu0
  %v6190 = vadd.f32 %v4825, %v6189
  %v6191 = vpop.f32.mrb[0].mxu0
  %v6192 = vpop.f32.mrb[0].mxu0
  %6193 = vdwg.mxu0
  %6194 = vmatprep.subr.bf16.mxu0 %v5254
  %6195 = vmatpush1.bf16.msra.mxu0 %v5253
  %6196 = vmatprep.subr.bf16.mxu0 %v5303
  %6197 = vmatpush1.bf16.msra.mxu0 %v5302
  %6198 = vmatprep.subr.bf16.mxu0 0
  %6199 = vmatpush1.bf16.msra.mxu0 0
  %6200 = vmatprep.subr.bf16.mxu0 0
  %6201 = vmatpush1.bf16.msra.mxu0 0
  %6202 = vmatprep.subr.bf16.mxu0 0
  %6203 = vmatpush1.bf16.msra.mxu0 0
  %6204 = vmatprep.subr.bf16.mxu0 0
  %6205 = vmatpush1.bf16.msra.mxu0 0
  %6206 = vmatprep.subr.bf16.mxu0 0
  %6207 = vmatpush1.bf16.msra.mxu0 0
  %6208 = vmatprep.subr.bf16.mxu0 0
  %6209 = vmatpush1.bf16.msra.mxu0 0
  %6210 = vmatprep.subr.bf16.mxu0 0
  %6211 = vmatpush1.bf16.msra.mxu0 0
  %6212 = vmatprep.subr.bf16.mxu0 0
  %6213 = vmatpush1.bf16.msra.mxu0 0
  %6214 = vmatprep.subr.bf16.mxu0 0
  %6215 = vmatpush1.bf16.msra.mxu0 0
  %6216 = vmatprep.subr.bf16.mxu0 0
  %6217 = vmatpush1.bf16.msra.mxu0 0
  %6218 = vmatprep.subr.bf16.mxu0 0
  %6219 = vmatpush1.bf16.msra.mxu0 0
  %6220 = vmatprep.subr.bf16.mxu0 0
  %6221 = vmatpush1.bf16.msra.mxu0 0
  %6222 = vmatprep.subr.bf16.mxu0 0
  %6223 = vmatpush1.bf16.msra.mxu0 0
  %6224 = vmatprep.subr.bf16.mxu0 0
  %6225 = vmatpush1.bf16.msra.mxu0 0
  %6226 = vmatprep.mubr.bf16.mxu0 0
  %6227 = vmatmul.mubr.bf16.gmra.mrb[0].mxu0 %v5413
  %v6228 = vpop.f32.mrb[0].mxu0
  %v6229 = vadd.f32 %v4829, %v6228
  %v6230 = vpop.f32.mrb[0].mxu0
  %v6231 = vadd.f32 %v4833, %v6230
  %v6232 = vpop.f32.mrb[0].mxu0
  %v6233 = vpop.f32.mrb[0].mxu0
  %6234 = vdwg.mxu0
  %6235 = vmatprep.subr.bf16.mxu0 %v5256
  %6236 = vmatpush1.bf16.msra.mxu0 %v5255
  %6237 = vmatprep.subr.bf16.mxu0 %v5305
  %6238 = vmatpush1.bf16.msra.mxu0 %v5304
  %6239 = vmatprep.subr.bf16.mxu0 0
  %6240 = vmatpush1.bf16.msra.mxu0 0
  %6241 = vmatprep.subr.bf16.mxu0 0
  %6242 = vmatpush1.bf16.msra.mxu0 0
  %6243 = vmatprep.subr.bf16.mxu0 0
  %6244 = vmatpush1.bf16.msra.mxu0 0
  %6245 = vmatprep.subr.bf16.mxu0 0
  %6246 = vmatpush1.bf16.msra.mxu0 0
  %6247 = vmatprep.subr.bf16.mxu0 0
  %6248 = vmatpush1.bf16.msra.mxu0 0
  %6249 = vmatprep.subr.bf16.mxu0 0
  %6250 = vmatpush1.bf16.msra.mxu0 0
  %6251 = vmatprep.subr.bf16.mxu0 0
  %6252 = vmatpush1.bf16.msra.mxu0 0
  %6253 = vmatprep.subr.bf16.mxu0 0
  %6254 = vmatpush1.bf16.msra.mxu0 0
  %6255 = vmatprep.subr.bf16.mxu0 0
  %6256 = vmatpush1.bf16.msra.mxu0 0
  %6257 = vmatprep.subr.bf16.mxu0 0
  %6258 = vmatpush1.bf16.msra.mxu0 0
  %6259 = vmatprep.subr.bf16.mxu0 0
  %6260 = vmatpush1.bf16.msra.mxu0 0
  %6261 = vmatprep.subr.bf16.mxu0 0
  %6262 = vmatpush1.bf16.msra.mxu0 0
  %6263 = vmatprep.subr.bf16.mxu0 0
  %6264 = vmatpush1.bf16.msra.mxu0 0
  %6265 = vmatprep.subr.bf16.mxu0 0
  %6266 = vmatpush1.bf16.msra.mxu0 0
  %6267 = vmatprep.mubr.bf16.mxu0 0
  %6268 = vmatmul.mubr.bf16.gmra.mrb[0].mxu0 %v5413
  %v6269 = vpop.f32.mrb[0].mxu0
  %v6270 = vadd.f32 %v4837, %v6269
  %v6271 = vpop.f32.mrb[0].mxu0
  %v6272 = vadd.f32 %v4841, %v6271
  %v6273 = vpop.f32.mrb[0].mxu0
  %v6274 = vpop.f32.mrb[0].mxu0
  %6275 = vdwg.mxu0
  %6276 = vmatprep.subr.bf16.mxu0 %v5258
  %6277 = vmatpush1.bf16.msra.mxu0 %v5257
  %6278 = vmatprep.subr.bf16.mxu0 %v5307
  %6279 = vmatpush1.bf16.msra.mxu0 %v5306
  %6280 = vmatprep.subr.bf16.mxu0 0
  %6281 = vmatpush1.bf16.msra.mxu0 0
  %6282 = vmatprep.subr.bf16.mxu0 0
  %6283 = vmatpush1.bf16.msra.mxu0 0
  %6284 = vmatprep.subr.bf16.mxu0 0
  %6285 = vmatpush1.bf16.msra.mxu0 0
  %6286 = vmatprep.subr.bf16.mxu0 0
  %6287 = vmatpush1.bf16.msra.mxu0 0
  %6288 = vmatprep.subr.bf16.mxu0 0
  %6289 = vmatpush1.bf16.msra.mxu0 0
  %6290 = vmatprep.subr.bf16.mxu0 0
  %6291 = vmatpush1.bf16.msra.mxu0 0
  %6292 = vmatprep.subr.bf16.mxu0 0
  %6293 = vmatpush1.bf16.msra.mxu0 0
  %6294 = vmatprep.subr.bf16.mxu0 0
  %6295 = vmatpush1.bf16.msra.mxu0 0
  %6296 = vmatprep.subr.bf16.mxu0 0
  %6297 = vmatpush1.bf16.msra.mxu0 0
  %6298 = vmatprep.subr.bf16.mxu0 0
  %6299 = vmatpush1.bf16.msra.mxu0 0
  %6300 = vmatprep.subr.bf16.mxu0 0
  %6301 = vmatpush1.bf16.msra.mxu0 0
  %6302 = vmatprep.subr.bf16.mxu0 0
  %6303 = vmatpush1.bf16.msra.mxu0 0
  %6304 = vmatprep.subr.bf16.mxu0 0
  %6305 = vmatpush1.bf16.msra.mxu0 0
  %6306 = vmatprep.subr.bf16.mxu0 0
  %6307 = vmatpush1.bf16.msra.mxu0 0
  %6308 = vmatprep.mubr.bf16.mxu0 0
  %6309 = vmatmul.mubr.bf16.gmra.mrb[0].mxu0 %v5413
  %v6310 = vpop.f32.mrb[0].mxu0
  %v6311 = vadd.f32 %v4845, %v6310
  %v6312 = vpop.f32.mrb[0].mxu0
  %v6313 = vadd.f32 %v4849, %v6312
  %v6314 = vpop.f32.mrb[0].mxu0
  %v6315 = vpop.f32.mrb[0].mxu0
  %6316 = vdwg.mxu0
  %6317 = vmatprep.subr.bf16.mxu0 %v5260
  %6318 = vmatpush1.bf16.msra.mxu0 %v5259
  %6319 = vmatprep.subr.bf16.mxu0 %v5309
  %6320 = vmatpush1.bf16.msra.mxu0 %v5308
  %6321 = vmatprep.subr.bf16.mxu0 0
  %6322 = vmatpush1.bf16.msra.mxu0 0
  %6323 = vmatprep.subr.bf16.mxu0 0
  %6324 = vmatpush1.bf16.msra.mxu0 0
  %6325 = vmatprep.subr.bf16.mxu0 0
  %6326 = vmatpush1.bf16.msra.mxu0 0
  %6327 = vmatprep.subr.bf16.mxu0 0
  %6328 = vmatpush1.bf16.msra.mxu0 0
  %6329 = vmatprep.subr.bf16.mxu0 0
  %6330 = vmatpush1.bf16.msra.mxu0 0
  %6331 = vmatprep.subr.bf16.mxu0 0
  %6332 = vmatpush1.bf16.msra.mxu0 0
  %6333 = vmatprep.subr.bf16.mxu0 0
  %6334 = vmatpush1.bf16.msra.mxu0 0
  %6335 = vmatprep.subr.bf16.mxu0 0
  %6336 = vmatpush1.bf16.msra.mxu0 0
  %6337 = vmatprep.subr.bf16.mxu0 0
  %6338 = vmatpush1.bf16.msra.mxu0 0
  %6339 = vmatprep.subr.bf16.mxu0 0
  %6340 = vmatpush1.bf16.msra.mxu0 0
  %6341 = vmatprep.subr.bf16.mxu0 0
  %6342 = vmatpush1.bf16.msra.mxu0 0
  %6343 = vmatprep.subr.bf16.mxu0 0
  %6344 = vmatpush1.bf16.msra.mxu0 0
  %6345 = vmatprep.subr.bf16.mxu0 0
  %6346 = vmatpush1.bf16.msra.mxu0 0
  %6347 = vmatprep.subr.bf16.mxu0 0
  %6348 = vmatpush1.bf16.msra.mxu0 0
  %6349 = vmatprep.mubr.bf16.mxu0 0
  %6350 = vmatmul.mubr.bf16.gmra.mrb[0].mxu0 %v5413
  %v6351 = vpop.f32.mrb[0].mxu0
  %v6352 = vadd.f32 %v4853, %v6351
  %v6353 = vpop.f32.mrb[0].mxu0
  %v6354 = vadd.f32 %v4857, %v6353
  %v6355 = vpop.f32.mrb[0].mxu0
  %v6356 = vpop.f32.mrb[0].mxu0
  %6357 = vdwg.mxu0
  %6358 = vmatprep.subr.bf16.mxu0 %v5262
  %6359 = vmatpush1.bf16.msra.mxu0 %v5261
  %6360 = vmatprep.subr.bf16.mxu0 %v5311
  %6361 = vmatpush1.bf16.msra.mxu0 %v5310
  %6362 = vmatprep.subr.bf16.mxu0 0
  %6363 = vmatpush1.bf16.msra.mxu0 0
  %6364 = vmatprep.subr.bf16.mxu0 0
  %6365 = vmatpush1.bf16.msra.mxu0 0
  %6366 = vmatprep.subr.bf16.mxu0 0
  %6367 = vmatpush1.bf16.msra.mxu0 0
  %6368 = vmatprep.subr.bf16.mxu0 0
  %6369 = vmatpush1.bf16.msra.mxu0 0
  %6370 = vmatprep.subr.bf16.mxu0 0
  %6371 = vmatpush1.bf16.msra.mxu0 0
  %6372 = vmatprep.subr.bf16.mxu0 0
  %6373 = vmatpush1.bf16.msra.mxu0 0
  %6374 = vmatprep.subr.bf16.mxu0 0
  %6375 = vmatpush1.bf16.msra.mxu0 0
  %6376 = vmatprep.subr.bf16.mxu0 0
  %6377 = vmatpush1.bf16.msra.mxu0 0
  %6378 = vmatprep.subr.bf16.mxu0 0
  %6379 = vmatpush1.bf16.msra.mxu0 0
  %6380 = vmatprep.subr.bf16.mxu0 0
  %6381 = vmatpush1.bf16.msra.mxu0 0
  %6382 = vmatprep.subr.bf16.mxu0 0
  %6383 = vmatpush1.bf16.msra.mxu0 0
  %6384 = vmatprep.subr.bf16.mxu0 0
  %6385 = vmatpush1.bf16.msra.mxu0 0
  %6386 = vmatprep.subr.bf16.mxu0 0
  %6387 = vmatpush1.bf16.msra.mxu0 0
  %6388 = vmatprep.subr.bf16.mxu0 0
  %6389 = vmatpush1.bf16.msra.mxu0 0
  %6390 = vmatprep.mubr.bf16.mxu0 0
  %6391 = vmatmul.mubr.bf16.gmra.mrb[0].mxu0 %v5413
  %v6392 = vpop.f32.mrb[0].mxu0
  %v6393 = vadd.f32 %v4861, %v6392
  %v6394 = vpop.f32.mrb[0].mxu0
  %v6395 = vadd.f32 %v4865, %v6394
  %v6396 = vpop.f32.mrb[0].mxu0
  %v6397 = vpop.f32.mrb[0].mxu0
  %6398 = vdwg.mxu0
  %6399 = vmatprep.subr.bf16.mxu0 0
  %6400 = vmatpush1.bf16.msra.mxu0 %v5263
  %6401 = vmatprep.subr.bf16.mxu0 0
  %6402 = vmatpush1.bf16.msra.mxu0 %v5312
  %6403 = vmatprep.subr.bf16.mxu0 0
  %6404 = vmatpush1.bf16.msra.mxu0 0
  %6405 = vmatprep.subr.bf16.mxu0 0
  %6406 = vmatpush1.bf16.msra.mxu0 0
  %6407 = vmatprep.subr.bf16.mxu0 0
  %6408 = vmatpush1.bf16.msra.mxu0 0
  %6409 = vmatprep.subr.bf16.mxu0 0
  %6410 = vmatpush1.bf16.msra.mxu0 0
  %6411 = vmatprep.subr.bf16.mxu0 0
  %6412 = vmatpush1.bf16.msra.mxu0 0
  %6413 = vmatprep.subr.bf16.mxu0 0
  %6414 = vmatpush1.bf16.msra.mxu0 0
  %6415 = vmatprep.subr.bf16.mxu0 0
  %6416 = vmatpush1.bf16.msra.mxu0 0
  %6417 = vmatprep.subr.bf16.mxu0 0
  %6418 = vmatpush1.bf16.msra.mxu0 0
  %6419 = vmatprep.subr.bf16.mxu0 0
  %6420 = vmatpush1.bf16.msra.mxu0 0
  %6421 = vmatprep.subr.bf16.mxu0 0
  %6422 = vmatpush1.bf16.msra.mxu0 0
  %6423 = vmatprep.subr.bf16.mxu0 0
  %6424 = vmatpush1.bf16.msra.mxu0 0
  %6425 = vmatprep.subr.bf16.mxu0 0
  %6426 = vmatpush1.bf16.msra.mxu0 0
  %6427 = vmatprep.subr.bf16.mxu0 0
  %6428 = vmatpush1.bf16.msra.mxu0 0
  %6429 = vmatprep.subr.bf16.mxu0 0
  %6430 = vmatpush1.bf16.msra.mxu0 0
  %6431 = vmatprep.mubr.bf16.mxu0 0
  %6432 = vmatmul.mubr.bf16.gmra.mrb[0].mxu0 %v5413
  %v6433 = vpop.f32.mrb[0].mxu0
  %v6434 = vadd.f32 %v4869, %v6433
  %v6435 = vpop.f32.mrb[0].mxu0
  %v6436 = vpop.f32.mrb[0].mxu0
  %v6437 = vpop.f32.mrb[0].mxu0
  %6438 = vdwg.mxu0
  %v6439 = vpack.c.bf16 %v5450, %v5450
  %v6440 = vpack.c.bf16 %v5452, %v5452
  %v6441 = vpack.c.bf16 %v5491, %v5491
  %v6442 = vpack.c.bf16 %v5493, %v5493
  %v6443 = vpack.c.bf16 %v5532, %v5532
  %v6444 = vpack.c.bf16 %v5534, %v5534
  %v6445 = vpack.c.bf16 %v5573, %v5573
  %v6446 = vpack.c.bf16 %v5575, %v5575
  %v6447 = vpack.c.bf16 %v5614, %v5614
  %v6448 = vpack.c.bf16 %v5616, %v5616
  %v6449 = vpack.c.bf16 %v5655, %v5655
  %v6450 = vpack.c.bf16 %v5657, %v5657
  %v6451 = vpack.c.bf16 %v5696, %v5696
  %v6452 = vpack.c.bf16 %v5698, %v5698
  %v6453 = vpack.c.bf16 %v5737, %v5737
  %v6454 = vpack.c.bf16 %v5739, %v5739
  %v6455 = vpack.c.bf16 %v5778, %v5778
  %v6456 = vpack.c.bf16 %v5780, %v5780
  %v6457 = vpack.c.bf16 %v5819, %v5819
  %v6458 = vpack.c.bf16 %v5821, %v5821
  %v6459 = vpack.c.bf16 %v5860, %v5860
  %v6460 = vpack.c.bf16 %v5862, %v5862
  %v6461 = vpack.c.bf16 %v5901, %v5901
  %v6462 = vpack.c.bf16 %v5903, %v5903
  %v6463 = vpack.c.bf16 %v5942, %v5942
  %v6464 = vpack.c.bf16 %v5944, %v5944
  %v6465 = vpack.c.bf16 %v5983, %v5983
  %v6466 = vpack.c.bf16 %v5985, %v5985
  %v6467 = vpack.c.bf16 %v6024, %v6024
  %v6468 = vpack.c.bf16 %v6026, %v6026
  %v6469 = vpack.c.bf16 %v6065, %v6065
  %v6470 = vpack.c.bf16 %v6067, %v6067
  %v6471 = vpack.c.bf16 %v6106, %v6106
  %v6472 = vpack.c.bf16 %v6108, %v6108
  %v6473 = vpack.c.bf16 %v6147, %v6147
  %v6474 = vpack.c.bf16 %v6149, %v6149
  %v6475 = vpack.c.bf16 %v6188, %v6188
  %v6476 = vpack.c.bf16 %v6190, %v6190
  %v6477 = vpack.c.bf16 %v6229, %v6229
  %v6478 = vpack.c.bf16 %v6231, %v6231
  %v6479 = vpack.c.bf16 %v6270, %v6270
  %v6480 = vpack.c.bf16 %v6272, %v6272
  %v6481 = vpack.c.bf16 %v6311, %v6311
  %v6482 = vpack.c.bf16 %v6313, %v6313
  %v6483 = vpack.c.bf16 %v6352, %v6352
  %v6484 = vpack.c.bf16 %v6354, %v6354
  %v6485 = vpack.c.bf16 %v6393, %v6393
  %v6486 = vpack.c.bf16 %v6395, %v6395
  %v6487 = vpack.c.bf16 %v6434, %v6434
  %v6537 = vcombine.low %v6439, %v6440
  %v6538 = vcombine.low %v6441, %v6442
  %v6539 = vcombine.low %v6443, %v6444
  %v6540 = vcombine.low %v6445, %v6446
  %v6542 = vunpack.c.l.s4 1966171168
  %v6543 = vunpack.c.0.s8 %v6542
  %v6544 = vlaneseq
  %v6545 = vshrl.u32 %v6544, 7
  %v6546 = vsub.s32 %v6543, %v6545
  %v6547 = vrot.slane %v6537, %v6546
  %v6549 = vunpack.c.l.s4 1966171168
  %v6550 = vunpack.c.0.s8 %v6549
  %v6551 = vlaneseq
  %v6552 = vshrl.u32 %v6551, 7
  %v6553 = vsub.s32 %v6550, %v6552
  %v6554 = vrot.slane %v6538, %v6553
  %v6556 = vunpack.c.l.s4 1966171168
  %v6557 = vunpack.c.0.s8 %v6556
  %v6558 = vlaneseq
  %v6559 = vshrl.u32 %v6558, 7
  %v6560 = vsub.s32 %v6557, %v6559
  %v6561 = vrot.slane %v6539, %v6560
  %v6563 = vunpack.c.l.s4 1966171168
  %v6564 = vunpack.c.0.s8 %v6563
  %v6565 = vlaneseq
  %v6566 = vshrl.u32 %v6565, 7
  %v6567 = vsub.s32 %v6564, %v6566
  %v6568 = vrot.slane %v6540, %v6567
  %v6569 = vcombine.low %v6547, %v6554
  %v6570 = vcombine.low %v6561, %v6568
  %v6572 = vunpack.c.l.s4 1966171168
  %v6573 = vunpack.c.0.s8 %v6572
  %v6574 = vlaneseq
  %v6575 = vshrl.u32 %v6574, 7
  %v6576 = vsub.s32 %v6573, %v6575
  %v6577 = vrot.slane %v6569, %v6576
  %v6579 = vunpack.c.l.s4 1966171168
  %v6580 = vunpack.c.0.s8 %v6579
  %v6581 = vlaneseq
  %v6582 = vshrl.u32 %v6581, 7
  %v6583 = vsub.s32 %v6580, %v6582
  %v6584 = vrot.slane %v6570, %v6583
  %v6585 = vcombine.low %v6577, %v6584
  %v6586 = vcombine.low %v6447, %v6448
  %v6587 = vcombine.low %v6449, %v6450
  %v6588 = vcombine.low %v6451, %v6452
  %v6589 = vcombine.low %v6453, %v6454
  %v6591 = vunpack.c.l.s4 1966171168
  %v6592 = vunpack.c.0.s8 %v6591
  %v6593 = vlaneseq
  %v6594 = vshrl.u32 %v6593, 7
  %v6595 = vsub.s32 %v6592, %v6594
  %v6596 = vrot.slane %v6586, %v6595
  %v6598 = vunpack.c.l.s4 1966171168
  %v6599 = vunpack.c.0.s8 %v6598
  %v6600 = vlaneseq
  %v6601 = vshrl.u32 %v6600, 7
  %v6602 = vsub.s32 %v6599, %v6601
  %v6603 = vrot.slane %v6587, %v6602
  %v6605 = vunpack.c.l.s4 1966171168
  %v6606 = vunpack.c.0.s8 %v6605
  %v6607 = vlaneseq
  %v6608 = vshrl.u32 %v6607, 7
  %v6609 = vsub.s32 %v6606, %v6608
  %v6610 = vrot.slane %v6588, %v6609
  %v6612 = vunpack.c.l.s4 1966171168
  %v6613 = vunpack.c.0.s8 %v6612
  %v6614 = vlaneseq
  %v6615 = vshrl.u32 %v6614, 7
  %v6616 = vsub.s32 %v6613, %v6615
  %v6617 = vrot.slane %v6589, %v6616
  %v6618 = vcombine.low %v6596, %v6603
  %v6619 = vcombine.low %v6610, %v6617
  %v6621 = vunpack.c.l.s4 1966171168
  %v6622 = vunpack.c.0.s8 %v6621
  %v6623 = vlaneseq
  %v6624 = vshrl.u32 %v6623, 7
  %v6625 = vsub.s32 %v6622, %v6624
  %v6626 = vrot.slane %v6618, %v6625
  %v6628 = vunpack.c.l.s4 1966171168
  %v6629 = vunpack.c.0.s8 %v6628
  %v6630 = vlaneseq
  %v6631 = vshrl.u32 %v6630, 7
  %v6632 = vsub.s32 %v6629, %v6631
  %v6633 = vrot.slane %v6619, %v6632
  %v6634 = vcombine.low %v6626, %v6633
  %v6635 = vcombine.low %v6455, %v6456
  %v6636 = vcombine.low %v6457, %v6458
  %v6637 = vcombine.low %v6459, %v6460
  %v6638 = vcombine.low %v6461, %v6462
  %v6640 = vunpack.c.l.s4 1966171168
  %v6641 = vunpack.c.0.s8 %v6640
  %v6642 = vlaneseq
  %v6643 = vshrl.u32 %v6642, 7
  %v6644 = vsub.s32 %v6641, %v6643
  %v6645 = vrot.slane %v6635, %v6644
  %v6647 = vunpack.c.l.s4 1966171168
  %v6648 = vunpack.c.0.s8 %v6647
  %v6649 = vlaneseq
  %v6650 = vshrl.u32 %v6649, 7
  %v6651 = vsub.s32 %v6648, %v6650
  %v6652 = vrot.slane %v6636, %v6651
  %v6654 = vunpack.c.l.s4 1966171168
  %v6655 = vunpack.c.0.s8 %v6654
  %v6656 = vlaneseq
  %v6657 = vshrl.u32 %v6656, 7
  %v6658 = vsub.s32 %v6655, %v6657
  %v6659 = vrot.slane %v6637, %v6658
  %v6661 = vunpack.c.l.s4 1966171168
  %v6662 = vunpack.c.0.s8 %v6661
  %v6663 = vlaneseq
  %v6664 = vshrl.u32 %v6663, 7
  %v6665 = vsub.s32 %v6662, %v6664
  %v6666 = vrot.slane %v6638, %v6665
  %v6667 = vcombine.low %v6645, %v6652
  %v6668 = vcombine.low %v6659, %v6666
  %v6670 = vunpack.c.l.s4 1966171168
  %v6671 = vunpack.c.0.s8 %v6670
  %v6672 = vlaneseq
  %v6673 = vshrl.u32 %v6672, 7
  %v6674 = vsub.s32 %v6671, %v6673
  %v6675 = vrot.slane %v6667, %v6674
  %v6677 = vunpack.c.l.s4 1966171168
  %v6678 = vunpack.c.0.s8 %v6677
  %v6679 = vlaneseq
  %v6680 = vshrl.u32 %v6679, 7
  %v6681 = vsub.s32 %v6678, %v6680
  %v6682 = vrot.slane %v6668, %v6681
  %v6683 = vcombine.low %v6675, %v6682
  %v6684 = vcombine.low %v6463, %v6464
  %v6685 = vcombine.low %v6465, %v6466
  %v6686 = vcombine.low %v6467, %v6468
  %v6687 = vcombine.low %v6469, %v6470
  %v6689 = vunpack.c.l.s4 1966171168
  %v6690 = vunpack.c.0.s8 %v6689
  %v6691 = vlaneseq
  %v6692 = vshrl.u32 %v6691, 7
  %v6693 = vsub.s32 %v6690, %v6692
  %v6694 = vrot.slane %v6684, %v6693
  %v6696 = vunpack.c.l.s4 1966171168
  %v6697 = vunpack.c.0.s8 %v6696
  %v6698 = vlaneseq
  %v6699 = vshrl.u32 %v6698, 7
  %v6700 = vsub.s32 %v6697, %v6699
  %v6701 = vrot.slane %v6685, %v6700
  %v6703 = vunpack.c.l.s4 1966171168
  %v6704 = vunpack.c.0.s8 %v6703
  %v6705 = vlaneseq
  %v6706 = vshrl.u32 %v6705, 7
  %v6707 = vsub.s32 %v6704, %v6706
  %v6708 = vrot.slane %v6686, %v6707
  %v6710 = vunpack.c.l.s4 1966171168
  %v6711 = vunpack.c.0.s8 %v6710
  %v6712 = vlaneseq
  %v6713 = vshrl.u32 %v6712, 7
  %v6714 = vsub.s32 %v6711, %v6713
  %v6715 = vrot.slane %v6687, %v6714
  %v6716 = vcombine.low %v6694, %v6701
  %v6717 = vcombine.low %v6708, %v6715
  %v6719 = vunpack.c.l.s4 1966171168
  %v6720 = vunpack.c.0.s8 %v6719
  %v6721 = vlaneseq
  %v6722 = vshrl.u32 %v6721, 7
  %v6723 = vsub.s32 %v6720, %v6722
  %v6724 = vrot.slane %v6716, %v6723
  %v6726 = vunpack.c.l.s4 1966171168
  %v6727 = vunpack.c.0.s8 %v6726
  %v6728 = vlaneseq
  %v6729 = vshrl.u32 %v6728, 7
  %v6730 = vsub.s32 %v6727, %v6729
  %v6731 = vrot.slane %v6717, %v6730
  %v6732 = vcombine.low %v6724, %v6731
  %v6733 = vcombine.low %v6471, %v6472
  %v6734 = vcombine.low %v6473, %v6474
  %v6735 = vcombine.low %v6475, %v6476
  %v6736 = vcombine.low %v6477, %v6478
  %v6738 = vunpack.c.l.s4 1966171168
  %v6739 = vunpack.c.0.s8 %v6738
  %v6740 = vlaneseq
  %v6741 = vshrl.u32 %v6740, 7
  %v6742 = vsub.s32 %v6739, %v6741
  %v6743 = vrot.slane %v6733, %v6742
  %v6745 = vunpack.c.l.s4 1966171168
  %v6746 = vunpack.c.0.s8 %v6745
  %v6747 = vlaneseq
  %v6748 = vshrl.u32 %v6747, 7
  %v6749 = vsub.s32 %v6746, %v6748
  %v6750 = vrot.slane %v6734, %v6749
  %v6752 = vunpack.c.l.s4 1966171168
  %v6753 = vunpack.c.0.s8 %v6752
  %v6754 = vlaneseq
  %v6755 = vshrl.u32 %v6754, 7
  %v6756 = vsub.s32 %v6753, %v6755
  %v6757 = vrot.slane %v6735, %v6756
  %v6759 = vunpack.c.l.s4 1966171168
  %v6760 = vunpack.c.0.s8 %v6759
  %v6761 = vlaneseq
  %v6762 = vshrl.u32 %v6761, 7
  %v6763 = vsub.s32 %v6760, %v6762
  %v6764 = vrot.slane %v6736, %v6763
  %v6765 = vcombine.low %v6743, %v6750
  %v6766 = vcombine.low %v6757, %v6764
  %v6768 = vunpack.c.l.s4 1966171168
  %v6769 = vunpack.c.0.s8 %v6768
  %v6770 = vlaneseq
  %v6771 = vshrl.u32 %v6770, 7
  %v6772 = vsub.s32 %v6769, %v6771
  %v6773 = vrot.slane %v6765, %v6772
  %v6775 = vunpack.c.l.s4 1966171168
  %v6776 = vunpack.c.0.s8 %v6775
  %v6777 = vlaneseq
  %v6778 = vshrl.u32 %v6777, 7
  %v6779 = vsub.s32 %v6776, %v6778
  %v6780 = vrot.slane %v6766, %v6779
  %v6781 = vcombine.low %v6773, %v6780
  %v6782 = vcombine.low %v6479, %v6480
  %v6783 = vcombine.low %v6481, %v6482
  %v6784 = vcombine.low %v6483, %v6484
  %v6785 = vcombine.low %v6485, %v6486
  %v6787 = vunpack.c.l.s4 1966171168
  %v6788 = vunpack.c.0.s8 %v6787
  %v6789 = vlaneseq
  %v6790 = vshrl.u32 %v6789, 7
  %v6791 = vsub.s32 %v6788, %v6790
  %v6792 = vrot.slane %v6782, %v6791
  %v6794 = vunpack.c.l.s4 1966171168
  %v6795 = vunpack.c.0.s8 %v6794
  %v6796 = vlaneseq
  %v6797 = vshrl.u32 %v6796, 7
  %v6798 = vsub.s32 %v6795, %v6797
  %v6799 = vrot.slane %v6783, %v6798
  %v6801 = vunpack.c.l.s4 1966171168
  %v6802 = vunpack.c.0.s8 %v6801
  %v6803 = vlaneseq
  %v6804 = vshrl.u32 %v6803, 7
  %v6805 = vsub.s32 %v6802, %v6804
  %v6806 = vrot.slane %v6784, %v6805
  %v6808 = vunpack.c.l.s4 1966171168
  %v6809 = vunpack.c.0.s8 %v6808
  %v6810 = vlaneseq
  %v6811 = vshrl.u32 %v6810, 7
  %v6812 = vsub.s32 %v6809, %v6811
  %v6813 = vrot.slane %v6785, %v6812
  %v6814 = vcombine.low %v6792, %v6799
  %v6815 = vcombine.low %v6806, %v6813
  %v6817 = vunpack.c.l.s4 1966171168
  %v6818 = vunpack.c.0.s8 %v6817
  %v6819 = vlaneseq
  %v6820 = vshrl.u32 %v6819, 7
  %v6821 = vsub.s32 %v6818, %v6820
  %v6822 = vrot.slane %v6814, %v6821
  %v6824 = vunpack.c.l.s4 1966171168
  %v6825 = vunpack.c.0.s8 %v6824
  %v6826 = vlaneseq
  %v6827 = vshrl.u32 %v6826, 7
  %v6828 = vsub.s32 %v6825, %v6827
  %v6829 = vrot.slane %v6815, %v6828
  %v6830 = vcombine.low %v6822, %v6829
  %v6832 = vunpack.c.l.s4 1966171168
  %v6833 = vunpack.c.0.s8 %v6832
  %v6834 = vlaneseq
  %v6835 = vshrl.u32 %v6834, 7
  %v6836 = vsub.s32 %v6833, %v6835
  %v6837 = vrot.slane %v6487, %v6836
  %v6839 = vunpack.c.l.s4 1966171168
  %v6840 = vunpack.c.0.s8 %v6839
  %v6841 = vlaneseq
  %v6842 = vshrl.u32 %v6841, 7
  %v6843 = vsub.s32 %v6840, %v6842
  %v6844 = vrot.slane %v6837, %v6843
  %6852 = vst [vmem:[%s7] sm:$0xff] %v6585
  %6853 = vst [vmem:[%s7 + $0x8] sm:$0xff] %v6634
  %6854 = vst [vmem:[%s7 + $0x10] sm:$0xff] %v6683
  %6855 = vst [vmem:[%s7 + $0x18] sm:$0xff] %v6732
  %6856 = vst [vmem:[%s7 + $0x20] sm:$0xff] %v6781
  %6857 = vst [vmem:[%s7 + $0x28] sm:$0xff] %v6830
  %6858 = vst [vmem:[%s7 + $0x30] sm:$0x1] %v6844
  // Predicated region
  $region26: #{vae_forward.9} parent=0 // pred_check
    _
  $region27: #{vae_forward.9} parent=0 // pred_check_branch
    %6860 = sbr.rel (0) target = $region29
  $region28: #{vae_forward.9} parent=0 // pred_region
    _
  $region29: #{vae_forward.9} parent=0 // pred_fallthru
    _
  // Predicated region
  $region30: #{vae_forward.9} parent=0 // pred_check
    _
  $region31: #{vae_forward.9} parent=0 // pred_check_branch
    %6862 = sbr.rel (0) target = $region33
  $region32: #{vae_forward.9} parent=0 // pred_region
    _
  $region33: #{vae_forward.9} parent=0 // pred_fallthru
    _
  // Predicated region
  $region34: #{vae_forward.9} parent=0 // pred_check
    _
  $region35: #{vae_forward.9} parent=0 // pred_check_branch
    %6864 = sbr.rel (0) target = $region37
  $region36: #{vae_forward.9} parent=0 // pred_region
    _
  $region37: #{vae_forward.9} parent=0 // pred_fallthru
    _
  // Predicated region
  $region38: #{vae_forward.9} parent=0 // pred_check
    _
  $region39: #{vae_forward.9} parent=0 // pred_check_branch
    %6866 = sbr.rel (0) target = $region41
  $region40: #{vae_forward.9} parent=0 // pred_region
    _
  $region41: #{vae_forward.9} parent=0 // pred_fallthru
    _

// kernel: vae_forward.11
$region0: #{vae_forward.11}
  #allocation0 [shape = 'u32[]', space=smem, size = 0x4, offset = 0x4, fixed_abs, tag = 'smem constant byte address 0x4 - core index']
  #allocation1 [shape = 'u32[144,128]{1,0:T(1,128)}', space=vmem, size = 0x12000, scoped, tag = 'internal scratch']
  %s0 = inlined_call_operand.vmem [shape: bf16[450,256], index: 0, kind: input, shape index: {}]
  %s1 = inlined_call_operand.vmem [shape: bf16[256,128], index: 1, kind: input, shape index: {}]
  %s2 = inlined_call_operand.vmem [shape: f32[1,128], index: 2, kind: input, shape index: {}]
  %s3 = inlined_call_operand.vmem [shape: f32[450,128], index: 3, kind: output, shape index: {}]
  %s4 = sld [smem:[#allocation0]]
  $region22: #{vae_forward.11} parent=0
    _
  %s6 = ssub.s32 1, %s4
  %s7 = scalar_select 0, %s6, %s4
  // Predicated region
  $region2: #{vae_forward.11} parent=0 // pred_check
    _
  $region3: #{vae_forward.11} parent=0 // pred_check_branch
    %9 = sbr.rel (0) target = $region5
  $region4: #{vae_forward.11} parent=0 // pred_region
    _
  $region5: #{vae_forward.11} parent=0 // pred_fallthru
    _
  // Predicated region
  $region6: #{vae_forward.11} parent=0 // pred_check
    _
  $region7: #{vae_forward.11} parent=0 // pred_check_branch
    %11 = sbr.rel (0) target = $region9
  $region8: #{vae_forward.11} parent=0 // pred_region
    _
  $region9: #{vae_forward.11} parent=0 // pred_fallthru
    _
  // Predicated region
  $region10: #{vae_forward.11} parent=0 // pred_check
    _
  $region11: #{vae_forward.11} parent=0 // pred_check_branch
    %13 = sbr.rel (0) target = $region13
  $region12: #{vae_forward.11} parent=0 // pred_region
    _
  $region13: #{vae_forward.11} parent=0 // pred_fallthru
    _
  %v15 = vld [vmem:[%s0] sm:$0xff]
  %v16 = vld [vmem:[%s0 + $0x8] sm:$0xff]
  %v17 = vld [vmem:[%s0 + $0x10] sm:$0xff]
  %v18 = vld [vmem:[%s0 + $0x18] sm:$0xff]
  %v19 = vld [vmem:[%s0 + $0x20] sm:$0xff]
  %v20 = vld [vmem:[%s0 + $0x28] sm:$0xff]
  %v21 = vld [vmem:[%s0 + $0x30] sm:$0xff]
  %v22 = vld [vmem:[%s0 + $0x38] sm:$0xff]
  %v23 = vld [vmem:[%s0 + $0x40] sm:$0xff]
  %v24 = vld [vmem:[%s0 + $0x48] sm:$0xff]
  %v25 = vld [vmem:[%s0 + $0x50] sm:$0xff]
  %v26 = vld [vmem:[%s0 + $0x58] sm:$0xff]
  %v27 = vld [vmem:[%s0 + $0x60] sm:$0xff]
  %v28 = vld [vmem:[%s0 + $0x68] sm:$0xff]
  %v29 = vld [vmem:[%s0 + $0x70] sm:$0xff]
  %v30 = vld [vmem:[%s0 + $0x78] sm:$0xff]
  %v31 = vld [vmem:[%s0 + $0x80] sm:$0xff]
  %v32 = vld [vmem:[%s0 + $0x88] sm:$0xff]
  %v33 = vld [vmem:[%s0 + $0x90] sm:$0xff]
  %v34 = vld [vmem:[%s0 + $0x98] sm:$0xff]
  %v35 = vld [vmem:[%s0 + $0xa0] sm:$0xff]
  %v36 = vld [vmem:[%s0 + $0xa8] sm:$0xff]
  %v37 = vld [vmem:[%s0 + $0xb0] sm:$0xff]
  %v38 = vld [vmem:[%s0 + $0xb8] sm:$0xff]
  %v39 = vld [vmem:[%s0 + $0xc0] sm:$0xff]
  %v40 = vld [vmem:[%s0 + $0xc8] sm:$0xff]
  %v41 = vld [vmem:[%s0 + $0xd0] sm:$0xff]
  %v42 = vld [vmem:[%s0 + $0xd8] sm:$0xff]
  %v43 = vld [vmem:[%s0 + $0xe0] sm:$0xff]
  %v44 = vld [vmem:[%s0 + $0xe8] sm:$0xff]
  %v45 = vld [vmem:[%s0 + $0xf0] sm:$0xff]
  %v46 = vld [vmem:[%s0 + $0xf8] sm:$0xff]
  %v47 = vld [vmem:[%s0 + $0x100] sm:$0xff]
  %v48 = vld [vmem:[%s0 + $0x108] sm:$0xff]
  %v49 = vld [vmem:[%s0 + $0x110] sm:$0xff]
  %v50 = vld [vmem:[%s0 + $0x118] sm:$0xff]
  %v51 = vld [vmem:[%s0 + $0x120] sm:$0xff]
  %v52 = vld [vmem:[%s0 + $0x128] sm:$0xff]
  %v53 = vld [vmem:[%s0 + $0x130] sm:$0xff]
  %v54 = vld [vmem:[%s0 + $0x138] sm:$0xff]
  %v55 = vld [vmem:[%s0 + $0x140] sm:$0xff]
  %v56 = vld [vmem:[%s0 + $0x148] sm:$0xff]
  %v57 = vld [vmem:[%s0 + $0x150] sm:$0xff]
  %v58 = vld [vmem:[%s0 + $0x158] sm:$0xff]
  %v59 = vld [vmem:[%s0 + $0x160] sm:$0xff]
  %v60 = vld [vmem:[%s0 + $0x168] sm:$0xff]
  %v61 = vld [vmem:[%s0 + $0x170] sm:$0xff]
  %v62 = vld [vmem:[%s0 + $0x178] sm:$0xff]
  %v63 = vld [vmem:[%s0 + $0x180] sm:$0xff]
  %v64 = vld [vmem:[%s0 + $0x188] sm:$0xff]
  %v65 = vld [vmem:[%s0 + $0x190] sm:$0xff]
  %v66 = vld [vmem:[%s0 + $0x198] sm:$0xff]
  %v67 = vld [vmem:[%s0 + $0x1a0] sm:$0xff]
  %v68 = vld [vmem:[%s0 + $0x1a8] sm:$0xff]
  %v69 = vld [vmem:[%s0 + $0x1b0] sm:$0xff]
  %v70 = vld [vmem:[%s0 + $0x1b8] sm:$0xff]
  %v71 = vld [vmem:[%s0 + $0x1c0] sm:$0x11]
  %v72 = vld [vmem:[%s1] sm:$0xf]
  %v73 = vld [vmem:[%s1 + $0x4] sm:$0xf]
  %v74 = vld [vmem:[%s1 + $0x8] sm:$0xf]
  %v75 = vld [vmem:[%s1 + $0xc] sm:$0xf]
  %v76 = vld [vmem:[%s1 + $0x10] sm:$0xf]
  %v77 = vld [vmem:[%s1 + $0x14] sm:$0xf]
  %v78 = vld [vmem:[%s1 + $0x18] sm:$0xf]
  %v79 = vld [vmem:[%s1 + $0x1c] sm:$0xf]
  %v80 = vld [vmem:[%s1 + $0x20] sm:$0xf]
  %v81 = vld [vmem:[%s1 + $0x24] sm:$0xf]
  %v82 = vld [vmem:[%s1 + $0x28] sm:$0xf]
  %v83 = vld [vmem:[%s1 + $0x2c] sm:$0xf]
  %v84 = vld [vmem:[%s1 + $0x30] sm:$0xf]
  %v85 = vld [vmem:[%s1 + $0x34] sm:$0xf]
  %v86 = vld [vmem:[%s1 + $0x38] sm:$0xf]
  %v87 = vld [vmem:[%s1 + $0x3c] sm:$0xf]
  %v88 = vld [vmem:[%s1 + $0x40] sm:$0xf]
  %v89 = vld [vmem:[%s1 + $0x44] sm:$0xf]
  %v90 = vld [vmem:[%s1 + $0x48] sm:$0xf]
  %v91 = vld [vmem:[%s1 + $0x4c] sm:$0xf]
  %v92 = vld [vmem:[%s1 + $0x50] sm:$0xf]
  %v93 = vld [vmem:[%s1 + $0x54] sm:$0xf]
  %v94 = vld [vmem:[%s1 + $0x58] sm:$0xf]
  %v95 = vld [vmem:[%s1 + $0x5c] sm:$0xf]
  %v96 = vld [vmem:[%s1 + $0x60] sm:$0xf]
  %v97 = vld [vmem:[%s1 + $0x64] sm:$0xf]
  %v98 = vld [vmem:[%s1 + $0x68] sm:$0xf]
  %v99 = vld [vmem:[%s1 + $0x6c] sm:$0xf]
  %v100 = vld [vmem:[%s1 + $0x70] sm:$0xf]
  %v101 = vld [vmem:[%s1 + $0x74] sm:$0xf]
  %v102 = vld [vmem:[%s1 + $0x78] sm:$0xf]
  %v103 = vld [vmem:[%s1 + $0x7c] sm:$0xf]
  %v104 = vld [vmem:[%s2] sm:$0x1]
  %v106 = vlaneseq
  %v107 = vshrl.u32 %v106, 7
  %v108 = vsub.s32 0, %v107
  %v109 = vrot.slane %v104, %v108
  %v168 = vunpack.c.l.b16 %v15
  %v169 = vunpack.c.h.b16 %v15
  %v170 = vunpack.c.l.b16 %v16
  %v171 = vunpack.c.h.b16 %v16
  %v172 = vunpack.c.l.b16 %v17
  %v173 = vunpack.c.h.b16 %v17
  %v174 = vunpack.c.l.b16 %v18
  %v175 = vunpack.c.h.b16 %v18
  %v176 = vunpack.c.l.b16 %v19
  %v177 = vunpack.c.h.b16 %v19
  %v178 = vunpack.c.l.b16 %v20
  %v179 = vunpack.c.h.b16 %v20
  %v180 = vunpack.c.l.b16 %v21
  %v181 = vunpack.c.h.b16 %v21
  %v182 = vunpack.c.l.b16 %v22
  %v183 = vunpack.c.h.b16 %v22
  %v184 = vunpack.c.l.b16 %v23
  %v185 = vunpack.c.h.b16 %v23
  %v186 = vunpack.c.l.b16 %v24
  %v187 = vunpack.c.h.b16 %v24
  %v188 = vunpack.c.l.b16 %v25
  %v189 = vunpack.c.h.b16 %v25
  %v190 = vunpack.c.l.b16 %v26
  %v191 = vunpack.c.h.b16 %v26
  %v192 = vunpack.c.l.b16 %v27
  %v193 = vunpack.c.h.b16 %v27
  %v194 = vunpack.c.l.b16 %v28
  %v195 = vunpack.c.h.b16 %v28
  %v196 = vunpack.c.l.b16 %v29
  %v197 = vunpack.c.h.b16 %v29
  %v198 = vunpack.c.l.b16 %v30
  %v199 = vunpack.c.h.b16 %v30
  %v200 = vunpack.c.l.b16 %v31
  %v201 = vunpack.c.h.b16 %v31
  %v202 = vunpack.c.l.b16 %v32
  %v203 = vunpack.c.h.b16 %v32
  %v204 = vunpack.c.l.b16 %v33
  %v205 = vunpack.c.h.b16 %v33
  %v206 = vunpack.c.l.b16 %v34
  %v207 = vunpack.c.h.b16 %v34
  %v208 = vunpack.c.l.b16 %v35
  %v209 = vunpack.c.h.b16 %v35
  %v210 = vunpack.c.l.b16 %v36
  %v211 = vunpack.c.h.b16 %v36
  %v212 = vunpack.c.l.b16 %v37
  %v213 = vunpack.c.h.b16 %v37
  %v214 = vunpack.c.l.b16 %v38
  %v215 = vunpack.c.h.b16 %v38
  %v216 = vunpack.c.l.b16 %v39
  %v217 = vunpack.c.h.b16 %v39
  %v218 = vunpack.c.l.b16 %v40
  %v219 = vunpack.c.h.b16 %v40
  %v220 = vunpack.c.l.b16 %v41
  %v221 = vunpack.c.h.b16 %v41
  %v222 = vunpack.c.l.b16 %v42
  %v223 = vunpack.c.h.b16 %v42
  %v224 = vunpack.c.l.b16 %v43
  %v225 = vunpack.c.h.b16 %v43
  %v226 = vunpack.c.l.b16 %v44
  %v227 = vunpack.c.h.b16 %v44
  %v228 = vunpack.c.l.b16 %v45
  %v229 = vunpack.c.h.b16 %v45
  %v230 = vunpack.c.l.b16 %v46
  %v231 = vunpack.c.h.b16 %v46
  %v232 = vunpack.c.l.b16 %v47
  %v233 = vunpack.c.h.b16 %v47
  %v234 = vunpack.c.l.b16 %v48
  %v235 = vunpack.c.h.b16 %v48
  %v236 = vunpack.c.l.b16 %v49
  %v237 = vunpack.c.h.b16 %v49
  %v238 = vunpack.c.l.b16 %v50
  %v239 = vunpack.c.h.b16 %v50
  %v240 = vunpack.c.l.b16 %v51
  %v241 = vunpack.c.h.b16 %v51
  %v242 = vunpack.c.l.b16 %v52
  %v243 = vunpack.c.h.b16 %v52
  %v244 = vunpack.c.l.b16 %v53
  %v245 = vunpack.c.h.b16 %v53
  %v246 = vunpack.c.l.b16 %v54
  %v247 = vunpack.c.h.b16 %v54
  %v248 = vunpack.c.l.b16 %v55
  %v249 = vunpack.c.h.b16 %v55
  %v250 = vunpack.c.l.b16 %v56
  %v251 = vunpack.c.h.b16 %v56
  %v252 = vunpack.c.l.b16 %v57
  %v253 = vunpack.c.h.b16 %v57
  %v254 = vunpack.c.l.b16 %v58
  %v255 = vunpack.c.h.b16 %v58
  %v256 = vunpack.c.l.b16 %v59
  %v257 = vunpack.c.h.b16 %v59
  %v258 = vunpack.c.l.b16 %v60
  %v259 = vunpack.c.h.b16 %v60
  %v260 = vunpack.c.l.b16 %v61
  %v261 = vunpack.c.h.b16 %v61
  %v262 = vunpack.c.l.b16 %v62
  %v263 = vunpack.c.h.b16 %v62
  %v264 = vunpack.c.l.b16 %v63
  %v265 = vunpack.c.h.b16 %v63
  %v266 = vunpack.c.l.b16 %v64
  %v267 = vunpack.c.h.b16 %v64
  %v268 = vunpack.c.l.b16 %v65
  %v269 = vunpack.c.h.b16 %v65
  %v270 = vunpack.c.l.b16 %v66
  %v271 = vunpack.c.h.b16 %v66
  %v272 = vunpack.c.l.b16 %v67
  %v273 = vunpack.c.h.b16 %v67
  %v274 = vunpack.c.l.b16 %v68
  %v275 = vunpack.c.h.b16 %v68
  %v276 = vunpack.c.l.b16 %v69
  %v277 = vunpack.c.h.b16 %v69
  %v278 = vunpack.c.l.b16 %v70
  %v279 = vunpack.c.h.b16 %v70
  %v280 = vunpack.c.l.b16 %v71
  %v281 = vunpack.c.h.b16 %v71
  %v282 = vpack.c.b16 %v170, %v168
  %v283 = vpack.c.b16 %v171, %v169
  %v284 = vpack.c.b16 %v174, %v172
  %v285 = vpack.c.b16 %v175, %v173
  %v286 = vpack.c.b16 %v178, %v176
  %v287 = vpack.c.b16 %v179, %v177
  %v288 = vpack.c.b16 %v182, %v180
  %v289 = vpack.c.b16 %v183, %v181
  %v290 = vpack.c.b16 %v186, %v184
  %v291 = vpack.c.b16 %v187, %v185
  %v292 = vpack.c.b16 %v190, %v188
  %v293 = vpack.c.b16 %v191, %v189
  %v294 = vpack.c.b16 %v194, %v192
  %v295 = vpack.c.b16 %v195, %v193
  %v296 = vpack.c.b16 %v198, %v196
  %v297 = vpack.c.b16 %v199, %v197
  %v298 = vpack.c.b16 %v202, %v200
  %v299 = vpack.c.b16 %v203, %v201
  %v300 = vpack.c.b16 %v206, %v204
  %v301 = vpack.c.b16 %v207, %v205
  %v302 = vpack.c.b16 %v210, %v208
  %v303 = vpack.c.b16 %v211, %v209
  %v304 = vpack.c.b16 %v214, %v212
  %v305 = vpack.c.b16 %v215, %v213
  %v306 = vpack.c.b16 %v218, %v216
  %v307 = vpack.c.b16 %v219, %v217
  %v308 = vpack.c.b16 %v222, %v220
  %v309 = vpack.c.b16 %v223, %v221
  %v310 = vpack.c.b16 %v226, %v224
  %v311 = vpack.c.b16 %v227, %v225
  %v312 = vpack.c.b16 %v230, %v228
  %v313 = vpack.c.b16 %v231, %v229
  %v314 = vpack.c.b16 %v234, %v232
  %v315 = vpack.c.b16 %v235, %v233
  %v316 = vpack.c.b16 %v238, %v236
  %v317 = vpack.c.b16 %v239, %v237
  %v318 = vpack.c.b16 %v242, %v240
  %v319 = vpack.c.b16 %v243, %v241
  %v320 = vpack.c.b16 %v246, %v244
  %v321 = vpack.c.b16 %v247, %v245
  %v322 = vpack.c.b16 %v250, %v248
  %v323 = vpack.c.b16 %v251, %v249
  %v324 = vpack.c.b16 %v254, %v252
  %v325 = vpack.c.b16 %v255, %v253
  %v326 = vpack.c.b16 %v258, %v256
  %v327 = vpack.c.b16 %v259, %v257
  %v328 = vpack.c.b16 %v262, %v260
  %v329 = vpack.c.b16 %v263, %v261
  %v330 = vpack.c.b16 %v266, %v264
  %v331 = vpack.c.b16 %v267, %v265
  %v332 = vpack.c.b16 %v270, %v268
  %v333 = vpack.c.b16 %v271, %v269
  %v334 = vpack.c.b16 %v274, %v272
  %v335 = vpack.c.b16 %v275, %v273
  %v336 = vpack.c.b16 %v278, %v276
  %v337 = vpack.c.b16 %v279, %v277
  %v338 = vpack.c.b16 %v280, %v280
  %v339 = vpack.c.b16 %v281, %v281
  %v430 = vunpack.c.l.b16 %v72
  %v431 = vunpack.c.l.b16 %v73
  %v432 = vunpack.c.l.b16 %v74
  %v433 = vunpack.c.l.b16 %v75
  %v434 = vunpack.c.l.b16 %v76
  %v435 = vunpack.c.l.b16 %v77
  %v436 = vunpack.c.l.b16 %v78
  %v437 = vunpack.c.l.b16 %v79
  %v438 = vunpack.c.l.b16 %v80
  %v439 = vunpack.c.l.b16 %v81
  %v440 = vunpack.c.l.b16 %v82
  %v441 = vunpack.c.l.b16 %v83
  %v442 = vunpack.c.l.b16 %v84
  %v443 = vunpack.c.l.b16 %v85
  %v444 = vunpack.c.l.b16 %v86
  %v445 = vunpack.c.l.b16 %v87
  %v446 = vunpack.c.l.b16 %v88
  %v447 = vunpack.c.l.b16 %v89
  %v448 = vunpack.c.l.b16 %v90
  %v449 = vunpack.c.l.b16 %v91
  %v450 = vunpack.c.l.b16 %v92
  %v451 = vunpack.c.l.b16 %v93
  %v452 = vunpack.c.l.b16 %v94
  %v453 = vunpack.c.l.b16 %v95
  %v454 = vunpack.c.l.b16 %v96
  %v455 = vunpack.c.l.b16 %v97
  %v456 = vunpack.c.l.b16 %v98
  %v457 = vunpack.c.l.b16 %v99
  %v458 = vunpack.c.l.b16 %v100
  %v459 = vunpack.c.l.b16 %v101
  %v460 = vunpack.c.l.b16 %v102
  %v461 = vunpack.c.l.b16 %v103
  %v462 = vpack.c.b16 %v431, %v430
  %v463 = vpack.c.b16 %v433, %v432
  %v464 = vpack.c.b16 %v435, %v434
  %v465 = vpack.c.b16 %v437, %v436
  %v466 = vpack.c.b16 %v439, %v438
  %v467 = vpack.c.b16 %v441, %v440
  %v468 = vpack.c.b16 %v443, %v442
  %v469 = vpack.c.b16 %v445, %v444
  %v470 = vpack.c.b16 %v447, %v446
  %v471 = vpack.c.b16 %v449, %v448
  %v472 = vpack.c.b16 %v451, %v450
  %v473 = vpack.c.b16 %v453, %v452
  %v474 = vpack.c.b16 %v455, %v454
  %v475 = vpack.c.b16 %v457, %v456
  %v476 = vpack.c.b16 %v459, %v458
  %v477 = vpack.c.b16 %v461, %v460
  %494 = vmatprep.subr.bf16.mxu0 0
  %495 = vmatpush1.bf16.msra.mxu0 %v462
  %496 = vmatprep.subr.bf16.mxu0 0
  %497 = vmatpush1.bf16.msra.mxu0 %v463
  %498 = vmatprep.subr.bf16.mxu0 0
  %499 = vmatpush1.bf16.msra.mxu0 %v464
  %500 = vmatprep.subr.bf16.mxu0 0
  %501 = vmatpush1.bf16.msra.mxu0 %v465
  %502 = vmatprep.subr.bf16.mxu0 0
  %503 = vmatpush1.bf16.msra.mxu0 %v466
  %504 = vmatprep.subr.bf16.mxu0 0
  %505 = vmatpush1.bf16.msra.mxu0 %v467
  %506 = vmatprep.subr.bf16.mxu0 0
  %507 = vmatpush1.bf16.msra.mxu0 %v468
  %508 = vmatprep.subr.bf16.mxu0 0
  %509 = vmatpush1.bf16.msra.mxu0 %v469
  %510 = vmatprep.subr.bf16.mxu0 0
  %511 = vmatpush1.bf16.msra.mxu0 %v470
  %512 = vmatprep.subr.bf16.mxu0 0
  %513 = vmatpush1.bf16.msra.mxu0 %v471
  %514 = vmatprep.subr.bf16.mxu0 0
  %515 = vmatpush1.bf16.msra.mxu0 %v472
  %516 = vmatprep.subr.bf16.mxu0 0
  %517 = vmatpush1.bf16.msra.mxu0 %v473
  %518 = vmatprep.subr.bf16.mxu0 0
  %519 = vmatpush1.bf16.msra.mxu0 %v474
  %520 = vmatprep.subr.bf16.mxu0 0
  %521 = vmatpush1.bf16.msra.mxu0 %v475
  %522 = vmatprep.subr.bf16.mxu0 0
  %523 = vmatpush1.bf16.msra.mxu0 %v476
  %524 = vmatprep.subr.bf16.mxu0 0
  %525 = vmatpush1.bf16.msra.mxu0 %v477
  %526 = vmatprep.mubr.bf16.mxu0 %v283
  %527 = vmatmul.mubr.bf16.gmra.mrb[0].mxu0 %v282
  %v528 = vpop.f32.mrb[0].mxu0
  %v529 = vadd.f32 %v109, %v528
  %v530 = vpop.f32.mrb[0].mxu0
  %v531 = vpop.f32.mrb[0].mxu0
  %v532 = vadd.f32 %v109, %v531
  %v533 = vpop.f32.mrb[0].mxu0
  %534 = vmatprep.mubr.bf16.mxu0 %v285
  %535 = vmatmul.mubr.bf16.gmra.mrb[0].mxu0 %v284
  %v536 = vpop.f32.mrb[0].mxu0
  %v537 = vadd.f32 %v109, %v536
  %v538 = vpop.f32.mrb[0].mxu0
  %v539 = vpop.f32.mrb[0].mxu0
  %v540 = vadd.f32 %v109, %v539
  %v541 = vpop.f32.mrb[0].mxu0
  %542 = vmatprep.mubr.bf16.mxu0 %v287
  %543 = vmatmul.mubr.bf16.gmra.mrb[0].mxu0 %v286
  %v544 = vpop.f32.mrb[0].mxu0
  %v545 = vadd.f32 %v109, %v544
  %v546 = vpop.f32.mrb[0].mxu0
  %v547 = vpop.f32.mrb[0].mxu0
  %v548 = vadd.f32 %v109, %v547
  %v549 = vpop.f32.mrb[0].mxu0
  %550 = vmatprep.mubr.bf16.mxu0 %v289
  %551 = vmatmul.mubr.bf16.gmra.mrb[0].mxu0 %v288
  %v552 = vpop.f32.mrb[0].mxu0
  %v553 = vadd.f32 %v109, %v552
  %v554 = vpop.f32.mrb[0].mxu0
  %v555 = vpop.f32.mrb[0].mxu0
  %v556 = vadd.f32 %v109, %v555
  %v557 = vpop.f32.mrb[0].mxu0
  %558 = vmatprep.mubr.bf16.mxu0 %v291
  %559 = vmatmul.mubr.bf16.gmra.mrb[0].mxu0 %v290
  %v560 = vpop.f32.mrb[0].mxu0
  %v561 = vadd.f32 %v109, %v560
  %v562 = vpop.f32.mrb[0].mxu0
  %v563 = vpop.f32.mrb[0].mxu0
  %v564 = vadd.f32 %v109, %v563
  %v565 = vpop.f32.mrb[0].mxu0
  %566 = vmatprep.mubr.bf16.mxu0 %v293
  %567 = vmatmul.mubr.bf16.gmra.mrb[0].mxu0 %v292
  %v568 = vpop.f32.mrb[0].mxu0
  %v569 = vadd.f32 %v109, %v568
  %v570 = vpop.f32.mrb[0].mxu0
  %v571 = vpop.f32.mrb[0].mxu0
  %v572 = vadd.f32 %v109, %v571
  %v573 = vpop.f32.mrb[0].mxu0
  %574 = vmatprep.mubr.bf16.mxu0 %v295
  %575 = vmatmul.mubr.bf16.gmra.mrb[0].mxu0 %v294
  %v576 = vpop.f32.mrb[0].mxu0
  %v577 = vadd.f32 %v109, %v576
  %v578 = vpop.f32.mrb[0].mxu0
  %v579 = vpop.f32.mrb[0].mxu0
  %v580 = vadd.f32 %v109, %v579
  %v581 = vpop.f32.mrb[0].mxu0
  %582 = vmatprep.mubr.bf16.mxu0 %v297
  %583 = vmatmul.mubr.bf16.gmra.mrb[0].mxu0 %v296
  %v584 = vpop.f32.mrb[0].mxu0
  %v585 = vadd.f32 %v109, %v584
  %v586 = vpop.f32.mrb[0].mxu0
  %v587 = vpop.f32.mrb[0].mxu0
  %v588 = vadd.f32 %v109, %v587
  %v589 = vpop.f32.mrb[0].mxu0
  %590 = vmatprep.mubr.bf16.mxu0 %v299
  %591 = vmatmul.mubr.bf16.gmra.mrb[0].mxu0 %v298
  %v592 = vpop.f32.mrb[0].mxu0
  %v593 = vadd.f32 %v109, %v592
  %v594 = vpop.f32.mrb[0].mxu0
  %v595 = vpop.f32.mrb[0].mxu0
  %v596 = vadd.f32 %v109, %v595
  %v597 = vpop.f32.mrb[0].mxu0
  %598 = vmatprep.mubr.bf16.mxu0 %v301
  %599 = vmatmul.mubr.bf16.gmra.mrb[0].mxu0 %v300
  %v600 = vpop.f32.mrb[0].mxu0
  %v601 = vadd.f32 %v109, %v600
  %v602 = vpop.f32.mrb[0].mxu0
  %v603 = vpop.f32.mrb[0].mxu0
  %v604 = vadd.f32 %v109, %v603
  %v605 = vpop.f32.mrb[0].mxu0
  %606 = vmatprep.mubr.bf16.mxu0 %v303
  %607 = vmatmul.mubr.bf16.gmra.mrb[0].mxu0 %v302
  %v608 = vpop.f32.mrb[0].mxu0
  %v609 = vadd.f32 %v109, %v608
  %v610 = vpop.f32.mrb[0].mxu0
  %v611 = vpop.f32.mrb[0].mxu0
  %v612 = vadd.f32 %v109, %v611
  %v613 = vpop.f32.mrb[0].mxu0
  %614 = vmatprep.mubr.bf16.mxu0 %v305
  %615 = vmatmul.mubr.bf16.gmra.mrb[0].mxu0 %v304
  %v616 = vpop.f32.mrb[0].mxu0
  %v617 = vadd.f32 %v109, %v616
  %v618 = vpop.f32.mrb[0].mxu0
  %v619 = vpop.f32.mrb[0].mxu0
  %v620 = vadd.f32 %v109, %v619
  %v621 = vpop.f32.mrb[0].mxu0
  %622 = vmatprep.mubr.bf16.mxu0 %v307
  %623 = vmatmul.mubr.bf16.gmra.mrb[0].mxu0 %v306
  %v624 = vpop.f32.mrb[0].mxu0
  %v625 = vadd.f32 %v109, %v624
  %v626 = vpop.f32.mrb[0].mxu0
  %v627 = vpop.f32.mrb[0].mxu0
  %v628 = vadd.f32 %v109, %v627
  %v629 = vpop.f32.mrb[0].mxu0
  %630 = vmatprep.mubr.bf16.mxu0 %v309
  %631 = vmatmul.mubr.bf16.gmra.mrb[0].mxu0 %v308
  %v632 = vpop.f32.mrb[0].mxu0
  %v633 = vadd.f32 %v109, %v632
  %v634 = vpop.f32.mrb[0].mxu0
  %v635 = vpop.f32.mrb[0].mxu0
  %v636 = vadd.f32 %v109, %v635
  %v637 = vpop.f32.mrb[0].mxu0
  %638 = vmatprep.mubr.bf16.mxu0 %v311
  %639 = vmatmul.mubr.bf16.gmra.mrb[0].mxu0 %v310
  %v640 = vpop.f32.mrb[0].mxu0
  %v641 = vadd.f32 %v109, %v640
  %v642 = vpop.f32.mrb[0].mxu0
  %v643 = vpop.f32.mrb[0].mxu0
  %v644 = vadd.f32 %v109, %v643
  %v645 = vpop.f32.mrb[0].mxu0
  %646 = vmatprep.mubr.bf16.mxu0 %v313
  %647 = vmatmul.mubr.bf16.gmra.mrb[0].mxu0 %v312
  %v648 = vpop.f32.mrb[0].mxu0
  %v649 = vadd.f32 %v109, %v648
  %v650 = vpop.f32.mrb[0].mxu0
  %v651 = vpop.f32.mrb[0].mxu0
  %v652 = vadd.f32 %v109, %v651
  %v653 = vpop.f32.mrb[0].mxu0
  %654 = vmatprep.mubr.bf16.mxu0 %v315
  %655 = vmatmul.mubr.bf16.gmra.mrb[0].mxu0 %v314
  %v656 = vpop.f32.mrb[0].mxu0
  %v657 = vadd.f32 %v109, %v656
  %v658 = vpop.f32.mrb[0].mxu0
  %v659 = vpop.f32.mrb[0].mxu0
  %v660 = vadd.f32 %v109, %v659
  %v661 = vpop.f32.mrb[0].mxu0
  %662 = vmatprep.mubr.bf16.mxu0 %v317
  %663 = vmatmul.mubr.bf16.gmra.mrb[0].mxu0 %v316
  %v664 = vpop.f32.mrb[0].mxu0
  %v665 = vadd.f32 %v109, %v664
  %v666 = vpop.f32.mrb[0].mxu0
  %v667 = vpop.f32.mrb[0].mxu0
  %v668 = vadd.f32 %v109, %v667
  %v669 = vpop.f32.mrb[0].mxu0
  %670 = vmatprep.mubr.bf16.mxu0 %v319
  %671 = vmatmul.mubr.bf16.gmra.mrb[0].mxu0 %v318
  %v672 = vpop.f32.mrb[0].mxu0
  %v673 = vadd.f32 %v109, %v672
  %v674 = vpop.f32.mrb[0].mxu0
  %v675 = vpop.f32.mrb[0].mxu0
  %v676 = vadd.f32 %v109, %v675
  %v677 = vpop.f32.mrb[0].mxu0
  %678 = vmatprep.mubr.bf16.mxu0 %v321
  %679 = vmatmul.mubr.bf16.gmra.mrb[0].mxu0 %v320
  %v680 = vpop.f32.mrb[0].mxu0
  %v681 = vadd.f32 %v109, %v680
  %v682 = vpop.f32.mrb[0].mxu0
  %v683 = vpop.f32.mrb[0].mxu0
  %v684 = vadd.f32 %v109, %v683
  %v685 = vpop.f32.mrb[0].mxu0
  %686 = vmatprep.mubr.bf16.mxu0 %v323
  %687 = vmatmul.mubr.bf16.gmra.mrb[0].mxu0 %v322
  %v688 = vpop.f32.mrb[0].mxu0
  %v689 = vadd.f32 %v109, %v688
  %v690 = vpop.f32.mrb[0].mxu0
  %v691 = vpop.f32.mrb[0].mxu0
  %v692 = vadd.f32 %v109, %v691
  %v693 = vpop.f32.mrb[0].mxu0
  %694 = vmatprep.mubr.bf16.mxu0 %v325
  %695 = vmatmul.mubr.bf16.gmra.mrb[0].mxu0 %v324
  %v696 = vpop.f32.mrb[0].mxu0
  %v697 = vadd.f32 %v109, %v696
  %v698 = vpop.f32.mrb[0].mxu0
  %v699 = vpop.f32.mrb[0].mxu0
  %v700 = vadd.f32 %v109, %v699
  %v701 = vpop.f32.mrb[0].mxu0
  %702 = vmatprep.mubr.bf16.mxu0 %v327
  %703 = vmatmul.mubr.bf16.gmra.mrb[0].mxu0 %v326
  %v704 = vpop.f32.mrb[0].mxu0
  %v705 = vadd.f32 %v109, %v704
  %v706 = vpop.f32.mrb[0].mxu0
  %v707 = vpop.f32.mrb[0].mxu0
  %v708 = vadd.f32 %v109, %v707
  %v709 = vpop.f32.mrb[0].mxu0
  %710 = vmatprep.mubr.bf16.mxu0 %v329
  %711 = vmatmul.mubr.bf16.gmra.mrb[0].mxu0 %v328
  %v712 = vpop.f32.mrb[0].mxu0
  %v713 = vadd.f32 %v109, %v712
  %v714 = vpop.f32.mrb[0].mxu0
  %v715 = vpop.f32.mrb[0].mxu0
  %v716 = vadd.f32 %v109, %v715
  %v717 = vpop.f32.mrb[0].mxu0
  %718 = vmatprep.mubr.bf16.mxu0 %v331
  %719 = vmatmul.mubr.bf16.gmra.mrb[0].mxu0 %v330
  %v720 = vpop.f32.mrb[0].mxu0
  %v721 = vadd.f32 %v109, %v720
  %v722 = vpop.f32.mrb[0].mxu0
  %v723 = vpop.f32.mrb[0].mxu0
  %v724 = vadd.f32 %v109, %v723
  %v725 = vpop.f32.mrb[0].mxu0
  %726 = vmatprep.mubr.bf16.mxu0 %v333
  %727 = vmatmul.mubr.bf16.gmra.mrb[0].mxu0 %v332
  %v728 = vpop.f32.mrb[0].mxu0
  %v729 = vadd.f32 %v109, %v728
  %v730 = vpop.f32.mrb[0].mxu0
  %v731 = vpop.f32.mrb[0].mxu0
  %v732 = vadd.f32 %v109, %v731
  %v733 = vpop.f32.mrb[0].mxu0
  %734 = vmatprep.mubr.bf16.mxu0 %v335
  %735 = vmatmul.mubr.bf16.gmra.mrb[0].mxu0 %v334
  %v736 = vpop.f32.mrb[0].mxu0
  %v737 = vadd.f32 %v109, %v736
  %v738 = vpop.f32.mrb[0].mxu0
  %v739 = vpop.f32.mrb[0].mxu0
  %v740 = vadd.f32 %v109, %v739
  %v741 = vpop.f32.mrb[0].mxu0
  %742 = vmatprep.mubr.bf16.mxu0 %v337
  %743 = vmatmul.mubr.bf16.gmra.mrb[0].mxu0 %v336
  %v744 = vpop.f32.mrb[0].mxu0
  %v745 = vadd.f32 %v109, %v744
  %v746 = vpop.f32.mrb[0].mxu0
  %v747 = vpop.f32.mrb[0].mxu0
  %v748 = vadd.f32 %v109, %v747
  %v749 = vpop.f32.mrb[0].mxu0
  %750 = vmatprep.mubr.bf16.mxu0 %v339
  %751 = vmatmul.mubr.bf16.gmra.mrb[0].mxu0 %v338
  %v752 = vpop.f32.mrb[0].mxu0
  %v753 = vadd.f32 %v109, %v752
  %v754 = vpop.f32.mrb[0].mxu0
  %v755 = vpop.f32.mrb[0].mxu0
  %v756 = vpop.f32.mrb[0].mxu0
  %757 = vdwg.mxu0
  %v758 = vxor.u32 %v529, 2147483648
  %v759 = vxor.u32 %v532, 2147483648
  %v760 = vxor.u32 %v537, 2147483648
  %v761 = vxor.u32 %v540, 2147483648
  %v762 = vxor.u32 %v545, 2147483648
  %v763 = vxor.u32 %v548, 2147483648
  %v764 = vxor.u32 %v553, 2147483648
  %v765 = vxor.u32 %v556, 2147483648
  %v766 = vxor.u32 %v561, 2147483648
  %v767 = vxor.u32 %v564, 2147483648
  %v768 = vxor.u32 %v569, 2147483648
  %v769 = vxor.u32 %v572, 2147483648
  %v770 = vxor.u32 %v577, 2147483648
  %v771 = vxor.u32 %v580, 2147483648
  %v772 = vxor.u32 %v585, 2147483648
  %v773 = vxor.u32 %v588, 2147483648
  %v774 = vxor.u32 %v593, 2147483648
  %v775 = vxor.u32 %v596, 2147483648
  %v776 = vxor.u32 %v601, 2147483648
  %v777 = vxor.u32 %v604, 2147483648
  %v778 = vxor.u32 %v609, 2147483648
  %v779 = vxor.u32 %v612, 2147483648
  %v780 = vxor.u32 %v617, 2147483648
  %v781 = vxor.u32 %v620, 2147483648
  %v782 = vxor.u32 %v625, 2147483648
  %v783 = vxor.u32 %v628, 2147483648
  %v784 = vxor.u32 %v633, 2147483648
  %v785 = vxor.u32 %v636, 2147483648
  %v786 = vxor.u32 %v641, 2147483648
  %v787 = vxor.u32 %v644, 2147483648
  %v788 = vxor.u32 %v649, 2147483648
  %v789 = vxor.u32 %v652, 2147483648
  %v790 = vxor.u32 %v657, 2147483648
  %v791 = vxor.u32 %v660, 2147483648
  %v792 = vxor.u32 %v665, 2147483648
  %v793 = vxor.u32 %v668, 2147483648
  %v794 = vxor.u32 %v673, 2147483648
  %v795 = vxor.u32 %v676, 2147483648
  %v796 = vxor.u32 %v681, 2147483648
  %v797 = vxor.u32 %v684, 2147483648
  %v798 = vxor.u32 %v689, 2147483648
  %v799 = vxor.u32 %v692, 2147483648
  %v800 = vxor.u32 %v697, 2147483648
  %v801 = vxor.u32 %v700, 2147483648
  %v802 = vxor.u32 %v705, 2147483648
  %v803 = vxor.u32 %v708, 2147483648
  %v804 = vxor.u32 %v713, 2147483648
  %v805 = vxor.u32 %v716, 2147483648
  %v806 = vxor.u32 %v721, 2147483648
  %v807 = vxor.u32 %v724, 2147483648
  %v808 = vxor.u32 %v729, 2147483648
  %v809 = vxor.u32 %v732, 2147483648
  %v810 = vxor.u32 %v737, 2147483648
  %v811 = vxor.u32 %v740, 2147483648
  %v812 = vxor.u32 %v745, 2147483648
  %v813 = vxor.u32 %v748, 2147483648
  %v814 = vxor.u32 %v753, 2147483648
  %v815 = vmul.f32 %v758, 1.442695
  %v816 = vpow.pop %v815
  %v817 = vmul.f32 %v759, 1.442695
  %v818 = vpow.pop %v817
  %v819 = vmul.f32 %v760, 1.442695
  %v820 = vpow.pop %v819
  %v821 = vmul.f32 %v761, 1.442695
  %v822 = vpow.pop %v821
  %v823 = vmul.f32 %v762, 1.442695
  %v824 = vpow.pop %v823
  %v825 = vmul.f32 %v763, 1.442695
  %v826 = vpow.pop %v825
  %v827 = vmul.f32 %v764, 1.442695
  %v828 = vpow.pop %v827
  %v829 = vmul.f32 %v765, 1.442695
  %v830 = vpow.pop %v829
  %v831 = vmul.f32 %v766, 1.442695
  %v832 = vpow.pop %v831
  %v833 = vmul.f32 %v767, 1.442695
  %v834 = vpow.pop %v833
  %v835 = vmul.f32 %v768, 1.442695
  %v836 = vpow.pop %v835
  %v837 = vmul.f32 %v769, 1.442695
  %v838 = vpow.pop %v837
  %v839 = vmul.f32 %v770, 1.442695
  %v840 = vpow.pop %v839
  %v841 = vmul.f32 %v771, 1.442695
  %v842 = vpow.pop %v841
  %v843 = vmul.f32 %v772, 1.442695
  %v844 = vpow.pop %v843
  %v845 = vmul.f32 %v773, 1.442695
  %v846 = vpow.pop %v845
  %v847 = vmul.f32 %v774, 1.442695
  %v848 = vpow.pop %v847
  %v849 = vmul.f32 %v775, 1.442695
  %v850 = vpow.pop %v849
  %v851 = vmul.f32 %v776, 1.442695
  %v852 = vpow.pop %v851
  %v853 = vmul.f32 %v777, 1.442695
  %v854 = vpow.pop %v853
  %v855 = vmul.f32 %v778, 1.442695
  %v856 = vpow.pop %v855
  %v857 = vmul.f32 %v779, 1.442695
  %v858 = vpow.pop %v857
  %v859 = vmul.f32 %v780, 1.442695
  %v860 = vpow.pop %v859
  %v861 = vmul.f32 %v781, 1.442695
  %v862 = vpow.pop %v861
  %v863 = vmul.f32 %v782, 1.442695
  %v864 = vpow.pop %v863
  %v865 = vmul.f32 %v783, 1.442695
  %v866 = vpow.pop %v865
  %v867 = vmul.f32 %v784, 1.442695
  %v868 = vpow.pop %v867
  %v869 = vmul.f32 %v785, 1.442695
  %v870 = vpow.pop %v869
  %v871 = vmul.f32 %v786, 1.442695
  %v872 = vpow.pop %v871
  %v873 = vmul.f32 %v787, 1.442695
  %v874 = vpow.pop %v873
  %v875 = vmul.f32 %v788, 1.442695
  %v876 = vpow.pop %v875
  %v877 = vmul.f32 %v789, 1.442695
  %v878 = vpow.pop %v877
  %v879 = vmul.f32 %v790, 1.442695
  %v880 = vpow.pop %v879
  %v881 = vmul.f32 %v791, 1.442695
  %v882 = vpow.pop %v881
  %v883 = vmul.f32 %v792, 1.442695
  %v884 = vpow.pop %v883
  %v885 = vmul.f32 %v793, 1.442695
  %v886 = vpow.pop %v885
  %v887 = vmul.f32 %v794, 1.442695
  %v888 = vpow.pop %v887
  %v889 = vmul.f32 %v795, 1.442695
  %v890 = vpow.pop %v889
  %v891 = vmul.f32 %v796, 1.442695
  %v892 = vpow.pop %v891
  %v893 = vmul.f32 %v797, 1.442695
  %v894 = vpow.pop %v893
  %v895 = vmul.f32 %v798, 1.442695
  %v896 = vpow.pop %v895
  %v897 = vmul.f32 %v799, 1.442695
  %v898 = vpow.pop %v897
  %v899 = vmul.f32 %v800, 1.442695
  %v900 = vpow.pop %v899
  %v901 = vmul.f32 %v801, 1.442695
  %v902 = vpow.pop %v901
  %v903 = vmul.f32 %v802, 1.442695
  %v904 = vpow.pop %v903
  %v905 = vmul.f32 %v803, 1.442695
  %v906 = vpow.pop %v905
  %v907 = vmul.f32 %v804, 1.442695
  %v908 = vpow.pop %v907
  %v909 = vmul.f32 %v805, 1.442695
  %v910 = vpow.pop %v909
  %v911 = vmul.f32 %v806, 1.442695
  %v912 = vpow.pop %v911
  %v913 = vmul.f32 %v807, 1.442695
  %v914 = vpow.pop %v913
  %v915 = vmul.f32 %v808, 1.442695
  %v916 = vpow.pop %v915
  %v917 = vmul.f32 %v809, 1.442695
  %v918 = vpow.pop %v917
  %v919 = vmul.f32 %v810, 1.442695
  %v920 = vpow.pop %v919
  %v921 = vmul.f32 %v811, 1.442695
  %v922 = vpow.pop %v921
  %v923 = vmul.f32 %v812, 1.442695
  %v924 = vpow.pop %v923
  %v925 = vmul.f32 %v813, 1.442695
  %v926 = vpow.pop %v925
  %v927 = vmul.f32 %v814, 1.442695
  %v928 = vpow.pop %v927
  %v929 = vadd.f32 %v816, 1.0
  %v930 = vadd.f32 %v818, 1.0
  %v931 = vadd.f32 %v820, 1.0
  %v932 = vadd.f32 %v822, 1.0
  %v933 = vadd.f32 %v824, 1.0
  %v934 = vadd.f32 %v826, 1.0
  %v935 = vadd.f32 %v828, 1.0
  %v936 = vadd.f32 %v830, 1.0
  %v937 = vadd.f32 %v832, 1.0
  %v938 = vadd.f32 %v834, 1.0
  %v939 = vadd.f32 %v836, 1.0
  %v940 = vadd.f32 %v838, 1.0
  %v941 = vadd.f32 %v840, 1.0
  %v942 = vadd.f32 %v842, 1.0
  %v943 = vadd.f32 %v844, 1.0
  %v944 = vadd.f32 %v846, 1.0
  %v945 = vadd.f32 %v848, 1.0
  %v946 = vadd.f32 %v850, 1.0
  %v947 = vadd.f32 %v852, 1.0
  %v948 = vadd.f32 %v854, 1.0
  %v949 = vadd.f32 %v856, 1.0
  %v950 = vadd.f32 %v858, 1.0
  %v951 = vadd.f32 %v860, 1.0
  %v952 = vadd.f32 %v862, 1.0
  %v953 = vadd.f32 %v864, 1.0
  %v954 = vadd.f32 %v866, 1.0
  %v955 = vadd.f32 %v868, 1.0
  %v956 = vadd.f32 %v870, 1.0
  %v957 = vadd.f32 %v872, 1.0
  %v958 = vadd.f32 %v874, 1.0
  %v959 = vadd.f32 %v876, 1.0
  %v960 = vadd.f32 %v878, 1.0
  %v961 = vadd.f32 %v880, 1.0
  %v962 = vadd.f32 %v882, 1.0
  %v963 = vadd.f32 %v884, 1.0
  %v964 = vadd.f32 %v886, 1.0
  %v965 = vadd.f32 %v888, 1.0
  %v966 = vadd.f32 %v890, 1.0
  %v967 = vadd.f32 %v892, 1.0
  %v968 = vadd.f32 %v894, 1.0
  %v969 = vadd.f32 %v896, 1.0
  %v970 = vadd.f32 %v898, 1.0
  %v971 = vadd.f32 %v900, 1.0
  %v972 = vadd.f32 %v902, 1.0
  %v973 = vadd.f32 %v904, 1.0
  %v974 = vadd.f32 %v906, 1.0
  %v975 = vadd.f32 %v908, 1.0
  %v976 = vadd.f32 %v910, 1.0
  %v977 = vadd.f32 %v912, 1.0
  %v978 = vadd.f32 %v914, 1.0
  %v979 = vadd.f32 %v916, 1.0
  %v980 = vadd.f32 %v918, 1.0
  %v981 = vadd.f32 %v920, 1.0
  %v982 = vadd.f32 %v922, 1.0
  %v983 = vadd.f32 %v924, 1.0
  %v984 = vadd.f32 %v926, 1.0
  %v985 = vadd.f32 %v928, 1.0
  %v986 = vrcp.pop %v929
  %v987 = vmul.f32 1.0, %v986
  %v988 = vrcp.pop %v930
  %v989 = vmul.f32 1.0, %v988
  %v990 = vrcp.pop %v931
  %v991 = vmul.f32 1.0, %v990
  %v992 = vrcp.pop %v932
  %v993 = vmul.f32 1.0, %v992
  %v994 = vrcp.pop %v933
  %v995 = vmul.f32 1.0, %v994
  %v996 = vrcp.pop %v934
  %v997 = vmul.f32 1.0, %v996
  %v998 = vrcp.pop %v935
  %v999 = vmul.f32 1.0, %v998
  %v1000 = vrcp.pop %v936
  %v1001 = vmul.f32 1.0, %v1000
  %v1002 = vrcp.pop %v937
  %v1003 = vmul.f32 1.0, %v1002
  %v1004 = vrcp.pop %v938
  %v1005 = vmul.f32 1.0, %v1004
  %v1006 = vrcp.pop %v939
  %v1007 = vmul.f32 1.0, %v1006
  %v1008 = vrcp.pop %v940
  %v1009 = vmul.f32 1.0, %v1008
  %v1010 = vrcp.pop %v941
  %v1011 = vmul.f32 1.0, %v1010
  %v1012 = vrcp.pop %v942
  %v1013 = vmul.f32 1.0, %v1012
  %v1014 = vrcp.pop %v943
  %v1015 = vmul.f32 1.0, %v1014
  %v1016 = vrcp.pop %v944
  %v1017 = vmul.f32 1.0, %v1016
  %v1018 = vrcp.pop %v945
  %v1019 = vmul.f32 1.0, %v1018
  %v1020 = vrcp.pop %v946
  %v1021 = vmul.f32 1.0, %v1020
  %v1022 = vrcp.pop %v947
  %v1023 = vmul.f32 1.0, %v1022
  %v1024 = vrcp.pop %v948
  %v1025 = vmul.f32 1.0, %v1024
  %v1026 = vrcp.pop %v949
  %v1027 = vmul.f32 1.0, %v1026
  %v1028 = vrcp.pop %v950
  %v1029 = vmul.f32 1.0, %v1028
  %v1030 = vrcp.pop %v951
  %v1031 = vmul.f32 1.0, %v1030
  %v1032 = vrcp.pop %v952
  %v1033 = vmul.f32 1.0, %v1032
  %v1034 = vrcp.pop %v953
  %v1035 = vmul.f32 1.0, %v1034
  %v1036 = vrcp.pop %v954
  %v1037 = vmul.f32 1.0, %v1036
  %v1038 = vrcp.pop %v955
  %v1039 = vmul.f32 1.0, %v1038
  %v1040 = vrcp.pop %v956
  %v1041 = vmul.f32 1.0, %v1040
  %v1042 = vrcp.pop %v957
  %v1043 = vmul.f32 1.0, %v1042
  %v1044 = vrcp.pop %v958
  %v1045 = vmul.f32 1.0, %v1044
  %v1046 = vrcp.pop %v959
  %v1047 = vmul.f32 1.0, %v1046
  %v1048 = vrcp.pop %v960
  %v1049 = vmul.f32 1.0, %v1048
  %v1050 = vrcp.pop %v961
  %v1051 = vmul.f32 1.0, %v1050
  %v1052 = vrcp.pop %v962
  %v1053 = vmul.f32 1.0, %v1052
  %v1054 = vrcp.pop %v963
  %v1055 = vmul.f32 1.0, %v1054
  %v1056 = vrcp.pop %v964
  %v1057 = vmul.f32 1.0, %v1056
  %v1058 = vrcp.pop %v965
  %v1059 = vmul.f32 1.0, %v1058
  %v1060 = vrcp.pop %v966
  %v1061 = vmul.f32 1.0, %v1060
  %v1062 = vrcp.pop %v967
  %v1063 = vmul.f32 1.0, %v1062
  %v1064 = vrcp.pop %v968
  %v1065 = vmul.f32 1.0, %v1064
  %v1066 = vrcp.pop %v969
  %v1067 = vmul.f32 1.0, %v1066
  %v1068 = vrcp.pop %v970
  %v1069 = vmul.f32 1.0, %v1068
  %v1070 = vrcp.pop %v971
  %v1071 = vmul.f32 1.0, %v1070
  %v1072 = vrcp.pop %v972
  %v1073 = vmul.f32 1.0, %v1072
  %v1074 = vrcp.pop %v973
  %v1075 = vmul.f32 1.0, %v1074
  %v1076 = vrcp.pop %v974
  %v1077 = vmul.f32 1.0, %v1076
  %v1078 = vrcp.pop %v975
  %v1079 = vmul.f32 1.0, %v1078
  %v1080 = vrcp.pop %v976
  %v1081 = vmul.f32 1.0, %v1080
  %v1082 = vrcp.pop %v977
  %v1083 = vmul.f32 1.0, %v1082
  %v1084 = vrcp.pop %v978
  %v1085 = vmul.f32 1.0, %v1084
  %v1086 = vrcp.pop %v979
  %v1087 = vmul.f32 1.0, %v1086
  %v1088 = vrcp.pop %v980
  %v1089 = vmul.f32 1.0, %v1088
  %v1090 = vrcp.pop %v981
  %v1091 = vmul.f32 1.0, %v1090
  %v1092 = vrcp.pop %v982
  %v1093 = vmul.f32 1.0, %v1092
  %v1094 = vrcp.pop %v983
  %v1095 = vmul.f32 1.0, %v1094
  %v1096 = vrcp.pop %v984
  %v1097 = vmul.f32 1.0, %v1096
  %v1098 = vrcp.pop %v985
  %v1099 = vmul.f32 1.0, %v1098
  %1100 = vst [vmem:[%s3] sm:$0xff] %v987
  %1101 = vst [vmem:[%s3 + $0x8] sm:$0xff] %v989
  %1102 = vst [vmem:[%s3 + $0x10] sm:$0xff] %v991
  %1103 = vst [vmem:[%s3 + $0x18] sm:$0xff] %v993
  %1104 = vst [vmem:[%s3 + $0x20] sm:$0xff] %v995
  %1105 = vst [vmem:[%s3 + $0x28] sm:$0xff] %v997
  %1106 = vst [vmem:[%s3 + $0x30] sm:$0xff] %v999
  %1107 = vst [vmem:[%s3 + $0x38] sm:$0xff] %v1001
  %1108 = vst [vmem:[%s3 + $0x40] sm:$0xff] %v1003
  %1109 = vst [vmem:[%s3 + $0x48] sm:$0xff] %v1005
  %1110 = vst [vmem:[%s3 + $0x50] sm:$0xff] %v1007
  %1111 = vst [vmem:[%s3 + $0x58] sm:$0xff] %v1009
  %1112 = vst [vmem:[%s3 + $0x60] sm:$0xff] %v1011
  %1113 = vst [vmem:[%s3 + $0x68] sm:$0xff] %v1013
  %1114 = vst [vmem:[%s3 + $0x70] sm:$0xff] %v1015
  %1115 = vst [vmem:[%s3 + $0x78] sm:$0xff] %v1017
  %1116 = vst [vmem:[%s3 + $0x80] sm:$0xff] %v1019
  %1117 = vst [vmem:[%s3 + $0x88] sm:$0xff] %v1021
  %1118 = vst [vmem:[%s3 + $0x90] sm:$0xff] %v1023
  %1119 = vst [vmem:[%s3 + $0x98] sm:$0xff] %v1025
  %1120 = vst [vmem:[%s3 + $0xa0] sm:$0xff] %v1027
  %1121 = vst [vmem:[%s3 + $0xa8] sm:$0xff] %v1029
  %1122 = vst [vmem:[%s3 + $0xb0] sm:$0xff] %v1031
  %1123 = vst [vmem:[%s3 + $0xb8] sm:$0xff] %v1033
  %1124 = vst [vmem:[%s3 + $0xc0] sm:$0xff] %v1035
  %1125 = vst [vmem:[%s3 + $0xc8] sm:$0xff] %v1037
  %1126 = vst [vmem:[%s3 + $0xd0] sm:$0xff] %v1039
  %1127 = vst [vmem:[%s3 + $0xd8] sm:$0xff] %v1041
  %1128 = vst [vmem:[%s3 + $0xe0] sm:$0xff] %v1043
  %1129 = vst [vmem:[%s3 + $0xe8] sm:$0xff] %v1045
  %1130 = vst [vmem:[%s3 + $0xf0] sm:$0xff] %v1047
  %1131 = vst [vmem:[%s3 + $0xf8] sm:$0xff] %v1049
  %1132 = vst [vmem:[%s3 + $0x100] sm:$0xff] %v1051
  %1133 = vst [vmem:[%s3 + $0x108] sm:$0xff] %v1053
  %1134 = vst [vmem:[%s3 + $0x110] sm:$0xff] %v1055
  %1135 = vst [vmem:[%s3 + $0x118] sm:$0xff] %v1057
  %1136 = vst [vmem:[%s3 + $0x120] sm:$0xff] %v1059
  %1137 = vst [vmem:[%s3 + $0x128] sm:$0xff] %v1061
  %1138 = vst [vmem:[%s3 + $0x130] sm:$0xff] %v1063
  %1139 = vst [vmem:[%s3 + $0x138] sm:$0xff] %v1065
  %1140 = vst [vmem:[%s3 + $0x140] sm:$0xff] %v1067
  %1141 = vst [vmem:[%s3 + $0x148] sm:$0xff] %v1069
  %1142 = vst [vmem:[%s3 + $0x150] sm:$0xff] %v1071
  %1143 = vst [vmem:[%s3 + $0x158] sm:$0xff] %v1073
  %1144 = vst [vmem:[%s3 + $0x160] sm:$0xff] %v1075
  %1145 = vst [vmem:[%s3 + $0x168] sm:$0xff] %v1077
  %1146 = vst [vmem:[%s3 + $0x170] sm:$0xff] %v1079
  %1147 = vst [vmem:[%s3 + $0x178] sm:$0xff] %v1081
  %1148 = vst [vmem:[%s3 + $0x180] sm:$0xff] %v1083
  %1149 = vst [vmem:[%s3 + $0x188] sm:$0xff] %v1085
  %1150 = vst [vmem:[%s3 + $0x190] sm:$0xff] %v1087
  %1151 = vst [vmem:[%s3 + $0x198] sm:$0xff] %v1089
  %1152 = vst [vmem:[%s3 + $0x1a0] sm:$0xff] %v1091
  %1153 = vst [vmem:[%s3 + $0x1a8] sm:$0xff] %v1093
  %1154 = vst [vmem:[%s3 + $0x1b0] sm:$0xff] %v1095
  %1155 = vst [vmem:[%s3 + $0x1b8] sm:$0xff] %v1097
  %1156 = vst [vmem:[%s3 + $0x1c0] sm:$0x3] %v1099
  // Predicated region
  $region14: #{vae_forward.11} parent=0 // pred_check
    _
  $region15: #{vae_forward.11} parent=0 // pred_check_branch
    %1158 = sbr.rel (0) target = $region17
  $region16: #{vae_forward.11} parent=0 // pred_region
    _
  $region17: #{vae_forward.11} parent=0 // pred_fallthru
    _
  // Predicated region
  $region18: #{vae_forward.11} parent=0 // pred_check
    _
  $region19: #{vae_forward.11} parent=0 // pred_check_branch
    %1160 = sbr.rel (0) target = $region21
  $region20: #{vae_forward.11} parent=0 // pred_region
    _
  $region21: #{vae_forward.11} parent=0 // pred_fallthru
    _

</llo_original>
